<compile_context>
chip_gen: v6e
topology: v6e:2x2x1
jax: 0.10.0
libtpu: 0.0.40
codegen_flags: <defaults>
</compile_context>

<pallas_src>
import functools

import jax
import jax.numpy as jnp
from jax import lax
from jax.experimental import pallas as pl
from jax.experimental.pallas import tpu as pltpu


# ----------------------------------------------------------------------------
# Pallas kernel: per (image, row-band) — fused H-upsample + H-pad of the low
# branch, dilated 3x3 conv (+folded BN), 1x1 conv (+folded BN) on the high
# branch, fused add+ReLU, and the 1x1 classification conv.
# ----------------------------------------------------------------------------
def _cff_kernel(H, Hl,
                xl_ref, xh_ref,
                wl_ref, bl_ref,
                wh_ref, bh_ref,
                wc_ref, bc_ref,
                x_ref, cls_ref,
                up_ref):
    # xl_ref : (1, Hl, Wp, C_low)    bf16  W-upsampled + W-padded low branch
    #                                      (full low-res image, resident)
    # xh_ref : (1, TH, W, C_high)    bf16  high branch row-band
    # wl_ref : (3, 3, C_low, C_out_p) bf16 dilated conv weights (BN scale folded)
    # bl_ref : (1, C_out_p)          f32   folded BN bias (low)
    # wh_ref : (C_high, C_out_p)     bf16  1x1 conv weights (BN scale folded)
    # bh_ref : (1, C_out_p)          f32   folded BN bias (high)
    # wc_ref : (C_out_p, n_cls)      bf16  classification 1x1 conv weights
    # bc_ref : (1, n_cls)            f32   bias_low @ w_cls (precomputed)
    # x_ref  : (1, TH, W, C_out_p)   bf16
    # cls_ref: (1, TH, W, n_cls)     bf16
    # up_ref : VMEM scratch (TH+4, Wp, C_low) bf16 (H-upsampled + padded band)
    _, _, Wp, C_low = xl_ref.shape
    _, TH, W, C_high = xh_ref.shape
    C_out_p = x_ref.shape[3]
    n_cls = cls_ref.shape[3]

    t = pl.program_id(1)
    scale_h = (Hl - 1.0) / (H - 1.0)

    # ---- fused bilinear x2 row-upsample (align_corners) + 2-row zero pad ----
    # Scratch row r holds padded upsampled row g = t*TH + r.  Padding rows get
    # zero interpolation weights, so no branch is needed.  The unroll is
    # bounded by TH + 4 (<= 36) because TH never falls back to H.
    # TODO(synk): vectorize this as a (TH+4, Hl) interpolation-matrix matmul
    # on the MXU instead of an unrolled per-row blend.
    for r in range(TH + 4):
        g = t * TH + r                                     # padded row index
        valid = jnp.where(
            jnp.logical_and(g >= 2, g < H + 2), 1.0, 0.0).astype(jnp.float32)
        ho = jnp.clip(g - 2, 0, H - 1)                     # upsampled row idx
        pos = ho.astype(jnp.float32) * jnp.float32(scale_h)
        y0f = jnp.floor(pos)
        y0 = y0f.astype(jnp.int32)
        y1 = jnp.minimum(y0 + 1, Hl - 1)
        w1 = (pos - y0f) * valid
        w0 = valid - w1
        row = (xl_ref[0, y0].astype(jnp.float32) * w0 +
               xl_ref[0, y1].astype(jnp.float32) * w1)
        up_ref[r] = row.astype(jnp.bfloat16)

    # ---- low branch: dilated 3x3 conv (dilation=2) as 9 bf16 MXU matmuls ----
    # Register-level accumulation (no VMEM scratch, no zero-init pass).
    # TODO(synk): when C_low is small, im2col into one K=9*C_low matmul.
    acc = None
    for dy in range(3):
        for dx in range(3):
            patch = up_ref[pl.ds(2 * dy, TH), pl.ds(2 * dx, W), :]
            part = jnp.dot(patch.reshape(TH * W, C_low),
                           wl_ref[dy, dx],
                           preferred_element_type=jnp.float32)
            acc = part if acc is None else acc + part
    xl_feat = acc + bl_ref[...]                            # folded BN bias, f32

    # ---- high branch: 1x1 conv + folded BatchNorm ----
    xh_flat = xh_ref[0].reshape(TH * W, C_high)
    xh_feat = jnp.dot(xh_flat, wh_ref[...],
                      preferred_element_type=jnp.float32) + bh_ref[...]

    # ---- fuse + ReLU; classification head on xl_feat (matching the module) --
    x = jnp.maximum(xl_feat + xh_feat, 0.0)
    # xl_feat @ w_cls == acc @ w_cls + bias_low @ w_cls (= bc_ref)
    x_cls = jnp.dot(acc.astype(jnp.bfloat16), wc_ref[...],
                    preferred_element_type=jnp.float32) + bc_ref[...]

    x_ref[0] = x.reshape(TH, W, C_out_p).astype(jnp.bfloat16)
    cls_ref[0] = x_cls.reshape(TH, W, n_cls).astype(jnp.bfloat16)


# ----------------------------------------------------------------------------
# Wrapper helpers.
# ----------------------------------------------------------------------------
def _round_up(x, m):
    return (x + m - 1) // m * m


def _pick_band_rows(H, W, N, max_rows=32, max_elems=2048):
    """Largest divisor of H that is <= max_rows and keeps TH*W <= max_elems.

    TODO(synk): for H with no good divisor, pad H and mask the tail band
    instead of shrinking TH.  Tune max_rows/max_elems per generation
    (smaller on v7x's 64 MiB VMEM, larger on v5e/v6e 128 MiB parts).
    """
    cap = max_rows
    if N == 1 and H > 1:
        cap = min(cap, H // 2)        # keep >= 2 grid steps for 2 v7x cores
    cap = max(cap, 1)
    th = 1
    for cand in range(1, min(H, cap) + 1):
        if H % cand == 0 and cand * W <= max_elems:
            th = cand
    return th


def _upsample_w2x_ac(x_nhwc):
    """Width-only bilinear x2 upsample with align_corners=True."""
    n, h, w, c = x_nhwc.shape
    wo = 2 * w
    xs = jnp.arange(wo, dtype=jnp.float32) * (w - 1) / (wo - 1)
    x0 = jnp.floor(xs).astype(jnp.int32)
    x1 = jnp.minimum(x0 + 1, w - 1)
    wx = (xs - x0.astype(jnp.float32))[None, None, :, None]
    v0 = x_nhwc[:, :, x0, :]
    v1 = x_nhwc[:, :, x1, :]
    return v0 * (1.0 - wx) + v1 * wx


def _upsample2x_bilinear_ac(x_nhwc):
    """Full 2D bilinear x2 upsample (align_corners) — reference path only."""
    n, h, w, c = x_nhwc.shape
    ho, wo = 2 * h, 2 * w
    ys = jnp.arange(ho, dtype=jnp.float32) * (h - 1) / (ho - 1)
    xs = jnp.arange(wo, dtype=jnp.float32) * (w - 1) / (wo - 1)
    y0 = jnp.floor(ys).astype(jnp.int32)
    x0 = jnp.floor(xs).astype(jnp.int32)
    y1 = jnp.minimum(y0 + 1, h - 1)
    x1 = jnp.minimum(x0 + 1, w - 1)
    wy = (ys - y0.astype(jnp.float32))[None, :, None, None]
    wx = (xs - x0.astype(jnp.float32))[None, None, :, None]
    v00 = x_nhwc[:, y0][:, :, x0]
    v01 = x_nhwc[:, y0][:, :, x1]
    v10 = x_nhwc[:, y1][:, :, x0]
    v11 = x_nhwc[:, y1][:, :, x1]
    top = v00 * (1.0 - wx) + v01 * wx
    bot = v10 * (1.0 - wx) + v11 * wx
    return top * (1.0 - wy) + bot * wy


@jax.jit
def cff_block_forward(xl_nchw, xh_nchw, params):
    """CFFBlock forward. xl/xh are NCHW; returns (x, x_cls) in NCHW (bf16)."""
    xl = jnp.transpose(xl_nchw, (0, 2, 3, 1)).astype(jnp.float32)   # NHWC
    xh = jnp.transpose(xh_nchw, (0, 2, 3, 1)).astype(jnp.float32)

    N, Hl, Wl, C_low = xl.shape
    _, H, W, C_high = xh.shape                    # H = 2*Hl, W = 2*Wl
    C_out = params["w_low"].shape[3]
    n_cls = params["w_cls"].shape[1]
    C_out_p = _round_up(C_out, 128)               # lane-dense x stores

    TH = _pick_band_rows(H, W, N)
    T = H // TH

    # Low branch: W-upsample + W-pad in the wrapper (half-resolution rows);
    # the H-upsample + H-pad (and the row halo) are fused into the kernel.
    xl_wup = _upsample_w2x_ac(xl)                                   # (N,Hl,W,C)
    xl_wup = jnp.pad(xl_wup, ((0, 0), (0, 0), (2, 2), (0, 0)))      # (N,Hl,W+4,C)
    xl_wup = xl_wup.astype(jnp.bfloat16)
    Wp = W + 4
    xh_b = xh.astype(jnp.bfloat16)

    def padc(a, axis, new):
        pad = [(0, 0)] * a.ndim
        pad[axis] = (0, new - a.shape[axis])
        return jnp.pad(a, pad)

    # Fold BN scales into the bf16 weights; only biases remain per-channel.
    w_low = params["w_low"] * params["scale_low"].reshape(1, 1, 1, C_out)
    w_high = params["w_high"] * params["scale_high"]                # (C_high,C_out)
    bias_cls = params["bias_low"] @ params["w_cls"]                 # (1, n_cls)

    w_low = padc(w_low, 3, C_out_p).astype(jnp.bfloat16)
    w_high = padc(w_high, 1, C_out_p).astype(jnp.bfloat16)
    w_cls = padc(params["w_cls"], 0, C_out_p).astype(jnp.bfloat16)  # (C_out_p,n_cls)
    b_low = padc(params["bias_low"], 1, C_out_p)                    # f32, zero-padded
    b_high = padc(params["bias_high"], 1, C_out_p)

    kernel = functools.partial(_cff_kernel, H, Hl)

    grid_spec = pltpu.PrefetchScalarGridSpec(
        num_scalar_prefetch=0,
        grid=(N, T),
        in_specs=[
            # low branch: full low-H image, resident across the t axis
            # TODO(synk): pipeline_mode=pl.Buffered(1) here and on the
            # constant weight specs to halve static VMEM on v7x.
            pl.BlockSpec((1, Hl, Wp, C_low), lambda n, t: (n, 0, 0, 0)),
            # high branch: one row-band per step
            pl.BlockSpec((1, TH, W, C_high), lambda n, t: (n, t, 0, 0)),
            pl.BlockSpec((3, 3, C_low, C_out_p), lambda n, t: (0, 0, 0, 0)),
            pl.BlockSpec((1, C_out_p), lambda n, t: (0, 0)),
            pl.BlockSpec((C_high, C_out_p), lambda n, t: (0, 0)),
            pl.BlockSpec((1, C_out_p), lambda n, t: (0, 0)),
            pl.BlockSpec((C_out_p, n_cls), lambda n, t: (0, 0)),
            pl.BlockSpec((1, n_cls), lambda n, t: (0, 0)),
        ],
        out_specs=[
            pl.BlockSpec((1, TH, W, C_out_p), lambda n, t: (n, t, 0, 0)),
            pl.BlockSpec((1, TH, W, n_cls), lambda n, t: (n, t, 0, 0)),
        ],
        scratch_shapes=[
            pltpu.VMEM((TH + 4, Wp, C_low), jnp.bfloat16),   # upsampled band
        ],
    )

    # Advisory cost estimate so XLA schedules surrounding ops sensibly.
    flops = 2 * N * H * W * (9 * C_low + C_high + n_cls) * C_out_p
    bytes_accessed = (N * Hl * Wp * C_low * 2 +            # low branch (bf16)
                      N * H * W * C_high * 2 +             # high branch (bf16)
                      N * H * W * (C_out_p + n_cls) * 2)   # bf16 outputs
    cost = pl.CostEstimate(flops=flops, transcendentals=0,
                           bytes_accessed=bytes_accessed)

    x_p, cls_p = pl.pallas_call(
        kernel,
        out_shape=(jax.ShapeDtypeStruct((N, H, W, C_out_p), jnp.bfloat16),
                   jax.ShapeDtypeStruct((N, H, W, n_cls), jnp.bfloat16)),
        grid_spec=grid_spec,
        compiler_params=pltpu.CompilerParams(
            dimension_semantics=("parallel", "parallel")),
        cost_estimate=cost,
    )(xl_wup, xh_b, w_low, b_low, w_high, b_high, w_cls, bias_cls)

    # Drop channel padding (zero-padded weights/biases keep padded lanes at 0),
    # NHWC -> NCHW.  Outputs stay bf16 to halve HBM writeback / transpose cost.
    x = jnp.transpose(x_p[..., :C_out], (0, 3, 1, 2))
    x_cls = jnp.transpose(cls_p, (0, 3, 1, 2))
    return x, x_cls


# ----------------------------------------------------------------------------
# Deterministic synthetic parameter construction (BatchNorm folded for eval).
# ----------------------------------------------------------------------------
def make_params(key, in_ch_low, in_ch_high, out_ch, num_classes):
    ks = jax.random.split(key, 11)
    eps = 1e-5

    def bn_fold(kg, kb, km, kv, c):
        gamma = 1.0 + 0.1 * jax.random.normal(kg, (c,), jnp.float32)
        beta = 0.1 * jax.random.normal(kb, (c,), jnp.float32)
        mean = 0.1 * jax.random.normal(km, (c,), jnp.float32)
        var = jnp.abs(jax.random.normal(kv, (c,), jnp.float32)) + 0.5
        scale = gamma / jnp.sqrt(var + eps)
        bias = beta - mean * scale
        return scale.reshape(1, c), bias.reshape(1, c)

    w_low = 0.1 * jax.random.normal(ks[0], (3, 3, in_ch_low, out_ch), jnp.float32)
    scale_low, bias_low = bn_fold(ks[1], ks[2], ks[3], ks[4], out_ch)
    w_high = 0.1 * jax.random.normal(ks[5], (in_ch_high, out_ch), jnp.float32)
    scale_high, bias_high = bn_fold(ks[6], ks[7], ks[8], ks[9], out_ch)
    w_cls = 0.1 * jax.random.normal(ks[10], (out_ch, num_classes), jnp.float32)

    return dict(w_low=w_low, scale_low=scale_low, bias_low=bias_low,
                w_high=w_high, scale_high=scale_high, bias_high=bias_high,
                w_cls=w_cls)


# ----------------------------------------------------------------------------
# Pure-JAX f32 reference (same math via lax.conv_general_dilated).
# ----------------------------------------------------------------------------
def ref_forward(xl_nchw, xh_nchw, p):
    dn = ("NHWC", "HWIO", "NHWC")
    xl = jnp.transpose(xl_nchw, (0, 2, 3, 1)).astype(jnp.float32)
    xh = jnp.transpose(xh_nchw, (0, 2, 3, 1)).astype(jnp.float32)
    xl_up = _upsample2x_bilinear_ac(xl)
    xl_feat = lax.conv_general_dilated(
        xl_up, p["w_low"], (1, 1), ((2, 2), (2, 2)),
        rhs_dilation=(2, 2), dimension_numbers=dn)
    xl_feat = xl_feat * p["scale_low"] + p["bias_low"]
    xh_feat = lax.conv_general_dilated(
        xh, p["w_high"][None, None], (1, 1), "VALID", dimension_numbers=dn)
    xh_feat = xh_feat * p["scale_high"] + p["bias_high"]
    x = jnp.maximum(xl_feat + xh_feat, 0.0)
    x_cls = lax.conv_general_dilated(
        xl_feat, p["w_cls"][None, None], (1, 1), "VALID", dimension_numbers=dn)
    return (jnp.transpose(x, (0, 3, 1, 2)),
            jnp.transpose(x_cls, (0, 3, 1, 2)))


if __name__ == "__main__":
    # Small shapes: xl (low-res) is half the spatial size of xh (high-res).
    N = 2
    in_ch_low, in_ch_high = 4, 8
    out_ch, num_classes = 16, 8
    Hl = Wl = 8           # low-branch spatial (upsampled to 16x16)
    Hh = Wh = 16          # high-branch spatial

    key = jax.random.PRNGKey(0)
    k_xl, k_xh, k_p = jax.random.split(key, 3)
    xl = jax.random.normal(k_xl, (N, in_ch_low, Hl, Wl), jnp.float32)
    xh = jax.random.normal(k_xh, (N, in_ch_high, Hh, Wh), jnp.float32)
    params = make_params(k_p, in_ch_low, in_ch_high, out_ch, num_classes)

    x_out, x_cls = cff_block_forward(xl, xh, params)
    jax.block_until_ready((x_out, x_cls))

    # Validate against the pure-JAX f32 reference.  Kernel matmuls and
    # outputs are bf16, hence the relaxed tolerance.
    x_ref, cls_ref = ref_forward(xl, xh, params)
    assert x_out.shape == (N, out_ch, Hh, Wh)
    assert x_cls.shape == (N, num_classes, Hh, Wh)
    assert jnp.allclose(x_out.astype(jnp.float32), x_ref, atol=3e-2, rtol=3e-2)
    assert jnp.allclose(x_cls.astype(jnp.float32), cls_ref, atol=3e-2, rtol=3e-2)

    print("KERNEL_OK")
</pallas_src>

<mosaic_0001>
module attributes {stable_mosaic.version = 11 : i64} {
  func.func @_cff_kernel(%arg0: i32, %arg1: i32, %arg2: memref<1x8x20x4xbf16, #tpu.memory_space<vmem>>, %arg3: memref<1x16x16x8xbf16, #tpu.memory_space<vmem>>, %arg4: memref<3x3x4x128xbf16, #tpu.memory_space<vmem>>, %arg5: memref<1x128xf32, #tpu.memory_space<vmem>>, %arg6: memref<8x128xbf16, #tpu.memory_space<vmem>>, %arg7: memref<1x128xf32, #tpu.memory_space<vmem>>, %arg8: memref<128x8xbf16, #tpu.memory_space<vmem>>, %arg9: memref<1x8xf32, #tpu.memory_space<vmem>>, %arg10: memref<1x16x16x128xbf16, #tpu.memory_space<vmem>>, %arg11: memref<1x16x16x8xbf16, #tpu.memory_space<vmem>>, %arg12: memref<20x20x4xbf16, #tpu.memory_space<vmem>>) attributes {dimension_semantics = [#tpu.dimension_semantics<parallel>, #tpu.dimension_semantics<parallel>], iteration_bounds = array<i64: 2, 1>, scalar_prefetch = 0 : i64, scratch_operands = 1 : i64, tpu.core_type = #tpu.core_type<tc>, window_params = [{transform_indices = @transform_0, window_bounds = array<i64: 1, 8, 20, 4>}, {transform_indices = @transform_1, window_bounds = array<i64: 1, 16, 16, 8>}, {pipeline_mode = #tpu.pipeline_mode<synchronous>, transform_indices = @transform_2, window_bounds = array<i64: 3, 3, 4, 128>}, {pipeline_mode = #tpu.pipeline_mode<synchronous>, transform_indices = @transform_3, window_bounds = array<i64: 1, 128>}, {pipeline_mode = #tpu.pipeline_mode<synchronous>, transform_indices = @transform_4, window_bounds = array<i64: 8, 128>}, {pipeline_mode = #tpu.pipeline_mode<synchronous>, transform_indices = @transform_5, window_bounds = array<i64: 1, 128>}, {pipeline_mode = #tpu.pipeline_mode<synchronous>, transform_indices = @transform_6, window_bounds = array<i64: 128, 8>}, {pipeline_mode = #tpu.pipeline_mode<synchronous>, transform_indices = @transform_7, window_bounds = array<i64: 1, 8>}, {transform_indices = @transform_8, window_bounds = array<i64: 1, 16, 16, 128>}, {transform_indices = @transform_9, window_bounds = array<i64: 1, 16, 16, 8>}]} {
    %c16_i32 = arith.constant 16 : i32
    %0 = arith.muli %arg1, %c16_i32 : i32
    %c0_i32 = arith.constant 0 : i32
    %1 = arith.addi %0, %c0_i32 : i32
    %c2_i32 = arith.constant 2 : i32
    %2 = arith.cmpi sge, %1, %c2_i32 : i32
    %c18_i32 = arith.constant 18 : i32
    %3 = arith.cmpi slt, %1, %c18_i32 : i32
    %4 = arith.andi %2, %3 : i1
    %cst = arith.constant 1.000000e+00 : f32
    %cst_0 = arith.constant 0.000000e+00 : f32
    %5 = arith.select %4, %cst, %cst_0 : f32
    %c2_i32_1 = arith.constant 2 : i32
    %6 = arith.subi %1, %c2_i32_1 : i32
    %c0_i32_2 = arith.constant 0 : i32
    %c15_i32 = arith.constant 15 : i32
    %7 = arith.maxsi %c0_i32_2, %6 : i32
    %8 = arith.minsi %c15_i32, %7 : i32
    %9 = arith.sitofp %8 : i32 to f32
    %cst_3 = arith.constant 0.466666669 : f32
    %10 = arith.mulf %9, %cst_3 : f32
    %11 = math.floor %10 : f32
    %12 = arith.fptosi %11 : f32 to i32
    %c1_i32 = arith.constant 1 : i32
    %13 = arith.addi %12, %c1_i32 : i32
    %c7_i32 = arith.constant 7 : i32
    %14 = arith.minsi %13, %c7_i32 : i32
    %15 = arith.subf %10, %11 : f32
    %16 = arith.mulf %15, %5 : f32
    %17 = arith.subf %5, %16 : f32
    %c0 = arith.constant 0 : index
    %18 = arith.index_cast %12 : i32 to index
    %c0_4 = arith.constant 0 : index
    %c0_5 = arith.constant 0 : index
    %19 = vector.load %arg2[%c0, %18, %c0_4, %c0_5] : memref<1x8x20x4xbf16, #tpu.memory_space<vmem>>, vector<1x1x20x4xbf16>
    %20 = vector.shape_cast %19 : vector<1x1x20x4xbf16> to vector<20x4xbf16>
    %21 = arith.extf %20 : vector<20x4xbf16> to vector<20x4xf32>
    %22 = vector.broadcast %17 : f32 to vector<20x4xf32>
    %23 = arith.mulf %21, %22 : vector<20x4xf32>
    %c0_6 = arith.constant 0 : index
    %24 = arith.index_cast %14 : i32 to index
    %c0_7 = arith.constant 0 : index
    %c0_8 = arith.constant 0 : index
    %25 = vector.load %arg2[%c0_6, %24, %c0_7, %c0_8] : memref<1x8x20x4xbf16, #tpu.memory_space<vmem>>, vector<1x1x20x4xbf16>
    %26 = vector.shape_cast %25 : vector<1x1x20x4xbf16> to vector<20x4xbf16>
    %27 = arith.extf %26 : vector<20x4xbf16> to vector<20x4xf32>
    %28 = vector.broadcast %16 : f32 to vector<20x4xf32>
    %29 = arith.mulf %27, %28 : vector<20x4xf32>
    %30 = arith.addf %23, %29 : vector<20x4xf32>
    %31 = arith.truncf %30 : vector<20x4xf32> to vector<20x4xbf16>
    %c0_9 = arith.constant 0 : index
    %c0_10 = arith.constant 0 : index
    %c0_11 = arith.constant 0 : index
    %32 = vector.load %arg12[%c0_9, %c0_10, %c0_11] : memref<20x20x4xbf16, #tpu.memory_space<vmem>>, vector<1x20x4xbf16>
    %33 = vector.shape_cast %32 : vector<1x20x4xbf16> to vector<20x4xbf16>
    %34 = vector.shape_cast %31 : vector<20x4xbf16> to vector<1x20x4xbf16>
    tpu.vector_store %arg12[%c0_9, %c0_10, %c0_11], %34 {strides = array<i32>} : memref<20x20x4xbf16, #tpu.memory_space<vmem>>, vector<1x20x4xbf16>,
    %c16_i32_12 = arith.constant 16 : i32
    %35 = arith.muli %arg1, %c16_i32_12 : i32
    %c1_i32_13 = arith.constant 1 : i32
    %36 = arith.addi %35, %c1_i32_13 : i32
    %c2_i32_14 = arith.constant 2 : i32
    %37 = arith.cmpi sge, %36, %c2_i32_14 : i32
    %c18_i32_15 = arith.constant 18 : i32
    %38 = arith.cmpi slt, %36, %c18_i32_15 : i32
    %39 = arith.andi %37, %38 : i1
    %cst_16 = arith.constant 1.000000e+00 : f32
    %cst_17 = arith.constant 0.000000e+00 : f32
    %40 = arith.select %39, %cst_16, %cst_17 : f32
    %c2_i32_18 = arith.constant 2 : i32
    %41 = arith.subi %36, %c2_i32_18 : i32
    %c0_i32_19 = arith.constant 0 : i32
    %c15_i32_20 = arith.constant 15 : i32
    %42 = arith.maxsi %c0_i32_19, %41 : i32
    %43 = arith.minsi %c15_i32_20, %42 : i32
    %44 = arith.sitofp %43 : i32 to f32
    %cst_21 = arith.constant 0.466666669 : f32
    %45 = arith.mulf %44, %cst_21 : f32
    %46 = math.floor %45 : f32
    %47 = arith.fptosi %46 : f32 to i32
    %c1_i32_22 = arith.constant 1 : i32
    %48 = arith.addi %47, %c1_i32_22 : i32
    %c7_i32_23 = arith.constant 7 : i32
    %49 = arith.minsi %48, %c7_i32_23 : i32
    %50 = arith.subf %45, %46 : f32
    %51 = arith.mulf %50, %40 : f32
    %52 = arith.subf %40, %51 : f32
    %c0_24 = arith.constant 0 : index
    %53 = arith.index_cast %47 : i32 to index
    %c0_25 = arith.constant 0 : index
    %c0_26 = arith.constant 0 : index
    %54 = vector.load %arg2[%c0_24, %53, %c0_25, %c0_26] : memref<1x8x20x4xbf16, #tpu.memory_space<vmem>>, vector<1x1x20x4xbf16>
    %55 = vector.shape_cast %54 : vector<1x1x20x4xbf16> to vector<20x4xbf16>
    %56 = arith.extf %55 : vector<20x4xbf16> to vector<20x4xf32>
    %57 = vector.broadcast %52 : f32 to vector<20x4xf32>
    %58 = arith.mulf %56, %57 : vector<20x4xf32>
    %c0_27 = arith.constant 0 : index
    %59 = arith.index_cast %49 : i32 to index
    %c0_28 = arith.constant 0 : index
    %c0_29 = arith.constant 0 : index
    %60 = vector.load %arg2[%c0_27, %59, %c0_28, %c0_29] : memref<1x8x20x4xbf16, #tpu.memory_space<vmem>>, vector<1x1x20x4xbf16>
    %61 = vector.shape_cast %60 : vector<1x1x20x4xbf16> to vector<20x4xbf16>
    %62 = arith.extf %61 : vector<20x4xbf16> to vector<20x4xf32>
    %63 = vector.broadcast %51 : f32 to vector<20x4xf32>
    %64 = arith.mulf %62, %63 : vector<20x4xf32>
    %65 = arith.addf %58, %64 : vector<20x4xf32>
    %66 = arith.truncf %65 : vector<20x4xf32> to vector<20x4xbf16>
    %c1 = arith.constant 1 : index
    %c0_30 = arith.constant 0 : index
    %c0_31 = arith.constant 0 : index
    %67 = vector.load %arg12[%c1, %c0_30, %c0_31] : memref<20x20x4xbf16, #tpu.memory_space<vmem>>, vector<1x20x4xbf16>
    %68 = vector.shape_cast %67 : vector<1x20x4xbf16> to vector<20x4xbf16>
    %69 = vector.shape_cast %66 : vector<20x4xbf16> to vector<1x20x4xbf16>
    tpu.vector_store %arg12[%c1, %c0_30, %c0_31], %69 {strides = array<i32>} : memref<20x20x4xbf16, #tpu.memory_space<vmem>>, vector<1x20x4xbf16>,
    %c16_i32_32 = arith.constant 16 : i32
    %70 = arith.muli %arg1, %c16_i32_32 : i32
    %c2_i32_33 = arith.constant 2 : i32
    %71 = arith.addi %70, %c2_i32_33 : i32
    %c2_i32_34 = arith.constant 2 : i32
    %72 = arith.cmpi sge, %71, %c2_i32_34 : i32
    %c18_i32_35 = arith.constant 18 : i32
    %73 = arith.cmpi slt, %71, %c18_i32_35 : i32
    %74 = arith.andi %72, %73 : i1
    %cst_36 = arith.constant 1.000000e+00 : f32
    %cst_37 = arith.constant 0.000000e+00 : f32
    %75 = arith.select %74, %cst_36, %cst_37 : f32
    %c2_i32_38 = arith.constant 2 : i32
    %76 = arith.subi %71, %c2_i32_38 : i32
    %c0_i32_39 = arith.constant 0 : i32
    %c15_i32_40 = arith.constant 15 : i32
    %77 = arith.maxsi %c0_i32_39, %76 : i32
    %78 = arith.minsi %c15_i32_40, %77 : i32
    %79 = arith.sitofp %78 : i32 to f32
    %cst_41 = arith.constant 0.466666669 : f32
    %80 = arith.mulf %79, %cst_41 : f32
    %81 = math.floor %80 : f32
    %82 = arith.fptosi %81 : f32 to i32
    %c1_i32_42 = arith.constant 1 : i32
    %83 = arith.addi %82, %c1_i32_42 : i32
    %c7_i32_43 = arith.constant 7 : i32
    %84 = arith.minsi %83, %c7_i32_43 : i32
    %85 = arith.subf %80, %81 : f32
    %86 = arith.mulf %85, %75 : f32
    %87 = arith.subf %75, %86 : f32
    %c0_44 = arith.constant 0 : index
    %88 = arith.index_cast %82 : i32 to index
    %c0_45 = arith.constant 0 : index
    %c0_46 = arith.constant 0 : index
    %89 = vector.load %arg2[%c0_44, %88, %c0_45, %c0_46] : memref<1x8x20x4xbf16, #tpu.memory_space<vmem>>, vector<1x1x20x4xbf16>
    %90 = vector.shape_cast %89 : vector<1x1x20x4xbf16> to vector<20x4xbf16>
    %91 = arith.extf %90 : vector<20x4xbf16> to vector<20x4xf32>
    %92 = vector.broadcast %87 : f32 to vector<20x4xf32>
    %93 = arith.mulf %91, %92 : vector<20x4xf32>
    %c0_47 = arith.constant 0 : index
    %94 = arith.index_cast %84 : i32 to index
    %c0_48 = arith.constant 0 : index
    %c0_49 = arith.constant 0 : index
    %95 = vector.load %arg2[%c0_47, %94, %c0_48, %c0_49] : memref<1x8x20x4xbf16, #tpu.memory_space<vmem>>, vector<1x1x20x4xbf16>
    %96 = vector.shape_cast %95 : vector<1x1x20x4xbf16> to vector<20x4xbf16>
    %97 = arith.extf %96 : vector<20x4xbf16> to vector<20x4xf32>
    %98 = vector.broadcast %86 : f32 to vector<20x4xf32>
    %99 = arith.mulf %97, %98 : vector<20x4xf32>
    %100 = arith.addf %93, %99 : vector<20x4xf32>
    %101 = arith.truncf %100 : vector<20x4xf32> to vector<20x4xbf16>
    %c2 = arith.constant 2 : index
    %c0_50 = arith.constant 0 : index
    %c0_51 = arith.constant 0 : index
    %102 = vector.load %arg12[%c2, %c0_50, %c0_51] : memref<20x20x4xbf16, #tpu.memory_space<vmem>>, vector<1x20x4xbf16>
    %103 = vector.shape_cast %102 : vector<1x20x4xbf16> to vector<20x4xbf16>
    %104 = vector.shape_cast %101 : vector<20x4xbf16> to vector<1x20x4xbf16>
    tpu.vector_store %arg12[%c2, %c0_50, %c0_51], %104 {strides = array<i32>} : memref<20x20x4xbf16, #tpu.memory_space<vmem>>, vector<1x20x4xbf16>,
    %c16_i32_52 = arith.constant 16 : i32
    %105 = arith.muli %arg1, %c16_i32_52 : i32
    %c3_i32 = arith.constant 3 : i32
    %106 = arith.addi %105, %c3_i32 : i32
    %c2_i32_53 = arith.constant 2 : i32
    %107 = arith.cmpi sge, %106, %c2_i32_53 : i32
    %c18_i32_54 = arith.constant 18 : i32
    %108 = arith.cmpi slt, %106, %c18_i32_54 : i32
    %109 = arith.andi %107, %108 : i1
    %cst_55 = arith.constant 1.000000e+00 : f32
    %cst_56 = arith.constant 0.000000e+00 : f32
    %110 = arith.select %109, %cst_55, %cst_56 : f32
    %c2_i32_57 = arith.constant 2 : i32
    %111 = arith.subi %106, %c2_i32_57 : i32
    %c0_i32_58 = arith.constant 0 : i32
    %c15_i32_59 = arith.constant 15 : i32
    %112 = arith.maxsi %c0_i32_58, %111 : i32
    %113 = arith.minsi %c15_i32_59, %112 : i32
    %114 = arith.sitofp %113 : i32 to f32
    %cst_60 = arith.constant 0.466666669 : f32
    %115 = arith.mulf %114, %cst_60 : f32
    %116 = math.floor %115 : f32
    %117 = arith.fptosi %116 : f32 to i32
    %c1_i32_61 = arith.constant 1 : i32
    %118 = arith.addi %117, %c1_i32_61 : i32
    %c7_i32_62 = arith.constant 7 : i32
    %119 = arith.minsi %118, %c7_i32_62 : i32
    %120 = arith.subf %115, %116 : f32
    %121 = arith.mulf %120, %110 : f32
    %122 = arith.subf %110, %121 : f32
    %c0_63 = arith.constant 0 : index
    %123 = arith.index_cast %117 : i32 to index
    %c0_64 = arith.constant 0 : index
    %c0_65 = arith.constant 0 : index
    %124 = vector.load %arg2[%c0_63, %123, %c0_64, %c0_65] : memref<1x8x20x4xbf16, #tpu.memory_space<vmem>>, vector<1x1x20x4xbf16>
    %125 = vector.shape_cast %124 : vector<1x1x20x4xbf16> to vector<20x4xbf16>
    %126 = arith.extf %125 : vector<20x4xbf16> to vector<20x4xf32>
    %127 = vector.broadcast %122 : f32 to vector<20x4xf32>
    %128 = arith.mulf %126, %127 : vector<20x4xf32>
    %c0_66 = arith.constant 0 : index
    %129 = arith.index_cast %119 : i32 to index
    %c0_67 = arith.constant 0 : index
    %c0_68 = arith.constant 0 : index
    %130 = vector.load %arg2[%c0_66, %129, %c0_67, %c0_68] : memref<1x8x20x4xbf16, #tpu.memory_space<vmem>>, vector<1x1x20x4xbf16>
    %131 = vector.shape_cast %130 : vector<1x1x20x4xbf16> to vector<20x4xbf16>
    %132 = arith.extf %131 : vector<20x4xbf16> to vector<20x4xf32>
    %133 = vector.broadcast %121 : f32 to vector<20x4xf32>
    %134 = arith.mulf %132, %133 : vector<20x4xf32>
    %135 = arith.addf %128, %134 : vector<20x4xf32>
    %136 = arith.truncf %135 : vector<20x4xf32> to vector<20x4xbf16>
    %c3 = arith.constant 3 : index
    %c0_69 = arith.constant 0 : index
    %c0_70 = arith.constant 0 : index
    %137 = vector.load %arg12[%c3, %c0_69, %c0_70] : memref<20x20x4xbf16, #tpu.memory_space<vmem>>, vector<1x20x4xbf16>
    %138 = vector.shape_cast %137 : vector<1x20x4xbf16> to vector<20x4xbf16>
    %139 = vector.shape_cast %136 : vector<20x4xbf16> to vector<1x20x4xbf16>
    tpu.vector_store %arg12[%c3, %c0_69, %c0_70], %139 {strides = array<i32>} : memref<20x20x4xbf16, #tpu.memory_space<vmem>>, vector<1x20x4xbf16>,
    %c16_i32_71 = arith.constant 16 : i32
    %140 = arith.muli %arg1, %c16_i32_71 : i32
    %c4_i32 = arith.constant 4 : i32
    %141 = arith.addi %140, %c4_i32 : i32
    %c2_i32_72 = arith.constant 2 : i32
    %142 = arith.cmpi sge, %141, %c2_i32_72 : i32
    %c18_i32_73 = arith.constant 18 : i32
    %143 = arith.cmpi slt, %141, %c18_i32_73 : i32
    %144 = arith.andi %142, %143 : i1
    %cst_74 = arith.constant 1.000000e+00 : f32
    %cst_75 = arith.constant 0.000000e+00 : f32
    %145 = arith.select %144, %cst_74, %cst_75 : f32
    %c2_i32_76 = arith.constant 2 : i32
    %146 = arith.subi %141, %c2_i32_76 : i32
    %c0_i32_77 = arith.constant 0 : i32
    %c15_i32_78 = arith.constant 15 : i32
    %147 = arith.maxsi %c0_i32_77, %146 : i32
    %148 = arith.minsi %c15_i32_78, %147 : i32
    %149 = arith.sitofp %148 : i32 to f32
    %cst_79 = arith.constant 0.466666669 : f32
    %150 = arith.mulf %149, %cst_79 : f32
    %151 = math.floor %150 : f32
    %152 = arith.fptosi %151 : f32 to i32
    %c1_i32_80 = arith.constant 1 : i32
    %153 = arith.addi %152, %c1_i32_80 : i32
    %c7_i32_81 = arith.constant 7 : i32
    %154 = arith.minsi %153, %c7_i32_81 : i32
    %155 = arith.subf %150, %151 : f32
    %156 = arith.mulf %155, %145 : f32
    %157 = arith.subf %145, %156 : f32
    %c0_82 = arith.constant 0 : index
    %158 = arith.index_cast %152 : i32 to index
    %c0_83 = arith.constant 0 : index
    %c0_84 = arith.constant 0 : index
    %159 = vector.load %arg2[%c0_82, %158, %c0_83, %c0_84] : memref<1x8x20x4xbf16, #tpu.memory_space<vmem>>, vector<1x1x20x4xbf16>
    %160 = vector.shape_cast %159 : vector<1x1x20x4xbf16> to vector<20x4xbf16>
    %161 = arith.extf %160 : vector<20x4xbf16> to vector<20x4xf32>
    %162 = vector.broadcast %157 : f32 to vector<20x4xf32>
    %163 = arith.mulf %161, %162 : vector<20x4xf32>
    %c0_85 = arith.constant 0 : index
    %164 = arith.index_cast %154 : i32 to index
    %c0_86 = arith.constant 0 : index
    %c0_87 = arith.constant 0 : index
    %165 = vector.load %arg2[%c0_85, %164, %c0_86, %c0_87] : memref<1x8x20x4xbf16, #tpu.memory_space<vmem>>, vector<1x1x20x4xbf16>
    %166 = vector.shape_cast %165 : vector<1x1x20x4xbf16> to vector<20x4xbf16>
    %167 = arith.extf %166 : vector<20x4xbf16> to vector<20x4xf32>
    %168 = vector.broadcast %156 : f32 to vector<20x4xf32>
    %169 = arith.mulf %167, %168 : vector<20x4xf32>
    %170 = arith.addf %163, %169 : vector<20x4xf32>
    %171 = arith.truncf %170 : vector<20x4xf32> to vector<20x4xbf16>
    %c4 = arith.constant 4 : index
    %c0_88 = arith.constant 0 : index
    %c0_89 = arith.constant 0 : index
    %172 = vector.load %arg12[%c4, %c0_88, %c0_89] : memref<20x20x4xbf16, #tpu.memory_space<vmem>>, vector<1x20x4xbf16>
    %173 = vector.shape_cast %172 : vector<1x20x4xbf16> to vector<20x4xbf16>
    %174 = vector.shape_cast %171 : vector<20x4xbf16> to vector<1x20x4xbf16>
    tpu.vector_store %arg12[%c4, %c0_88, %c0_89], %174 {strides = array<i32>} : memref<20x20x4xbf16, #tpu.memory_space<vmem>>, vector<1x20x4xbf16>,
    %c16_i32_90 = arith.constant 16 : i32
    %175 = arith.muli %arg1, %c16_i32_90 : i32
    %c5_i32 = arith.constant 5 : i32
    %176 = arith.addi %175, %c5_i32 : i32
    %c2_i32_91 = arith.constant 2 : i32
    %177 = arith.cmpi sge, %176, %c2_i32_91 : i32
    %c18_i32_92 = arith.constant 18 : i32
    %178 = arith.cmpi slt, %176, %c18_i32_92 : i32
    %179 = arith.andi %177, %178 : i1
    %cst_93 = arith.constant 1.000000e+00 : f32
    %cst_94 = arith.constant 0.000000e+00 : f32
    %180 = arith.select %179, %cst_93, %cst_94 : f32
    %c2_i32_95 = arith.constant 2 : i32
    %181 = arith.subi %176, %c2_i32_95 : i32
    %c0_i32_96 = arith.constant 0 : i32
    %c15_i32_97 = arith.constant 15 : i32
    %182 = arith.maxsi %c0_i32_96, %181 : i32
    %183 = arith.minsi %c15_i32_97, %182 : i32
    %184 = arith.sitofp %183 : i32 to f32
    %cst_98 = arith.constant 0.466666669 : f32
    %185 = arith.mulf %184, %cst_98 : f32
    %186 = math.floor %185 : f32
    %187 = arith.fptosi %186 : f32 to i32
    %c1_i32_99 = arith.constant 1 : i32
    %188 = arith.addi %187, %c1_i32_99 : i32
    %c7_i32_100 = arith.constant 7 : i32
    %189 = arith.minsi %188, %c7_i32_100 : i32
    %190 = arith.subf %185, %186 : f32
    %191 = arith.mulf %190, %180 : f32
    %192 = arith.subf %180, %191 : f32
    %c0_101 = arith.constant 0 : index
    %193 = arith.index_cast %187 : i32 to index
    %c0_102 = arith.constant 0 : index
    %c0_103 = arith.constant 0 : index
    %194 = vector.load %arg2[%c0_101, %193, %c0_102, %c0_103] : memref<1x8x20x4xbf16, #tpu.memory_space<vmem>>, vector<1x1x20x4xbf16>
    %195 = vector.shape_cast %194 : vector<1x1x20x4xbf16> to vector<20x4xbf16>
    %196 = arith.extf %195 : vector<20x4xbf16> to vector<20x4xf32>
    %197 = vector.broadcast %192 : f32 to vector<20x4xf32>
    %198 = arith.mulf %196, %197 : vector<20x4xf32>
    %c0_104 = arith.constant 0 : index
    %199 = arith.index_cast %189 : i32 to index
    %c0_105 = arith.constant 0 : index
    %c0_106 = arith.constant 0 : index
    %200 = vector.load %arg2[%c0_104, %199, %c0_105, %c0_106] : memref<1x8x20x4xbf16, #tpu.memory_space<vmem>>, vector<1x1x20x4xbf16>
    %201 = vector.shape_cast %200 : vector<1x1x20x4xbf16> to vector<20x4xbf16>
    %202 = arith.extf %201 : vector<20x4xbf16> to vector<20x4xf32>
    %203 = vector.broadcast %191 : f32 to vector<20x4xf32>
    %204 = arith.mulf %202, %203 : vector<20x4xf32>
    %205 = arith.addf %198, %204 : vector<20x4xf32>
    %206 = arith.truncf %205 : vector<20x4xf32> to vector<20x4xbf16>
    %c5 = arith.constant 5 : index
    %c0_107 = arith.constant 0 : index
    %c0_108 = arith.constant 0 : index
    %207 = vector.load %arg12[%c5, %c0_107, %c0_108] : memref<20x20x4xbf16, #tpu.memory_space<vmem>>, vector<1x20x4xbf16>
    %208 = vector.shape_cast %207 : vector<1x20x4xbf16> to vector<20x4xbf16>
    %209 = vector.shape_cast %206 : vector<20x4xbf16> to vector<1x20x4xbf16>
    tpu.vector_store %arg12[%c5, %c0_107, %c0_108], %209 {strides = array<i32>} : memref<20x20x4xbf16, #tpu.memory_space<vmem>>, vector<1x20x4xbf16>,
    %c16_i32_109 = arith.constant 16 : i32
    %210 = arith.muli %arg1, %c16_i32_109 : i32
    %c6_i32 = arith.constant 6 : i32
    %211 = arith.addi %210, %c6_i32 : i32
    %c2_i32_110 = arith.constant 2 : i32
    %212 = arith.cmpi sge, %211, %c2_i32_110 : i32
    %c18_i32_111 = arith.constant 18 : i32
    %213 = arith.cmpi slt, %211, %c18_i32_111 : i32
    %214 = arith.andi %212, %213 : i1
    %cst_112 = arith.constant 1.000000e+00 : f32
    %cst_113 = arith.constant 0.000000e+00 : f32
    %215 = arith.select %214, %cst_112, %cst_113 : f32
    %c2_i32_114 = arith.constant 2 : i32
    %216 = arith.subi %211, %c2_i32_114 : i32
    %c0_i32_115 = arith.constant 0 : i32
    %c15_i32_116 = arith.constant 15 : i32
    %217 = arith.maxsi %c0_i32_115, %216 : i32
    %218 = arith.minsi %c15_i32_116, %217 : i32
    %219 = arith.sitofp %218 : i32 to f32
    %cst_117 = arith.constant 0.466666669 : f32
    %220 = arith.mulf %219, %cst_117 : f32
    %221 = math.floor %220 : f32
    %222 = arith.fptosi %221 : f32 to i32
    %c1_i32_118 = arith.constant 1 : i32
    %223 = arith.addi %222, %c1_i32_118 : i32
    %c7_i32_119 = arith.constant 7 : i32
    %224 = arith.minsi %223, %c7_i32_119 : i32
    %225 = arith.subf %220, %221 : f32
    %226 = arith.mulf %225, %215 : f32
    %227 = arith.subf %215, %226 : f32
    %c0_120 = arith.constant 0 : index
    %228 = arith.index_cast %222 : i32 to index
    %c0_121 = arith.constant 0 : index
    %c0_122 = arith.constant 0 : index
    %229 = vector.load %arg2[%c0_120, %228, %c0_121, %c0_122] : memref<1x8x20x4xbf16, #tpu.memory_space<vmem>>, vector<1x1x20x4xbf16>
    %230 = vector.shape_cast %229 : vector<1x1x20x4xbf16> to vector<20x4xbf16>
    %231 = arith.extf %230 : vector<20x4xbf16> to vector<20x4xf32>
    %232 = vector.broadcast %227 : f32 to vector<20x4xf32>
    %233 = arith.mulf %231, %232 : vector<20x4xf32>
    %c0_123 = arith.constant 0 : index
    %234 = arith.index_cast %224 : i32 to index
    %c0_124 = arith.constant 0 : index
    %c0_125 = arith.constant 0 : index
    %235 = vector.load %arg2[%c0_123, %234, %c0_124, %c0_125] : memref<1x8x20x4xbf16, #tpu.memory_space<vmem>>, vector<1x1x20x4xbf16>
    %236 = vector.shape_cast %235 : vector<1x1x20x4xbf16> to vector<20x4xbf16>
    %237 = arith.extf %236 : vector<20x4xbf16> to vector<20x4xf32>
    %238 = vector.broadcast %226 : f32 to vector<20x4xf32>
    %239 = arith.mulf %237, %238 : vector<20x4xf32>
    %240 = arith.addf %233, %239 : vector<20x4xf32>
    %241 = arith.truncf %240 : vector<20x4xf32> to vector<20x4xbf16>
    %c6 = arith.constant 6 : index
    %c0_126 = arith.constant 0 : index
    %c0_127 = arith.constant 0 : index
    %242 = vector.load %arg12[%c6, %c0_126, %c0_127] : memref<20x20x4xbf16, #tpu.memory_space<vmem>>, vector<1x20x4xbf16>
    %243 = vector.shape_cast %242 : vector<1x20x4xbf16> to vector<20x4xbf16>
    %244 = vector.shape_cast %241 : vector<20x4xbf16> to vector<1x20x4xbf16>
    tpu.vector_store %arg12[%c6, %c0_126, %c0_127], %244 {strides = array<i32>} : memref<20x20x4xbf16, #tpu.memory_space<vmem>>, vector<1x20x4xbf16>,
    %c16_i32_128 = arith.constant 16 : i32
    %245 = arith.muli %arg1, %c16_i32_128 : i32
    %c7_i32_129 = arith.constant 7 : i32
    %246 = arith.addi %245, %c7_i32_129 : i32
    %c2_i32_130 = arith.constant 2 : i32
    %247 = arith.cmpi sge, %246, %c2_i32_130 : i32
    %c18_i32_131 = arith.constant 18 : i32
    %248 = arith.cmpi slt, %246, %c18_i32_131 : i32
    %249 = arith.andi %247, %248 : i1
    %cst_132 = arith.constant 1.000000e+00 : f32
    %cst_133 = arith.constant 0.000000e+00 : f32
    %250 = arith.select %249, %cst_132, %cst_133 : f32
    %c2_i32_134 = arith.constant 2 : i32
    %251 = arith.subi %246, %c2_i32_134 : i32
    %c0_i32_135 = arith.constant 0 : i32
    %c15_i32_136 = arith.constant 15 : i32
    %252 = arith.maxsi %c0_i32_135, %251 : i32
    %253 = arith.minsi %c15_i32_136, %252 : i32
    %254 = arith.sitofp %253 : i32 to f32
    %cst_137 = arith.constant 0.466666669 : f32
    %255 = arith.mulf %254, %cst_137 : f32
    %256 = math.floor %255 : f32
    %257 = arith.fptosi %256 : f32 to i32
    %c1_i32_138 = arith.constant 1 : i32
    %258 = arith.addi %257, %c1_i32_138 : i32
    %c7_i32_139 = arith.constant 7 : i32
    %259 = arith.minsi %258, %c7_i32_139 : i32
    %260 = arith.subf %255, %256 : f32
    %261 = arith.mulf %260, %250 : f32
    %262 = arith.subf %250, %261 : f32
    %c0_140 = arith.constant 0 : index
    %263 = arith.index_cast %257 : i32 to index
    %c0_141 = arith.constant 0 : index
    %c0_142 = arith.constant 0 : index
    %264 = vector.load %arg2[%c0_140, %263, %c0_141, %c0_142] : memref<1x8x20x4xbf16, #tpu.memory_space<vmem>>, vector<1x1x20x4xbf16>
    %265 = vector.shape_cast %264 : vector<1x1x20x4xbf16> to vector<20x4xbf16>
    %266 = arith.extf %265 : vector<20x4xbf16> to vector<20x4xf32>
    %267 = vector.broadcast %262 : f32 to vector<20x4xf32>
    %268 = arith.mulf %266, %267 : vector<20x4xf32>
    %c0_143 = arith.constant 0 : index
    %269 = arith.index_cast %259 : i32 to index
    %c0_144 = arith.constant 0 : index
    %c0_145 = arith.constant 0 : index
    %270 = vector.load %arg2[%c0_143, %269, %c0_144, %c0_145] : memref<1x8x20x4xbf16, #tpu.memory_space<vmem>>, vector<1x1x20x4xbf16>
    %271 = vector.shape_cast %270 : vector<1x1x20x4xbf16> to vector<20x4xbf16>
    %272 = arith.extf %271 : vector<20x4xbf16> to vector<20x4xf32>
    %273 = vector.broadcast %261 : f32 to vector<20x4xf32>
    %274 = arith.mulf %272, %273 : vector<20x4xf32>
    %275 = arith.addf %268, %274 : vector<20x4xf32>
    %276 = arith.truncf %275 : vector<20x4xf32> to vector<20x4xbf16>
    %c7 = arith.constant 7 : index
    %c0_146 = arith.constant 0 : index
    %c0_147 = arith.constant 0 : index
    %277 = vector.load %arg12[%c7, %c0_146, %c0_147] : memref<20x20x4xbf16, #tpu.memory_space<vmem>>, vector<1x20x4xbf16>
    %278 = vector.shape_cast %277 : vector<1x20x4xbf16> to vector<20x4xbf16>
    %279 = vector.shape_cast %276 : vector<20x4xbf16> to vector<1x20x4xbf16>
    tpu.vector_store %arg12[%c7, %c0_146, %c0_147], %279 {strides = array<i32>} : memref<20x20x4xbf16, #tpu.memory_space<vmem>>, vector<1x20x4xbf16>,
    %c16_i32_148 = arith.constant 16 : i32
    %280 = arith.muli %arg1, %c16_i32_148 : i32
    %c8_i32 = arith.constant 8 : i32
    %281 = arith.addi %280, %c8_i32 : i32
    %c2_i32_149 = arith.constant 2 : i32
    %282 = arith.cmpi sge, %281, %c2_i32_149 : i32
    %c18_i32_150 = arith.constant 18 : i32
    %283 = arith.cmpi slt, %281, %c18_i32_150 : i32
    %284 = arith.andi %282, %283 : i1
    %cst_151 = arith.constant 1.000000e+00 : f32
    %cst_152 = arith.constant 0.000000e+00 : f32
    %285 = arith.select %284, %cst_151, %cst_152 : f32
    %c2_i32_153 = arith.constant 2 : i32
    %286 = arith.subi %281, %c2_i32_153 : i32
    %c0_i32_154 = arith.constant 0 : i32
    %c15_i32_155 = arith.constant 15 : i32
    %287 = arith.maxsi %c0_i32_154, %286 : i32
    %288 = arith.minsi %c15_i32_155, %287 : i32
    %289 = arith.sitofp %288 : i32 to f32
    %cst_156 = arith.constant 0.466666669 : f32
    %290 = arith.mulf %289, %cst_156 : f32
    %291 = math.floor %290 : f32
    %292 = arith.fptosi %291 : f32 to i32
    %c1_i32_157 = arith.constant 1 : i32
    %293 = arith.addi %292, %c1_i32_157 : i32
    %c7_i32_158 = arith.constant 7 : i32
    %294 = arith.minsi %293, %c7_i32_158 : i32
    %295 = arith.subf %290, %291 : f32
    %296 = arith.mulf %295, %285 : f32
    %297 = arith.subf %285, %296 : f32
    %c0_159 = arith.constant 0 : index
    %298 = arith.index_cast %292 : i32 to index
    %c0_160 = arith.constant 0 : index
    %c0_161 = arith.constant 0 : index
    %299 = vector.load %arg2[%c0_159, %298, %c0_160, %c0_161] : memref<1x8x20x4xbf16, #tpu.memory_space<vmem>>, vector<1x1x20x4xbf16>
    %300 = vector.shape_cast %299 : vector<1x1x20x4xbf16> to vector<20x4xbf16>
    %301 = arith.extf %300 : vector<20x4xbf16> to vector<20x4xf32>
    %302 = vector.broadcast %297 : f32 to vector<20x4xf32>
    %303 = arith.mulf %301, %302 : vector<20x4xf32>
    %c0_162 = arith.constant 0 : index
    %304 = arith.index_cast %294 : i32 to index
    %c0_163 = arith.constant 0 : index
    %c0_164 = arith.constant 0 : index
    %305 = vector.load %arg2[%c0_162, %304, %c0_163, %c0_164] : memref<1x8x20x4xbf16, #tpu.memory_space<vmem>>, vector<1x1x20x4xbf16>
    %306 = vector.shape_cast %305 : vector<1x1x20x4xbf16> to vector<20x4xbf16>
    %307 = arith.extf %306 : vector<20x4xbf16> to vector<20x4xf32>
    %308 = vector.broadcast %296 : f32 to vector<20x4xf32>
    %309 = arith.mulf %307, %308 : vector<20x4xf32>
    %310 = arith.addf %303, %309 : vector<20x4xf32>
    %311 = arith.truncf %310 : vector<20x4xf32> to vector<20x4xbf16>
    %c8 = arith.constant 8 : index
    %c0_165 = arith.constant 0 : index
    %c0_166 = arith.constant 0 : index
    %312 = vector.load %arg12[%c8, %c0_165, %c0_166] : memref<20x20x4xbf16, #tpu.memory_space<vmem>>, vector<1x20x4xbf16>
    %313 = vector.shape_cast %312 : vector<1x20x4xbf16> to vector<20x4xbf16>
    %314 = vector.shape_cast %311 : vector<20x4xbf16> to vector<1x20x4xbf16>
    tpu.vector_store %arg12[%c8, %c0_165, %c0_166], %314 {strides = array<i32>} : memref<20x20x4xbf16, #tpu.memory_space<vmem>>, vector<1x20x4xbf16>,
    %c16_i32_167 = arith.constant 16 : i32
    %315 = arith.muli %arg1, %c16_i32_167 : i32
    %c9_i32 = arith.constant 9 : i32
    %316 = arith.addi %315, %c9_i32 : i32
    %c2_i32_168 = arith.constant 2 : i32
    %317 = arith.cmpi sge, %316, %c2_i32_168 : i32
    %c18_i32_169 = arith.constant 18 : i32
    %318 = arith.cmpi slt, %316, %c18_i32_169 : i32
    %319 = arith.andi %317, %318 : i1
    %cst_170 = arith.constant 1.000000e+00 : f32
    %cst_171 = arith.constant 0.000000e+00 : f32
    %320 = arith.select %319, %cst_170, %cst_171 : f32
    %c2_i32_172 = arith.constant 2 : i32
    %321 = arith.subi %316, %c2_i32_172 : i32
    %c0_i32_173 = arith.constant 0 : i32
    %c15_i32_174 = arith.constant 15 : i32
    %322 = arith.maxsi %c0_i32_173, %321 : i32
    %323 = arith.minsi %c15_i32_174, %322 : i32
    %324 = arith.sitofp %323 : i32 to f32
    %cst_175 = arith.constant 0.466666669 : f32
    %325 = arith.mulf %324, %cst_175 : f32
    %326 = math.floor %325 : f32
    %327 = arith.fptosi %326 : f32 to i32
    %c1_i32_176 = arith.constant 1 : i32
    %328 = arith.addi %327, %c1_i32_176 : i32
    %c7_i32_177 = arith.constant 7 : i32
    %329 = arith.minsi %328, %c7_i32_177 : i32
    %330 = arith.subf %325, %326 : f32
    %331 = arith.mulf %330, %320 : f32
    %332 = arith.subf %320, %331 : f32
    %c0_178 = arith.constant 0 : index
    %333 = arith.index_cast %327 : i32 to index
    %c0_179 = arith.constant 0 : index
    %c0_180 = arith.constant 0 : index
    %334 = vector.load %arg2[%c0_178, %333, %c0_179, %c0_180] : memref<1x8x20x4xbf16, #tpu.memory_space<vmem>>, vector<1x1x20x4xbf16>
    %335 = vector.shape_cast %334 : vector<1x1x20x4xbf16> to vector<20x4xbf16>
    %336 = arith.extf %335 : vector<20x4xbf16> to vector<20x4xf32>
    %337 = vector.broadcast %332 : f32 to vector<20x4xf32>
    %338 = arith.mulf %336, %337 : vector<20x4xf32>
    %c0_181 = arith.constant 0 : index
    %339 = arith.index_cast %329 : i32 to index
    %c0_182 = arith.constant 0 : index
    %c0_183 = arith.constant 0 : index
    %340 = vector.load %arg2[%c0_181, %339, %c0_182, %c0_183] : memref<1x8x20x4xbf16, #tpu.memory_space<vmem>>, vector<1x1x20x4xbf16>
    %341 = vector.shape_cast %340 : vector<1x1x20x4xbf16> to vector<20x4xbf16>
    %342 = arith.extf %341 : vector<20x4xbf16> to vector<20x4xf32>
    %343 = vector.broadcast %331 : f32 to vector<20x4xf32>
    %344 = arith.mulf %342, %343 : vector<20x4xf32>
    %345 = arith.addf %338, %344 : vector<20x4xf32>
    %346 = arith.truncf %345 : vector<20x4xf32> to vector<20x4xbf16>
    %c9 = arith.constant 9 : index
    %c0_184 = arith.constant 0 : index
    %c0_185 = arith.constant 0 : index
    %347 = vector.load %arg12[%c9, %c0_184, %c0_185] : memref<20x20x4xbf16, #tpu.memory_space<vmem>>, vector<1x20x4xbf16>
    %348 = vector.shape_cast %347 : vector<1x20x4xbf16> to vector<20x4xbf16>
    %349 = vector.shape_cast %346 : vector<20x4xbf16> to vector<1x20x4xbf16>
    tpu.vector_store %arg12[%c9, %c0_184, %c0_185], %349 {strides = array<i32>} : memref<20x20x4xbf16, #tpu.memory_space<vmem>>, vector<1x20x4xbf16>,
    %c16_i32_186 = arith.constant 16 : i32
    %350 = arith.muli %arg1, %c16_i32_186 : i32
    %c10_i32 = arith.constant 10 : i32
    %351 = arith.addi %350, %c10_i32 : i32
    %c2_i32_187 = arith.constant 2 : i32
    %352 = arith.cmpi sge, %351, %c2_i32_187 : i32
    %c18_i32_188 = arith.constant 18 : i32
    %353 = arith.cmpi slt, %351, %c18_i32_188 : i32
    %354 = arith.andi %352, %353 : i1
    %cst_189 = arith.constant 1.000000e+00 : f32
    %cst_190 = arith.constant 0.000000e+00 : f32
    %355 = arith.select %354, %cst_189, %cst_190 : f32
    %c2_i32_191 = arith.constant 2 : i32
    %356 = arith.subi %351, %c2_i32_191 : i32
    %c0_i32_192 = arith.constant 0 : i32
    %c15_i32_193 = arith.constant 15 : i32
    %357 = arith.maxsi %c0_i32_192, %356 : i32
    %358 = arith.minsi %c15_i32_193, %357 : i32
    %359 = arith.sitofp %358 : i32 to f32
    %cst_194 = arith.constant 0.466666669 : f32
    %360 = arith.mulf %359, %cst_194 : f32
    %361 = math.floor %360 : f32
    %362 = arith.fptosi %361 : f32 to i32
    %c1_i32_195 = arith.constant 1 : i32
    %363 = arith.addi %362, %c1_i32_195 : i32
    %c7_i32_196 = arith.constant 7 : i32
    %364 = arith.minsi %363, %c7_i32_196 : i32
    %365 = arith.subf %360, %361 : f32
    %366 = arith.mulf %365, %355 : f32
    %367 = arith.subf %355, %366 : f32
    %c0_197 = arith.constant 0 : index
    %368 = arith.index_cast %362 : i32 to index
    %c0_198 = arith.constant 0 : index
    %c0_199 = arith.constant 0 : index
    %369 = vector.load %arg2[%c0_197, %368, %c0_198, %c0_199] : memref<1x8x20x4xbf16, #tpu.memory_space<vmem>>, vector<1x1x20x4xbf16>
    %370 = vector.shape_cast %369 : vector<1x1x20x4xbf16> to vector<20x4xbf16>
    %371 = arith.extf %370 : vector<20x4xbf16> to vector<20x4xf32>
    %372 = vector.broadcast %367 : f32 to vector<20x4xf32>
    %373 = arith.mulf %371, %372 : vector<20x4xf32>
    %c0_200 = arith.constant 0 : index
    %374 = arith.index_cast %364 : i32 to index
    %c0_201 = arith.constant 0 : index
    %c0_202 = arith.constant 0 : index
    %375 = vector.load %arg2[%c0_200, %374, %c0_201, %c0_202] : memref<1x8x20x4xbf16, #tpu.memory_space<vmem>>, vector<1x1x20x4xbf16>
    %376 = vector.shape_cast %375 : vector<1x1x20x4xbf16> to vector<20x4xbf16>
    %377 = arith.extf %376 : vector<20x4xbf16> to vector<20x4xf32>
    %378 = vector.broadcast %366 : f32 to vector<20x4xf32>
    %379 = arith.mulf %377, %378 : vector<20x4xf32>
    %380 = arith.addf %373, %379 : vector<20x4xf32>
    %381 = arith.truncf %380 : vector<20x4xf32> to vector<20x4xbf16>
    %c10 = arith.constant 10 : index
    %c0_203 = arith.constant 0 : index
    %c0_204 = arith.constant 0 : index
    %382 = vector.load %arg12[%c10, %c0_203, %c0_204] : memref<20x20x4xbf16, #tpu.memory_space<vmem>>, vector<1x20x4xbf16>
    %383 = vector.shape_cast %382 : vector<1x20x4xbf16> to vector<20x4xbf16>
    %384 = vector.shape_cast %381 : vector<20x4xbf16> to vector<1x20x4xbf16>
    tpu.vector_store %arg12[%c10, %c0_203, %c0_204], %384 {strides = array<i32>} : memref<20x20x4xbf16, #tpu.memory_space<vmem>>, vector<1x20x4xbf16>,
    %c16_i32_205 = arith.constant 16 : i32
    %385 = arith.muli %arg1, %c16_i32_205 : i32
    %c11_i32 = arith.constant 11 : i32
    %386 = arith.addi %385, %c11_i32 : i32
    %c2_i32_206 = arith.constant 2 : i32
    %387 = arith.cmpi sge, %386, %c2_i32_206 : i32
    %c18_i32_207 = arith.constant 18 : i32
    %388 = arith.cmpi slt, %386, %c18_i32_207 : i32
    %389 = arith.andi %387, %388 : i1
    %cst_208 = arith.constant 1.000000e+00 : f32
    %cst_209 = arith.constant 0.000000e+00 : f32
    %390 = arith.select %389, %cst_208, %cst_209 : f32
    %c2_i32_210 = arith.constant 2 : i32
    %391 = arith.subi %386, %c2_i32_210 : i32
    %c0_i32_211 = arith.constant 0 : i32
    %c15_i32_212 = arith.constant 15 : i32
    %392 = arith.maxsi %c0_i32_211, %391 : i32
    %393 = arith.minsi %c15_i32_212, %392 : i32
    %394 = arith.sitofp %393 : i32 to f32
    %cst_213 = arith.constant 0.466666669 : f32
    %395 = arith.mulf %394, %cst_213 : f32
    %396 = math.floor %395 : f32
    %397 = arith.fptosi %396 : f32 to i32
    %c1_i32_214 = arith.constant 1 : i32
    %398 = arith.addi %397, %c1_i32_214 : i32
    %c7_i32_215 = arith.constant 7 : i32
    %399 = arith.minsi %398, %c7_i32_215 : i32
    %400 = arith.subf %395, %396 : f32
    %401 = arith.mulf %400, %390 : f32
    %402 = arith.subf %390, %401 : f32
    %c0_216 = arith.constant 0 : index
    %403 = arith.index_cast %397 : i32 to index
    %c0_217 = arith.constant 0 : index
    %c0_218 = arith.constant 0 : index
    %404 = vector.load %arg2[%c0_216, %403, %c0_217, %c0_218] : memref<1x8x20x4xbf16, #tpu.memory_space<vmem>>, vector<1x1x20x4xbf16>
    %405 = vector.shape_cast %404 : vector<1x1x20x4xbf16> to vector<20x4xbf16>
    %406 = arith.extf %405 : vector<20x4xbf16> to vector<20x4xf32>
    %407 = vector.broadcast %402 : f32 to vector<20x4xf32>
    %408 = arith.mulf %406, %407 : vector<20x4xf32>
    %c0_219 = arith.constant 0 : index
    %409 = arith.index_cast %399 : i32 to index
    %c0_220 = arith.constant 0 : index
    %c0_221 = arith.constant 0 : index
    %410 = vector.load %arg2[%c0_219, %409, %c0_220, %c0_221] : memref<1x8x20x4xbf16, #tpu.memory_space<vmem>>, vector<1x1x20x4xbf16>
    %411 = vector.shape_cast %410 : vector<1x1x20x4xbf16> to vector<20x4xbf16>
    %412 = arith.extf %411 : vector<20x4xbf16> to vector<20x4xf32>
    %413 = vector.broadcast %401 : f32 to vector<20x4xf32>
    %414 = arith.mulf %412, %413 : vector<20x4xf32>
    %415 = arith.addf %408, %414 : vector<20x4xf32>
    %416 = arith.truncf %415 : vector<20x4xf32> to vector<20x4xbf16>
    %c11 = arith.constant 11 : index
    %c0_222 = arith.constant 0 : index
    %c0_223 = arith.constant 0 : index
    %417 = vector.load %arg12[%c11, %c0_222, %c0_223] : memref<20x20x4xbf16, #tpu.memory_space<vmem>>, vector<1x20x4xbf16>
    %418 = vector.shape_cast %417 : vector<1x20x4xbf16> to vector<20x4xbf16>
    %419 = vector.shape_cast %416 : vector<20x4xbf16> to vector<1x20x4xbf16>
    tpu.vector_store %arg12[%c11, %c0_222, %c0_223], %419 {strides = array<i32>} : memref<20x20x4xbf16, #tpu.memory_space<vmem>>, vector<1x20x4xbf16>,
    %c16_i32_224 = arith.constant 16 : i32
    %420 = arith.muli %arg1, %c16_i32_224 : i32
    %c12_i32 = arith.constant 12 : i32
    %421 = arith.addi %420, %c12_i32 : i32
    %c2_i32_225 = arith.constant 2 : i32
    %422 = arith.cmpi sge, %421, %c2_i32_225 : i32
    %c18_i32_226 = arith.constant 18 : i32
    %423 = arith.cmpi slt, %421, %c18_i32_226 : i32
    %424 = arith.andi %422, %423 : i1
    %cst_227 = arith.constant 1.000000e+00 : f32
    %cst_228 = arith.constant 0.000000e+00 : f32
    %425 = arith.select %424, %cst_227, %cst_228 : f32
    %c2_i32_229 = arith.constant 2 : i32
    %426 = arith.subi %421, %c2_i32_229 : i32
    %c0_i32_230 = arith.constant 0 : i32
    %c15_i32_231 = arith.constant 15 : i32
    %427 = arith.maxsi %c0_i32_230, %426 : i32
    %428 = arith.minsi %c15_i32_231, %427 : i32
    %429 = arith.sitofp %428 : i32 to f32
    %cst_232 = arith.constant 0.466666669 : f32
    %430 = arith.mulf %429, %cst_232 : f32
    %431 = math.floor %430 : f32
    %432 = arith.fptosi %431 : f32 to i32
    %c1_i32_233 = arith.constant 1 : i32
    %433 = arith.addi %432, %c1_i32_233 : i32
    %c7_i32_234 = arith.constant 7 : i32
    %434 = arith.minsi %433, %c7_i32_234 : i32
    %435 = arith.subf %430, %431 : f32
    %436 = arith.mulf %435, %425 : f32
    %437 = arith.subf %425, %436 : f32
    %c0_235 = arith.constant 0 : index
    %438 = arith.index_cast %432 : i32 to index
    %c0_236 = arith.constant 0 : index
    %c0_237 = arith.constant 0 : index
    %439 = vector.load %arg2[%c0_235, %438, %c0_236, %c0_237] : memref<1x8x20x4xbf16, #tpu.memory_space<vmem>>, vector<1x1x20x4xbf16>
    %440 = vector.shape_cast %439 : vector<1x1x20x4xbf16> to vector<20x4xbf16>
    %441 = arith.extf %440 : vector<20x4xbf16> to vector<20x4xf32>
    %442 = vector.broadcast %437 : f32 to vector<20x4xf32>
    %443 = arith.mulf %441, %442 : vector<20x4xf32>
    %c0_238 = arith.constant 0 : index
    %444 = arith.index_cast %434 : i32 to index
    %c0_239 = arith.constant 0 : index
    %c0_240 = arith.constant 0 : index
    %445 = vector.load %arg2[%c0_238, %444, %c0_239, %c0_240] : memref<1x8x20x4xbf16, #tpu.memory_space<vmem>>, vector<1x1x20x4xbf16>
    %446 = vector.shape_cast %445 : vector<1x1x20x4xbf16> to vector<20x4xbf16>
    %447 = arith.extf %446 : vector<20x4xbf16> to vector<20x4xf32>
    %448 = vector.broadcast %436 : f32 to vector<20x4xf32>
    %449 = arith.mulf %447, %448 : vector<20x4xf32>
    %450 = arith.addf %443, %449 : vector<20x4xf32>
    %451 = arith.truncf %450 : vector<20x4xf32> to vector<20x4xbf16>
    %c12 = arith.constant 12 : index
    %c0_241 = arith.constant 0 : index
    %c0_242 = arith.constant 0 : index
    %452 = vector.load %arg12[%c12, %c0_241, %c0_242] : memref<20x20x4xbf16, #tpu.memory_space<vmem>>, vector<1x20x4xbf16>
    %453 = vector.shape_cast %452 : vector<1x20x4xbf16> to vector<20x4xbf16>
    %454 = vector.shape_cast %451 : vector<20x4xbf16> to vector<1x20x4xbf16>
    tpu.vector_store %arg12[%c12, %c0_241, %c0_242], %454 {strides = array<i32>} : memref<20x20x4xbf16, #tpu.memory_space<vmem>>, vector<1x20x4xbf16>,
    %c16_i32_243 = arith.constant 16 : i32
    %455 = arith.muli %arg1, %c16_i32_243 : i32
    %c13_i32 = arith.constant 13 : i32
    %456 = arith.addi %455, %c13_i32 : i32
    %c2_i32_244 = arith.constant 2 : i32
    %457 = arith.cmpi sge, %456, %c2_i32_244 : i32
    %c18_i32_245 = arith.constant 18 : i32
    %458 = arith.cmpi slt, %456, %c18_i32_245 : i32
    %459 = arith.andi %457, %458 : i1
    %cst_246 = arith.constant 1.000000e+00 : f32
    %cst_247 = arith.constant 0.000000e+00 : f32
    %460 = arith.select %459, %cst_246, %cst_247 : f32
    %c2_i32_248 = arith.constant 2 : i32
    %461 = arith.subi %456, %c2_i32_248 : i32
    %c0_i32_249 = arith.constant 0 : i32
    %c15_i32_250 = arith.constant 15 : i32
    %462 = arith.maxsi %c0_i32_249, %461 : i32
    %463 = arith.minsi %c15_i32_250, %462 : i32
    %464 = arith.sitofp %463 : i32 to f32
    %cst_251 = arith.constant 0.466666669 : f32
    %465 = arith.mulf %464, %cst_251 : f32
    %466 = math.floor %465 : f32
    %467 = arith.fptosi %466 : f32 to i32
    %c1_i32_252 = arith.constant 1 : i32
    %468 = arith.addi %467, %c1_i32_252 : i32
    %c7_i32_253 = arith.constant 7 : i32
    %469 = arith.minsi %468, %c7_i32_253 : i32
    %470 = arith.subf %465, %466 : f32
    %471 = arith.mulf %470, %460 : f32
    %472 = arith.subf %460, %471 : f32
    %c0_254 = arith.constant 0 : index
    %473 = arith.index_cast %467 : i32 to index
    %c0_255 = arith.constant 0 : index
    %c0_256 = arith.constant 0 : index
    %474 = vector.load %arg2[%c0_254, %473, %c0_255, %c0_256] : memref<1x8x20x4xbf16, #tpu.memory_space<vmem>>, vector<1x1x20x4xbf16>
    %475 = vector.shape_cast %474 : vector<1x1x20x4xbf16> to vector<20x4xbf16>
    %476 = arith.extf %475 : vector<20x4xbf16> to vector<20x4xf32>
    %477 = vector.broadcast %472 : f32 to vector<20x4xf32>
    %478 = arith.mulf %476, %477 : vector<20x4xf32>
    %c0_257 = arith.constant 0 : index
    %479 = arith.index_cast %469 : i32 to index
    %c0_258 = arith.constant 0 : index
    %c0_259 = arith.constant 0 : index
    %480 = vector.load %arg2[%c0_257, %479, %c0_258, %c0_259] : memref<1x8x20x4xbf16, #tpu.memory_space<vmem>>, vector<1x1x20x4xbf16>
    %481 = vector.shape_cast %480 : vector<1x1x20x4xbf16> to vector<20x4xbf16>
    %482 = arith.extf %481 : vector<20x4xbf16> to vector<20x4xf32>
    %483 = vector.broadcast %471 : f32 to vector<20x4xf32>
    %484 = arith.mulf %482, %483 : vector<20x4xf32>
    %485 = arith.addf %478, %484 : vector<20x4xf32>
    %486 = arith.truncf %485 : vector<20x4xf32> to vector<20x4xbf16>
    %c13 = arith.constant 13 : index
    %c0_260 = arith.constant 0 : index
    %c0_261 = arith.constant 0 : index
    %487 = vector.load %arg12[%c13, %c0_260, %c0_261] : memref<20x20x4xbf16, #tpu.memory_space<vmem>>, vector<1x20x4xbf16>
    %488 = vector.shape_cast %487 : vector<1x20x4xbf16> to vector<20x4xbf16>
    %489 = vector.shape_cast %486 : vector<20x4xbf16> to vector<1x20x4xbf16>
    tpu.vector_store %arg12[%c13, %c0_260, %c0_261], %489 {strides = array<i32>} : memref<20x20x4xbf16, #tpu.memory_space<vmem>>, vector<1x20x4xbf16>,
    %c16_i32_262 = arith.constant 16 : i32
    %490 = arith.muli %arg1, %c16_i32_262 : i32
    %c14_i32 = arith.constant 14 : i32
    %491 = arith.addi %490, %c14_i32 : i32
    %c2_i32_263 = arith.constant 2 : i32
    %492 = arith.cmpi sge, %491, %c2_i32_263 : i32
    %c18_i32_264 = arith.constant 18 : i32
    %493 = arith.cmpi slt, %491, %c18_i32_264 : i32
    %494 = arith.andi %492, %493 : i1
    %cst_265 = arith.constant 1.000000e+00 : f32
    %cst_266 = arith.constant 0.000000e+00 : f32
    %495 = arith.select %494, %cst_265, %cst_266 : f32
    %c2_i32_267 = arith.constant 2 : i32
    %496 = arith.subi %491, %c2_i32_267 : i32
    %c0_i32_268 = arith.constant 0 : i32
    %c15_i32_269 = arith.constant 15 : i32
    %497 = arith.maxsi %c0_i32_268, %496 : i32
    %498 = arith.minsi %c15_i32_269, %497 : i32
    %499 = arith.sitofp %498 : i32 to f32
    %cst_270 = arith.constant 0.466666669 : f32
    %500 = arith.mulf %499, %cst_270 : f32
    %501 = math.floor %500 : f32
    %502 = arith.fptosi %501 : f32 to i32
    %c1_i32_271 = arith.constant 1 : i32
    %503 = arith.addi %502, %c1_i32_271 : i32
    %c7_i32_272 = arith.constant 7 : i32
    %504 = arith.minsi %503, %c7_i32_272 : i32
    %505 = arith.subf %500, %501 : f32
    %506 = arith.mulf %505, %495 : f32
    %507 = arith.subf %495, %506 : f32
    %c0_273 = arith.constant 0 : index
    %508 = arith.index_cast %502 : i32 to index
    %c0_274 = arith.constant 0 : index
    %c0_275 = arith.constant 0 : index
    %509 = vector.load %arg2[%c0_273, %508, %c0_274, %c0_275] : memref<1x8x20x4xbf16, #tpu.memory_space<vmem>>, vector<1x1x20x4xbf16>
    %510 = vector.shape_cast %509 : vector<1x1x20x4xbf16> to vector<20x4xbf16>
    %511 = arith.extf %510 : vector<20x4xbf16> to vector<20x4xf32>
    %512 = vector.broadcast %507 : f32 to vector<20x4xf32>
    %513 = arith.mulf %511, %512 : vector<20x4xf32>
    %c0_276 = arith.constant 0 : index
    %514 = arith.index_cast %504 : i32 to index
    %c0_277 = arith.constant 0 : index
    %c0_278 = arith.constant 0 : index
    %515 = vector.load %arg2[%c0_276, %514, %c0_277, %c0_278] : memref<1x8x20x4xbf16, #tpu.memory_space<vmem>>, vector<1x1x20x4xbf16>
    %516 = vector.shape_cast %515 : vector<1x1x20x4xbf16> to vector<20x4xbf16>
    %517 = arith.extf %516 : vector<20x4xbf16> to vector<20x4xf32>
    %518 = vector.broadcast %506 : f32 to vector<20x4xf32>
    %519 = arith.mulf %517, %518 : vector<20x4xf32>
    %520 = arith.addf %513, %519 : vector<20x4xf32>
    %521 = arith.truncf %520 : vector<20x4xf32> to vector<20x4xbf16>
    %c14 = arith.constant 14 : index
    %c0_279 = arith.constant 0 : index
    %c0_280 = arith.constant 0 : index
    %522 = vector.load %arg12[%c14, %c0_279, %c0_280] : memref<20x20x4xbf16, #tpu.memory_space<vmem>>, vector<1x20x4xbf16>
    %523 = vector.shape_cast %522 : vector<1x20x4xbf16> to vector<20x4xbf16>
    %524 = vector.shape_cast %521 : vector<20x4xbf16> to vector<1x20x4xbf16>
    tpu.vector_store %arg12[%c14, %c0_279, %c0_280], %524 {strides = array<i32>} : memref<20x20x4xbf16, #tpu.memory_space<vmem>>, vector<1x20x4xbf16>,
    %c16_i32_281 = arith.constant 16 : i32
    %525 = arith.muli %arg1, %c16_i32_281 : i32
    %c15_i32_282 = arith.constant 15 : i32
    %526 = arith.addi %525, %c15_i32_282 : i32
    %c2_i32_283 = arith.constant 2 : i32
    %527 = arith.cmpi sge, %526, %c2_i32_283 : i32
    %c18_i32_284 = arith.constant 18 : i32
    %528 = arith.cmpi slt, %526, %c18_i32_284 : i32
    %529 = arith.andi %527, %528 : i1
    %cst_285 = arith.constant 1.000000e+00 : f32
    %cst_286 = arith.constant 0.000000e+00 : f32
    %530 = arith.select %529, %cst_285, %cst_286 : f32
    %c2_i32_287 = arith.constant 2 : i32
    %531 = arith.subi %526, %c2_i32_287 : i32
    %c0_i32_288 = arith.constant 0 : i32
    %c15_i32_289 = arith.constant 15 : i32
    %532 = arith.maxsi %c0_i32_288, %531 : i32
    %533 = arith.minsi %c15_i32_289, %532 : i32
    %534 = arith.sitofp %533 : i32 to f32
    %cst_290 = arith.constant 0.466666669 : f32
    %535 = arith.mulf %534, %cst_290 : f32
    %536 = math.floor %535 : f32
    %537 = arith.fptosi %536 : f32 to i32
    %c1_i32_291 = arith.constant 1 : i32
    %538 = arith.addi %537, %c1_i32_291 : i32
    %c7_i32_292 = arith.constant 7 : i32
    %539 = arith.minsi %538, %c7_i32_292 : i32
    %540 = arith.subf %535, %536 : f32
    %541 = arith.mulf %540, %530 : f32
    %542 = arith.subf %530, %541 : f32
    %c0_293 = arith.constant 0 : index
    %543 = arith.index_cast %537 : i32 to index
    %c0_294 = arith.constant 0 : index
    %c0_295 = arith.constant 0 : index
    %544 = vector.load %arg2[%c0_293, %543, %c0_294, %c0_295] : memref<1x8x20x4xbf16, #tpu.memory_space<vmem>>, vector<1x1x20x4xbf16>
    %545 = vector.shape_cast %544 : vector<1x1x20x4xbf16> to vector<20x4xbf16>
    %546 = arith.extf %545 : vector<20x4xbf16> to vector<20x4xf32>
    %547 = vector.broadcast %542 : f32 to vector<20x4xf32>
    %548 = arith.mulf %546, %547 : vector<20x4xf32>
    %c0_296 = arith.constant 0 : index
    %549 = arith.index_cast %539 : i32 to index
    %c0_297 = arith.constant 0 : index
    %c0_298 = arith.constant 0 : index
    %550 = vector.load %arg2[%c0_296, %549, %c0_297, %c0_298] : memref<1x8x20x4xbf16, #tpu.memory_space<vmem>>, vector<1x1x20x4xbf16>
    %551 = vector.shape_cast %550 : vector<1x1x20x4xbf16> to vector<20x4xbf16>
    %552 = arith.extf %551 : vector<20x4xbf16> to vector<20x4xf32>
    %553 = vector.broadcast %541 : f32 to vector<20x4xf32>
    %554 = arith.mulf %552, %553 : vector<20x4xf32>
    %555 = arith.addf %548, %554 : vector<20x4xf32>
    %556 = arith.truncf %555 : vector<20x4xf32> to vector<20x4xbf16>
    %c15 = arith.constant 15 : index
    %c0_299 = arith.constant 0 : index
    %c0_300 = arith.constant 0 : index
    %557 = vector.load %arg12[%c15, %c0_299, %c0_300] : memref<20x20x4xbf16, #tpu.memory_space<vmem>>, vector<1x20x4xbf16>
    %558 = vector.shape_cast %557 : vector<1x20x4xbf16> to vector<20x4xbf16>
    %559 = vector.shape_cast %556 : vector<20x4xbf16> to vector<1x20x4xbf16>
    tpu.vector_store %arg12[%c15, %c0_299, %c0_300], %559 {strides = array<i32>} : memref<20x20x4xbf16, #tpu.memory_space<vmem>>, vector<1x20x4xbf16>,
    %c16_i32_301 = arith.constant 16 : i32
    %560 = arith.muli %arg1, %c16_i32_301 : i32
    %c16_i32_302 = arith.constant 16 : i32
    %561 = arith.addi %560, %c16_i32_302 : i32
    %c2_i32_303 = arith.constant 2 : i32
    %562 = arith.cmpi sge, %561, %c2_i32_303 : i32
    %c18_i32_304 = arith.constant 18 : i32
    %563 = arith.cmpi slt, %561, %c18_i32_304 : i32
    %564 = arith.andi %562, %563 : i1
    %cst_305 = arith.constant 1.000000e+00 : f32
    %cst_306 = arith.constant 0.000000e+00 : f32
    %565 = arith.select %564, %cst_305, %cst_306 : f32
    %c2_i32_307 = arith.constant 2 : i32
    %566 = arith.subi %561, %c2_i32_307 : i32
    %c0_i32_308 = arith.constant 0 : i32
    %c15_i32_309 = arith.constant 15 : i32
    %567 = arith.maxsi %c0_i32_308, %566 : i32
    %568 = arith.minsi %c15_i32_309, %567 : i32
    %569 = arith.sitofp %568 : i32 to f32
    %cst_310 = arith.constant 0.466666669 : f32
    %570 = arith.mulf %569, %cst_310 : f32
    %571 = math.floor %570 : f32
    %572 = arith.fptosi %571 : f32 to i32
    %c1_i32_311 = arith.constant 1 : i32
    %573 = arith.addi %572, %c1_i32_311 : i32
    %c7_i32_312 = arith.constant 7 : i32
    %574 = arith.minsi %573, %c7_i32_312 : i32
    %575 = arith.subf %570, %571 : f32
    %576 = arith.mulf %575, %565 : f32
    %577 = arith.subf %565, %576 : f32
    %c0_313 = arith.constant 0 : index
    %578 = arith.index_cast %572 : i32 to index
    %c0_314 = arith.constant 0 : index
    %c0_315 = arith.constant 0 : index
    %579 = vector.load %arg2[%c0_313, %578, %c0_314, %c0_315] : memref<1x8x20x4xbf16, #tpu.memory_space<vmem>>, vector<1x1x20x4xbf16>
    %580 = vector.shape_cast %579 : vector<1x1x20x4xbf16> to vector<20x4xbf16>
    %581 = arith.extf %580 : vector<20x4xbf16> to vector<20x4xf32>
    %582 = vector.broadcast %577 : f32 to vector<20x4xf32>
    %583 = arith.mulf %581, %582 : vector<20x4xf32>
    %c0_316 = arith.constant 0 : index
    %584 = arith.index_cast %574 : i32 to index
    %c0_317 = arith.constant 0 : index
    %c0_318 = arith.constant 0 : index
    %585 = vector.load %arg2[%c0_316, %584, %c0_317, %c0_318] : memref<1x8x20x4xbf16, #tpu.memory_space<vmem>>, vector<1x1x20x4xbf16>
    %586 = vector.shape_cast %585 : vector<1x1x20x4xbf16> to vector<20x4xbf16>
    %587 = arith.extf %586 : vector<20x4xbf16> to vector<20x4xf32>
    %588 = vector.broadcast %576 : f32 to vector<20x4xf32>
    %589 = arith.mulf %587, %588 : vector<20x4xf32>
    %590 = arith.addf %583, %589 : vector<20x4xf32>
    %591 = arith.truncf %590 : vector<20x4xf32> to vector<20x4xbf16>
    %c16 = arith.constant 16 : index
    %c0_319 = arith.constant 0 : index
    %c0_320 = arith.constant 0 : index
    %592 = vector.load %arg12[%c16, %c0_319, %c0_320] : memref<20x20x4xbf16, #tpu.memory_space<vmem>>, vector<1x20x4xbf16>
    %593 = vector.shape_cast %592 : vector<1x20x4xbf16> to vector<20x4xbf16>
    %594 = vector.shape_cast %591 : vector<20x4xbf16> to vector<1x20x4xbf16>
    tpu.vector_store %arg12[%c16, %c0_319, %c0_320], %594 {strides = array<i32>} : memref<20x20x4xbf16, #tpu.memory_space<vmem>>, vector<1x20x4xbf16>,
    %c16_i32_321 = arith.constant 16 : i32
    %595 = arith.muli %arg1, %c16_i32_321 : i32
    %c17_i32 = arith.constant 17 : i32
    %596 = arith.addi %595, %c17_i32 : i32
    %c2_i32_322 = arith.constant 2 : i32
    %597 = arith.cmpi sge, %596, %c2_i32_322 : i32
    %c18_i32_323 = arith.constant 18 : i32
    %598 = arith.cmpi slt, %596, %c18_i32_323 : i32
    %599 = arith.andi %597, %598 : i1
    %cst_324 = arith.constant 1.000000e+00 : f32
    %cst_325 = arith.constant 0.000000e+00 : f32
    %600 = arith.select %599, %cst_324, %cst_325 : f32
    %c2_i32_326 = arith.constant 2 : i32
    %601 = arith.subi %596, %c2_i32_326 : i32
    %c0_i32_327 = arith.constant 0 : i32
    %c15_i32_328 = arith.constant 15 : i32
    %602 = arith.maxsi %c0_i32_327, %601 : i32
    %603 = arith.minsi %c15_i32_328, %602 : i32
    %604 = arith.sitofp %603 : i32 to f32
    %cst_329 = arith.constant 0.466666669 : f32
    %605 = arith.mulf %604, %cst_329 : f32
    %606 = math.floor %605 : f32
    %607 = arith.fptosi %606 : f32 to i32
    %c1_i32_330 = arith.constant 1 : i32
    %608 = arith.addi %607, %c1_i32_330 : i32
    %c7_i32_331 = arith.constant 7 : i32
    %609 = arith.minsi %608, %c7_i32_331 : i32
    %610 = arith.subf %605, %606 : f32
    %611 = arith.mulf %610, %600 : f32
    %612 = arith.subf %600, %611 : f32
    %c0_332 = arith.constant 0 : index
    %613 = arith.index_cast %607 : i32 to index
    %c0_333 = arith.constant 0 : index
    %c0_334 = arith.constant 0 : index
    %614 = vector.load %arg2[%c0_332, %613, %c0_333, %c0_334] : memref<1x8x20x4xbf16, #tpu.memory_space<vmem>>, vector<1x1x20x4xbf16>
    %615 = vector.shape_cast %614 : vector<1x1x20x4xbf16> to vector<20x4xbf16>
    %616 = arith.extf %615 : vector<20x4xbf16> to vector<20x4xf32>
    %617 = vector.broadcast %612 : f32 to vector<20x4xf32>
    %618 = arith.mulf %616, %617 : vector<20x4xf32>
    %c0_335 = arith.constant 0 : index
    %619 = arith.index_cast %609 : i32 to index
    %c0_336 = arith.constant 0 : index
    %c0_337 = arith.constant 0 : index
    %620 = vector.load %arg2[%c0_335, %619, %c0_336, %c0_337] : memref<1x8x20x4xbf16, #tpu.memory_space<vmem>>, vector<1x1x20x4xbf16>
    %621 = vector.shape_cast %620 : vector<1x1x20x4xbf16> to vector<20x4xbf16>
    %622 = arith.extf %621 : vector<20x4xbf16> to vector<20x4xf32>
    %623 = vector.broadcast %611 : f32 to vector<20x4xf32>
    %624 = arith.mulf %622, %623 : vector<20x4xf32>
    %625 = arith.addf %618, %624 : vector<20x4xf32>
    %626 = arith.truncf %625 : vector<20x4xf32> to vector<20x4xbf16>
    %c17 = arith.constant 17 : index
    %c0_338 = arith.constant 0 : index
    %c0_339 = arith.constant 0 : index
    %627 = vector.load %arg12[%c17, %c0_338, %c0_339] : memref<20x20x4xbf16, #tpu.memory_space<vmem>>, vector<1x20x4xbf16>
    %628 = vector.shape_cast %627 : vector<1x20x4xbf16> to vector<20x4xbf16>
    %629 = vector.shape_cast %626 : vector<20x4xbf16> to vector<1x20x4xbf16>
    tpu.vector_store %arg12[%c17, %c0_338, %c0_339], %629 {strides = array<i32>} : memref<20x20x4xbf16, #tpu.memory_space<vmem>>, vector<1x20x4xbf16>,
    %c16_i32_340 = arith.constant 16 : i32
    %630 = arith.muli %arg1, %c16_i32_340 : i32
    %c18_i32_341 = arith.constant 18 : i32
    %631 = arith.addi %630, %c18_i32_341 : i32
    %c2_i32_342 = arith.constant 2 : i32
    %632 = arith.cmpi sge, %631, %c2_i32_342 : i32
    %c18_i32_343 = arith.constant 18 : i32
    %633 = arith.cmpi slt, %631, %c18_i32_343 : i32
    %634 = arith.andi %632, %633 : i1
    %cst_344 = arith.constant 1.000000e+00 : f32
    %cst_345 = arith.constant 0.000000e+00 : f32
    %635 = arith.select %634, %cst_344, %cst_345 : f32
    %c2_i32_346 = arith.constant 2 : i32
    %636 = arith.subi %631, %c2_i32_346 : i32
    %c0_i32_347 = arith.constant 0 : i32
    %c15_i32_348 = arith.constant 15 : i32
    %637 = arith.maxsi %c0_i32_347, %636 : i32
    %638 = arith.minsi %c15_i32_348, %637 : i32
    %639 = arith.sitofp %638 : i32 to f32
    %cst_349 = arith.constant 0.466666669 : f32
    %640 = arith.mulf %639, %cst_349 : f32
    %641 = math.floor %640 : f32
    %642 = arith.fptosi %641 : f32 to i32
    %c1_i32_350 = arith.constant 1 : i32
    %643 = arith.addi %642, %c1_i32_350 : i32
    %c7_i32_351 = arith.constant 7 : i32
    %644 = arith.minsi %643, %c7_i32_351 : i32
    %645 = arith.subf %640, %641 : f32
    %646 = arith.mulf %645, %635 : f32
    %647 = arith.subf %635, %646 : f32
    %c0_352 = arith.constant 0 : index
    %648 = arith.index_cast %642 : i32 to index
    %c0_353 = arith.constant 0 : index
    %c0_354 = arith.constant 0 : index
    %649 = vector.load %arg2[%c0_352, %648, %c0_353, %c0_354] : memref<1x8x20x4xbf16, #tpu.memory_space<vmem>>, vector<1x1x20x4xbf16>
    %650 = vector.shape_cast %649 : vector<1x1x20x4xbf16> to vector<20x4xbf16>
    %651 = arith.extf %650 : vector<20x4xbf16> to vector<20x4xf32>
    %652 = vector.broadcast %647 : f32 to vector<20x4xf32>
    %653 = arith.mulf %651, %652 : vector<20x4xf32>
    %c0_355 = arith.constant 0 : index
    %654 = arith.index_cast %644 : i32 to index
    %c0_356 = arith.constant 0 : index
    %c0_357 = arith.constant 0 : index
    %655 = vector.load %arg2[%c0_355, %654, %c0_356, %c0_357] : memref<1x8x20x4xbf16, #tpu.memory_space<vmem>>, vector<1x1x20x4xbf16>
    %656 = vector.shape_cast %655 : vector<1x1x20x4xbf16> to vector<20x4xbf16>
    %657 = arith.extf %656 : vector<20x4xbf16> to vector<20x4xf32>
    %658 = vector.broadcast %646 : f32 to vector<20x4xf32>
    %659 = arith.mulf %657, %658 : vector<20x4xf32>
    %660 = arith.addf %653, %659 : vector<20x4xf32>
    %661 = arith.truncf %660 : vector<20x4xf32> to vector<20x4xbf16>
    %c18 = arith.constant 18 : index
    %c0_358 = arith.constant 0 : index
    %c0_359 = arith.constant 0 : index
    %662 = vector.load %arg12[%c18, %c0_358, %c0_359] : memref<20x20x4xbf16, #tpu.memory_space<vmem>>, vector<1x20x4xbf16>
    %663 = vector.shape_cast %662 : vector<1x20x4xbf16> to vector<20x4xbf16>
    %664 = vector.shape_cast %661 : vector<20x4xbf16> to vector<1x20x4xbf16>
    tpu.vector_store %arg12[%c18, %c0_358, %c0_359], %664 {strides = array<i32>} : memref<20x20x4xbf16, #tpu.memory_space<vmem>>, vector<1x20x4xbf16>,
    %c16_i32_360 = arith.constant 16 : i32
    %665 = arith.muli %arg1, %c16_i32_360 : i32
    %c19_i32 = arith.constant 19 : i32
    %666 = arith.addi %665, %c19_i32 : i32
    %c2_i32_361 = arith.constant 2 : i32
    %667 = arith.cmpi sge, %666, %c2_i32_361 : i32
    %c18_i32_362 = arith.constant 18 : i32
    %668 = arith.cmpi slt, %666, %c18_i32_362 : i32
    %669 = arith.andi %667, %668 : i1
    %cst_363 = arith.constant 1.000000e+00 : f32
    %cst_364 = arith.constant 0.000000e+00 : f32
    %670 = arith.select %669, %cst_363, %cst_364 : f32
    %c2_i32_365 = arith.constant 2 : i32
    %671 = arith.subi %666, %c2_i32_365 : i32
    %c0_i32_366 = arith.constant 0 : i32
    %c15_i32_367 = arith.constant 15 : i32
    %672 = arith.maxsi %c0_i32_366, %671 : i32
    %673 = arith.minsi %c15_i32_367, %672 : i32
    %674 = arith.sitofp %673 : i32 to f32
    %cst_368 = arith.constant 0.466666669 : f32
    %675 = arith.mulf %674, %cst_368 : f32
    %676 = math.floor %675 : f32
    %677 = arith.fptosi %676 : f32 to i32
    %c1_i32_369 = arith.constant 1 : i32
    %678 = arith.addi %677, %c1_i32_369 : i32
    %c7_i32_370 = arith.constant 7 : i32
    %679 = arith.minsi %678, %c7_i32_370 : i32
    %680 = arith.subf %675, %676 : f32
    %681 = arith.mulf %680, %670 : f32
    %682 = arith.subf %670, %681 : f32
    %c0_371 = arith.constant 0 : index
    %683 = arith.index_cast %677 : i32 to index
    %c0_372 = arith.constant 0 : index
    %c0_373 = arith.constant 0 : index
    %684 = vector.load %arg2[%c0_371, %683, %c0_372, %c0_373] : memref<1x8x20x4xbf16, #tpu.memory_space<vmem>>, vector<1x1x20x4xbf16>
    %685 = vector.shape_cast %684 : vector<1x1x20x4xbf16> to vector<20x4xbf16>
    %686 = arith.extf %685 : vector<20x4xbf16> to vector<20x4xf32>
    %687 = vector.broadcast %682 : f32 to vector<20x4xf32>
    %688 = arith.mulf %686, %687 : vector<20x4xf32>
    %c0_374 = arith.constant 0 : index
    %689 = arith.index_cast %679 : i32 to index
    %c0_375 = arith.constant 0 : index
    %c0_376 = arith.constant 0 : index
    %690 = vector.load %arg2[%c0_374, %689, %c0_375, %c0_376] : memref<1x8x20x4xbf16, #tpu.memory_space<vmem>>, vector<1x1x20x4xbf16>
    %691 = vector.shape_cast %690 : vector<1x1x20x4xbf16> to vector<20x4xbf16>
    %692 = arith.extf %691 : vector<20x4xbf16> to vector<20x4xf32>
    %693 = vector.broadcast %681 : f32 to vector<20x4xf32>
    %694 = arith.mulf %692, %693 : vector<20x4xf32>
    %695 = arith.addf %688, %694 : vector<20x4xf32>
    %696 = arith.truncf %695 : vector<20x4xf32> to vector<20x4xbf16>
    %c19 = arith.constant 19 : index
    %c0_377 = arith.constant 0 : index
    %c0_378 = arith.constant 0 : index
    %697 = vector.load %arg12[%c19, %c0_377, %c0_378] : memref<20x20x4xbf16, #tpu.memory_space<vmem>>, vector<1x20x4xbf16>
    %698 = vector.shape_cast %697 : vector<1x20x4xbf16> to vector<20x4xbf16>
    %699 = vector.shape_cast %696 : vector<20x4xbf16> to vector<1x20x4xbf16>
    tpu.vector_store %arg12[%c19, %c0_377, %c0_378], %699 {strides = array<i32>} : memref<20x20x4xbf16, #tpu.memory_space<vmem>>, vector<1x20x4xbf16>,
    %c0_379 = arith.constant 0 : index
    %c0_380 = arith.constant 0 : index
    %c0_381 = arith.constant 0 : index
    %700 = vector.load %arg12[%c0_379, %c0_380, %c0_381] : memref<20x20x4xbf16, #tpu.memory_space<vmem>>, vector<16x16x4xbf16>
    %701 = vector.shape_cast %700 : vector<16x16x4xbf16> to vector<256x4xbf16>
    %c0_382 = arith.constant 0 : index
    %c0_383 = arith.constant 0 : index
    %c0_384 = arith.constant 0 : index
    %c0_385 = arith.constant 0 : index
    %702 = vector.load %arg4[%c0_382, %c0_383, %c0_384, %c0_385] : memref<3x3x4x128xbf16, #tpu.memory_space<vmem>>, vector<1x1x4x128xbf16>
    %703 = vector.shape_cast %702 : vector<1x1x4x128xbf16> to vector<4x128xbf16>
    %cst_386 = arith.constant dense<0.000000e+00> : vector<256x128xf32>
    %704 = tpu.matmul %701, %703, %cst_386 {dimension_numbers = #tpu.dot_dimension_numbers<[1], [0], [0], [1], [0, 0, 1, 1], [], []>} : vector<256x4xbf16>, vector<4x128xbf16>, vector<256x128xf32> -> vector<256x128xf32>
    %c0_387 = arith.constant 0 : index
    %c2_388 = arith.constant 2 : index
    %c0_389 = arith.constant 0 : index
    %705 = vector.load %arg12[%c0_387, %c2_388, %c0_389] : memref<20x20x4xbf16, #tpu.memory_space<vmem>>, vector<16x16x4xbf16>
    %706 = vector.shape_cast %705 : vector<16x16x4xbf16> to vector<256x4xbf16>
    %c0_390 = arith.constant 0 : index
    %c1_391 = arith.constant 1 : index
    %c0_392 = arith.constant 0 : index
    %c0_393 = arith.constant 0 : index
    %707 = vector.load %arg4[%c0_390, %c1_391, %c0_392, %c0_393] : memref<3x3x4x128xbf16, #tpu.memory_space<vmem>>, vector<1x1x4x128xbf16>
    %708 = vector.shape_cast %707 : vector<1x1x4x128xbf16> to vector<4x128xbf16>
    %cst_394 = arith.constant dense<0.000000e+00> : vector<256x128xf32>
    %709 = tpu.matmul %706, %708, %cst_394 {dimension_numbers = #tpu.dot_dimension_numbers<[1], [0], [0], [1], [0, 0, 1, 1], [], []>} : vector<256x4xbf16>, vector<4x128xbf16>, vector<256x128xf32> -> vector<256x128xf32>
    %710 = arith.addf %704, %709 : vector<256x128xf32>
    %c0_395 = arith.constant 0 : index
    %c4_396 = arith.constant 4 : index
    %c0_397 = arith.constant 0 : index
    %711 = vector.load %arg12[%c0_395, %c4_396, %c0_397] : memref<20x20x4xbf16, #tpu.memory_space<vmem>>, vector<16x16x4xbf16>
    %712 = vector.shape_cast %711 : vector<16x16x4xbf16> to vector<256x4xbf16>
    %c0_398 = arith.constant 0 : index
    %c2_399 = arith.constant 2 : index
    %c0_400 = arith.constant 0 : index
    %c0_401 = arith.constant 0 : index
    %713 = vector.load %arg4[%c0_398, %c2_399, %c0_400, %c0_401] : memref<3x3x4x128xbf16, #tpu.memory_space<vmem>>, vector<1x1x4x128xbf16>
    %714 = vector.shape_cast %713 : vector<1x1x4x128xbf16> to vector<4x128xbf16>
    %cst_402 = arith.constant dense<0.000000e+00> : vector<256x128xf32>
    %715 = tpu.matmul %712, %714, %cst_402 {dimension_numbers = #tpu.dot_dimension_numbers<[1], [0], [0], [1], [0, 0, 1, 1], [], []>} : vector<256x4xbf16>, vector<4x128xbf16>, vector<256x128xf32> -> vector<256x128xf32>
    %716 = arith.addf %710, %715 : vector<256x128xf32>
    %c2_403 = arith.constant 2 : index
    %c0_404 = arith.constant 0 : index
    %c0_405 = arith.constant 0 : index
    %717 = vector.load %arg12[%c2_403, %c0_404, %c0_405] : memref<20x20x4xbf16, #tpu.memory_space<vmem>>, vector<16x16x4xbf16>
    %718 = vector.shape_cast %717 : vector<16x16x4xbf16> to vector<256x4xbf16>
    %c1_406 = arith.constant 1 : index
    %c0_407 = arith.constant 0 : index
    %c0_408 = arith.constant 0 : index
    %c0_409 = arith.constant 0 : index
    %719 = vector.load %arg4[%c1_406, %c0_407, %c0_408, %c0_409] : memref<3x3x4x128xbf16, #tpu.memory_space<vmem>>, vector<1x1x4x128xbf16>
    %720 = vector.shape_cast %719 : vector<1x1x4x128xbf16> to vector<4x128xbf16>
    %cst_410 = arith.constant dense<0.000000e+00> : vector<256x128xf32>
    %721 = tpu.matmul %718, %720, %cst_410 {dimension_numbers = #tpu.dot_dimension_numbers<[1], [0], [0], [1], [0, 0, 1, 1], [], []>} : vector<256x4xbf16>, vector<4x128xbf16>, vector<256x128xf32> -> vector<256x128xf32>
    %722 = arith.addf %716, %721 : vector<256x128xf32>
    %c2_411 = arith.constant 2 : index
    %c2_412 = arith.constant 2 : index
    %c0_413 = arith.constant 0 : index
    %723 = vector.load %arg12[%c2_411, %c2_412, %c0_413] : memref<20x20x4xbf16, #tpu.memory_space<vmem>>, vector<16x16x4xbf16>
    %724 = vector.shape_cast %723 : vector<16x16x4xbf16> to vector<256x4xbf16>
    %c1_414 = arith.constant 1 : index
    %c1_415 = arith.constant 1 : index
    %c0_416 = arith.constant 0 : index
    %c0_417 = arith.constant 0 : index
    %725 = vector.load %arg4[%c1_414, %c1_415, %c0_416, %c0_417] : memref<3x3x4x128xbf16, #tpu.memory_space<vmem>>, vector<1x1x4x128xbf16>
    %726 = vector.shape_cast %725 : vector<1x1x4x128xbf16> to vector<4x128xbf16>
    %cst_418 = arith.constant dense<0.000000e+00> : vector<256x128xf32>
    %727 = tpu.matmul %724, %726, %cst_418 {dimension_numbers = #tpu.dot_dimension_numbers<[1], [0], [0], [1], [0, 0, 1, 1], [], []>} : vector<256x4xbf16>, vector<4x128xbf16>, vector<256x128xf32> -> vector<256x128xf32>
    %728 = arith.addf %722, %727 : vector<256x128xf32>
    %c2_419 = arith.constant 2 : index
    %c4_420 = arith.constant 4 : index
    %c0_421 = arith.constant 0 : index
    %729 = vector.load %arg12[%c2_419, %c4_420, %c0_421] : memref<20x20x4xbf16, #tpu.memory_space<vmem>>, vector<16x16x4xbf16>
    %730 = vector.shape_cast %729 : vector<16x16x4xbf16> to vector<256x4xbf16>
    %c1_422 = arith.constant 1 : index
    %c2_423 = arith.constant 2 : index
    %c0_424 = arith.constant 0 : index
    %c0_425 = arith.constant 0 : index
    %731 = vector.load %arg4[%c1_422, %c2_423, %c0_424, %c0_425] : memref<3x3x4x128xbf16, #tpu.memory_space<vmem>>, vector<1x1x4x128xbf16>
    %732 = vector.shape_cast %731 : vector<1x1x4x128xbf16> to vector<4x128xbf16>
    %cst_426 = arith.constant dense<0.000000e+00> : vector<256x128xf32>
    %733 = tpu.matmul %730, %732, %cst_426 {dimension_numbers = #tpu.dot_dimension_numbers<[1], [0], [0], [1], [0, 0, 1, 1], [], []>} : vector<256x4xbf16>, vector<4x128xbf16>, vector<256x128xf32> -> vector<256x128xf32>
    %734 = arith.addf %728, %733 : vector<256x128xf32>
    %c4_427 = arith.constant 4 : index
    %c0_428 = arith.constant 0 : index
    %c0_429 = arith.constant 0 : index
    %735 = vector.load %arg12[%c4_427, %c0_428, %c0_429] : memref<20x20x4xbf16, #tpu.memory_space<vmem>>, vector<16x16x4xbf16>
    %736 = vector.shape_cast %735 : vector<16x16x4xbf16> to vector<256x4xbf16>
    %c2_430 = arith.constant 2 : index
    %c0_431 = arith.constant 0 : index
    %c0_432 = arith.constant 0 : index
    %c0_433 = arith.constant 0 : index
    %737 = vector.load %arg4[%c2_430, %c0_431, %c0_432, %c0_433] : memref<3x3x4x128xbf16, #tpu.memory_space<vmem>>, vector<1x1x4x128xbf16>
    %738 = vector.shape_cast %737 : vector<1x1x4x128xbf16> to vector<4x128xbf16>
    %cst_434 = arith.constant dense<0.000000e+00> : vector<256x128xf32>
    %739 = tpu.matmul %736, %738, %cst_434 {dimension_numbers = #tpu.dot_dimension_numbers<[1], [0], [0], [1], [0, 0, 1, 1], [], []>} : vector<256x4xbf16>, vector<4x128xbf16>, vector<256x128xf32> -> vector<256x128xf32>
    %740 = arith.addf %734, %739 : vector<256x128xf32>
    %c4_435 = arith.constant 4 : index
    %c2_436 = arith.constant 2 : index
    %c0_437 = arith.constant 0 : index
    %741 = vector.load %arg12[%c4_435, %c2_436, %c0_437] : memref<20x20x4xbf16, #tpu.memory_space<vmem>>, vector<16x16x4xbf16>
    %742 = vector.shape_cast %741 : vector<16x16x4xbf16> to vector<256x4xbf16>
    %c2_438 = arith.constant 2 : index
    %c1_439 = arith.constant 1 : index
    %c0_440 = arith.constant 0 : index
    %c0_441 = arith.constant 0 : index
    %743 = vector.load %arg4[%c2_438, %c1_439, %c0_440, %c0_441] : memref<3x3x4x128xbf16, #tpu.memory_space<vmem>>, vector<1x1x4x128xbf16>
    %744 = vector.shape_cast %743 : vector<1x1x4x128xbf16> to vector<4x128xbf16>
    %cst_442 = arith.constant dense<0.000000e+00> : vector<256x128xf32>
    %745 = tpu.matmul %742, %744, %cst_442 {dimension_numbers = #tpu.dot_dimension_numbers<[1], [0], [0], [1], [0, 0, 1, 1], [], []>} : vector<256x4xbf16>, vector<4x128xbf16>, vector<256x128xf32> -> vector<256x128xf32>
    %746 = arith.addf %740, %745 : vector<256x128xf32>
    %c4_443 = arith.constant 4 : index
    %c4_444 = arith.constant 4 : index
    %c0_445 = arith.constant 0 : index
    %747 = vector.load %arg12[%c4_443, %c4_444, %c0_445] : memref<20x20x4xbf16, #tpu.memory_space<vmem>>, vector<16x16x4xbf16>
    %748 = vector.shape_cast %747 : vector<16x16x4xbf16> to vector<256x4xbf16>
    %c2_446 = arith.constant 2 : index
    %c2_447 = arith.constant 2 : index
    %c0_448 = arith.constant 0 : index
    %c0_449 = arith.constant 0 : index
    %749 = vector.load %arg4[%c2_446, %c2_447, %c0_448, %c0_449] : memref<3x3x4x128xbf16, #tpu.memory_space<vmem>>, vector<1x1x4x128xbf16>
    %750 = vector.shape_cast %749 : vector<1x1x4x128xbf16> to vector<4x128xbf16>
    %cst_450 = arith.constant dense<0.000000e+00> : vector<256x128xf32>
    %751 = tpu.matmul %748, %750, %cst_450 {dimension_numbers = #tpu.dot_dimension_numbers<[1], [0], [0], [1], [0, 0, 1, 1], [], []>} : vector<256x4xbf16>, vector<4x128xbf16>, vector<256x128xf32> -> vector<256x128xf32>
    %752 = arith.addf %746, %751 : vector<256x128xf32>
    %c0_451 = arith.constant 0 : index
    %c0_452 = arith.constant 0 : index
    %753 = vector.load %arg5[%c0_451, %c0_452] : memref<1x128xf32, #tpu.memory_space<vmem>>, vector<1x128xf32>
    %754 = vector.broadcast %753 : vector<1x128xf32> to vector<256x128xf32>
    %755 = arith.addf %752, %754 : vector<256x128xf32>
    %c0_453 = arith.constant 0 : index
    %c0_454 = arith.constant 0 : index
    %c0_455 = arith.constant 0 : index
    %c0_456 = arith.constant 0 : index
    %756 = vector.load %arg3[%c0_453, %c0_454, %c0_455, %c0_456] : memref<1x16x16x8xbf16, #tpu.memory_space<vmem>>, vector<1x16x16x8xbf16>
    %757 = vector.shape_cast %756 : vector<1x16x16x8xbf16> to vector<16x16x8xbf16>
    %758 = vector.shape_cast %757 : vector<16x16x8xbf16> to vector<256x8xbf16>
    %c0_457 = arith.constant 0 : index
    %c0_458 = arith.constant 0 : index
    %759 = vector.load %arg6[%c0_457, %c0_458] : memref<8x128xbf16, #tpu.memory_space<vmem>>, vector<8x128xbf16>
    %cst_459 = arith.constant dense<0.000000e+00> : vector<256x128xf32>
    %760 = tpu.matmul %758, %759, %cst_459 {dimension_numbers = #tpu.dot_dimension_numbers<[1], [0], [0], [1], [0, 0, 1, 1], [], []>} : vector<256x8xbf16>, vector<8x128xbf16>, vector<256x128xf32> -> vector<256x128xf32>
    %c0_460 = arith.constant 0 : index
    %c0_461 = arith.constant 0 : index
    %761 = vector.load %arg7[%c0_460, %c0_461] : memref<1x128xf32, #tpu.memory_space<vmem>>, vector<1x128xf32>
    %762 = vector.broadcast %761 : vector<1x128xf32> to vector<256x128xf32>
    %763 = arith.addf %760, %762 : vector<256x128xf32>
    %764 = arith.addf %755, %763 : vector<256x128xf32>
    %cst_462 = arith.constant 0.000000e+00 : f32
    %765 = vector.broadcast %cst_462 : f32 to vector<256x128xf32>
    %766 = arith.maximumf %764, %765 : vector<256x128xf32>
    %767 = arith.truncf %752 : vector<256x128xf32> to vector<256x128xbf16>
    %c0_463 = arith.constant 0 : index
    %c0_464 = arith.constant 0 : index
    %768 = vector.load %arg8[%c0_463, %c0_464] : memref<128x8xbf16, #tpu.memory_space<vmem>>, vector<128x8xbf16>
    %cst_465 = arith.constant dense<0.000000e+00> : vector<256x8xf32>
    %769 = tpu.matmul %767, %768, %cst_465 {dimension_numbers = #tpu.dot_dimension_numbers<[1], [0], [0], [1], [0, 0, 1, 1], [], []>} : vector<256x128xbf16>, vector<128x8xbf16>, vector<256x8xf32> -> vector<256x8xf32>
    %c0_466 = arith.constant 0 : index
    %c0_467 = arith.constant 0 : index
    %770 = vector.load %arg9[%c0_466, %c0_467] : memref<1x8xf32, #tpu.memory_space<vmem>>, vector<1x8xf32>
    %771 = vector.broadcast %770 : vector<1x8xf32> to vector<256x8xf32>
    %772 = arith.addf %769, %771 : vector<256x8xf32>
    %773 = vector.shape_cast %766 : vector<256x128xf32> to vector<16x16x128xf32>
    %774 = arith.truncf %773 : vector<16x16x128xf32> to vector<16x16x128xbf16>
    %c0_468 = arith.constant 0 : index
    %c0_469 = arith.constant 0 : index
    %c0_470 = arith.constant 0 : index
    %c0_471 = arith.constant 0 : index
    %775 = vector.load %arg10[%c0_468, %c0_469, %c0_470, %c0_471] : memref<1x16x16x128xbf16, #tpu.memory_space<vmem>>, vector<1x16x16x128xbf16>
    %776 = vector.shape_cast %775 : vector<1x16x16x128xbf16> to vector<16x16x128xbf16>
    %777 = vector.shape_cast %774 : vector<16x16x128xbf16> to vector<1x16x16x128xbf16>
    tpu.vector_store %arg10[%c0_468, %c0_469, %c0_470, %c0_471], %777 {strides = array<i32>} : memref<1x16x16x128xbf16, #tpu.memory_space<vmem>>, vector<1x16x16x128xbf16>,
    %778 = vector.shape_cast %772 : vector<256x8xf32> to vector<16x16x8xf32>
    %779 = arith.truncf %778 : vector<16x16x8xf32> to vector<16x16x8xbf16>
    %c0_472 = arith.constant 0 : index
    %c0_473 = arith.constant 0 : index
    %c0_474 = arith.constant 0 : index
    %c0_475 = arith.constant 0 : index
    %780 = vector.load %arg11[%c0_472, %c0_473, %c0_474, %c0_475] : memref<1x16x16x8xbf16, #tpu.memory_space<vmem>>, vector<1x16x16x8xbf16>
    %781 = vector.shape_cast %780 : vector<1x16x16x8xbf16> to vector<16x16x8xbf16>
    %782 = vector.shape_cast %779 : vector<16x16x8xbf16> to vector<1x16x16x8xbf16>
    tpu.vector_store %arg11[%c0_472, %c0_473, %c0_474, %c0_475], %782 {strides = array<i32>} : memref<1x16x16x8xbf16, #tpu.memory_space<vmem>>, vector<1x16x16x8xbf16>,
    return
  }
  func.func @transform_0(%arg0: i32, %arg1: i32) -> (i32, i32, i32, i32) {
    %c0_i32 = arith.constant 0 : i32
    %c0_i32_0 = arith.constant 0 : i32
    %c0_i32_1 = arith.constant 0 : i32
    %c0_i32_2 = arith.constant 0 : i32
    return %arg0, %c0_i32, %c0_i32_0, %c0_i32_1 : i32, i32, i32, i32
  }
  func.func @transform_1(%arg0: i32, %arg1: i32) -> (i32, i32, i32, i32) {
    %c0_i32 = arith.constant 0 : i32
    %c0_i32_0 = arith.constant 0 : i32
    %c0_i32_1 = arith.constant 0 : i32
    return %arg0, %arg1, %c0_i32, %c0_i32_0 : i32, i32, i32, i32
  }
  func.func @transform_2(%arg0: i32, %arg1: i32) -> (i32, i32, i32, i32) {
    %c0_i32 = arith.constant 0 : i32
    %c0_i32_0 = arith.constant 0 : i32
    %c0_i32_1 = arith.constant 0 : i32
    %c0_i32_2 = arith.constant 0 : i32
    %c0_i32_3 = arith.constant 0 : i32
    return %c0_i32, %c0_i32_0, %c0_i32_1, %c0_i32_2 : i32, i32, i32, i32
  }
  func.func @transform_3(%arg0: i32, %arg1: i32) -> (i32, i32) {
    %c0_i32 = arith.constant 0 : i32
    %c0_i32_0 = arith.constant 0 : i32
    %c0_i32_1 = arith.constant 0 : i32
    return %c0_i32, %c0_i32_0 : i32, i32
  }
  func.func @transform_4(%arg0: i32, %arg1: i32) -> (i32, i32) {
    %c0_i32 = arith.constant 0 : i32
    %c0_i32_0 = arith.constant 0 : i32
    %c0_i32_1 = arith.constant 0 : i32
    return %c0_i32, %c0_i32_0 : i32, i32
  }
  func.func @transform_5(%arg0: i32, %arg1: i32) -> (i32, i32) {
    %c0_i32 = arith.constant 0 : i32
    %c0_i32_0 = arith.constant 0 : i32
    %c0_i32_1 = arith.constant 0 : i32
    return %c0_i32, %c0_i32_0 : i32, i32
  }
  func.func @transform_6(%arg0: i32, %arg1: i32) -> (i32, i32) {
    %c0_i32 = arith.constant 0 : i32
    %c0_i32_0 = arith.constant 0 : i32
    %c0_i32_1 = arith.constant 0 : i32
    return %c0_i32, %c0_i32_0 : i32, i32
  }
  func.func @transform_7(%arg0: i32, %arg1: i32) -> (i32, i32) {
    %c0_i32 = arith.constant 0 : i32
    %c0_i32_0 = arith.constant 0 : i32
    %c0_i32_1 = arith.constant 0 : i32
    return %c0_i32, %c0_i32_0 : i32, i32
  }
  func.func @transform_8(%arg0: i32, %arg1: i32) -> (i32, i32, i32, i32) {
    %c0_i32 = arith.constant 0 : i32
    %c0_i32_0 = arith.constant 0 : i32
    %c0_i32_1 = arith.constant 0 : i32
    return %arg0, %arg1, %c0_i32, %c0_i32_0 : i32, i32, i32, i32
  }
  func.func @transform_9(%arg0: i32, %arg1: i32) -> (i32, i32, i32, i32) {
    %c0_i32 = arith.constant 0 : i32
    %c0_i32_0 = arith.constant 0 : i32
    %c0_i32_1 = arith.constant 0 : i32
    return %arg0, %arg1, %c0_i32, %c0_i32_0 : i32, i32, i32, i32
  }
}

</mosaic_0001>

<llo_original>
// kernel: cff_block_forward.1
$region0: #{cff_block_forward.1}
  #allocation0 [shape = 'u32[]', space=smem, size = 0x4, offset = 0x4, fixed_abs, tag = 'smem constant byte address 0x4 - core index']
  #allocation1 [shape = 'u32[144,128]{1,0:T(1,128)}', space=vmem, size = 0x12000, scoped, tag = 'internal scratch']
  #allocation2 [shape = 'bf16[20,20,4]{2,1,0:T(8,128)(2,1)}', space=vmem, size = 0x1e000, scoped, tag = 'scratch operand']
  %s0 = inlined_call_operand.vmem [shape: bf16[2,8,20,4], index: 0, kind: input, shape index: {}]
  %s1 = inlined_call_operand.vmem [shape: bf16[2,16,16,8], index: 1, kind: input, shape index: {}]
  %s2 = inlined_call_operand.vmem [shape: bf16[3,3,4,128], index: 2, kind: input, shape index: {}]
  %s3 = inlined_call_operand.vmem [shape: f32[1,128], index: 3, kind: input, shape index: {}]
  %s4 = inlined_call_operand.vmem [shape: bf16[8,128], index: 4, kind: input, shape index: {}]
  %s5 = inlined_call_operand.vmem [shape: f32[1,128], index: 5, kind: input, shape index: {}]
  %s6 = inlined_call_operand.vmem [shape: bf16[128,8], index: 6, kind: input, shape index: {}]
  %s7 = inlined_call_operand.vmem [shape: f32[1,8], index: 7, kind: input, shape index: {}]
  %s8 = inlined_call_operand.vmem [shape: bf16[2,16,16,128], index: 8, kind: output, shape index: {0}]
  %s9 = inlined_call_operand.vmem [shape: bf16[2,16,16,8], index: 9, kind: output, shape index: {1}]
  %10 = xla_tuple %s8, %s9
  %s11 = sld [smem:[#allocation0]]
  $region73: #{cff_block_forward.1} parent=0
    _
  %s13 = ssub.s32 1, %s11
  %s14 = scalar_select 0, %s13, %s11
  loop: start=0, step=1, limit=4
  $region2: #{cff_block_forward.1} parent=0 // loop_pre_header
    _
  $region3: #{cff_block_forward.1} parent=0 // loop_header
    %s16 = sphi 0, %s20
    %p17 = scmp.ge.s32.totalorder %s16, 4
    %s23 = sphi 0, %s35
    %s24 = sphi 0, %s31
    %s25 = sphi 0, %s23
    %s26 = sphi 0, %s24
    %s27 = sphi 0, %s25
    %s28 = sphi 0, %s26
    %s38 = sphi 0, %s40
    %s41 = sphi 0, %s38
    %s42 = sphi 0, %s41
    %s58 = sphi 0, %s42
    %s66 = sphi 0, %s68
    %s69 = sphi 0, %s66
    %s70 = sphi 0, %s69
    %s86 = sphi 0, %s70
    %s90 = sphi 0, %s90
    %s92 = sphi 0, %s90
    %s93 = sphi 0, %s92
    %s107 = sphi 0, %s93
    %s111 = sphi 0, %s111
    %s113 = sphi 0, %s111
    %s114 = sphi 0, %s113
    %s128 = sphi 0, %s114
    %s132 = sphi 0, %s132
    %s134 = sphi 0, %s132
    %s135 = sphi 0, %s134
    %s149 = sphi 0, %s135
    %s153 = sphi 0, %s153
    %s155 = sphi 0, %s153
    %s156 = sphi 0, %s155
    %s170 = sphi 0, %s156
    %s174 = sphi 0, %s174
    %s176 = sphi 0, %s174
    %s177 = sphi 0, %s176
    %s191 = sphi 0, %s177
    %s195 = sphi 0, %s195
    %s197 = sphi 0, %s195
    %s198 = sphi 0, %s197
    %s212 = sphi 0, %s198
    %s220 = sphi 0, %s222
    %s223 = sphi 0, %s220
    %s224 = sphi 0, %s223
    %s240 = sphi 0, %s224
    %s248 = sphi 0, %s250
    %s251 = sphi 0, %s248
    %s252 = sphi 0, %s251
    %s268 = sphi 0, %s252
  $region4: #{cff_block_forward.1} parent=0 // loop_header_branch
    %19 = sbr.rel (%p17) target = $region8
  $region5: #{cff_block_forward.1} parent=0 // loop_body
    %s21 = ssub.s32 %s16, 1
    %s22 = ssub.s32 %s16, 2
    %s29 = sadd.s32 1, %s24
    %p30 = scmp.ge.s32.totalorder %s29, 1
    %s31 = scalar_select %p30, 0, %s29
    %s32 = sadd.s32 1, %s23
    %s33 = scalar_select %p30, %s32, %s23
    %p34 = scmp.ge.s32.totalorder %s33, 2
    %s35 = scalar_select %p34, 0, %s33
    %s36 = ssub.s32 %s23, %s35
    %p37 = scmp.eq.s32.totalorder %s36, 0
    %s39 = sadd.s32 %s38, 1
    %s40 = scalar_select %p37, %s38, %s39
    %p43 = pneg %p37
    %p44 = scmp.eq.s32.totalorder %s16, 1
    %p45 = por %p43, %p44
    %p46 = scmp.ne.s32.totalorder %s38, %s41
    %p47 = scmp.eq.s32.totalorder %s16, 0
    %p48 = por %p46, %p47
    %p49 = scmp.ne.s32.totalorder %s38, %s41
    %p50 = scmp.eq.s32.totalorder %s21, 1
    %p51 = por %p49, %p50
    %p52 = scmp.ne.s32.totalorder %s41, %s42
    %p53 = scmp.eq.s32.totalorder %s21, 0
    %p54 = por %p52, %p53
    %p55 = scmp.ne.s32.totalorder %s41, %s42
    %p56 = scmp.eq.s32.totalorder %s22, 1
    %p57 = por %p55, %p56
    %p59 = scmp.ne.s32.totalorder %s42, %s58
    %p60 = scmp.eq.s32.totalorder %s22, 0
    %p61 = por %p59, %p60
    %s62 = ssub.s32 %s23, %s35
    %s63 = ssub.s32 %s24, %s31
    %s64 = sor.u32 %s62, %s63
    %p65 = scmp.eq.s32.totalorder %s64, 0
    %s67 = sadd.s32 %s66, 1
    %s68 = scalar_select %p65, %s66, %s67
    %p71 = pneg %p65
    %p72 = scmp.eq.s32.totalorder %s16, 1
    %p73 = por %p71, %p72
    %p74 = scmp.ne.s32.totalorder %s66, %s69
    %p75 = scmp.eq.s32.totalorder %s16, 0
    %p76 = por %p74, %p75
    %p77 = scmp.ne.s32.totalorder %s66, %s69
    %p78 = scmp.eq.s32.totalorder %s21, 1
    %p79 = por %p77, %p78
    %p80 = scmp.ne.s32.totalorder %s69, %s70
    %p81 = scmp.eq.s32.totalorder %s21, 0
    %p82 = por %p80, %p81
    %p83 = scmp.ne.s32.totalorder %s69, %s70
    %p84 = scmp.eq.s32.totalorder %s22, 1
    %p85 = por %p83, %p84
    %p87 = scmp.ne.s32.totalorder %s70, %s86
    %p88 = scmp.eq.s32.totalorder %s22, 0
    %p89 = por %p87, %p88
    %s91 = sadd.s32 %s90, 1
    %p94 = scmp.eq.s32.totalorder %s16, 1
    %p95 = scmp.ne.s32.totalorder %s90, %s92
    %p96 = scmp.eq.s32.totalorder %s16, 0
    %p97 = por %p95, %p96
    %p98 = scmp.ne.s32.totalorder %s90, %s92
    %p99 = scmp.eq.s32.totalorder %s21, 1
    %p100 = por %p98, %p99
    %p101 = scmp.ne.s32.totalorder %s92, %s93
    %p102 = scmp.eq.s32.totalorder %s21, 0
    %p103 = por %p101, %p102
    %p104 = scmp.ne.s32.totalorder %s92, %s93
    %p105 = scmp.eq.s32.totalorder %s22, 1
    %p106 = por %p104, %p105
    %p108 = scmp.ne.s32.totalorder %s93, %s107
    %p109 = scmp.eq.s32.totalorder %s22, 0
    %p110 = por %p108, %p109
    %s112 = sadd.s32 %s111, 1
    %p115 = scmp.eq.s32.totalorder %s16, 1
    %p116 = scmp.ne.s32.totalorder %s111, %s113
    %p117 = scmp.eq.s32.totalorder %s16, 0
    %p118 = por %p116, %p117
    %p119 = scmp.ne.s32.totalorder %s111, %s113
    %p120 = scmp.eq.s32.totalorder %s21, 1
    %p121 = por %p119, %p120
    %p122 = scmp.ne.s32.totalorder %s113, %s114
    %p123 = scmp.eq.s32.totalorder %s21, 0
    %p124 = por %p122, %p123
    %p125 = scmp.ne.s32.totalorder %s113, %s114
    %p126 = scmp.eq.s32.totalorder %s22, 1
    %p127 = por %p125, %p126
    %p129 = scmp.ne.s32.totalorder %s114, %s128
    %p130 = scmp.eq.s32.totalorder %s22, 0
    %p131 = por %p129, %p130
    %s133 = sadd.s32 %s132, 1
    %p136 = scmp.eq.s32.totalorder %s16, 1
    %p137 = scmp.ne.s32.totalorder %s132, %s134
    %p138 = scmp.eq.s32.totalorder %s16, 0
    %p139 = por %p137, %p138
    %p140 = scmp.ne.s32.totalorder %s132, %s134
    %p141 = scmp.eq.s32.totalorder %s21, 1
    %p142 = por %p140, %p141
    %p143 = scmp.ne.s32.totalorder %s134, %s135
    %p144 = scmp.eq.s32.totalorder %s21, 0
    %p145 = por %p143, %p144
    %p146 = scmp.ne.s32.totalorder %s134, %s135
    %p147 = scmp.eq.s32.totalorder %s22, 1
    %p148 = por %p146, %p147
    %p150 = scmp.ne.s32.totalorder %s135, %s149
    %p151 = scmp.eq.s32.totalorder %s22, 0
    %p152 = por %p150, %p151
    %s154 = sadd.s32 %s153, 1
    %p157 = scmp.eq.s32.totalorder %s16, 1
    %p158 = scmp.ne.s32.totalorder %s153, %s155
    %p159 = scmp.eq.s32.totalorder %s16, 0
    %p160 = por %p158, %p159
    %p161 = scmp.ne.s32.totalorder %s153, %s155
    %p162 = scmp.eq.s32.totalorder %s21, 1
    %p163 = por %p161, %p162
    %p164 = scmp.ne.s32.totalorder %s155, %s156
    %p165 = scmp.eq.s32.totalorder %s21, 0
    %p166 = por %p164, %p165
    %p167 = scmp.ne.s32.totalorder %s155, %s156
    %p168 = scmp.eq.s32.totalorder %s22, 1
    %p169 = por %p167, %p168
    %p171 = scmp.ne.s32.totalorder %s156, %s170
    %p172 = scmp.eq.s32.totalorder %s22, 0
    %p173 = por %p171, %p172
    %s175 = sadd.s32 %s174, 1
    %p178 = scmp.eq.s32.totalorder %s16, 1
    %p179 = scmp.ne.s32.totalorder %s174, %s176
    %p180 = scmp.eq.s32.totalorder %s16, 0
    %p181 = por %p179, %p180
    %p182 = scmp.ne.s32.totalorder %s174, %s176
    %p183 = scmp.eq.s32.totalorder %s21, 1
    %p184 = por %p182, %p183
    %p185 = scmp.ne.s32.totalorder %s176, %s177
    %p186 = scmp.eq.s32.totalorder %s21, 0
    %p187 = por %p185, %p186
    %p188 = scmp.ne.s32.totalorder %s176, %s177
    %p189 = scmp.eq.s32.totalorder %s22, 1
    %p190 = por %p188, %p189
    %p192 = scmp.ne.s32.totalorder %s177, %s191
    %p193 = scmp.eq.s32.totalorder %s22, 0
    %p194 = por %p192, %p193
    %s196 = sadd.s32 %s195, 1
    %p199 = scmp.eq.s32.totalorder %s16, 1
    %p200 = scmp.ne.s32.totalorder %s195, %s197
    %p201 = scmp.eq.s32.totalorder %s16, 0
    %p202 = por %p200, %p201
    %p203 = scmp.ne.s32.totalorder %s195, %s197
    %p204 = scmp.eq.s32.totalorder %s21, 1
    %p205 = por %p203, %p204
    %p206 = scmp.ne.s32.totalorder %s197, %s198
    %p207 = scmp.eq.s32.totalorder %s21, 0
    %p208 = por %p206, %p207
    %p209 = scmp.ne.s32.totalorder %s197, %s198
    %p210 = scmp.eq.s32.totalorder %s22, 1
    %p211 = por %p209, %p210
    %p213 = scmp.ne.s32.totalorder %s198, %s212
    %p214 = scmp.eq.s32.totalorder %s22, 0
    %p215 = por %p213, %p214
    %s216 = ssub.s32 %s23, %s35
    %s217 = ssub.s32 %s24, %s31
    %s218 = sor.u32 %s216, %s217
    %p219 = scmp.eq.s32.totalorder %s218, 0
    %s221 = sadd.s32 %s220, 1
    %s222 = scalar_select %p219, %s220, %s221
    %p225 = pneg %p219
    %p226 = scmp.eq.s32.totalorder %s16, 1
    %p227 = por %p225, %p226
    %p228 = scmp.ne.s32.totalorder %s220, %s223
    %p229 = scmp.eq.s32.totalorder %s16, 0
    %p230 = por %p228, %p229
    %p231 = scmp.ne.s32.totalorder %s220, %s223
    %p232 = scmp.eq.s32.totalorder %s21, 1
    %p233 = por %p231, %p232
    %p234 = scmp.ne.s32.totalorder %s223, %s224
    %p235 = scmp.eq.s32.totalorder %s21, 0
    %p236 = por %p234, %p235
    %p237 = scmp.ne.s32.totalorder %s223, %s224
    %p238 = scmp.eq.s32.totalorder %s22, 1
    %p239 = por %p237, %p238
    %p241 = scmp.ne.s32.totalorder %s224, %s240
    %p242 = scmp.eq.s32.totalorder %s22, 0
    %p243 = por %p241, %p242
    %s244 = ssub.s32 %s23, %s35
    %s245 = ssub.s32 %s24, %s31
    %s246 = sor.u32 %s244, %s245
    %p247 = scmp.eq.s32.totalorder %s246, 0
    %s249 = sadd.s32 %s248, 1
    %s250 = scalar_select %p247, %s248, %s249
    %p253 = pneg %p247
    %p254 = scmp.eq.s32.totalorder %s16, 1
    %p255 = por %p253, %p254
    %p256 = scmp.ne.s32.totalorder %s248, %s251
    %p257 = scmp.eq.s32.totalorder %s16, 0
    %p258 = por %p256, %p257
    %p259 = scmp.ne.s32.totalorder %s248, %s251
    %p260 = scmp.eq.s32.totalorder %s21, 1
    %p261 = por %p259, %p260
    %p262 = scmp.ne.s32.totalorder %s251, %s252
    %p263 = scmp.eq.s32.totalorder %s21, 0
    %p264 = por %p262, %p263
    %p265 = scmp.ne.s32.totalorder %s251, %s252
    %p266 = scmp.eq.s32.totalorder %s22, 1
    %p267 = por %p265, %p266
    %p269 = scmp.ne.s32.totalorder %s252, %s268
    %p270 = scmp.eq.s32.totalorder %s22, 0
    %p271 = por %p269, %p270
    %p272 = scmp.le.s32.totalorder 1, %s16
    %p273 = scmp.lt.s32.totalorder %s16, 3
    %p274 = pnand %p272, %p273
    %p275 = pneg %p274
    // Predicated region
    $region9: #{cff_block_forward.1} parent=5 // pred_check
      _
    $region10: #{cff_block_forward.1} parent=5 // pred_check_branch
      %277 = sbr.rel (%p274) target = $region12
    $region11: #{cff_block_forward.1} parent=5 // pred_region
      %s278 = ssub.s32 %s16, 1
      // Predicated region
      $region13: #{cff_block_forward.1} parent=11 // pred_check
        %p279 = pneg %p103
      $region14: #{cff_block_forward.1} parent=11 // pred_check_branch
        %281 = sbr.rel (%p279) target = $region16
      $region15: #{cff_block_forward.1} parent=11 // pred_region
        _
      $region16: #{cff_block_forward.1} parent=11 // pred_fallthru
        _
      // Predicated region
      $region17: #{cff_block_forward.1} parent=11 // pred_check
        %p282 = pneg %p124
      $region18: #{cff_block_forward.1} parent=11 // pred_check_branch
        %284 = sbr.rel (%p282) target = $region20
      $region19: #{cff_block_forward.1} parent=11 // pred_region
        _
      $region20: #{cff_block_forward.1} parent=11 // pred_fallthru
        _
      // Predicated region
      $region21: #{cff_block_forward.1} parent=11 // pred_check
        %p285 = pneg %p145
      $region22: #{cff_block_forward.1} parent=11 // pred_check_branch
        %287 = sbr.rel (%p285) target = $region24
      $region23: #{cff_block_forward.1} parent=11 // pred_region
        _
      $region24: #{cff_block_forward.1} parent=11 // pred_fallthru
        _
      // Predicated region
      $region25: #{cff_block_forward.1} parent=11 // pred_check
        %p288 = pneg %p166
      $region26: #{cff_block_forward.1} parent=11 // pred_check_branch
        %290 = sbr.rel (%p288) target = $region28
      $region27: #{cff_block_forward.1} parent=11 // pred_region
        _
      $region28: #{cff_block_forward.1} parent=11 // pred_fallthru
        _
      // Predicated region
      $region29: #{cff_block_forward.1} parent=11 // pred_check
        %p291 = pneg %p187
      $region30: #{cff_block_forward.1} parent=11 // pred_check_branch
        %293 = sbr.rel (%p291) target = $region32
      $region31: #{cff_block_forward.1} parent=11 // pred_region
        _
      $region32: #{cff_block_forward.1} parent=11 // pred_fallthru
        _
      // Predicated region
      $region33: #{cff_block_forward.1} parent=11 // pred_check
        %p294 = pneg %p208
      $region34: #{cff_block_forward.1} parent=11 // pred_check_branch
        %296 = sbr.rel (%p294) target = $region36
      $region35: #{cff_block_forward.1} parent=11 // pred_region
        _
      $region36: #{cff_block_forward.1} parent=11 // pred_fallthru
        _
    $region12: #{cff_block_forward.1} parent=5 // pred_fallthru
      _
    %p297 = scmp.lt.s32.totalorder %s16, 2
    // Predicated region
    $region37: #{cff_block_forward.1} parent=5 // pred_check
      %p298 = pneg %p297
    $region38: #{cff_block_forward.1} parent=5 // pred_check_branch
      %300 = sbr.rel (%p298) target = $region40
    $region39: #{cff_block_forward.1} parent=5 // pred_region
      // Predicated region
      $region41: #{cff_block_forward.1} parent=39 // pred_check
        %p301 = pneg %p48
      $region42: #{cff_block_forward.1} parent=39 // pred_check_branch
        %303 = sbr.rel (%p301) target = $region44
      $region43: #{cff_block_forward.1} parent=39 // pred_region
        %p304 = scmp.lt.s32.totalorder %s23, 1
        %s305 = scalar_select %p304, %s23, 1
        %s306 = smul.addr %s305, 24
        %s307 = smul.addr %s306, 4
        %s308 = scalar_lea.vmem %s0, %s307
      $region44: #{cff_block_forward.1} parent=39 // pred_fallthru
        _
      // Predicated region
      $region45: #{cff_block_forward.1} parent=39 // pred_check
        %p309 = pneg %p76
      $region46: #{cff_block_forward.1} parent=39 // pred_check_branch
        %311 = sbr.rel (%p309) target = $region48
      $region47: #{cff_block_forward.1} parent=39 // pred_region
        %s312 = smul.u32 16, %s24
        %p313 = scmp.lt.s32.totalorder %s23, 1
        %s314 = scalar_select %p313, %s23, 1
        %p315 = scmp.lt.s32.totalorder %s312, 15
        %s316 = scalar_select %p315, %s312, 15
        %s317 = smul.addr %s316, 2
        %s318 = smul.addr %s314, 32
        %s319 = sadd.s32 %s317, %s318
        %s320 = smul.addr %s319, 4
        %s321 = scalar_lea.vmem %s1, %s320
        %s322 = smul.u32 16, %s24
      $region48: #{cff_block_forward.1} parent=39 // pred_fallthru
        _
    $region40: #{cff_block_forward.1} parent=5 // pred_fallthru
      _
    %p323 = scmp.le.s32.totalorder 1, %s16
    %p324 = scmp.lt.s32.totalorder %s16, 3
    %p325 = pnand %p323, %p324
    %p326 = pneg %p325
    // Predicated region
    $region49: #{cff_block_forward.1} parent=5 // pred_check
      _
    $region50: #{cff_block_forward.1} parent=5 // pred_check_branch
      %328 = sbr.rel (%p325) target = $region52
    $region51: #{cff_block_forward.1} parent=5 // pred_region
      %s329 = ssub.s32 %s16, 1
      %p330 = scmp.lt.s32.totalorder %s25, 1
      %s331 = scalar_select %p330, %s25, 1
      %s332 = smul.addr %s331, 24
      %s333 = smul.addr %s332, 4
      %s334 = scalar_lea.vmem %s0, %s333
      %p335 = pneg %p54
      %p336 = pneg %p51
      %s337 = smul.u32 16, %s26
      %p338 = scmp.lt.s32.totalorder %s25, 1
      %s339 = scalar_select %p338, %s25, 1
      %p340 = scmp.lt.s32.totalorder %s337, 15
      %s341 = scalar_select %p340, %s337, 15
      %s342 = smul.addr %s341, 2
      %s343 = smul.addr %s339, 32
      %s344 = sadd.s32 %s342, %s343
      %s345 = smul.addr %s344, 4
      %s346 = scalar_lea.vmem %s1, %s345
      %p347 = pneg %p82
      %p348 = pneg %p79
      %p349 = pneg %p103
      %p350 = pneg %p100
      %p351 = pneg %p124
      %p352 = pneg %p121
      %p353 = pneg %p145
      %p354 = pneg %p142
      %p355 = pneg %p166
      %p356 = pneg %p163
      %p357 = pneg %p187
      %p358 = pneg %p184
      %p359 = pneg %p208
      %p360 = pneg %p205
      %p361 = pneg %p236
      %p362 = pneg %p233
      %s363 = smul.u32 16, %s26
      %p364 = scmp.lt.s32.totalorder %s25, 1
      %s365 = scalar_select %p364, %s25, 1
      %p366 = scmp.lt.s32.totalorder %s363, 15
      %s367 = scalar_select %p366, %s363, 15
      %s368 = smul.addr %s367, 2
      %s369 = smul.addr %s365, 32
      %s370 = sadd.s32 %s368, %s369
      %s371 = smul.addr %s370, 4
      %s372 = scalar_lea.vmem %s8, %s371
      %p373 = pneg %p264
      %p374 = pneg %p261
      %s375 = smul.u32 16, %s26
      %p376 = scmp.lt.s32.totalorder %s25, 1
      %s377 = scalar_select %p376, %s25, 1
      %p378 = scmp.lt.s32.totalorder %s375, 15
      %s379 = scalar_select %p378, %s375, 15
      %s380 = smul.addr %s379, 2
      %s381 = smul.addr %s377, 32
      %s382 = sadd.s32 %s380, %s381
      %s383 = smul.addr %s382, 4
      %s384 = scalar_lea.vmem %s9, %s383
      %p385 = scmp.lt.s32.totalorder %s25, 1
      %s386 = scalar_select %p385, %s25, 1
      %s387 = smul.addr %s386, 24
      %s388 = smul.addr %s387, 4
      %s389 = scalar_lea.vmem %s0, %s388
      %s390 = smul.u32 16, %s26
      %p391 = scmp.lt.s32.totalorder %s25, 1
      %s392 = scalar_select %p391, %s25, 1
      %p393 = scmp.lt.s32.totalorder %s390, 15
      %s394 = scalar_select %p393, %s390, 15
      %s395 = smul.addr %s394, 2
      %s396 = smul.addr %s392, 32
      %s397 = sadd.s32 %s395, %s396
      %s398 = smul.addr %s397, 4
      %s399 = scalar_lea.vmem %s1, %s398
      %s400 = smul.u32 16, %s26
      %s401 = smul.u32 16, %s26
      %p402 = scmp.lt.s32.totalorder %s25, 1
      %s403 = scalar_select %p402, %s25, 1
      %p404 = scmp.lt.s32.totalorder %s401, 15
      %s405 = scalar_select %p404, %s401, 15
      %s406 = smul.addr %s405, 2
      %s407 = smul.addr %s403, 32
      %s408 = sadd.s32 %s406, %s407
      %s409 = smul.addr %s408, 4
      %s410 = scalar_lea.vmem %s8, %s409
      %s411 = smul.u32 16, %s26
      %s412 = smul.u32 16, %s26
      %p413 = scmp.lt.s32.totalorder %s25, 1
      %s414 = scalar_select %p413, %s25, 1
      %p415 = scmp.lt.s32.totalorder %s412, 15
      %s416 = scalar_select %p415, %s412, 15
      %s417 = smul.addr %s416, 2
      %s418 = smul.addr %s414, 32
      %s419 = sadd.s32 %s417, %s418
      %s420 = smul.addr %s419, 4
      %s421 = scalar_lea.vmem %s9, %s420
      %s422 = smul.u32 16, %s26
      %s424 = smul.u32 %s26, 16
      %p425 = scmp.ge.s32.totalorder %s424, 2
      %p426 = scmp.lt.s32.totalorder %s424, 18
      %p427 = pnand %p425, %p426
      %p428 = pneg %p427
      %s429 = scalar_select %p428, 1.0, 0.0
      %s430 = sadd.s32 %s424, 4294967294
      %p431 = scmp.gt.s32.totalorder %s430, 0
      %s432 = scalar_select %p431, %s430, 0
      %p433 = scmp.lt.s32.totalorder %s432, 15
      %s434 = scalar_select %p433, %s432, 15
      %s435 = scvt.s32.f32 %s434
      %s436 = smul.f32 %s435, 0.46666667
      %s437 = sfloor.f32 %s436
      %s438 = scvt.f32.s32.to.zero.pseudo %s437
      %s439 = sadd.s32 %s438, 1
      %p440 = scmp.lt.s32.totalorder %s439, 7
      %s441 = scalar_select %p440, %s439, 7
      %s442 = ssub.f32 %s436, %s437
      %s443 = smul.f32 %s442, %s429
      %s444 = ssub.f32 %s429, %s443
      %s445 = smul.u32 %s438, 3
      %s446 = smul.addr %s445, 4
      %s447 = scalar_lea.vmem %s389, %s446
      %v448 = vld [vmem:[%s447] sm:$0xf]
      %v449 = vld [vmem:[%s447 + $0x4] sm:$0xf]
      %v450 = vld [vmem:[%s447 + $0x8] sm:$0x3]
      %v451 = vunpack.c.l.bf16 %v448
      %v452 = vunpack.c.l.bf16 %v449
      %v453 = vunpack.c.l.bf16 %v450
      %v454 = vstv %s444
      %v455 = vmul.f32 %v451, %v454
      %v456 = vmul.f32 %v452, %v454
      %v457 = vmul.f32 %v453, %v454
      %s458 = smul.u32 %s441, 3
      %s459 = smul.addr %s458, 4
      %s460 = scalar_lea.vmem %s389, %s459
      %v461 = vld [vmem:[%s460] sm:$0xf]
      %v462 = vld [vmem:[%s460 + $0x4] sm:$0xf]
      %v463 = vld [vmem:[%s460 + $0x8] sm:$0x3]
      %v464 = vunpack.c.l.bf16 %v461
      %v465 = vunpack.c.l.bf16 %v462
      %v466 = vunpack.c.l.bf16 %v463
      %v467 = vstv %s443
      %v468 = vmul.f32 %v464, %v467
      %v469 = vmul.f32 %v465, %v467
      %v470 = vmul.f32 %v466, %v467
      %v471 = vadd.f32 %v455, %v468
      %v472 = vadd.f32 %v456, %v469
      %v473 = vadd.f32 %v457, %v470
      %v474 = vpack.c.bf16 %v472, %v471
      %v475 = vpack.c.bf16 %v473, %v473
      %v478 = vunpack.c.l.b16 %v474
      %v479 = vunpack.c.h.b16 %v474
      %v480 = vunpack.c.l.b16 %v475
      %v481 = vpack.c.b16 %v478, %v478
      %v482 = vpack.c.b16 %v479, %v479
      %v483 = vpack.c.b16 %v480, %v480
      %vm487 = vcmask 27648
      %488 = vst.msk [vmem:[#allocation2] sm:$0xf] %vm487, %v481
      %489 = vst.msk [vmem:[#allocation2 + $0x4] sm:$0xf] %vm487, %v482
      %vm490 = vcmask 25600
      %491 = vst.msk [vmem:[#allocation2 + $0x8] sm:$0x3] %vm490, %v483
      %s492 = sadd.s32 %s424, 1
      %p493 = scmp.ge.s32.totalorder %s492, 2
      %p494 = scmp.lt.s32.totalorder %s492, 18
      %p495 = pnand %p493, %p494
      %p496 = pneg %p495
      %s497 = scalar_select %p496, 1.0, 0.0
      %s498 = sadd.s32 %s424, 4294967295
      %p499 = scmp.gt.s32.totalorder %s498, 0
      %s500 = scalar_select %p499, %s498, 0
      %p501 = scmp.lt.s32.totalorder %s500, 15
      %s502 = scalar_select %p501, %s500, 15
      %s503 = scvt.s32.f32 %s502
      %s504 = smul.f32 %s503, 0.46666667
      %s505 = sfloor.f32 %s504
      %s506 = scvt.f32.s32.to.zero.pseudo %s505
      %s507 = sadd.s32 %s506, 1
      %p508 = scmp.lt.s32.totalorder %s507, 7
      %s509 = scalar_select %p508, %s507, 7
      %s510 = ssub.f32 %s504, %s505
      %s511 = smul.f32 %s510, %s497
      %s512 = ssub.f32 %s497, %s511
      %s513 = smul.u32 %s506, 3
      %s514 = smul.addr %s513, 4
      %s515 = scalar_lea.vmem %s389, %s514
      %v516 = vld [vmem:[%s515] sm:$0xf]
      %v517 = vld [vmem:[%s515 + $0x4] sm:$0xf]
      %v518 = vld [vmem:[%s515 + $0x8] sm:$0x3]
      %v519 = vunpack.c.l.bf16 %v516
      %v520 = vunpack.c.l.bf16 %v517
      %v521 = vunpack.c.l.bf16 %v518
      %v522 = vstv %s512
      %v523 = vmul.f32 %v519, %v522
      %v524 = vmul.f32 %v520, %v522
      %v525 = vmul.f32 %v521, %v522
      %s526 = smul.u32 %s509, 3
      %s527 = smul.addr %s526, 4
      %s528 = scalar_lea.vmem %s389, %s527
      %v529 = vld [vmem:[%s528] sm:$0xf]
      %v530 = vld [vmem:[%s528 + $0x4] sm:$0xf]
      %v531 = vld [vmem:[%s528 + $0x8] sm:$0x3]
      %v532 = vunpack.c.l.bf16 %v529
      %v533 = vunpack.c.l.bf16 %v530
      %v534 = vunpack.c.l.bf16 %v531
      %v535 = vstv %s511
      %v536 = vmul.f32 %v532, %v535
      %v537 = vmul.f32 %v533, %v535
      %v538 = vmul.f32 %v534, %v535
      %v539 = vadd.f32 %v523, %v536
      %v540 = vadd.f32 %v524, %v537
      %v541 = vadd.f32 %v525, %v538
      %v542 = vpack.c.bf16 %v540, %v539
      %v543 = vpack.c.bf16 %v541, %v541
      %v546 = vunpack.c.l.b16 %v542
      %v547 = vunpack.c.h.b16 %v542
      %v548 = vunpack.c.l.b16 %v543
      %v549 = vpack.c.b16 %v546, %v546
      %v550 = vpack.c.b16 %v547, %v547
      %v551 = vpack.c.b16 %v548, %v548
      %s555 = scalar_lea.vmem [#allocation2], 12
      %556 = vst.msk [vmem:[%s555] sm:$0xf] %vm487, %v549
      %557 = vst.msk [vmem:[%s555 + $0x4] sm:$0xf] %vm487, %v550
      %558 = vst.msk [vmem:[%s555 + $0x8] sm:$0x3] %vm490, %v551
      %s559 = sadd.s32 %s424, 2
      %p560 = scmp.ge.s32.totalorder %s559, 2
      %p561 = scmp.lt.s32.totalorder %s559, 18
      %p562 = pnand %p560, %p561
      %p563 = pneg %p562
      %s564 = scalar_select %p563, 1.0, 0.0
      %p565 = scmp.gt.s32.totalorder %s424, 0
      %s566 = scalar_select %p565, %s424, 0
      %p567 = scmp.lt.s32.totalorder %s566, 15
      %s568 = scalar_select %p567, %s566, 15
      %s569 = scvt.s32.f32 %s568
      %s570 = smul.f32 %s569, 0.46666667
      %s571 = sfloor.f32 %s570
      %s572 = scvt.f32.s32.to.zero.pseudo %s571
      %s573 = sadd.s32 %s572, 1
      %p574 = scmp.lt.s32.totalorder %s573, 7
      %s575 = scalar_select %p574, %s573, 7
      %s576 = ssub.f32 %s570, %s571
      %s577 = smul.f32 %s576, %s564
      %s578 = ssub.f32 %s564, %s577
      %s579 = smul.u32 %s572, 3
      %s580 = smul.addr %s579, 4
      %s581 = scalar_lea.vmem %s389, %s580
      %v582 = vld [vmem:[%s581] sm:$0xf]
      %v583 = vld [vmem:[%s581 + $0x4] sm:$0xf]
      %v584 = vld [vmem:[%s581 + $0x8] sm:$0x3]
      %v585 = vunpack.c.l.bf16 %v582
      %v586 = vunpack.c.l.bf16 %v583
      %v587 = vunpack.c.l.bf16 %v584
      %v588 = vstv %s578
      %v589 = vmul.f32 %v585, %v588
      %v590 = vmul.f32 %v586, %v588
      %v591 = vmul.f32 %v587, %v588
      %s592 = smul.u32 %s575, 3
      %s593 = smul.addr %s592, 4
      %s594 = scalar_lea.vmem %s389, %s593
      %v595 = vld [vmem:[%s594] sm:$0xf]
      %v596 = vld [vmem:[%s594 + $0x4] sm:$0xf]
      %v597 = vld [vmem:[%s594 + $0x8] sm:$0x3]
      %v598 = vunpack.c.l.bf16 %v595
      %v599 = vunpack.c.l.bf16 %v596
      %v600 = vunpack.c.l.bf16 %v597
      %v601 = vstv %s577
      %v602 = vmul.f32 %v598, %v601
      %v603 = vmul.f32 %v599, %v601
      %v604 = vmul.f32 %v600, %v601
      %v605 = vadd.f32 %v589, %v602
      %v606 = vadd.f32 %v590, %v603
      %v607 = vadd.f32 %v591, %v604
      %v608 = vpack.c.bf16 %v606, %v605
      %v609 = vpack.c.bf16 %v607, %v607
      %v612 = vunpack.c.l.b16 %v608
      %v613 = vunpack.c.h.b16 %v608
      %v614 = vunpack.c.l.b16 %v609
      %v615 = vpack.c.b16 %v612, %v612
      %v616 = vpack.c.b16 %v613, %v613
      %v617 = vpack.c.b16 %v614, %v614
      %s621 = scalar_lea.vmem [#allocation2], 24
      %622 = vst.msk [vmem:[%s621] sm:$0xf] %vm487, %v615
      %623 = vst.msk [vmem:[%s621 + $0x4] sm:$0xf] %vm487, %v616
      %624 = vst.msk [vmem:[%s621 + $0x8] sm:$0x3] %vm490, %v617
      %s625 = sadd.s32 %s424, 3
      %p626 = scmp.ge.s32.totalorder %s625, 2
      %p627 = scmp.lt.s32.totalorder %s625, 18
      %p628 = pnand %p626, %p627
      %p629 = pneg %p628
      %s630 = scalar_select %p629, 1.0, 0.0
      %p631 = scmp.gt.s32.totalorder %s492, 0
      %s632 = scalar_select %p631, %s492, 0
      %p633 = scmp.lt.s32.totalorder %s632, 15
      %s634 = scalar_select %p633, %s632, 15
      %s635 = scvt.s32.f32 %s634
      %s636 = smul.f32 %s635, 0.46666667
      %s637 = sfloor.f32 %s636
      %s638 = scvt.f32.s32.to.zero.pseudo %s637
      %s639 = sadd.s32 %s638, 1
      %p640 = scmp.lt.s32.totalorder %s639, 7
      %s641 = scalar_select %p640, %s639, 7
      %s642 = ssub.f32 %s636, %s637
      %s643 = smul.f32 %s642, %s630
      %s644 = ssub.f32 %s630, %s643
      %s645 = smul.u32 %s638, 3
      %s646 = smul.addr %s645, 4
      %s647 = scalar_lea.vmem %s389, %s646
      %v648 = vld [vmem:[%s647] sm:$0xf]
      %v649 = vld [vmem:[%s647 + $0x4] sm:$0xf]
      %v650 = vld [vmem:[%s647 + $0x8] sm:$0x3]
      %v651 = vunpack.c.l.bf16 %v648
      %v652 = vunpack.c.l.bf16 %v649
      %v653 = vunpack.c.l.bf16 %v650
      %v654 = vstv %s644
      %v655 = vmul.f32 %v651, %v654
      %v656 = vmul.f32 %v652, %v654
      %v657 = vmul.f32 %v653, %v654
      %s658 = smul.u32 %s641, 3
      %s659 = smul.addr %s658, 4
      %s660 = scalar_lea.vmem %s389, %s659
      %v661 = vld [vmem:[%s660] sm:$0xf]
      %v662 = vld [vmem:[%s660 + $0x4] sm:$0xf]
      %v663 = vld [vmem:[%s660 + $0x8] sm:$0x3]
      %v664 = vunpack.c.l.bf16 %v661
      %v665 = vunpack.c.l.bf16 %v662
      %v666 = vunpack.c.l.bf16 %v663
      %v667 = vstv %s643
      %v668 = vmul.f32 %v664, %v667
      %v669 = vmul.f32 %v665, %v667
      %v670 = vmul.f32 %v666, %v667
      %v671 = vadd.f32 %v655, %v668
      %v672 = vadd.f32 %v656, %v669
      %v673 = vadd.f32 %v657, %v670
      %v674 = vpack.c.bf16 %v672, %v671
      %v675 = vpack.c.bf16 %v673, %v673
      %v678 = vunpack.c.l.b16 %v674
      %v679 = vunpack.c.h.b16 %v674
      %v680 = vunpack.c.l.b16 %v675
      %v681 = vpack.c.b16 %v678, %v678
      %v682 = vpack.c.b16 %v679, %v679
      %v683 = vpack.c.b16 %v680, %v680
      %s687 = scalar_lea.vmem [#allocation2], 36
      %688 = vst.msk [vmem:[%s687] sm:$0xf] %vm487, %v681
      %689 = vst.msk [vmem:[%s687 + $0x4] sm:$0xf] %vm487, %v682
      %690 = vst.msk [vmem:[%s687 + $0x8] sm:$0x3] %vm490, %v683
      %s691 = sadd.s32 %s424, 4
      %p692 = scmp.ge.s32.totalorder %s691, 2
      %p693 = scmp.lt.s32.totalorder %s691, 18
      %p694 = pnand %p692, %p693
      %p695 = pneg %p694
      %s696 = scalar_select %p695, 1.0, 0.0
      %p697 = scmp.gt.s32.totalorder %s559, 0
      %s698 = scalar_select %p697, %s559, 0
      %p699 = scmp.lt.s32.totalorder %s698, 15
      %s700 = scalar_select %p699, %s698, 15
      %s701 = scvt.s32.f32 %s700
      %s702 = smul.f32 %s701, 0.46666667
      %s703 = sfloor.f32 %s702
      %s704 = scvt.f32.s32.to.zero.pseudo %s703
      %s705 = sadd.s32 %s704, 1
      %p706 = scmp.lt.s32.totalorder %s705, 7
      %s707 = scalar_select %p706, %s705, 7
      %s708 = ssub.f32 %s702, %s703
      %s709 = smul.f32 %s708, %s696
      %s710 = ssub.f32 %s696, %s709
      %s711 = smul.u32 %s704, 3
      %s712 = smul.addr %s711, 4
      %s713 = scalar_lea.vmem %s389, %s712
      %v714 = vld [vmem:[%s713] sm:$0xf]
      %v715 = vld [vmem:[%s713 + $0x4] sm:$0xf]
      %v716 = vld [vmem:[%s713 + $0x8] sm:$0x3]
      %v717 = vunpack.c.l.bf16 %v714
      %v718 = vunpack.c.l.bf16 %v715
      %v719 = vunpack.c.l.bf16 %v716
      %v720 = vstv %s710
      %v721 = vmul.f32 %v717, %v720
      %v722 = vmul.f32 %v718, %v720
      %v723 = vmul.f32 %v719, %v720
      %s724 = smul.u32 %s707, 3
      %s725 = smul.addr %s724, 4
      %s726 = scalar_lea.vmem %s389, %s725
      %v727 = vld [vmem:[%s726] sm:$0xf]
      %v728 = vld [vmem:[%s726 + $0x4] sm:$0xf]
      %v729 = vld [vmem:[%s726 + $0x8] sm:$0x3]
      %v730 = vunpack.c.l.bf16 %v727
      %v731 = vunpack.c.l.bf16 %v728
      %v732 = vunpack.c.l.bf16 %v729
      %v733 = vstv %s709
      %v734 = vmul.f32 %v730, %v733
      %v735 = vmul.f32 %v731, %v733
      %v736 = vmul.f32 %v732, %v733
      %v737 = vadd.f32 %v721, %v734
      %v738 = vadd.f32 %v722, %v735
      %v739 = vadd.f32 %v723, %v736
      %v740 = vpack.c.bf16 %v738, %v737
      %v741 = vpack.c.bf16 %v739, %v739
      %v744 = vunpack.c.l.b16 %v740
      %v745 = vunpack.c.h.b16 %v740
      %v746 = vunpack.c.l.b16 %v741
      %v747 = vpack.c.b16 %v744, %v744
      %v748 = vpack.c.b16 %v745, %v745
      %v749 = vpack.c.b16 %v746, %v746
      %s753 = scalar_lea.vmem [#allocation2], 48
      %754 = vst.msk [vmem:[%s753] sm:$0xf] %vm487, %v747
      %755 = vst.msk [vmem:[%s753 + $0x4] sm:$0xf] %vm487, %v748
      %756 = vst.msk [vmem:[%s753 + $0x8] sm:$0x3] %vm490, %v749
      %s757 = sadd.s32 %s424, 5
      %p758 = scmp.ge.s32.totalorder %s757, 2
      %p759 = scmp.lt.s32.totalorder %s757, 18
      %p760 = pnand %p758, %p759
      %p761 = pneg %p760
      %s762 = scalar_select %p761, 1.0, 0.0
      %p763 = scmp.gt.s32.totalorder %s625, 0
      %s764 = scalar_select %p763, %s625, 0
      %p765 = scmp.lt.s32.totalorder %s764, 15
      %s766 = scalar_select %p765, %s764, 15
      %s767 = scvt.s32.f32 %s766
      %s768 = smul.f32 %s767, 0.46666667
      %s769 = sfloor.f32 %s768
      %s770 = scvt.f32.s32.to.zero.pseudo %s769
      %s771 = sadd.s32 %s770, 1
      %p772 = scmp.lt.s32.totalorder %s771, 7
      %s773 = scalar_select %p772, %s771, 7
      %s774 = ssub.f32 %s768, %s769
      %s775 = smul.f32 %s774, %s762
      %s776 = ssub.f32 %s762, %s775
      %s777 = smul.u32 %s770, 3
      %s778 = smul.addr %s777, 4
      %s779 = scalar_lea.vmem %s389, %s778
      %v780 = vld [vmem:[%s779] sm:$0xf]
      %v781 = vld [vmem:[%s779 + $0x4] sm:$0xf]
      %v782 = vld [vmem:[%s779 + $0x8] sm:$0x3]
      %v783 = vunpack.c.l.bf16 %v780
      %v784 = vunpack.c.l.bf16 %v781
      %v785 = vunpack.c.l.bf16 %v782
      %v786 = vstv %s776
      %v787 = vmul.f32 %v783, %v786
      %v788 = vmul.f32 %v784, %v786
      %v789 = vmul.f32 %v785, %v786
      %s790 = smul.u32 %s773, 3
      %s791 = smul.addr %s790, 4
      %s792 = scalar_lea.vmem %s389, %s791
      %v793 = vld [vmem:[%s792] sm:$0xf]
      %v794 = vld [vmem:[%s792 + $0x4] sm:$0xf]
      %v795 = vld [vmem:[%s792 + $0x8] sm:$0x3]
      %v796 = vunpack.c.l.bf16 %v793
      %v797 = vunpack.c.l.bf16 %v794
      %v798 = vunpack.c.l.bf16 %v795
      %v799 = vstv %s775
      %v800 = vmul.f32 %v796, %v799
      %v801 = vmul.f32 %v797, %v799
      %v802 = vmul.f32 %v798, %v799
      %v803 = vadd.f32 %v787, %v800
      %v804 = vadd.f32 %v788, %v801
      %v805 = vadd.f32 %v789, %v802
      %v806 = vpack.c.bf16 %v804, %v803
      %v807 = vpack.c.bf16 %v805, %v805
      %v810 = vunpack.c.l.b16 %v806
      %v811 = vunpack.c.h.b16 %v806
      %v812 = vunpack.c.l.b16 %v807
      %v813 = vpack.c.b16 %v810, %v810
      %v814 = vpack.c.b16 %v811, %v811
      %v815 = vpack.c.b16 %v812, %v812
      %s819 = scalar_lea.vmem [#allocation2], 60
      %820 = vst.msk [vmem:[%s819] sm:$0xf] %vm487, %v813
      %821 = vst.msk [vmem:[%s819 + $0x4] sm:$0xf] %vm487, %v814
      %822 = vst.msk [vmem:[%s819 + $0x8] sm:$0x3] %vm490, %v815
      %s823 = sadd.s32 %s424, 6
      %p824 = scmp.ge.s32.totalorder %s823, 2
      %p825 = scmp.lt.s32.totalorder %s823, 18
      %p826 = pnand %p824, %p825
      %p827 = pneg %p826
      %s828 = scalar_select %p827, 1.0, 0.0
      %p829 = scmp.gt.s32.totalorder %s691, 0
      %s830 = scalar_select %p829, %s691, 0
      %p831 = scmp.lt.s32.totalorder %s830, 15
      %s832 = scalar_select %p831, %s830, 15
      %s833 = scvt.s32.f32 %s832
      %s834 = smul.f32 %s833, 0.46666667
      %s835 = sfloor.f32 %s834
      %s836 = scvt.f32.s32.to.zero.pseudo %s835
      %s837 = sadd.s32 %s836, 1
      %p838 = scmp.lt.s32.totalorder %s837, 7
      %s839 = scalar_select %p838, %s837, 7
      %s840 = ssub.f32 %s834, %s835
      %s841 = smul.f32 %s840, %s828
      %s842 = ssub.f32 %s828, %s841
      %s843 = smul.u32 %s836, 3
      %s844 = smul.addr %s843, 4
      %s845 = scalar_lea.vmem %s389, %s844
      %v846 = vld [vmem:[%s845] sm:$0xf]
      %v847 = vld [vmem:[%s845 + $0x4] sm:$0xf]
      %v848 = vld [vmem:[%s845 + $0x8] sm:$0x3]
      %v849 = vunpack.c.l.bf16 %v846
      %v850 = vunpack.c.l.bf16 %v847
      %v851 = vunpack.c.l.bf16 %v848
      %v852 = vstv %s842
      %v853 = vmul.f32 %v849, %v852
      %v854 = vmul.f32 %v850, %v852
      %v855 = vmul.f32 %v851, %v852
      %s856 = smul.u32 %s839, 3
      %s857 = smul.addr %s856, 4
      %s858 = scalar_lea.vmem %s389, %s857
      %v859 = vld [vmem:[%s858] sm:$0xf]
      %v860 = vld [vmem:[%s858 + $0x4] sm:$0xf]
      %v861 = vld [vmem:[%s858 + $0x8] sm:$0x3]
      %v862 = vunpack.c.l.bf16 %v859
      %v863 = vunpack.c.l.bf16 %v860
      %v864 = vunpack.c.l.bf16 %v861
      %v865 = vstv %s841
      %v866 = vmul.f32 %v862, %v865
      %v867 = vmul.f32 %v863, %v865
      %v868 = vmul.f32 %v864, %v865
      %v869 = vadd.f32 %v853, %v866
      %v870 = vadd.f32 %v854, %v867
      %v871 = vadd.f32 %v855, %v868
      %v872 = vpack.c.bf16 %v870, %v869
      %v873 = vpack.c.bf16 %v871, %v871
      %v876 = vunpack.c.l.b16 %v872
      %v877 = vunpack.c.h.b16 %v872
      %v878 = vunpack.c.l.b16 %v873
      %v879 = vpack.c.b16 %v876, %v876
      %v880 = vpack.c.b16 %v877, %v877
      %v881 = vpack.c.b16 %v878, %v878
      %s885 = scalar_lea.vmem [#allocation2], 72
      %886 = vst.msk [vmem:[%s885] sm:$0xf] %vm487, %v879
      %887 = vst.msk [vmem:[%s885 + $0x4] sm:$0xf] %vm487, %v880
      %888 = vst.msk [vmem:[%s885 + $0x8] sm:$0x3] %vm490, %v881
      %s889 = sadd.s32 %s424, 7
      %p890 = scmp.ge.s32.totalorder %s889, 2
      %p891 = scmp.lt.s32.totalorder %s889, 18
      %p892 = pnand %p890, %p891
      %p893 = pneg %p892
      %s894 = scalar_select %p893, 1.0, 0.0
      %p895 = scmp.gt.s32.totalorder %s757, 0
      %s896 = scalar_select %p895, %s757, 0
      %p897 = scmp.lt.s32.totalorder %s896, 15
      %s898 = scalar_select %p897, %s896, 15
      %s899 = scvt.s32.f32 %s898
      %s900 = smul.f32 %s899, 0.46666667
      %s901 = sfloor.f32 %s900
      %s902 = scvt.f32.s32.to.zero.pseudo %s901
      %s903 = sadd.s32 %s902, 1
      %p904 = scmp.lt.s32.totalorder %s903, 7
      %s905 = scalar_select %p904, %s903, 7
      %s906 = ssub.f32 %s900, %s901
      %s907 = smul.f32 %s906, %s894
      %s908 = ssub.f32 %s894, %s907
      %s909 = smul.u32 %s902, 3
      %s910 = smul.addr %s909, 4
      %s911 = scalar_lea.vmem %s389, %s910
      %v912 = vld [vmem:[%s911] sm:$0xf]
      %v913 = vld [vmem:[%s911 + $0x4] sm:$0xf]
      %v914 = vld [vmem:[%s911 + $0x8] sm:$0x3]
      %v915 = vunpack.c.l.bf16 %v912
      %v916 = vunpack.c.l.bf16 %v913
      %v917 = vunpack.c.l.bf16 %v914
      %v918 = vstv %s908
      %v919 = vmul.f32 %v915, %v918
      %v920 = vmul.f32 %v916, %v918
      %v921 = vmul.f32 %v917, %v918
      %s922 = smul.u32 %s905, 3
      %s923 = smul.addr %s922, 4
      %s924 = scalar_lea.vmem %s389, %s923
      %v925 = vld [vmem:[%s924] sm:$0xf]
      %v926 = vld [vmem:[%s924 + $0x4] sm:$0xf]
      %v927 = vld [vmem:[%s924 + $0x8] sm:$0x3]
      %v928 = vunpack.c.l.bf16 %v925
      %v929 = vunpack.c.l.bf16 %v926
      %v930 = vunpack.c.l.bf16 %v927
      %v931 = vstv %s907
      %v932 = vmul.f32 %v928, %v931
      %v933 = vmul.f32 %v929, %v931
      %v934 = vmul.f32 %v930, %v931
      %v935 = vadd.f32 %v919, %v932
      %v936 = vadd.f32 %v920, %v933
      %v937 = vadd.f32 %v921, %v934
      %v938 = vpack.c.bf16 %v936, %v935
      %v939 = vpack.c.bf16 %v937, %v937
      %v942 = vunpack.c.l.b16 %v938
      %v943 = vunpack.c.h.b16 %v938
      %v944 = vunpack.c.l.b16 %v939
      %v945 = vpack.c.b16 %v942, %v942
      %v946 = vpack.c.b16 %v943, %v943
      %v947 = vpack.c.b16 %v944, %v944
      %s951 = scalar_lea.vmem [#allocation2], 84
      %952 = vst.msk [vmem:[%s951] sm:$0xf] %vm487, %v945
      %953 = vst.msk [vmem:[%s951 + $0x4] sm:$0xf] %vm487, %v946
      %954 = vst.msk [vmem:[%s951 + $0x8] sm:$0x3] %vm490, %v947
      %s955 = sadd.s32 %s424, 8
      %p956 = scmp.ge.s32.totalorder %s955, 2
      %p957 = scmp.lt.s32.totalorder %s955, 18
      %p958 = pnand %p956, %p957
      %p959 = pneg %p958
      %s960 = scalar_select %p959, 1.0, 0.0
      %p961 = scmp.gt.s32.totalorder %s823, 0
      %s962 = scalar_select %p961, %s823, 0
      %p963 = scmp.lt.s32.totalorder %s962, 15
      %s964 = scalar_select %p963, %s962, 15
      %s965 = scvt.s32.f32 %s964
      %s966 = smul.f32 %s965, 0.46666667
      %s967 = sfloor.f32 %s966
      %s968 = scvt.f32.s32.to.zero.pseudo %s967
      %s969 = sadd.s32 %s968, 1
      %p970 = scmp.lt.s32.totalorder %s969, 7
      %s971 = scalar_select %p970, %s969, 7
      %s972 = ssub.f32 %s966, %s967
      %s973 = smul.f32 %s972, %s960
      %s974 = ssub.f32 %s960, %s973
      %s975 = smul.u32 %s968, 3
      %s976 = smul.addr %s975, 4
      %s977 = scalar_lea.vmem %s389, %s976
      %v978 = vld [vmem:[%s977] sm:$0xf]
      %v979 = vld [vmem:[%s977 + $0x4] sm:$0xf]
      %v980 = vld [vmem:[%s977 + $0x8] sm:$0x3]
      %v981 = vunpack.c.l.bf16 %v978
      %v982 = vunpack.c.l.bf16 %v979
      %v983 = vunpack.c.l.bf16 %v980
      %v984 = vstv %s974
      %v985 = vmul.f32 %v981, %v984
      %v986 = vmul.f32 %v982, %v984
      %v987 = vmul.f32 %v983, %v984
      %s988 = smul.u32 %s971, 3
      %s989 = smul.addr %s988, 4
      %s990 = scalar_lea.vmem %s389, %s989
      %v991 = vld [vmem:[%s990] sm:$0xf]
      %v992 = vld [vmem:[%s990 + $0x4] sm:$0xf]
      %v993 = vld [vmem:[%s990 + $0x8] sm:$0x3]
      %v994 = vunpack.c.l.bf16 %v991
      %v995 = vunpack.c.l.bf16 %v992
      %v996 = vunpack.c.l.bf16 %v993
      %v997 = vstv %s973
      %v998 = vmul.f32 %v994, %v997
      %v999 = vmul.f32 %v995, %v997
      %v1000 = vmul.f32 %v996, %v997
      %v1001 = vadd.f32 %v985, %v998
      %v1002 = vadd.f32 %v986, %v999
      %v1003 = vadd.f32 %v987, %v1000
      %v1004 = vpack.c.bf16 %v1002, %v1001
      %v1005 = vpack.c.bf16 %v1003, %v1003
      %v1008 = vunpack.c.l.b16 %v1004
      %v1009 = vunpack.c.h.b16 %v1004
      %v1010 = vunpack.c.l.b16 %v1005
      %v1011 = vpack.c.b16 %v1008, %v1008
      %v1012 = vpack.c.b16 %v1009, %v1009
      %v1013 = vpack.c.b16 %v1010, %v1010
      %s1017 = scalar_lea.vmem [#allocation2], 96
      %1018 = vst.msk [vmem:[%s1017] sm:$0xf] %vm487, %v1011
      %1019 = vst.msk [vmem:[%s1017 + $0x4] sm:$0xf] %vm487, %v1012
      %1020 = vst.msk [vmem:[%s1017 + $0x8] sm:$0x3] %vm490, %v1013
      %s1021 = sadd.s32 %s424, 9
      %p1022 = scmp.ge.s32.totalorder %s1021, 2
      %p1023 = scmp.lt.s32.totalorder %s1021, 18
      %p1024 = pnand %p1022, %p1023
      %p1025 = pneg %p1024
      %s1026 = scalar_select %p1025, 1.0, 0.0
      %p1027 = scmp.gt.s32.totalorder %s889, 0
      %s1028 = scalar_select %p1027, %s889, 0
      %p1029 = scmp.lt.s32.totalorder %s1028, 15
      %s1030 = scalar_select %p1029, %s1028, 15
      %s1031 = scvt.s32.f32 %s1030
      %s1032 = smul.f32 %s1031, 0.46666667
      %s1033 = sfloor.f32 %s1032
      %s1034 = scvt.f32.s32.to.zero.pseudo %s1033
      %s1035 = sadd.s32 %s1034, 1
      %p1036 = scmp.lt.s32.totalorder %s1035, 7
      %s1037 = scalar_select %p1036, %s1035, 7
      %s1038 = ssub.f32 %s1032, %s1033
      %s1039 = smul.f32 %s1038, %s1026
      %s1040 = ssub.f32 %s1026, %s1039
      %s1041 = smul.u32 %s1034, 3
      %s1042 = smul.addr %s1041, 4
      %s1043 = scalar_lea.vmem %s389, %s1042
      %v1044 = vld [vmem:[%s1043] sm:$0xf]
      %v1045 = vld [vmem:[%s1043 + $0x4] sm:$0xf]
      %v1046 = vld [vmem:[%s1043 + $0x8] sm:$0x3]
      %v1047 = vunpack.c.l.bf16 %v1044
      %v1048 = vunpack.c.l.bf16 %v1045
      %v1049 = vunpack.c.l.bf16 %v1046
      %v1050 = vstv %s1040
      %v1051 = vmul.f32 %v1047, %v1050
      %v1052 = vmul.f32 %v1048, %v1050
      %v1053 = vmul.f32 %v1049, %v1050
      %s1054 = smul.u32 %s1037, 3
      %s1055 = smul.addr %s1054, 4
      %s1056 = scalar_lea.vmem %s389, %s1055
      %v1057 = vld [vmem:[%s1056] sm:$0xf]
      %v1058 = vld [vmem:[%s1056 + $0x4] sm:$0xf]
      %v1059 = vld [vmem:[%s1056 + $0x8] sm:$0x3]
      %v1060 = vunpack.c.l.bf16 %v1057
      %v1061 = vunpack.c.l.bf16 %v1058
      %v1062 = vunpack.c.l.bf16 %v1059
      %v1063 = vstv %s1039
      %v1064 = vmul.f32 %v1060, %v1063
      %v1065 = vmul.f32 %v1061, %v1063
      %v1066 = vmul.f32 %v1062, %v1063
      %v1067 = vadd.f32 %v1051, %v1064
      %v1068 = vadd.f32 %v1052, %v1065
      %v1069 = vadd.f32 %v1053, %v1066
      %v1070 = vpack.c.bf16 %v1068, %v1067
      %v1071 = vpack.c.bf16 %v1069, %v1069
      %v1074 = vunpack.c.l.b16 %v1070
      %v1075 = vunpack.c.h.b16 %v1070
      %v1076 = vunpack.c.l.b16 %v1071
      %v1077 = vpack.c.b16 %v1074, %v1074
      %v1078 = vpack.c.b16 %v1075, %v1075
      %v1079 = vpack.c.b16 %v1076, %v1076
      %s1083 = scalar_lea.vmem [#allocation2], 108
      %1084 = vst.msk [vmem:[%s1083] sm:$0xf] %vm487, %v1077
      %1085 = vst.msk [vmem:[%s1083 + $0x4] sm:$0xf] %vm487, %v1078
      %1086 = vst.msk [vmem:[%s1083 + $0x8] sm:$0x3] %vm490, %v1079
      %s1087 = sadd.s32 %s424, 10
      %p1088 = scmp.ge.s32.totalorder %s1087, 2
      %p1089 = scmp.lt.s32.totalorder %s1087, 18
      %p1090 = pnand %p1088, %p1089
      %p1091 = pneg %p1090
      %s1092 = scalar_select %p1091, 1.0, 0.0
      %p1093 = scmp.gt.s32.totalorder %s955, 0
      %s1094 = scalar_select %p1093, %s955, 0
      %p1095 = scmp.lt.s32.totalorder %s1094, 15
      %s1096 = scalar_select %p1095, %s1094, 15
      %s1097 = scvt.s32.f32 %s1096
      %s1098 = smul.f32 %s1097, 0.46666667
      %s1099 = sfloor.f32 %s1098
      %s1100 = scvt.f32.s32.to.zero.pseudo %s1099
      %s1101 = sadd.s32 %s1100, 1
      %p1102 = scmp.lt.s32.totalorder %s1101, 7
      %s1103 = scalar_select %p1102, %s1101, 7
      %s1104 = ssub.f32 %s1098, %s1099
      %s1105 = smul.f32 %s1104, %s1092
      %s1106 = ssub.f32 %s1092, %s1105
      %s1107 = smul.u32 %s1100, 3
      %s1108 = smul.addr %s1107, 4
      %s1109 = scalar_lea.vmem %s389, %s1108
      %v1110 = vld [vmem:[%s1109] sm:$0xf]
      %v1111 = vld [vmem:[%s1109 + $0x4] sm:$0xf]
      %v1112 = vld [vmem:[%s1109 + $0x8] sm:$0x3]
      %v1113 = vunpack.c.l.bf16 %v1110
      %v1114 = vunpack.c.l.bf16 %v1111
      %v1115 = vunpack.c.l.bf16 %v1112
      %v1116 = vstv %s1106
      %v1117 = vmul.f32 %v1113, %v1116
      %v1118 = vmul.f32 %v1114, %v1116
      %v1119 = vmul.f32 %v1115, %v1116
      %s1120 = smul.u32 %s1103, 3
      %s1121 = smul.addr %s1120, 4
      %s1122 = scalar_lea.vmem %s389, %s1121
      %v1123 = vld [vmem:[%s1122] sm:$0xf]
      %v1124 = vld [vmem:[%s1122 + $0x4] sm:$0xf]
      %v1125 = vld [vmem:[%s1122 + $0x8] sm:$0x3]
      %v1126 = vunpack.c.l.bf16 %v1123
      %v1127 = vunpack.c.l.bf16 %v1124
      %v1128 = vunpack.c.l.bf16 %v1125
      %v1129 = vstv %s1105
      %v1130 = vmul.f32 %v1126, %v1129
      %v1131 = vmul.f32 %v1127, %v1129
      %v1132 = vmul.f32 %v1128, %v1129
      %v1133 = vadd.f32 %v1117, %v1130
      %v1134 = vadd.f32 %v1118, %v1131
      %v1135 = vadd.f32 %v1119, %v1132
      %v1136 = vpack.c.bf16 %v1134, %v1133
      %v1137 = vpack.c.bf16 %v1135, %v1135
      %v1140 = vunpack.c.l.b16 %v1136
      %v1141 = vunpack.c.h.b16 %v1136
      %v1142 = vunpack.c.l.b16 %v1137
      %v1143 = vpack.c.b16 %v1140, %v1140
      %v1144 = vpack.c.b16 %v1141, %v1141
      %v1145 = vpack.c.b16 %v1142, %v1142
      %s1149 = scalar_lea.vmem [#allocation2], 120
      %1150 = vst.msk [vmem:[%s1149] sm:$0xf] %vm487, %v1143
      %1151 = vst.msk [vmem:[%s1149 + $0x4] sm:$0xf] %vm487, %v1144
      %1152 = vst.msk [vmem:[%s1149 + $0x8] sm:$0x3] %vm490, %v1145
      %s1153 = sadd.s32 %s424, 11
      %p1154 = scmp.ge.s32.totalorder %s1153, 2
      %p1155 = scmp.lt.s32.totalorder %s1153, 18
      %p1156 = pnand %p1154, %p1155
      %p1157 = pneg %p1156
      %s1158 = scalar_select %p1157, 1.0, 0.0
      %p1159 = scmp.gt.s32.totalorder %s1021, 0
      %s1160 = scalar_select %p1159, %s1021, 0
      %p1161 = scmp.lt.s32.totalorder %s1160, 15
      %s1162 = scalar_select %p1161, %s1160, 15
      %s1163 = scvt.s32.f32 %s1162
      %s1164 = smul.f32 %s1163, 0.46666667
      %s1165 = sfloor.f32 %s1164
      %s1166 = scvt.f32.s32.to.zero.pseudo %s1165
      %s1167 = sadd.s32 %s1166, 1
      %p1168 = scmp.lt.s32.totalorder %s1167, 7
      %s1169 = scalar_select %p1168, %s1167, 7
      %s1170 = ssub.f32 %s1164, %s1165
      %s1171 = smul.f32 %s1170, %s1158
      %s1172 = ssub.f32 %s1158, %s1171
      %s1173 = smul.u32 %s1166, 3
      %s1174 = smul.addr %s1173, 4
      %s1175 = scalar_lea.vmem %s389, %s1174
      %v1176 = vld [vmem:[%s1175] sm:$0xf]
      %v1177 = vld [vmem:[%s1175 + $0x4] sm:$0xf]
      %v1178 = vld [vmem:[%s1175 + $0x8] sm:$0x3]
      %v1179 = vunpack.c.l.bf16 %v1176
      %v1180 = vunpack.c.l.bf16 %v1177
      %v1181 = vunpack.c.l.bf16 %v1178
      %v1182 = vstv %s1172
      %v1183 = vmul.f32 %v1179, %v1182
      %v1184 = vmul.f32 %v1180, %v1182
      %v1185 = vmul.f32 %v1181, %v1182
      %s1186 = smul.u32 %s1169, 3
      %s1187 = smul.addr %s1186, 4
      %s1188 = scalar_lea.vmem %s389, %s1187
      %v1189 = vld [vmem:[%s1188] sm:$0xf]
      %v1190 = vld [vmem:[%s1188 + $0x4] sm:$0xf]
      %v1191 = vld [vmem:[%s1188 + $0x8] sm:$0x3]
      %v1192 = vunpack.c.l.bf16 %v1189
      %v1193 = vunpack.c.l.bf16 %v1190
      %v1194 = vunpack.c.l.bf16 %v1191
      %v1195 = vstv %s1171
      %v1196 = vmul.f32 %v1192, %v1195
      %v1197 = vmul.f32 %v1193, %v1195
      %v1198 = vmul.f32 %v1194, %v1195
      %v1199 = vadd.f32 %v1183, %v1196
      %v1200 = vadd.f32 %v1184, %v1197
      %v1201 = vadd.f32 %v1185, %v1198
      %v1202 = vpack.c.bf16 %v1200, %v1199
      %v1203 = vpack.c.bf16 %v1201, %v1201
      %v1206 = vunpack.c.l.b16 %v1202
      %v1207 = vunpack.c.h.b16 %v1202
      %v1208 = vunpack.c.l.b16 %v1203
      %v1209 = vpack.c.b16 %v1206, %v1206
      %v1210 = vpack.c.b16 %v1207, %v1207
      %v1211 = vpack.c.b16 %v1208, %v1208
      %s1215 = scalar_lea.vmem [#allocation2], 132
      %1216 = vst.msk [vmem:[%s1215] sm:$0xf] %vm487, %v1209
      %1217 = vst.msk [vmem:[%s1215 + $0x4] sm:$0xf] %vm487, %v1210
      %1218 = vst.msk [vmem:[%s1215 + $0x8] sm:$0x3] %vm490, %v1211
      %s1219 = sadd.s32 %s424, 12
      %p1220 = scmp.ge.s32.totalorder %s1219, 2
      %p1221 = scmp.lt.s32.totalorder %s1219, 18
      %p1222 = pnand %p1220, %p1221
      %p1223 = pneg %p1222
      %s1224 = scalar_select %p1223, 1.0, 0.0
      %p1225 = scmp.gt.s32.totalorder %s1087, 0
      %s1226 = scalar_select %p1225, %s1087, 0
      %p1227 = scmp.lt.s32.totalorder %s1226, 15
      %s1228 = scalar_select %p1227, %s1226, 15
      %s1229 = scvt.s32.f32 %s1228
      %s1230 = smul.f32 %s1229, 0.46666667
      %s1231 = sfloor.f32 %s1230
      %s1232 = scvt.f32.s32.to.zero.pseudo %s1231
      %s1233 = sadd.s32 %s1232, 1
      %p1234 = scmp.lt.s32.totalorder %s1233, 7
      %s1235 = scalar_select %p1234, %s1233, 7
      %s1236 = ssub.f32 %s1230, %s1231
      %s1237 = smul.f32 %s1236, %s1224
      %s1238 = ssub.f32 %s1224, %s1237
      %s1239 = smul.u32 %s1232, 3
      %s1240 = smul.addr %s1239, 4
      %s1241 = scalar_lea.vmem %s389, %s1240
      %v1242 = vld [vmem:[%s1241] sm:$0xf]
      %v1243 = vld [vmem:[%s1241 + $0x4] sm:$0xf]
      %v1244 = vld [vmem:[%s1241 + $0x8] sm:$0x3]
      %v1245 = vunpack.c.l.bf16 %v1242
      %v1246 = vunpack.c.l.bf16 %v1243
      %v1247 = vunpack.c.l.bf16 %v1244
      %v1248 = vstv %s1238
      %v1249 = vmul.f32 %v1245, %v1248
      %v1250 = vmul.f32 %v1246, %v1248
      %v1251 = vmul.f32 %v1247, %v1248
      %s1252 = smul.u32 %s1235, 3
      %s1253 = smul.addr %s1252, 4
      %s1254 = scalar_lea.vmem %s389, %s1253
      %v1255 = vld [vmem:[%s1254] sm:$0xf]
      %v1256 = vld [vmem:[%s1254 + $0x4] sm:$0xf]
      %v1257 = vld [vmem:[%s1254 + $0x8] sm:$0x3]
      %v1258 = vunpack.c.l.bf16 %v1255
      %v1259 = vunpack.c.l.bf16 %v1256
      %v1260 = vunpack.c.l.bf16 %v1257
      %v1261 = vstv %s1237
      %v1262 = vmul.f32 %v1258, %v1261
      %v1263 = vmul.f32 %v1259, %v1261
      %v1264 = vmul.f32 %v1260, %v1261
      %v1265 = vadd.f32 %v1249, %v1262
      %v1266 = vadd.f32 %v1250, %v1263
      %v1267 = vadd.f32 %v1251, %v1264
      %v1268 = vpack.c.bf16 %v1266, %v1265
      %v1269 = vpack.c.bf16 %v1267, %v1267
      %v1272 = vunpack.c.l.b16 %v1268
      %v1273 = vunpack.c.h.b16 %v1268
      %v1274 = vunpack.c.l.b16 %v1269
      %v1275 = vpack.c.b16 %v1272, %v1272
      %v1276 = vpack.c.b16 %v1273, %v1273
      %v1277 = vpack.c.b16 %v1274, %v1274
      %s1281 = scalar_lea.vmem [#allocation2], 144
      %1282 = vst.msk [vmem:[%s1281] sm:$0xf] %vm487, %v1275
      %1283 = vst.msk [vmem:[%s1281 + $0x4] sm:$0xf] %vm487, %v1276
      %1284 = vst.msk [vmem:[%s1281 + $0x8] sm:$0x3] %vm490, %v1277
      %s1285 = sadd.s32 %s424, 13
      %p1286 = scmp.ge.s32.totalorder %s1285, 2
      %p1287 = scmp.lt.s32.totalorder %s1285, 18
      %p1288 = pnand %p1286, %p1287
      %p1289 = pneg %p1288
      %s1290 = scalar_select %p1289, 1.0, 0.0
      %p1291 = scmp.gt.s32.totalorder %s1153, 0
      %s1292 = scalar_select %p1291, %s1153, 0
      %p1293 = scmp.lt.s32.totalorder %s1292, 15
      %s1294 = scalar_select %p1293, %s1292, 15
      %s1295 = scvt.s32.f32 %s1294
      %s1296 = smul.f32 %s1295, 0.46666667
      %s1297 = sfloor.f32 %s1296
      %s1298 = scvt.f32.s32.to.zero.pseudo %s1297
      %s1299 = sadd.s32 %s1298, 1
      %p1300 = scmp.lt.s32.totalorder %s1299, 7
      %s1301 = scalar_select %p1300, %s1299, 7
      %s1302 = ssub.f32 %s1296, %s1297
      %s1303 = smul.f32 %s1302, %s1290
      %s1304 = ssub.f32 %s1290, %s1303
      %s1305 = smul.u32 %s1298, 3
      %s1306 = smul.addr %s1305, 4
      %s1307 = scalar_lea.vmem %s389, %s1306
      %v1308 = vld [vmem:[%s1307] sm:$0xf]
      %v1309 = vld [vmem:[%s1307 + $0x4] sm:$0xf]
      %v1310 = vld [vmem:[%s1307 + $0x8] sm:$0x3]
      %v1311 = vunpack.c.l.bf16 %v1308
      %v1312 = vunpack.c.l.bf16 %v1309
      %v1313 = vunpack.c.l.bf16 %v1310
      %v1314 = vstv %s1304
      %v1315 = vmul.f32 %v1311, %v1314
      %v1316 = vmul.f32 %v1312, %v1314
      %v1317 = vmul.f32 %v1313, %v1314
      %s1318 = smul.u32 %s1301, 3
      %s1319 = smul.addr %s1318, 4
      %s1320 = scalar_lea.vmem %s389, %s1319
      %v1321 = vld [vmem:[%s1320] sm:$0xf]
      %v1322 = vld [vmem:[%s1320 + $0x4] sm:$0xf]
      %v1323 = vld [vmem:[%s1320 + $0x8] sm:$0x3]
      %v1324 = vunpack.c.l.bf16 %v1321
      %v1325 = vunpack.c.l.bf16 %v1322
      %v1326 = vunpack.c.l.bf16 %v1323
      %v1327 = vstv %s1303
      %v1328 = vmul.f32 %v1324, %v1327
      %v1329 = vmul.f32 %v1325, %v1327
      %v1330 = vmul.f32 %v1326, %v1327
      %v1331 = vadd.f32 %v1315, %v1328
      %v1332 = vadd.f32 %v1316, %v1329
      %v1333 = vadd.f32 %v1317, %v1330
      %v1334 = vpack.c.bf16 %v1332, %v1331
      %v1335 = vpack.c.bf16 %v1333, %v1333
      %v1338 = vunpack.c.l.b16 %v1334
      %v1339 = vunpack.c.h.b16 %v1334
      %v1340 = vunpack.c.l.b16 %v1335
      %v1341 = vpack.c.b16 %v1338, %v1338
      %v1342 = vpack.c.b16 %v1339, %v1339
      %v1343 = vpack.c.b16 %v1340, %v1340
      %s1347 = scalar_lea.vmem [#allocation2], 156
      %1348 = vst.msk [vmem:[%s1347] sm:$0xf] %vm487, %v1341
      %1349 = vst.msk [vmem:[%s1347 + $0x4] sm:$0xf] %vm487, %v1342
      %1350 = vst.msk [vmem:[%s1347 + $0x8] sm:$0x3] %vm490, %v1343
      %s1351 = sadd.s32 %s424, 14
      %p1352 = scmp.ge.s32.totalorder %s1351, 2
      %p1353 = scmp.lt.s32.totalorder %s1351, 18
      %p1354 = pnand %p1352, %p1353
      %p1355 = pneg %p1354
      %s1356 = scalar_select %p1355, 1.0, 0.0
      %p1357 = scmp.gt.s32.totalorder %s1219, 0
      %s1358 = scalar_select %p1357, %s1219, 0
      %p1359 = scmp.lt.s32.totalorder %s1358, 15
      %s1360 = scalar_select %p1359, %s1358, 15
      %s1361 = scvt.s32.f32 %s1360
      %s1362 = smul.f32 %s1361, 0.46666667
      %s1363 = sfloor.f32 %s1362
      %s1364 = scvt.f32.s32.to.zero.pseudo %s1363
      %s1365 = sadd.s32 %s1364, 1
      %p1366 = scmp.lt.s32.totalorder %s1365, 7
      %s1367 = scalar_select %p1366, %s1365, 7
      %s1368 = ssub.f32 %s1362, %s1363
      %s1369 = smul.f32 %s1368, %s1356
      %s1370 = ssub.f32 %s1356, %s1369
      %s1371 = smul.u32 %s1364, 3
      %s1372 = smul.addr %s1371, 4
      %s1373 = scalar_lea.vmem %s389, %s1372
      %v1374 = vld [vmem:[%s1373] sm:$0xf]
      %v1375 = vld [vmem:[%s1373 + $0x4] sm:$0xf]
      %v1376 = vld [vmem:[%s1373 + $0x8] sm:$0x3]
      %v1377 = vunpack.c.l.bf16 %v1374
      %v1378 = vunpack.c.l.bf16 %v1375
      %v1379 = vunpack.c.l.bf16 %v1376
      %v1380 = vstv %s1370
      %v1381 = vmul.f32 %v1377, %v1380
      %v1382 = vmul.f32 %v1378, %v1380
      %v1383 = vmul.f32 %v1379, %v1380
      %s1384 = smul.u32 %s1367, 3
      %s1385 = smul.addr %s1384, 4
      %s1386 = scalar_lea.vmem %s389, %s1385
      %v1387 = vld [vmem:[%s1386] sm:$0xf]
      %v1388 = vld [vmem:[%s1386 + $0x4] sm:$0xf]
      %v1389 = vld [vmem:[%s1386 + $0x8] sm:$0x3]
      %v1390 = vunpack.c.l.bf16 %v1387
      %v1391 = vunpack.c.l.bf16 %v1388
      %v1392 = vunpack.c.l.bf16 %v1389
      %v1393 = vstv %s1369
      %v1394 = vmul.f32 %v1390, %v1393
      %v1395 = vmul.f32 %v1391, %v1393
      %v1396 = vmul.f32 %v1392, %v1393
      %v1397 = vadd.f32 %v1381, %v1394
      %v1398 = vadd.f32 %v1382, %v1395
      %v1399 = vadd.f32 %v1383, %v1396
      %v1400 = vpack.c.bf16 %v1398, %v1397
      %v1401 = vpack.c.bf16 %v1399, %v1399
      %v1404 = vunpack.c.l.b16 %v1400
      %v1405 = vunpack.c.h.b16 %v1400
      %v1406 = vunpack.c.l.b16 %v1401
      %v1407 = vpack.c.b16 %v1404, %v1404
      %v1408 = vpack.c.b16 %v1405, %v1405
      %v1409 = vpack.c.b16 %v1406, %v1406
      %s1413 = scalar_lea.vmem [#allocation2], 168
      %1414 = vst.msk [vmem:[%s1413] sm:$0xf] %vm487, %v1407
      %1415 = vst.msk [vmem:[%s1413 + $0x4] sm:$0xf] %vm487, %v1408
      %1416 = vst.msk [vmem:[%s1413 + $0x8] sm:$0x3] %vm490, %v1409
      %s1417 = sadd.s32 %s424, 15
      %p1418 = scmp.ge.s32.totalorder %s1417, 2
      %p1419 = scmp.lt.s32.totalorder %s1417, 18
      %p1420 = pnand %p1418, %p1419
      %p1421 = pneg %p1420
      %s1422 = scalar_select %p1421, 1.0, 0.0
      %p1423 = scmp.gt.s32.totalorder %s1285, 0
      %s1424 = scalar_select %p1423, %s1285, 0
      %p1425 = scmp.lt.s32.totalorder %s1424, 15
      %s1426 = scalar_select %p1425, %s1424, 15
      %s1427 = scvt.s32.f32 %s1426
      %s1428 = smul.f32 %s1427, 0.46666667
      %s1429 = sfloor.f32 %s1428
      %s1430 = scvt.f32.s32.to.zero.pseudo %s1429
      %s1431 = sadd.s32 %s1430, 1
      %p1432 = scmp.lt.s32.totalorder %s1431, 7
      %s1433 = scalar_select %p1432, %s1431, 7
      %s1434 = ssub.f32 %s1428, %s1429
      %s1435 = smul.f32 %s1434, %s1422
      %s1436 = ssub.f32 %s1422, %s1435
      %s1437 = smul.u32 %s1430, 3
      %s1438 = smul.addr %s1437, 4
      %s1439 = scalar_lea.vmem %s389, %s1438
      %v1440 = vld [vmem:[%s1439] sm:$0xf]
      %v1441 = vld [vmem:[%s1439 + $0x4] sm:$0xf]
      %v1442 = vld [vmem:[%s1439 + $0x8] sm:$0x3]
      %v1443 = vunpack.c.l.bf16 %v1440
      %v1444 = vunpack.c.l.bf16 %v1441
      %v1445 = vunpack.c.l.bf16 %v1442
      %v1446 = vstv %s1436
      %v1447 = vmul.f32 %v1443, %v1446
      %v1448 = vmul.f32 %v1444, %v1446
      %v1449 = vmul.f32 %v1445, %v1446
      %s1450 = smul.u32 %s1433, 3
      %s1451 = smul.addr %s1450, 4
      %s1452 = scalar_lea.vmem %s389, %s1451
      %v1453 = vld [vmem:[%s1452] sm:$0xf]
      %v1454 = vld [vmem:[%s1452 + $0x4] sm:$0xf]
      %v1455 = vld [vmem:[%s1452 + $0x8] sm:$0x3]
      %v1456 = vunpack.c.l.bf16 %v1453
      %v1457 = vunpack.c.l.bf16 %v1454
      %v1458 = vunpack.c.l.bf16 %v1455
      %v1459 = vstv %s1435
      %v1460 = vmul.f32 %v1456, %v1459
      %v1461 = vmul.f32 %v1457, %v1459
      %v1462 = vmul.f32 %v1458, %v1459
      %v1463 = vadd.f32 %v1447, %v1460
      %v1464 = vadd.f32 %v1448, %v1461
      %v1465 = vadd.f32 %v1449, %v1462
      %v1466 = vpack.c.bf16 %v1464, %v1463
      %v1467 = vpack.c.bf16 %v1465, %v1465
      %v1470 = vunpack.c.l.b16 %v1466
      %v1471 = vunpack.c.h.b16 %v1466
      %v1472 = vunpack.c.l.b16 %v1467
      %v1473 = vpack.c.b16 %v1470, %v1470
      %v1474 = vpack.c.b16 %v1471, %v1471
      %v1475 = vpack.c.b16 %v1472, %v1472
      %s1479 = scalar_lea.vmem [#allocation2], 180
      %1480 = vst.msk [vmem:[%s1479] sm:$0xf] %vm487, %v1473
      %1481 = vst.msk [vmem:[%s1479 + $0x4] sm:$0xf] %vm487, %v1474
      %1482 = vst.msk [vmem:[%s1479 + $0x8] sm:$0x3] %vm490, %v1475
      %s1483 = sadd.s32 %s424, 16
      %p1484 = scmp.ge.s32.totalorder %s1483, 2
      %p1485 = scmp.lt.s32.totalorder %s1483, 18
      %p1486 = pnand %p1484, %p1485
      %p1487 = pneg %p1486
      %s1488 = scalar_select %p1487, 1.0, 0.0
      %p1489 = scmp.gt.s32.totalorder %s1351, 0
      %s1490 = scalar_select %p1489, %s1351, 0
      %p1491 = scmp.lt.s32.totalorder %s1490, 15
      %s1492 = scalar_select %p1491, %s1490, 15
      %s1493 = scvt.s32.f32 %s1492
      %s1494 = smul.f32 %s1493, 0.46666667
      %s1495 = sfloor.f32 %s1494
      %s1496 = scvt.f32.s32.to.zero.pseudo %s1495
      %s1497 = sadd.s32 %s1496, 1
      %p1498 = scmp.lt.s32.totalorder %s1497, 7
      %s1499 = scalar_select %p1498, %s1497, 7
      %s1500 = ssub.f32 %s1494, %s1495
      %s1501 = smul.f32 %s1500, %s1488
      %s1502 = ssub.f32 %s1488, %s1501
      %s1503 = smul.u32 %s1496, 3
      %s1504 = smul.addr %s1503, 4
      %s1505 = scalar_lea.vmem %s389, %s1504
      %v1506 = vld [vmem:[%s1505] sm:$0xf]
      %v1507 = vld [vmem:[%s1505 + $0x4] sm:$0xf]
      %v1508 = vld [vmem:[%s1505 + $0x8] sm:$0x3]
      %v1509 = vunpack.c.l.bf16 %v1506
      %v1510 = vunpack.c.l.bf16 %v1507
      %v1511 = vunpack.c.l.bf16 %v1508
      %v1512 = vstv %s1502
      %v1513 = vmul.f32 %v1509, %v1512
      %v1514 = vmul.f32 %v1510, %v1512
      %v1515 = vmul.f32 %v1511, %v1512
      %s1516 = smul.u32 %s1499, 3
      %s1517 = smul.addr %s1516, 4
      %s1518 = scalar_lea.vmem %s389, %s1517
      %v1519 = vld [vmem:[%s1518] sm:$0xf]
      %v1520 = vld [vmem:[%s1518 + $0x4] sm:$0xf]
      %v1521 = vld [vmem:[%s1518 + $0x8] sm:$0x3]
      %v1522 = vunpack.c.l.bf16 %v1519
      %v1523 = vunpack.c.l.bf16 %v1520
      %v1524 = vunpack.c.l.bf16 %v1521
      %v1525 = vstv %s1501
      %v1526 = vmul.f32 %v1522, %v1525
      %v1527 = vmul.f32 %v1523, %v1525
      %v1528 = vmul.f32 %v1524, %v1525
      %v1529 = vadd.f32 %v1513, %v1526
      %v1530 = vadd.f32 %v1514, %v1527
      %v1531 = vadd.f32 %v1515, %v1528
      %v1532 = vpack.c.bf16 %v1530, %v1529
      %v1533 = vpack.c.bf16 %v1531, %v1531
      %v1536 = vunpack.c.l.b16 %v1532
      %v1537 = vunpack.c.h.b16 %v1532
      %v1538 = vunpack.c.l.b16 %v1533
      %v1539 = vpack.c.b16 %v1536, %v1536
      %v1540 = vpack.c.b16 %v1537, %v1537
      %v1541 = vpack.c.b16 %v1538, %v1538
      %s1545 = scalar_lea.vmem [#allocation2], 192
      %1546 = vst.msk [vmem:[%s1545] sm:$0xf] %vm487, %v1539
      %1547 = vst.msk [vmem:[%s1545 + $0x4] sm:$0xf] %vm487, %v1540
      %1548 = vst.msk [vmem:[%s1545 + $0x8] sm:$0x3] %vm490, %v1541
      %s1549 = sadd.s32 %s424, 17
      %p1550 = scmp.ge.s32.totalorder %s1549, 2
      %p1551 = scmp.lt.s32.totalorder %s1549, 18
      %p1552 = pnand %p1550, %p1551
      %p1553 = pneg %p1552
      %s1554 = scalar_select %p1553, 1.0, 0.0
      %p1555 = scmp.gt.s32.totalorder %s1417, 0
      %s1556 = scalar_select %p1555, %s1417, 0
      %p1557 = scmp.lt.s32.totalorder %s1556, 15
      %s1558 = scalar_select %p1557, %s1556, 15
      %s1559 = scvt.s32.f32 %s1558
      %s1560 = smul.f32 %s1559, 0.46666667
      %s1561 = sfloor.f32 %s1560
      %s1562 = scvt.f32.s32.to.zero.pseudo %s1561
      %s1563 = sadd.s32 %s1562, 1
      %p1564 = scmp.lt.s32.totalorder %s1563, 7
      %s1565 = scalar_select %p1564, %s1563, 7
      %s1566 = ssub.f32 %s1560, %s1561
      %s1567 = smul.f32 %s1566, %s1554
      %s1568 = ssub.f32 %s1554, %s1567
      %s1569 = smul.u32 %s1562, 3
      %s1570 = smul.addr %s1569, 4
      %s1571 = scalar_lea.vmem %s389, %s1570
      %v1572 = vld [vmem:[%s1571] sm:$0xf]
      %v1573 = vld [vmem:[%s1571 + $0x4] sm:$0xf]
      %v1574 = vld [vmem:[%s1571 + $0x8] sm:$0x3]
      %v1575 = vunpack.c.l.bf16 %v1572
      %v1576 = vunpack.c.l.bf16 %v1573
      %v1577 = vunpack.c.l.bf16 %v1574
      %v1578 = vstv %s1568
      %v1579 = vmul.f32 %v1575, %v1578
      %v1580 = vmul.f32 %v1576, %v1578
      %v1581 = vmul.f32 %v1577, %v1578
      %s1582 = smul.u32 %s1565, 3
      %s1583 = smul.addr %s1582, 4
      %s1584 = scalar_lea.vmem %s389, %s1583
      %v1585 = vld [vmem:[%s1584] sm:$0xf]
      %v1586 = vld [vmem:[%s1584 + $0x4] sm:$0xf]
      %v1587 = vld [vmem:[%s1584 + $0x8] sm:$0x3]
      %v1588 = vunpack.c.l.bf16 %v1585
      %v1589 = vunpack.c.l.bf16 %v1586
      %v1590 = vunpack.c.l.bf16 %v1587
      %v1591 = vstv %s1567
      %v1592 = vmul.f32 %v1588, %v1591
      %v1593 = vmul.f32 %v1589, %v1591
      %v1594 = vmul.f32 %v1590, %v1591
      %v1595 = vadd.f32 %v1579, %v1592
      %v1596 = vadd.f32 %v1580, %v1593
      %v1597 = vadd.f32 %v1581, %v1594
      %v1598 = vpack.c.bf16 %v1596, %v1595
      %v1599 = vpack.c.bf16 %v1597, %v1597
      %v1602 = vunpack.c.l.b16 %v1598
      %v1603 = vunpack.c.h.b16 %v1598
      %v1604 = vunpack.c.l.b16 %v1599
      %v1605 = vpack.c.b16 %v1602, %v1602
      %v1606 = vpack.c.b16 %v1603, %v1603
      %v1607 = vpack.c.b16 %v1604, %v1604
      %s1611 = scalar_lea.vmem [#allocation2], 204
      %1612 = vst.msk [vmem:[%s1611] sm:$0xf] %vm487, %v1605
      %1613 = vst.msk [vmem:[%s1611 + $0x4] sm:$0xf] %vm487, %v1606
      %1614 = vst.msk [vmem:[%s1611 + $0x8] sm:$0x3] %vm490, %v1607
      %s1615 = sadd.s32 %s424, 18
      %p1616 = scmp.ge.s32.totalorder %s1615, 2
      %p1617 = scmp.lt.s32.totalorder %s1615, 18
      %p1618 = pnand %p1616, %p1617
      %p1619 = pneg %p1618
      %s1620 = scalar_select %p1619, 1.0, 0.0
      %p1621 = scmp.gt.s32.totalorder %s1483, 0
      %s1622 = scalar_select %p1621, %s1483, 0
      %p1623 = scmp.lt.s32.totalorder %s1622, 15
      %s1624 = scalar_select %p1623, %s1622, 15
      %s1625 = scvt.s32.f32 %s1624
      %s1626 = smul.f32 %s1625, 0.46666667
      %s1627 = sfloor.f32 %s1626
      %s1628 = scvt.f32.s32.to.zero.pseudo %s1627
      %s1629 = sadd.s32 %s1628, 1
      %p1630 = scmp.lt.s32.totalorder %s1629, 7
      %s1631 = scalar_select %p1630, %s1629, 7
      %s1632 = ssub.f32 %s1626, %s1627
      %s1633 = smul.f32 %s1632, %s1620
      %s1634 = ssub.f32 %s1620, %s1633
      %s1635 = smul.u32 %s1628, 3
      %s1636 = smul.addr %s1635, 4
      %s1637 = scalar_lea.vmem %s389, %s1636
      %v1638 = vld [vmem:[%s1637] sm:$0xf]
      %v1639 = vld [vmem:[%s1637 + $0x4] sm:$0xf]
      %v1640 = vld [vmem:[%s1637 + $0x8] sm:$0x3]
      %v1641 = vunpack.c.l.bf16 %v1638
      %v1642 = vunpack.c.l.bf16 %v1639
      %v1643 = vunpack.c.l.bf16 %v1640
      %v1644 = vstv %s1634
      %v1645 = vmul.f32 %v1641, %v1644
      %v1646 = vmul.f32 %v1642, %v1644
      %v1647 = vmul.f32 %v1643, %v1644
      %s1648 = smul.u32 %s1631, 3
      %s1649 = smul.addr %s1648, 4
      %s1650 = scalar_lea.vmem %s389, %s1649
      %v1651 = vld [vmem:[%s1650] sm:$0xf]
      %v1652 = vld [vmem:[%s1650 + $0x4] sm:$0xf]
      %v1653 = vld [vmem:[%s1650 + $0x8] sm:$0x3]
      %v1654 = vunpack.c.l.bf16 %v1651
      %v1655 = vunpack.c.l.bf16 %v1652
      %v1656 = vunpack.c.l.bf16 %v1653
      %v1657 = vstv %s1633
      %v1658 = vmul.f32 %v1654, %v1657
      %v1659 = vmul.f32 %v1655, %v1657
      %v1660 = vmul.f32 %v1656, %v1657
      %v1661 = vadd.f32 %v1645, %v1658
      %v1662 = vadd.f32 %v1646, %v1659
      %v1663 = vadd.f32 %v1647, %v1660
      %v1664 = vpack.c.bf16 %v1662, %v1661
      %v1665 = vpack.c.bf16 %v1663, %v1663
      %v1668 = vunpack.c.l.b16 %v1664
      %v1669 = vunpack.c.h.b16 %v1664
      %v1670 = vunpack.c.l.b16 %v1665
      %v1671 = vpack.c.b16 %v1668, %v1668
      %v1672 = vpack.c.b16 %v1669, %v1669
      %v1673 = vpack.c.b16 %v1670, %v1670
      %s1677 = scalar_lea.vmem [#allocation2], 216
      %1678 = vst.msk [vmem:[%s1677] sm:$0xf] %vm487, %v1671
      %1679 = vst.msk [vmem:[%s1677 + $0x4] sm:$0xf] %vm487, %v1672
      %1680 = vst.msk [vmem:[%s1677 + $0x8] sm:$0x3] %vm490, %v1673
      %s1681 = sadd.s32 %s424, 19
      %p1682 = scmp.ge.s32.totalorder %s1681, 2
      %p1683 = scmp.lt.s32.totalorder %s1681, 18
      %p1684 = pnand %p1682, %p1683
      %p1685 = pneg %p1684
      %s1686 = scalar_select %p1685, 1.0, 0.0
      %p1687 = scmp.gt.s32.totalorder %s1549, 0
      %s1688 = scalar_select %p1687, %s1549, 0
      %p1689 = scmp.lt.s32.totalorder %s1688, 15
      %s1690 = scalar_select %p1689, %s1688, 15
      %s1691 = scvt.s32.f32 %s1690
      %s1692 = smul.f32 %s1691, 0.46666667
      %s1693 = sfloor.f32 %s1692
      %s1694 = scvt.f32.s32.to.zero.pseudo %s1693
      %s1695 = sadd.s32 %s1694, 1
      %p1696 = scmp.lt.s32.totalorder %s1695, 7
      %s1697 = scalar_select %p1696, %s1695, 7
      %s1698 = ssub.f32 %s1692, %s1693
      %s1699 = smul.f32 %s1698, %s1686
      %s1700 = ssub.f32 %s1686, %s1699
      %s1701 = smul.u32 %s1694, 3
      %s1702 = smul.addr %s1701, 4
      %s1703 = scalar_lea.vmem %s389, %s1702
      %v1704 = vld [vmem:[%s1703] sm:$0xf]
      %v1705 = vld [vmem:[%s1703 + $0x4] sm:$0xf]
      %v1706 = vld [vmem:[%s1703 + $0x8] sm:$0x3]
      %v1707 = vunpack.c.l.bf16 %v1704
      %v1708 = vunpack.c.l.bf16 %v1705
      %v1709 = vunpack.c.l.bf16 %v1706
      %v1710 = vstv %s1700
      %v1711 = vmul.f32 %v1707, %v1710
      %v1712 = vmul.f32 %v1708, %v1710
      %v1713 = vmul.f32 %v1709, %v1710
      %s1714 = smul.u32 %s1697, 3
      %s1715 = smul.addr %s1714, 4
      %s1716 = scalar_lea.vmem %s389, %s1715
      %v1717 = vld [vmem:[%s1716] sm:$0xf]
      %v1718 = vld [vmem:[%s1716 + $0x4] sm:$0xf]
      %v1719 = vld [vmem:[%s1716 + $0x8] sm:$0x3]
      %v1720 = vunpack.c.l.bf16 %v1717
      %v1721 = vunpack.c.l.bf16 %v1718
      %v1722 = vunpack.c.l.bf16 %v1719
      %v1723 = vstv %s1699
      %v1724 = vmul.f32 %v1720, %v1723
      %v1725 = vmul.f32 %v1721, %v1723
      %v1726 = vmul.f32 %v1722, %v1723
      %v1727 = vadd.f32 %v1711, %v1724
      %v1728 = vadd.f32 %v1712, %v1725
      %v1729 = vadd.f32 %v1713, %v1726
      %v1730 = vpack.c.bf16 %v1728, %v1727
      %v1731 = vpack.c.bf16 %v1729, %v1729
      %v1734 = vunpack.c.l.b16 %v1730
      %v1735 = vunpack.c.h.b16 %v1730
      %v1736 = vunpack.c.l.b16 %v1731
      %v1737 = vpack.c.b16 %v1734, %v1734
      %v1738 = vpack.c.b16 %v1735, %v1735
      %v1739 = vpack.c.b16 %v1736, %v1736
      %s1743 = scalar_lea.vmem [#allocation2], 228
      %1744 = vst.msk [vmem:[%s1743] sm:$0xf] %vm487, %v1737
      %1745 = vst.msk [vmem:[%s1743 + $0x4] sm:$0xf] %vm487, %v1738
      %1746 = vst.msk [vmem:[%s1743 + $0x8] sm:$0x3] %vm490, %v1739
      %v1747 = vld [vmem:[#allocation2] sm:$0xf]
      %v1748 = vld [vmem:[#allocation2 + $0x4] sm:$0xf]
      %v1749 = vld [vmem:[#allocation2 + $0xc] sm:$0xf]
      %v1750 = vld [vmem:[#allocation2 + $0x10] sm:$0xf]
      %v1751 = vld [vmem:[#allocation2 + $0x18] sm:$0xf]
      %v1752 = vld [vmem:[#allocation2 + $0x1c] sm:$0xf]
      %v1753 = vld [vmem:[#allocation2 + $0x24] sm:$0xf]
      %v1754 = vld [vmem:[#allocation2 + $0x28] sm:$0xf]
      %v1755 = vld [vmem:[#allocation2 + $0x30] sm:$0xf]
      %v1756 = vld [vmem:[#allocation2 + $0x34] sm:$0xf]
      %v1757 = vld [vmem:[#allocation2 + $0x3c] sm:$0xf]
      %v1758 = vld [vmem:[#allocation2 + $0x40] sm:$0xf]
      %v1759 = vld [vmem:[#allocation2 + $0x48] sm:$0xf]
      %v1760 = vld [vmem:[#allocation2 + $0x4c] sm:$0xf]
      %v1761 = vld [vmem:[#allocation2 + $0x54] sm:$0xf]
      %v1762 = vld [vmem:[#allocation2 + $0x58] sm:$0xf]
      %v1763 = vld [vmem:[#allocation2 + $0x60] sm:$0xf]
      %v1764 = vld [vmem:[#allocation2 + $0x64] sm:$0xf]
      %v1765 = vld [vmem:[#allocation2 + $0x6c] sm:$0xf]
      %v1766 = vld [vmem:[#allocation2 + $0x70] sm:$0xf]
      %v1767 = vld [vmem:[#allocation2 + $0x78] sm:$0xf]
      %v1768 = vld [vmem:[#allocation2 + $0x7c] sm:$0xf]
      %v1769 = vld [vmem:[#allocation2 + $0x84] sm:$0xf]
      %v1770 = vld [vmem:[#allocation2 + $0x88] sm:$0xf]
      %v1771 = vld [vmem:[#allocation2 + $0x90] sm:$0xf]
      %v1772 = vld [vmem:[#allocation2 + $0x94] sm:$0xf]
      %v1773 = vld [vmem:[#allocation2 + $0x9c] sm:$0xf]
      %v1774 = vld [vmem:[#allocation2 + $0xa0] sm:$0xf]
      %v1775 = vld [vmem:[#allocation2 + $0xa8] sm:$0xf]
      %v1776 = vld [vmem:[#allocation2 + $0xac] sm:$0xf]
      %v1777 = vld [vmem:[#allocation2 + $0xb4] sm:$0xf]
      %v1778 = vld [vmem:[#allocation2 + $0xb8] sm:$0xf]
      %v1779 = vld [vmem:[%s2] sm:$0x3]
      %v1780 = vld [vmem:[#allocation2] sm:$0xe]
      %v1781 = vld [vmem:[#allocation2 + $0x8] sm:$0x1]
      %v1782 = vld [vmem:[#allocation2 + $0xc] sm:$0xe]
      %v1783 = vld [vmem:[#allocation2 + $0x14] sm:$0x1]
      %v1784 = vld [vmem:[#allocation2 + $0x18] sm:$0xe]
      %v1785 = vld [vmem:[#allocation2 + $0x20] sm:$0x1]
      %v1786 = vld [vmem:[#allocation2 + $0x24] sm:$0xe]
      %v1787 = vld [vmem:[#allocation2 + $0x2c] sm:$0x1]
      %v1788 = vld [vmem:[#allocation2 + $0x30] sm:$0xe]
      %v1789 = vld [vmem:[#allocation2 + $0x38] sm:$0x1]
      %v1790 = vld [vmem:[#allocation2 + $0x3c] sm:$0xe]
      %v1791 = vld [vmem:[#allocation2 + $0x44] sm:$0x1]
      %v1792 = vld [vmem:[#allocation2 + $0x48] sm:$0xe]
      %v1793 = vld [vmem:[#allocation2 + $0x50] sm:$0x1]
      %v1794 = vld [vmem:[#allocation2 + $0x54] sm:$0xe]
      %v1795 = vld [vmem:[#allocation2 + $0x5c] sm:$0x1]
      %v1796 = vld [vmem:[#allocation2 + $0x60] sm:$0xe]
      %v1797 = vld [vmem:[#allocation2 + $0x68] sm:$0x1]
      %v1798 = vld [vmem:[#allocation2 + $0x6c] sm:$0xe]
      %v1799 = vld [vmem:[#allocation2 + $0x74] sm:$0x1]
      %v1800 = vld [vmem:[#allocation2 + $0x78] sm:$0xe]
      %v1801 = vld [vmem:[#allocation2 + $0x80] sm:$0x1]
      %v1802 = vld [vmem:[#allocation2 + $0x84] sm:$0xe]
      %v1803 = vld [vmem:[#allocation2 + $0x8c] sm:$0x1]
      %v1804 = vld [vmem:[#allocation2 + $0x90] sm:$0xe]
      %v1805 = vld [vmem:[#allocation2 + $0x98] sm:$0x1]
      %v1806 = vld [vmem:[#allocation2 + $0x9c] sm:$0xe]
      %v1807 = vld [vmem:[#allocation2 + $0xa4] sm:$0x1]
      %v1808 = vld [vmem:[#allocation2 + $0xa8] sm:$0xe]
      %v1809 = vld [vmem:[#allocation2 + $0xb0] sm:$0x1]
      %v1810 = vld [vmem:[#allocation2 + $0xb4] sm:$0xe]
      %v1811 = vld [vmem:[#allocation2 + $0xbc] sm:$0x1]
      %vm1860 = vcmask 1042432
      %vm1861 = vcmask 1046532
      %vm1862 = vmor %vm1860, %vm1861
      %v1863 = vrot.slane %v1780, 5
      %v1864 = vrot.slane %v1863, 4
      %v1865 = vrot.slane %v1748, 5
      %v1866 = vsel %vm1862, %v1864, %v1865
      %v1867 = vrot.slane %v1865, 4
      %v1868 = vrot.slane %v1781, 5
      %v1869 = vsel %vm1862, %v1867, %v1868
      %v1870 = vrot.slane %v1782, 5
      %v1871 = vrot.slane %v1870, 4
      %v1872 = vrot.slane %v1750, 5
      %v1873 = vsel %vm1862, %v1871, %v1872
      %v1874 = vrot.slane %v1872, 4
      %v1875 = vrot.slane %v1783, 5
      %v1876 = vsel %vm1862, %v1874, %v1875
      %v1877 = vrot.slane %v1784, 5
      %v1878 = vrot.slane %v1877, 4
      %v1879 = vrot.slane %v1752, 5
      %v1880 = vsel %vm1862, %v1878, %v1879
      %v1881 = vrot.slane %v1879, 4
      %v1882 = vrot.slane %v1785, 5
      %v1883 = vsel %vm1862, %v1881, %v1882
      %v1884 = vrot.slane %v1786, 5
      %v1885 = vrot.slane %v1884, 4
      %v1886 = vrot.slane %v1754, 5
      %v1887 = vsel %vm1862, %v1885, %v1886
      %v1888 = vrot.slane %v1886, 4
      %v1889 = vrot.slane %v1787, 5
      %v1890 = vsel %vm1862, %v1888, %v1889
      %v1891 = vrot.slane %v1788, 5
      %v1892 = vrot.slane %v1891, 4
      %v1893 = vrot.slane %v1756, 5
      %v1894 = vsel %vm1862, %v1892, %v1893
      %v1895 = vrot.slane %v1893, 4
      %v1896 = vrot.slane %v1789, 5
      %v1897 = vsel %vm1862, %v1895, %v1896
      %v1898 = vrot.slane %v1790, 5
      %v1899 = vrot.slane %v1898, 4
      %v1900 = vrot.slane %v1758, 5
      %v1901 = vsel %vm1862, %v1899, %v1900
      %v1902 = vrot.slane %v1900, 4
      %v1903 = vrot.slane %v1791, 5
      %v1904 = vsel %vm1862, %v1902, %v1903
      %v1905 = vrot.slane %v1792, 5
      %v1906 = vrot.slane %v1905, 4
      %v1907 = vrot.slane %v1760, 5
      %v1908 = vsel %vm1862, %v1906, %v1907
      %v1909 = vrot.slane %v1907, 4
      %v1910 = vrot.slane %v1793, 5
      %v1911 = vsel %vm1862, %v1909, %v1910
      %v1912 = vrot.slane %v1794, 5
      %v1913 = vrot.slane %v1912, 4
      %v1914 = vrot.slane %v1762, 5
      %v1915 = vsel %vm1862, %v1913, %v1914
      %v1916 = vrot.slane %v1914, 4
      %v1917 = vrot.slane %v1795, 5
      %v1918 = vsel %vm1862, %v1916, %v1917
      %v1919 = vrot.slane %v1796, 5
      %v1920 = vrot.slane %v1919, 4
      %v1921 = vrot.slane %v1764, 5
      %v1922 = vsel %vm1862, %v1920, %v1921
      %v1923 = vrot.slane %v1921, 4
      %v1924 = vrot.slane %v1797, 5
      %v1925 = vsel %vm1862, %v1923, %v1924
      %v1926 = vrot.slane %v1798, 5
      %v1927 = vrot.slane %v1926, 4
      %v1928 = vrot.slane %v1766, 5
      %v1929 = vsel %vm1862, %v1927, %v1928
      %v1930 = vrot.slane %v1928, 4
      %v1931 = vrot.slane %v1799, 5
      %v1932 = vsel %vm1862, %v1930, %v1931
      %v1933 = vrot.slane %v1800, 5
      %v1934 = vrot.slane %v1933, 4
      %v1935 = vrot.slane %v1768, 5
      %v1936 = vsel %vm1862, %v1934, %v1935
      %v1937 = vrot.slane %v1935, 4
      %v1938 = vrot.slane %v1801, 5
      %v1939 = vsel %vm1862, %v1937, %v1938
      %v1940 = vrot.slane %v1802, 5
      %v1941 = vrot.slane %v1940, 4
      %v1942 = vrot.slane %v1770, 5
      %v1943 = vsel %vm1862, %v1941, %v1942
      %v1944 = vrot.slane %v1942, 4
      %v1945 = vrot.slane %v1803, 5
      %v1946 = vsel %vm1862, %v1944, %v1945
      %v1947 = vrot.slane %v1804, 5
      %v1948 = vrot.slane %v1947, 4
      %v1949 = vrot.slane %v1772, 5
      %v1950 = vsel %vm1862, %v1948, %v1949
      %v1951 = vrot.slane %v1949, 4
      %v1952 = vrot.slane %v1805, 5
      %v1953 = vsel %vm1862, %v1951, %v1952
      %v1954 = vrot.slane %v1806, 5
      %v1955 = vrot.slane %v1954, 4
      %v1956 = vrot.slane %v1774, 5
      %v1957 = vsel %vm1862, %v1955, %v1956
      %v1958 = vrot.slane %v1956, 4
      %v1959 = vrot.slane %v1807, 5
      %v1960 = vsel %vm1862, %v1958, %v1959
      %v1961 = vrot.slane %v1808, 5
      %v1962 = vrot.slane %v1961, 4
      %v1963 = vrot.slane %v1776, 5
      %v1964 = vsel %vm1862, %v1962, %v1963
      %v1965 = vrot.slane %v1963, 4
      %v1966 = vrot.slane %v1809, 5
      %v1967 = vsel %vm1862, %v1965, %v1966
      %v1968 = vrot.slane %v1810, 5
      %v1969 = vrot.slane %v1968, 4
      %v1970 = vrot.slane %v1778, 5
      %v1971 = vsel %vm1862, %v1969, %v1970
      %v1972 = vrot.slane %v1970, 4
      %v1973 = vrot.slane %v1811, 5
      %v1974 = vsel %vm1862, %v1972, %v1973
      %s1975 = scalar_lea.vmem %s2, 2
      %v1976 = vld [vmem:[%s1975] sm:$0x3]
      %v1977 = vunpack.c.l.b16 %v1866
      %v1978 = vunpack.c.l.b16 %v1869
      %v1979 = vunpack.c.l.b16 %v1873
      %v1980 = vunpack.c.l.b16 %v1876
      %v1981 = vunpack.c.l.b16 %v1880
      %v1982 = vunpack.c.l.b16 %v1883
      %v1983 = vunpack.c.l.b16 %v1887
      %v1984 = vunpack.c.l.b16 %v1890
      %v1985 = vunpack.c.l.b16 %v1894
      %v1986 = vunpack.c.l.b16 %v1897
      %v1987 = vunpack.c.l.b16 %v1901
      %v1988 = vunpack.c.l.b16 %v1904
      %v1989 = vunpack.c.l.b16 %v1908
      %v1990 = vunpack.c.l.b16 %v1911
      %v1991 = vunpack.c.l.b16 %v1915
      %v1992 = vunpack.c.l.b16 %v1918
      %v1993 = vunpack.c.l.b16 %v1922
      %v1994 = vunpack.c.l.b16 %v1925
      %v1995 = vunpack.c.l.b16 %v1929
      %v1996 = vunpack.c.l.b16 %v1932
      %v1997 = vunpack.c.l.b16 %v1936
      %v1998 = vunpack.c.l.b16 %v1939
      %v1999 = vunpack.c.l.b16 %v1943
      %v2000 = vunpack.c.l.b16 %v1946
      %v2001 = vunpack.c.l.b16 %v1950
      %v2002 = vunpack.c.l.b16 %v1953
      %v2003 = vunpack.c.l.b16 %v1957
      %v2004 = vunpack.c.l.b16 %v1960
      %v2005 = vunpack.c.l.b16 %v1964
      %v2006 = vunpack.c.l.b16 %v1967
      %v2007 = vunpack.c.l.b16 %v1971
      %v2008 = vunpack.c.l.b16 %v1974
      %v2009 = vpack.c.b16 %v1978, %v1977
      %v2010 = vpack.c.b16 %v1980, %v1979
      %v2011 = vpack.c.b16 %v1982, %v1981
      %v2012 = vpack.c.b16 %v1984, %v1983
      %v2013 = vpack.c.b16 %v1986, %v1985
      %v2014 = vpack.c.b16 %v1988, %v1987
      %v2015 = vpack.c.b16 %v1990, %v1989
      %v2016 = vpack.c.b16 %v1992, %v1991
      %v2017 = vpack.c.b16 %v1994, %v1993
      %v2018 = vpack.c.b16 %v1996, %v1995
      %v2019 = vpack.c.b16 %v1998, %v1997
      %v2020 = vpack.c.b16 %v2000, %v1999
      %v2021 = vpack.c.b16 %v2002, %v2001
      %v2022 = vpack.c.b16 %v2004, %v2003
      %v2023 = vpack.c.b16 %v2006, %v2005
      %v2024 = vpack.c.b16 %v2008, %v2007
      %vm2025 = vcmask 31744
      %v2027 = vsel %vm2025, %v2009, 0
      %v2030 = vsel %vm2025, %v2010, 0
      %v2033 = vsel %vm2025, %v2011, 0
      %v2036 = vsel %vm2025, %v2012, 0
      %v2039 = vsel %vm2025, %v2013, 0
      %v2042 = vsel %vm2025, %v2014, 0
      %v2045 = vsel %vm2025, %v2015, 0
      %v2048 = vsel %vm2025, %v2016, 0
      %v2051 = vsel %vm2025, %v2017, 0
      %v2054 = vsel %vm2025, %v2018, 0
      %v2057 = vsel %vm2025, %v2019, 0
      %v2060 = vsel %vm2025, %v2020, 0
      %v2063 = vsel %vm2025, %v2021, 0
      %v2066 = vsel %vm2025, %v2022, 0
      %v2069 = vsel %vm2025, %v2023, 0
      %v2072 = vsel %vm2025, %v2024, 0
      %vm2074 = vcmask 1041408
      %v2076 = vsel %vm2074, %v1976, 0
      %2078 = vmatprep.subr.bf16.mxu0 0
      %2079 = vmatpush1.bf16.msra.mxu0 0
      %2080 = vmatprep.subr.bf16.mxu0 0
      %2081 = vmatpush1.bf16.msra.mxu0 0
      %2082 = vmatprep.subr.bf16.mxu0 0
      %2083 = vmatpush1.bf16.msra.mxu0 0
      %2084 = vmatprep.subr.bf16.mxu0 0
      %2085 = vmatpush1.bf16.msra.mxu0 0
      %2086 = vmatprep.subr.bf16.mxu0 0
      %2087 = vmatpush1.bf16.msra.mxu0 0
      %2088 = vmatprep.subr.bf16.mxu0 0
      %2089 = vmatpush1.bf16.msra.mxu0 0
      %2090 = vmatprep.subr.bf16.mxu0 0
      %2091 = vmatpush1.bf16.msra.mxu0 0
      %2092 = vmatprep.subr.bf16.mxu0 0
      %2093 = vmatpush1.bf16.msra.mxu0 %v2076
      %2094 = vmatprep.subr.bf16.mxu0 0
      %2095 = vmatpush2.bf16.msra.mxu0 0
      %2096 = vmatprep.subr.bf16.mxu0 0
      %2097 = vmatpush2.bf16.msra.mxu0 0
      %2098 = vmatprep.subr.bf16.mxu0 0
      %2099 = vmatpush2.bf16.msra.mxu0 0
      %2100 = vmatprep.subr.bf16.mxu0 0
      %2101 = vmatpush2.bf16.msra.mxu0 0
      %2102 = vmatprep.subr.bf16.mxu0 0
      %2103 = vmatpush2.bf16.msra.mxu0 0
      %2104 = vmatprep.subr.bf16.mxu0 0
      %2105 = vmatpush2.bf16.msra.mxu0 0
      %2106 = vmatprep.subr.bf16.mxu0 0
      %2107 = vmatpush2.bf16.msra.mxu0 0
      %2108 = vmatprep.subr.bf16.mxu0 0
      %2109 = vmatpush2.bf16.msra.mxu0 0
      %2110 = vmatprep.mubr.bf16.mxu0 0
      %2111 = vmatmul.mubr.bf16.gmra.mxu0 %v2027
      %v2112 = vpop.f32.mrf.mxu0
      %v2113 = vadd.f32 0.0, %v2112
      %v2114 = vpop.f32.mrf.mxu0
      %v2115 = vpop.f32.mrf.mxu0
      %v2116 = vadd.f32 0.0, %v2115
      %v2117 = vpop.f32.mrf.mxu0
      %2118 = vmatprep.mubr.bf16.mxu0 0
      %2119 = vmatmul.mubr.bf16.gmra.mxu0 %v2030
      %v2120 = vpop.f32.mrf.mxu0
      %v2121 = vadd.f32 0.0, %v2120
      %v2122 = vpop.f32.mrf.mxu0
      %v2123 = vpop.f32.mrf.mxu0
      %v2124 = vadd.f32 0.0, %v2123
      %v2125 = vpop.f32.mrf.mxu0
      %2126 = vmatprep.mubr.bf16.mxu0 0
      %2127 = vmatmul.mubr.bf16.gmra.mxu0 %v2033
      %v2128 = vpop.f32.mrf.mxu0
      %v2129 = vadd.f32 0.0, %v2128
      %v2130 = vpop.f32.mrf.mxu0
      %v2131 = vpop.f32.mrf.mxu0
      %v2132 = vadd.f32 0.0, %v2131
      %v2133 = vpop.f32.mrf.mxu0
      %2134 = vmatprep.mubr.bf16.mxu0 0
      %2135 = vmatmul.mubr.bf16.gmra.mxu0 %v2036
      %v2136 = vpop.f32.mrf.mxu0
      %v2137 = vadd.f32 0.0, %v2136
      %v2138 = vpop.f32.mrf.mxu0
      %v2139 = vpop.f32.mrf.mxu0
      %v2140 = vadd.f32 0.0, %v2139
      %v2141 = vpop.f32.mrf.mxu0
      %2142 = vmatprep.mubr.bf16.mxu0 0
      %2143 = vmatmul.mubr.bf16.gmra.mxu0 %v2039
      %v2144 = vpop.f32.mrf.mxu0
      %v2145 = vadd.f32 0.0, %v2144
      %v2146 = vpop.f32.mrf.mxu0
      %v2147 = vpop.f32.mrf.mxu0
      %v2148 = vadd.f32 0.0, %v2147
      %v2149 = vpop.f32.mrf.mxu0
      %2150 = vmatprep.mubr.bf16.mxu0 0
      %2151 = vmatmul.mubr.bf16.gmra.mxu0 %v2042
      %v2152 = vpop.f32.mrf.mxu0
      %v2153 = vadd.f32 0.0, %v2152
      %v2154 = vpop.f32.mrf.mxu0
      %v2155 = vpop.f32.mrf.mxu0
      %v2156 = vadd.f32 0.0, %v2155
      %v2157 = vpop.f32.mrf.mxu0
      %2158 = vmatprep.mubr.bf16.mxu0 0
      %2159 = vmatmul.mubr.bf16.gmra.mxu0 %v2045
      %v2160 = vpop.f32.mrf.mxu0
      %v2161 = vadd.f32 0.0, %v2160
      %v2162 = vpop.f32.mrf.mxu0
      %v2163 = vpop.f32.mrf.mxu0
      %v2164 = vadd.f32 0.0, %v2163
      %v2165 = vpop.f32.mrf.mxu0
      %2166 = vmatprep.mubr.bf16.mxu0 0
      %2167 = vmatmul.mubr.bf16.gmra.mxu0 %v2048
      %v2168 = vpop.f32.mrf.mxu0
      %v2169 = vadd.f32 0.0, %v2168
      %v2170 = vpop.f32.mrf.mxu0
      %v2171 = vpop.f32.mrf.mxu0
      %v2172 = vadd.f32 0.0, %v2171
      %v2173 = vpop.f32.mrf.mxu0
      %2174 = vmatprep.mubr.bf16.mxu0 0
      %2175 = vmatmul.mubr.bf16.gmra.mxu0 %v2051
      %v2176 = vpop.f32.mrf.mxu0
      %v2177 = vadd.f32 0.0, %v2176
      %v2178 = vpop.f32.mrf.mxu0
      %v2179 = vpop.f32.mrf.mxu0
      %v2180 = vadd.f32 0.0, %v2179
      %v2181 = vpop.f32.mrf.mxu0
      %2182 = vmatprep.mubr.bf16.mxu0 0
      %2183 = vmatmul.mubr.bf16.gmra.mxu0 %v2054
      %v2184 = vpop.f32.mrf.mxu0
      %v2185 = vadd.f32 0.0, %v2184
      %v2186 = vpop.f32.mrf.mxu0
      %v2187 = vpop.f32.mrf.mxu0
      %v2188 = vadd.f32 0.0, %v2187
      %v2189 = vpop.f32.mrf.mxu0
      %2190 = vmatprep.mubr.bf16.mxu0 0
      %2191 = vmatmul.mubr.bf16.gmra.mxu0 %v2057
      %v2192 = vpop.f32.mrf.mxu0
      %v2193 = vadd.f32 0.0, %v2192
      %v2194 = vpop.f32.mrf.mxu0
      %v2195 = vpop.f32.mrf.mxu0
      %v2196 = vadd.f32 0.0, %v2195
      %v2197 = vpop.f32.mrf.mxu0
      %2198 = vmatprep.mubr.bf16.mxu0 0
      %2199 = vmatmul.mubr.bf16.gmra.mxu0 %v2060
      %v2200 = vpop.f32.mrf.mxu0
      %v2201 = vadd.f32 0.0, %v2200
      %v2202 = vpop.f32.mrf.mxu0
      %v2203 = vpop.f32.mrf.mxu0
      %v2204 = vadd.f32 0.0, %v2203
      %v2205 = vpop.f32.mrf.mxu0
      %2206 = vmatprep.mubr.bf16.mxu0 0
      %2207 = vmatmul.mubr.bf16.gmra.mxu0 %v2063
      %v2208 = vpop.f32.mrf.mxu0
      %v2209 = vadd.f32 0.0, %v2208
      %v2210 = vpop.f32.mrf.mxu0
      %v2211 = vpop.f32.mrf.mxu0
      %v2212 = vadd.f32 0.0, %v2211
      %v2213 = vpop.f32.mrf.mxu0
      %2214 = vmatprep.mubr.bf16.mxu0 0
      %2215 = vmatmul.mubr.bf16.gmra.mxu0 %v2066
      %v2216 = vpop.f32.mrf.mxu0
      %v2217 = vadd.f32 0.0, %v2216
      %v2218 = vpop.f32.mrf.mxu0
      %v2219 = vpop.f32.mrf.mxu0
      %v2220 = vadd.f32 0.0, %v2219
      %v2221 = vpop.f32.mrf.mxu0
      %2222 = vmatprep.mubr.bf16.mxu0 0
      %2223 = vmatmul.mubr.bf16.gmra.mxu0 %v2069
      %v2224 = vpop.f32.mrf.mxu0
      %v2225 = vadd.f32 0.0, %v2224
      %v2226 = vpop.f32.mrf.mxu0
      %v2227 = vpop.f32.mrf.mxu0
      %v2228 = vadd.f32 0.0, %v2227
      %v2229 = vpop.f32.mrf.mxu0
      %2230 = vmatprep.mubr.bf16.mxu0 0
      %2231 = vmatmul.mubr.bf16.gmra.mxu0 %v2072
      %v2232 = vpop.f32.mrf.mxu0
      %v2233 = vadd.f32 0.0, %v2232
      %v2234 = vpop.f32.mrf.mxu0
      %v2235 = vpop.f32.mrf.mxu0
      %v2236 = vadd.f32 0.0, %v2235
      %v2237 = vpop.f32.mrf.mxu0
      %2238 = vdwg.mxu0
      %v2255 = vunpack.c.l.b16 %v1747
      %v2256 = vunpack.c.l.b16 %v1748
      %v2257 = vunpack.c.l.b16 %v1749
      %v2258 = vunpack.c.l.b16 %v1750
      %v2259 = vunpack.c.l.b16 %v1751
      %v2260 = vunpack.c.l.b16 %v1752
      %v2261 = vunpack.c.l.b16 %v1753
      %v2262 = vunpack.c.l.b16 %v1754
      %v2263 = vunpack.c.l.b16 %v1755
      %v2264 = vunpack.c.l.b16 %v1756
      %v2265 = vunpack.c.l.b16 %v1757
      %v2266 = vunpack.c.l.b16 %v1758
      %v2267 = vunpack.c.l.b16 %v1759
      %v2268 = vunpack.c.l.b16 %v1760
      %v2269 = vunpack.c.l.b16 %v1761
      %v2270 = vunpack.c.l.b16 %v1762
      %v2271 = vunpack.c.l.b16 %v1763
      %v2272 = vunpack.c.l.b16 %v1764
      %v2273 = vunpack.c.l.b16 %v1765
      %v2274 = vunpack.c.l.b16 %v1766
      %v2275 = vunpack.c.l.b16 %v1767
      %v2276 = vunpack.c.l.b16 %v1768
      %v2277 = vunpack.c.l.b16 %v1769
      %v2278 = vunpack.c.l.b16 %v1770
      %v2279 = vunpack.c.l.b16 %v1771
      %v2280 = vunpack.c.l.b16 %v1772
      %v2281 = vunpack.c.l.b16 %v1773
      %v2282 = vunpack.c.l.b16 %v1774
      %v2283 = vunpack.c.l.b16 %v1775
      %v2284 = vunpack.c.l.b16 %v1776
      %v2285 = vunpack.c.l.b16 %v1777
      %v2286 = vunpack.c.l.b16 %v1778
      %v2287 = vpack.c.b16 %v2256, %v2255
      %v2288 = vpack.c.b16 %v2258, %v2257
      %v2289 = vpack.c.b16 %v2260, %v2259
      %v2290 = vpack.c.b16 %v2262, %v2261
      %v2291 = vpack.c.b16 %v2264, %v2263
      %v2292 = vpack.c.b16 %v2266, %v2265
      %v2293 = vpack.c.b16 %v2268, %v2267
      %v2294 = vpack.c.b16 %v2270, %v2269
      %v2295 = vpack.c.b16 %v2272, %v2271
      %v2296 = vpack.c.b16 %v2274, %v2273
      %v2297 = vpack.c.b16 %v2276, %v2275
      %v2298 = vpack.c.b16 %v2278, %v2277
      %v2299 = vpack.c.b16 %v2280, %v2279
      %v2300 = vpack.c.b16 %v2282, %v2281
      %v2301 = vpack.c.b16 %v2284, %v2283
      %v2302 = vpack.c.b16 %v2286, %v2285
      %v2304 = vsel %vm2025, %v2287, 0
      %v2307 = vsel %vm2025, %v2288, 0
      %v2310 = vsel %vm2025, %v2289, 0
      %v2313 = vsel %vm2025, %v2290, 0
      %v2316 = vsel %vm2025, %v2291, 0
      %v2319 = vsel %vm2025, %v2292, 0
      %v2322 = vsel %vm2025, %v2293, 0
      %v2325 = vsel %vm2025, %v2294, 0
      %v2328 = vsel %vm2025, %v2295, 0
      %v2331 = vsel %vm2025, %v2296, 0
      %v2334 = vsel %vm2025, %v2297, 0
      %v2337 = vsel %vm2025, %v2298, 0
      %v2340 = vsel %vm2025, %v2299, 0
      %v2343 = vsel %vm2025, %v2300, 0
      %v2346 = vsel %vm2025, %v2301, 0
      %v2349 = vsel %vm2025, %v2302, 0
      %v2352 = vsel %vm2074, %v1779, 0
      %2354 = vmatprep.subr.bf16.mxu0 0
      %2355 = vmatpush1.bf16.msra.mxu0 0
      %2356 = vmatprep.subr.bf16.mxu0 0
      %2357 = vmatpush1.bf16.msra.mxu0 0
      %2358 = vmatprep.subr.bf16.mxu0 0
      %2359 = vmatpush1.bf16.msra.mxu0 0
      %2360 = vmatprep.subr.bf16.mxu0 0
      %2361 = vmatpush1.bf16.msra.mxu0 0
      %2362 = vmatprep.subr.bf16.mxu0 0
      %2363 = vmatpush1.bf16.msra.mxu0 0
      %2364 = vmatprep.subr.bf16.mxu0 0
      %2365 = vmatpush1.bf16.msra.mxu0 0
      %2366 = vmatprep.subr.bf16.mxu0 0
      %2367 = vmatpush1.bf16.msra.mxu0 0
      %2368 = vmatprep.subr.bf16.mxu0 0
      %2369 = vmatpush1.bf16.msra.mxu0 %v2352
      %2370 = vmatprep.subr.bf16.mxu0 0
      %2371 = vmatpush2.bf16.msra.mxu0 0
      %2372 = vmatprep.subr.bf16.mxu0 0
      %2373 = vmatpush2.bf16.msra.mxu0 0
      %2374 = vmatprep.subr.bf16.mxu0 0
      %2375 = vmatpush2.bf16.msra.mxu0 0
      %2376 = vmatprep.subr.bf16.mxu0 0
      %2377 = vmatpush2.bf16.msra.mxu0 0
      %2378 = vmatprep.subr.bf16.mxu0 0
      %2379 = vmatpush2.bf16.msra.mxu0 0
      %2380 = vmatprep.subr.bf16.mxu0 0
      %2381 = vmatpush2.bf16.msra.mxu0 0
      %2382 = vmatprep.subr.bf16.mxu0 0
      %2383 = vmatpush2.bf16.msra.mxu0 0
      %2384 = vmatprep.subr.bf16.mxu0 0
      %2385 = vmatpush2.bf16.msra.mxu0 0
      %2386 = vmatprep.mubr.bf16.mxu0 0
      %2387 = vmatmul.mubr.bf16.gmra.mxu0 %v2304
      %v2388 = vpop.f32.mrf.mxu0
      %v2389 = vadd.f32 %v2113, %v2388
      %v2390 = vpop.f32.mrf.mxu0
      %v2391 = vpop.f32.mrf.mxu0
      %v2392 = vadd.f32 %v2116, %v2391
      %v2393 = vpop.f32.mrf.mxu0
      %2394 = vmatprep.mubr.bf16.mxu0 0
      %2395 = vmatmul.mubr.bf16.gmra.mxu0 %v2307
      %v2396 = vpop.f32.mrf.mxu0
      %v2397 = vadd.f32 %v2121, %v2396
      %v2398 = vpop.f32.mrf.mxu0
      %v2399 = vpop.f32.mrf.mxu0
      %v2400 = vadd.f32 %v2124, %v2399
      %v2401 = vpop.f32.mrf.mxu0
      %2402 = vmatprep.mubr.bf16.mxu0 0
      %2403 = vmatmul.mubr.bf16.gmra.mxu0 %v2310
      %v2404 = vpop.f32.mrf.mxu0
      %v2405 = vadd.f32 %v2129, %v2404
      %v2406 = vpop.f32.mrf.mxu0
      %v2407 = vpop.f32.mrf.mxu0
      %v2408 = vadd.f32 %v2132, %v2407
      %v2409 = vpop.f32.mrf.mxu0
      %2410 = vmatprep.mubr.bf16.mxu0 0
      %2411 = vmatmul.mubr.bf16.gmra.mxu0 %v2313
      %v2412 = vpop.f32.mrf.mxu0
      %v2413 = vadd.f32 %v2137, %v2412
      %v2414 = vpop.f32.mrf.mxu0
      %v2415 = vpop.f32.mrf.mxu0
      %v2416 = vadd.f32 %v2140, %v2415
      %v2417 = vpop.f32.mrf.mxu0
      %2418 = vmatprep.mubr.bf16.mxu0 0
      %2419 = vmatmul.mubr.bf16.gmra.mxu0 %v2316
      %v2420 = vpop.f32.mrf.mxu0
      %v2421 = vadd.f32 %v2145, %v2420
      %v2422 = vpop.f32.mrf.mxu0
      %v2423 = vpop.f32.mrf.mxu0
      %v2424 = vadd.f32 %v2148, %v2423
      %v2425 = vpop.f32.mrf.mxu0
      %2426 = vmatprep.mubr.bf16.mxu0 0
      %2427 = vmatmul.mubr.bf16.gmra.mxu0 %v2319
      %v2428 = vpop.f32.mrf.mxu0
      %v2429 = vadd.f32 %v2153, %v2428
      %v2430 = vpop.f32.mrf.mxu0
      %v2431 = vpop.f32.mrf.mxu0
      %v2432 = vadd.f32 %v2156, %v2431
      %v2433 = vpop.f32.mrf.mxu0
      %2434 = vmatprep.mubr.bf16.mxu0 0
      %2435 = vmatmul.mubr.bf16.gmra.mxu0 %v2322
      %v2436 = vpop.f32.mrf.mxu0
      %v2437 = vadd.f32 %v2161, %v2436
      %v2438 = vpop.f32.mrf.mxu0
      %v2439 = vpop.f32.mrf.mxu0
      %v2440 = vadd.f32 %v2164, %v2439
      %v2441 = vpop.f32.mrf.mxu0
      %2442 = vmatprep.mubr.bf16.mxu0 0
      %2443 = vmatmul.mubr.bf16.gmra.mxu0 %v2325
      %v2444 = vpop.f32.mrf.mxu0
      %v2445 = vadd.f32 %v2169, %v2444
      %v2446 = vpop.f32.mrf.mxu0
      %v2447 = vpop.f32.mrf.mxu0
      %v2448 = vadd.f32 %v2172, %v2447
      %v2449 = vpop.f32.mrf.mxu0
      %2450 = vmatprep.mubr.bf16.mxu0 0
      %2451 = vmatmul.mubr.bf16.gmra.mxu0 %v2328
      %v2452 = vpop.f32.mrf.mxu0
      %v2453 = vadd.f32 %v2177, %v2452
      %v2454 = vpop.f32.mrf.mxu0
      %v2455 = vpop.f32.mrf.mxu0
      %v2456 = vadd.f32 %v2180, %v2455
      %v2457 = vpop.f32.mrf.mxu0
      %2458 = vmatprep.mubr.bf16.mxu0 0
      %2459 = vmatmul.mubr.bf16.gmra.mxu0 %v2331
      %v2460 = vpop.f32.mrf.mxu0
      %v2461 = vadd.f32 %v2185, %v2460
      %v2462 = vpop.f32.mrf.mxu0
      %v2463 = vpop.f32.mrf.mxu0
      %v2464 = vadd.f32 %v2188, %v2463
      %v2465 = vpop.f32.mrf.mxu0
      %2466 = vmatprep.mubr.bf16.mxu0 0
      %2467 = vmatmul.mubr.bf16.gmra.mxu0 %v2334
      %v2468 = vpop.f32.mrf.mxu0
      %v2469 = vadd.f32 %v2193, %v2468
      %v2470 = vpop.f32.mrf.mxu0
      %v2471 = vpop.f32.mrf.mxu0
      %v2472 = vadd.f32 %v2196, %v2471
      %v2473 = vpop.f32.mrf.mxu0
      %2474 = vmatprep.mubr.bf16.mxu0 0
      %2475 = vmatmul.mubr.bf16.gmra.mxu0 %v2337
      %v2476 = vpop.f32.mrf.mxu0
      %v2477 = vadd.f32 %v2201, %v2476
      %v2478 = vpop.f32.mrf.mxu0
      %v2479 = vpop.f32.mrf.mxu0
      %v2480 = vadd.f32 %v2204, %v2479
      %v2481 = vpop.f32.mrf.mxu0
      %2482 = vmatprep.mubr.bf16.mxu0 0
      %2483 = vmatmul.mubr.bf16.gmra.mxu0 %v2340
      %v2484 = vpop.f32.mrf.mxu0
      %v2485 = vadd.f32 %v2209, %v2484
      %v2486 = vpop.f32.mrf.mxu0
      %v2487 = vpop.f32.mrf.mxu0
      %v2488 = vadd.f32 %v2212, %v2487
      %v2489 = vpop.f32.mrf.mxu0
      %2490 = vmatprep.mubr.bf16.mxu0 0
      %2491 = vmatmul.mubr.bf16.gmra.mxu0 %v2343
      %v2492 = vpop.f32.mrf.mxu0
      %v2493 = vadd.f32 %v2217, %v2492
      %v2494 = vpop.f32.mrf.mxu0
      %v2495 = vpop.f32.mrf.mxu0
      %v2496 = vadd.f32 %v2220, %v2495
      %v2497 = vpop.f32.mrf.mxu0
      %2498 = vmatprep.mubr.bf16.mxu0 0
      %2499 = vmatmul.mubr.bf16.gmra.mxu0 %v2346
      %v2500 = vpop.f32.mrf.mxu0
      %v2501 = vadd.f32 %v2225, %v2500
      %v2502 = vpop.f32.mrf.mxu0
      %v2503 = vpop.f32.mrf.mxu0
      %v2504 = vadd.f32 %v2228, %v2503
      %v2505 = vpop.f32.mrf.mxu0
      %2506 = vmatprep.mubr.bf16.mxu0 0
      %2507 = vmatmul.mubr.bf16.gmra.mxu0 %v2349
      %v2508 = vpop.f32.mrf.mxu0
      %v2509 = vadd.f32 %v2233, %v2508
      %v2510 = vpop.f32.mrf.mxu0
      %v2511 = vpop.f32.mrf.mxu0
      %v2512 = vadd.f32 %v2236, %v2511
      %v2513 = vpop.f32.mrf.mxu0
      %2514 = vdwg.mxu0
      %v2515 = vld [vmem:[#allocation2] sm:$0xc]
      %v2516 = vld [vmem:[#allocation2 + $0x8] sm:$0x3]
      %v2517 = vld [vmem:[#allocation2 + $0xc] sm:$0xc]
      %v2518 = vld [vmem:[#allocation2 + $0x14] sm:$0x3]
      %v2519 = vld [vmem:[#allocation2 + $0x18] sm:$0xc]
      %v2520 = vld [vmem:[#allocation2 + $0x20] sm:$0x3]
      %v2521 = vld [vmem:[#allocation2 + $0x24] sm:$0xc]
      %v2522 = vld [vmem:[#allocation2 + $0x2c] sm:$0x3]
      %v2523 = vld [vmem:[#allocation2 + $0x30] sm:$0xc]
      %v2524 = vld [vmem:[#allocation2 + $0x38] sm:$0x3]
      %v2525 = vld [vmem:[#allocation2 + $0x3c] sm:$0xc]
      %v2526 = vld [vmem:[#allocation2 + $0x44] sm:$0x3]
      %v2527 = vld [vmem:[#allocation2 + $0x48] sm:$0xc]
      %v2528 = vld [vmem:[#allocation2 + $0x50] sm:$0x3]
      %v2529 = vld [vmem:[#allocation2 + $0x54] sm:$0xc]
      %v2530 = vld [vmem:[#allocation2 + $0x5c] sm:$0x3]
      %v2531 = vld [vmem:[#allocation2 + $0x60] sm:$0xc]
      %v2532 = vld [vmem:[#allocation2 + $0x68] sm:$0x3]
      %v2533 = vld [vmem:[#allocation2 + $0x6c] sm:$0xc]
      %v2534 = vld [vmem:[#allocation2 + $0x74] sm:$0x3]
      %v2535 = vld [vmem:[#allocation2 + $0x78] sm:$0xc]
      %v2536 = vld [vmem:[#allocation2 + $0x80] sm:$0x3]
      %v2537 = vld [vmem:[#allocation2 + $0x84] sm:$0xc]
      %v2538 = vld [vmem:[#allocation2 + $0x8c] sm:$0x3]
      %v2539 = vld [vmem:[#allocation2 + $0x90] sm:$0xc]
      %v2540 = vld [vmem:[#allocation2 + $0x98] sm:$0x3]
      %v2541 = vld [vmem:[#allocation2 + $0x9c] sm:$0xc]
      %v2542 = vld [vmem:[#allocation2 + $0xa4] sm:$0x3]
      %v2543 = vld [vmem:[#allocation2 + $0xa8] sm:$0xc]
      %v2544 = vld [vmem:[#allocation2 + $0xb0] sm:$0x3]
      %v2545 = vld [vmem:[#allocation2 + $0xb4] sm:$0xc]
      %v2546 = vld [vmem:[#allocation2 + $0xbc] sm:$0x3]
      %vm2579 = vcmask 1041408
      %vm2580 = vcmask 1045508
      %vm2581 = vmor %vm2579, %vm2580
      %v2582 = vrot.slane %v2515, 6
      %v2583 = vrot.slane %v2582, 4
      %v2584 = vrot.slane %v1748, 6
      %v2585 = vsel %vm2581, %v2583, %v2584
      %v2586 = vrot.slane %v2584, 4
      %v2587 = vrot.slane %v2516, 6
      %v2588 = vsel %vm2581, %v2586, %v2587
      %v2589 = vrot.slane %v2517, 6
      %v2590 = vrot.slane %v2589, 4
      %v2591 = vrot.slane %v1750, 6
      %v2592 = vsel %vm2581, %v2590, %v2591
      %v2593 = vrot.slane %v2591, 4
      %v2594 = vrot.slane %v2518, 6
      %v2595 = vsel %vm2581, %v2593, %v2594
      %v2596 = vrot.slane %v2519, 6
      %v2597 = vrot.slane %v2596, 4
      %v2598 = vrot.slane %v1752, 6
      %v2599 = vsel %vm2581, %v2597, %v2598
      %v2600 = vrot.slane %v2598, 4
      %v2601 = vrot.slane %v2520, 6
      %v2602 = vsel %vm2581, %v2600, %v2601
      %v2603 = vrot.slane %v2521, 6
      %v2604 = vrot.slane %v2603, 4
      %v2605 = vrot.slane %v1754, 6
      %v2606 = vsel %vm2581, %v2604, %v2605
      %v2607 = vrot.slane %v2605, 4
      %v2608 = vrot.slane %v2522, 6
      %v2609 = vsel %vm2581, %v2607, %v2608
      %v2610 = vrot.slane %v2523, 6
      %v2611 = vrot.slane %v2610, 4
      %v2612 = vrot.slane %v1756, 6
      %v2613 = vsel %vm2581, %v2611, %v2612
      %v2614 = vrot.slane %v2612, 4
      %v2615 = vrot.slane %v2524, 6
      %v2616 = vsel %vm2581, %v2614, %v2615
      %v2617 = vrot.slane %v2525, 6
      %v2618 = vrot.slane %v2617, 4
      %v2619 = vrot.slane %v1758, 6
      %v2620 = vsel %vm2581, %v2618, %v2619
      %v2621 = vrot.slane %v2619, 4
      %v2622 = vrot.slane %v2526, 6
      %v2623 = vsel %vm2581, %v2621, %v2622
      %v2624 = vrot.slane %v2527, 6
      %v2625 = vrot.slane %v2624, 4
      %v2626 = vrot.slane %v1760, 6
      %v2627 = vsel %vm2581, %v2625, %v2626
      %v2628 = vrot.slane %v2626, 4
      %v2629 = vrot.slane %v2528, 6
      %v2630 = vsel %vm2581, %v2628, %v2629
      %v2631 = vrot.slane %v2529, 6
      %v2632 = vrot.slane %v2631, 4
      %v2633 = vrot.slane %v1762, 6
      %v2634 = vsel %vm2581, %v2632, %v2633
      %v2635 = vrot.slane %v2633, 4
      %v2636 = vrot.slane %v2530, 6
      %v2637 = vsel %vm2581, %v2635, %v2636
      %v2638 = vrot.slane %v2531, 6
      %v2639 = vrot.slane %v2638, 4
      %v2640 = vrot.slane %v1764, 6
      %v2641 = vsel %vm2581, %v2639, %v2640
      %v2642 = vrot.slane %v2640, 4
      %v2643 = vrot.slane %v2532, 6
      %v2644 = vsel %vm2581, %v2642, %v2643
      %v2645 = vrot.slane %v2533, 6
      %v2646 = vrot.slane %v2645, 4
      %v2647 = vrot.slane %v1766, 6
      %v2648 = vsel %vm2581, %v2646, %v2647
      %v2649 = vrot.slane %v2647, 4
      %v2650 = vrot.slane %v2534, 6
      %v2651 = vsel %vm2581, %v2649, %v2650
      %v2652 = vrot.slane %v2535, 6
      %v2653 = vrot.slane %v2652, 4
      %v2654 = vrot.slane %v1768, 6
      %v2655 = vsel %vm2581, %v2653, %v2654
      %v2656 = vrot.slane %v2654, 4
      %v2657 = vrot.slane %v2536, 6
      %v2658 = vsel %vm2581, %v2656, %v2657
      %v2659 = vrot.slane %v2537, 6
      %v2660 = vrot.slane %v2659, 4
      %v2661 = vrot.slane %v1770, 6
      %v2662 = vsel %vm2581, %v2660, %v2661
      %v2663 = vrot.slane %v2661, 4
      %v2664 = vrot.slane %v2538, 6
      %v2665 = vsel %vm2581, %v2663, %v2664
      %v2666 = vrot.slane %v2539, 6
      %v2667 = vrot.slane %v2666, 4
      %v2668 = vrot.slane %v1772, 6
      %v2669 = vsel %vm2581, %v2667, %v2668
      %v2670 = vrot.slane %v2668, 4
      %v2671 = vrot.slane %v2540, 6
      %v2672 = vsel %vm2581, %v2670, %v2671
      %v2673 = vrot.slane %v2541, 6
      %v2674 = vrot.slane %v2673, 4
      %v2675 = vrot.slane %v1774, 6
      %v2676 = vsel %vm2581, %v2674, %v2675
      %v2677 = vrot.slane %v2675, 4
      %v2678 = vrot.slane %v2542, 6
      %v2679 = vsel %vm2581, %v2677, %v2678
      %v2680 = vrot.slane %v2543, 6
      %v2681 = vrot.slane %v2680, 4
      %v2682 = vrot.slane %v1776, 6
      %v2683 = vsel %vm2581, %v2681, %v2682
      %v2684 = vrot.slane %v2682, 4
      %v2685 = vrot.slane %v2544, 6
      %v2686 = vsel %vm2581, %v2684, %v2685
      %v2687 = vrot.slane %v2545, 6
      %v2688 = vrot.slane %v2687, 4
      %v2689 = vrot.slane %v1778, 6
      %v2690 = vsel %vm2581, %v2688, %v2689
      %v2691 = vrot.slane %v2689, 4
      %v2692 = vrot.slane %v2546, 6
      %v2693 = vsel %vm2581, %v2691, %v2692
      %s2694 = scalar_lea.vmem %s2, 4
      %v2695 = vld [vmem:[%s2694] sm:$0x3]
      %v2696 = vunpack.c.l.b16 %v2585
      %v2697 = vunpack.c.l.b16 %v2588
      %v2698 = vunpack.c.l.b16 %v2592
      %v2699 = vunpack.c.l.b16 %v2595
      %v2700 = vunpack.c.l.b16 %v2599
      %v2701 = vunpack.c.l.b16 %v2602
      %v2702 = vunpack.c.l.b16 %v2606
      %v2703 = vunpack.c.l.b16 %v2609
      %v2704 = vunpack.c.l.b16 %v2613
      %v2705 = vunpack.c.l.b16 %v2616
      %v2706 = vunpack.c.l.b16 %v2620
      %v2707 = vunpack.c.l.b16 %v2623
      %v2708 = vunpack.c.l.b16 %v2627
      %v2709 = vunpack.c.l.b16 %v2630
      %v2710 = vunpack.c.l.b16 %v2634
      %v2711 = vunpack.c.l.b16 %v2637
      %v2712 = vunpack.c.l.b16 %v2641
      %v2713 = vunpack.c.l.b16 %v2644
      %v2714 = vunpack.c.l.b16 %v2648
      %v2715 = vunpack.c.l.b16 %v2651
      %v2716 = vunpack.c.l.b16 %v2655
      %v2717 = vunpack.c.l.b16 %v2658
      %v2718 = vunpack.c.l.b16 %v2662
      %v2719 = vunpack.c.l.b16 %v2665
      %v2720 = vunpack.c.l.b16 %v2669
      %v2721 = vunpack.c.l.b16 %v2672
      %v2722 = vunpack.c.l.b16 %v2676
      %v2723 = vunpack.c.l.b16 %v2679
      %v2724 = vunpack.c.l.b16 %v2683
      %v2725 = vunpack.c.l.b16 %v2686
      %v2726 = vunpack.c.l.b16 %v2690
      %v2727 = vunpack.c.l.b16 %v2693
      %v2728 = vpack.c.b16 %v2697, %v2696
      %v2729 = vpack.c.b16 %v2699, %v2698
      %v2730 = vpack.c.b16 %v2701, %v2700
      %v2731 = vpack.c.b16 %v2703, %v2702
      %v2732 = vpack.c.b16 %v2705, %v2704
      %v2733 = vpack.c.b16 %v2707, %v2706
      %v2734 = vpack.c.b16 %v2709, %v2708
      %v2735 = vpack.c.b16 %v2711, %v2710
      %v2736 = vpack.c.b16 %v2713, %v2712
      %v2737 = vpack.c.b16 %v2715, %v2714
      %v2738 = vpack.c.b16 %v2717, %v2716
      %v2739 = vpack.c.b16 %v2719, %v2718
      %v2740 = vpack.c.b16 %v2721, %v2720
      %v2741 = vpack.c.b16 %v2723, %v2722
      %v2742 = vpack.c.b16 %v2725, %v2724
      %v2743 = vpack.c.b16 %v2727, %v2726
      %v2745 = vsel %vm2025, %v2728, 0
      %v2748 = vsel %vm2025, %v2729, 0
      %v2751 = vsel %vm2025, %v2730, 0
      %v2754 = vsel %vm2025, %v2731, 0
      %v2757 = vsel %vm2025, %v2732, 0
      %v2760 = vsel %vm2025, %v2733, 0
      %v2763 = vsel %vm2025, %v2734, 0
      %v2766 = vsel %vm2025, %v2735, 0
      %v2769 = vsel %vm2025, %v2736, 0
      %v2772 = vsel %vm2025, %v2737, 0
      %v2775 = vsel %vm2025, %v2738, 0
      %v2778 = vsel %vm2025, %v2739, 0
      %v2781 = vsel %vm2025, %v2740, 0
      %v2784 = vsel %vm2025, %v2741, 0
      %v2787 = vsel %vm2025, %v2742, 0
      %v2790 = vsel %vm2025, %v2743, 0
      %v2793 = vsel %vm2074, %v2695, 0
      %2795 = vmatprep.subr.bf16.mxu0 0
      %2796 = vmatpush1.bf16.msra.mxu0 0
      %2797 = vmatprep.subr.bf16.mxu0 0
      %2798 = vmatpush1.bf16.msra.mxu0 0
      %2799 = vmatprep.subr.bf16.mxu0 0
      %2800 = vmatpush1.bf16.msra.mxu0 0
      %2801 = vmatprep.subr.bf16.mxu0 0
      %2802 = vmatpush1.bf16.msra.mxu0 0
      %2803 = vmatprep.subr.bf16.mxu0 0
      %2804 = vmatpush1.bf16.msra.mxu0 0
      %2805 = vmatprep.subr.bf16.mxu0 0
      %2806 = vmatpush1.bf16.msra.mxu0 0
      %2807 = vmatprep.subr.bf16.mxu0 0
      %2808 = vmatpush1.bf16.msra.mxu0 0
      %2809 = vmatprep.subr.bf16.mxu0 0
      %2810 = vmatpush1.bf16.msra.mxu0 %v2793
      %2811 = vmatprep.subr.bf16.mxu0 0
      %2812 = vmatpush2.bf16.msra.mxu0 0
      %2813 = vmatprep.subr.bf16.mxu0 0
      %2814 = vmatpush2.bf16.msra.mxu0 0
      %2815 = vmatprep.subr.bf16.mxu0 0
      %2816 = vmatpush2.bf16.msra.mxu0 0
      %2817 = vmatprep.subr.bf16.mxu0 0
      %2818 = vmatpush2.bf16.msra.mxu0 0
      %2819 = vmatprep.subr.bf16.mxu0 0
      %2820 = vmatpush2.bf16.msra.mxu0 0
      %2821 = vmatprep.subr.bf16.mxu0 0
      %2822 = vmatpush2.bf16.msra.mxu0 0
      %2823 = vmatprep.subr.bf16.mxu0 0
      %2824 = vmatpush2.bf16.msra.mxu0 0
      %2825 = vmatprep.subr.bf16.mxu0 0
      %2826 = vmatpush2.bf16.msra.mxu0 0
      %2827 = vmatprep.mubr.bf16.mxu0 0
      %2828 = vmatmul.mubr.bf16.gmra.mxu0 %v2745
      %v2829 = vpop.f32.mrf.mxu0
      %v2830 = vadd.f32 0.0, %v2829
      %v2831 = vpop.f32.mrf.mxu0
      %v2832 = vpop.f32.mrf.mxu0
      %v2833 = vadd.f32 0.0, %v2832
      %v2834 = vpop.f32.mrf.mxu0
      %2835 = vmatprep.mubr.bf16.mxu0 0
      %2836 = vmatmul.mubr.bf16.gmra.mxu0 %v2748
      %v2837 = vpop.f32.mrf.mxu0
      %v2838 = vadd.f32 0.0, %v2837
      %v2839 = vpop.f32.mrf.mxu0
      %v2840 = vpop.f32.mrf.mxu0
      %v2841 = vadd.f32 0.0, %v2840
      %v2842 = vpop.f32.mrf.mxu0
      %2843 = vmatprep.mubr.bf16.mxu0 0
      %2844 = vmatmul.mubr.bf16.gmra.mxu0 %v2751
      %v2845 = vpop.f32.mrf.mxu0
      %v2846 = vadd.f32 0.0, %v2845
      %v2847 = vpop.f32.mrf.mxu0
      %v2848 = vpop.f32.mrf.mxu0
      %v2849 = vadd.f32 0.0, %v2848
      %v2850 = vpop.f32.mrf.mxu0
      %2851 = vmatprep.mubr.bf16.mxu0 0
      %2852 = vmatmul.mubr.bf16.gmra.mxu0 %v2754
      %v2853 = vpop.f32.mrf.mxu0
      %v2854 = vadd.f32 0.0, %v2853
      %v2855 = vpop.f32.mrf.mxu0
      %v2856 = vpop.f32.mrf.mxu0
      %v2857 = vadd.f32 0.0, %v2856
      %v2858 = vpop.f32.mrf.mxu0
      %2859 = vmatprep.mubr.bf16.mxu0 0
      %2860 = vmatmul.mubr.bf16.gmra.mxu0 %v2757
      %v2861 = vpop.f32.mrf.mxu0
      %v2862 = vadd.f32 0.0, %v2861
      %v2863 = vpop.f32.mrf.mxu0
      %v2864 = vpop.f32.mrf.mxu0
      %v2865 = vadd.f32 0.0, %v2864
      %v2866 = vpop.f32.mrf.mxu0
      %2867 = vmatprep.mubr.bf16.mxu0 0
      %2868 = vmatmul.mubr.bf16.gmra.mxu0 %v2760
      %v2869 = vpop.f32.mrf.mxu0
      %v2870 = vadd.f32 0.0, %v2869
      %v2871 = vpop.f32.mrf.mxu0
      %v2872 = vpop.f32.mrf.mxu0
      %v2873 = vadd.f32 0.0, %v2872
      %v2874 = vpop.f32.mrf.mxu0
      %2875 = vmatprep.mubr.bf16.mxu0 0
      %2876 = vmatmul.mubr.bf16.gmra.mxu0 %v2763
      %v2877 = vpop.f32.mrf.mxu0
      %v2878 = vadd.f32 0.0, %v2877
      %v2879 = vpop.f32.mrf.mxu0
      %v2880 = vpop.f32.mrf.mxu0
      %v2881 = vadd.f32 0.0, %v2880
      %v2882 = vpop.f32.mrf.mxu0
      %2883 = vmatprep.mubr.bf16.mxu0 0
      %2884 = vmatmul.mubr.bf16.gmra.mxu0 %v2766
      %v2885 = vpop.f32.mrf.mxu0
      %v2886 = vadd.f32 0.0, %v2885
      %v2887 = vpop.f32.mrf.mxu0
      %v2888 = vpop.f32.mrf.mxu0
      %v2889 = vadd.f32 0.0, %v2888
      %v2890 = vpop.f32.mrf.mxu0
      %2891 = vmatprep.mubr.bf16.mxu0 0
      %2892 = vmatmul.mubr.bf16.gmra.mxu0 %v2769
      %v2893 = vpop.f32.mrf.mxu0
      %v2894 = vadd.f32 0.0, %v2893
      %v2895 = vpop.f32.mrf.mxu0
      %v2896 = vpop.f32.mrf.mxu0
      %v2897 = vadd.f32 0.0, %v2896
      %v2898 = vpop.f32.mrf.mxu0
      %2899 = vmatprep.mubr.bf16.mxu0 0
      %2900 = vmatmul.mubr.bf16.gmra.mxu0 %v2772
      %v2901 = vpop.f32.mrf.mxu0
      %v2902 = vadd.f32 0.0, %v2901
      %v2903 = vpop.f32.mrf.mxu0
      %v2904 = vpop.f32.mrf.mxu0
      %v2905 = vadd.f32 0.0, %v2904
      %v2906 = vpop.f32.mrf.mxu0
      %2907 = vmatprep.mubr.bf16.mxu0 0
      %2908 = vmatmul.mubr.bf16.gmra.mxu0 %v2775
      %v2909 = vpop.f32.mrf.mxu0
      %v2910 = vadd.f32 0.0, %v2909
      %v2911 = vpop.f32.mrf.mxu0
      %v2912 = vpop.f32.mrf.mxu0
      %v2913 = vadd.f32 0.0, %v2912
      %v2914 = vpop.f32.mrf.mxu0
      %2915 = vmatprep.mubr.bf16.mxu0 0
      %2916 = vmatmul.mubr.bf16.gmra.mxu0 %v2778
      %v2917 = vpop.f32.mrf.mxu0
      %v2918 = vadd.f32 0.0, %v2917
      %v2919 = vpop.f32.mrf.mxu0
      %v2920 = vpop.f32.mrf.mxu0
      %v2921 = vadd.f32 0.0, %v2920
      %v2922 = vpop.f32.mrf.mxu0
      %2923 = vmatprep.mubr.bf16.mxu0 0
      %2924 = vmatmul.mubr.bf16.gmra.mxu0 %v2781
      %v2925 = vpop.f32.mrf.mxu0
      %v2926 = vadd.f32 0.0, %v2925
      %v2927 = vpop.f32.mrf.mxu0
      %v2928 = vpop.f32.mrf.mxu0
      %v2929 = vadd.f32 0.0, %v2928
      %v2930 = vpop.f32.mrf.mxu0
      %2931 = vmatprep.mubr.bf16.mxu0 0
      %2932 = vmatmul.mubr.bf16.gmra.mxu0 %v2784
      %v2933 = vpop.f32.mrf.mxu0
      %v2934 = vadd.f32 0.0, %v2933
      %v2935 = vpop.f32.mrf.mxu0
      %v2936 = vpop.f32.mrf.mxu0
      %v2937 = vadd.f32 0.0, %v2936
      %v2938 = vpop.f32.mrf.mxu0
      %2939 = vmatprep.mubr.bf16.mxu0 0
      %2940 = vmatmul.mubr.bf16.gmra.mxu0 %v2787
      %v2941 = vpop.f32.mrf.mxu0
      %v2942 = vadd.f32 0.0, %v2941
      %v2943 = vpop.f32.mrf.mxu0
      %v2944 = vpop.f32.mrf.mxu0
      %v2945 = vadd.f32 0.0, %v2944
      %v2946 = vpop.f32.mrf.mxu0
      %2947 = vmatprep.mubr.bf16.mxu0 0
      %2948 = vmatmul.mubr.bf16.gmra.mxu0 %v2790
      %v2949 = vpop.f32.mrf.mxu0
      %v2950 = vadd.f32 0.0, %v2949
      %v2951 = vpop.f32.mrf.mxu0
      %v2952 = vpop.f32.mrf.mxu0
      %v2953 = vadd.f32 0.0, %v2952
      %v2954 = vpop.f32.mrf.mxu0
      %2955 = vdwg.mxu0
      %v2956 = vadd.f32 %v2389, %v2830
      %v2957 = vadd.f32 %v2392, %v2833
      %v2958 = vadd.f32 %v2397, %v2838
      %v2959 = vadd.f32 %v2400, %v2841
      %v2960 = vadd.f32 %v2405, %v2846
      %v2961 = vadd.f32 %v2408, %v2849
      %v2962 = vadd.f32 %v2413, %v2854
      %v2963 = vadd.f32 %v2416, %v2857
      %v2964 = vadd.f32 %v2421, %v2862
      %v2965 = vadd.f32 %v2424, %v2865
      %v2966 = vadd.f32 %v2429, %v2870
      %v2967 = vadd.f32 %v2432, %v2873
      %v2968 = vadd.f32 %v2437, %v2878
      %v2969 = vadd.f32 %v2440, %v2881
      %v2970 = vadd.f32 %v2445, %v2886
      %v2971 = vadd.f32 %v2448, %v2889
      %v2972 = vadd.f32 %v2453, %v2894
      %v2973 = vadd.f32 %v2456, %v2897
      %v2974 = vadd.f32 %v2461, %v2902
      %v2975 = vadd.f32 %v2464, %v2905
      %v2976 = vadd.f32 %v2469, %v2910
      %v2977 = vadd.f32 %v2472, %v2913
      %v2978 = vadd.f32 %v2477, %v2918
      %v2979 = vadd.f32 %v2480, %v2921
      %v2980 = vadd.f32 %v2485, %v2926
      %v2981 = vadd.f32 %v2488, %v2929
      %v2982 = vadd.f32 %v2493, %v2934
      %v2983 = vadd.f32 %v2496, %v2937
      %v2984 = vadd.f32 %v2501, %v2942
      %v2985 = vadd.f32 %v2504, %v2945
      %v2986 = vadd.f32 %v2509, %v2950
      %v2987 = vadd.f32 %v2512, %v2953
      %v2988 = vld [vmem:[%s621] sm:$0xf]
      %v2989 = vld [vmem:[%s621 + $0x4] sm:$0xf]
      %v2990 = vld [vmem:[%s621 + $0xc] sm:$0xf]
      %v2991 = vld [vmem:[%s621 + $0x10] sm:$0xf]
      %v2992 = vld [vmem:[%s621 + $0x18] sm:$0xf]
      %v2993 = vld [vmem:[%s621 + $0x1c] sm:$0xf]
      %v2994 = vld [vmem:[%s621 + $0x24] sm:$0xf]
      %v2995 = vld [vmem:[%s621 + $0x28] sm:$0xf]
      %v2996 = vld [vmem:[%s621 + $0x30] sm:$0xf]
      %v2997 = vld [vmem:[%s621 + $0x34] sm:$0xf]
      %v2998 = vld [vmem:[%s621 + $0x3c] sm:$0xf]
      %v2999 = vld [vmem:[%s621 + $0x40] sm:$0xf]
      %v3000 = vld [vmem:[%s621 + $0x48] sm:$0xf]
      %v3001 = vld [vmem:[%s621 + $0x4c] sm:$0xf]
      %v3002 = vld [vmem:[%s621 + $0x54] sm:$0xf]
      %v3003 = vld [vmem:[%s621 + $0x58] sm:$0xf]
      %v3004 = vld [vmem:[%s621 + $0x60] sm:$0xf]
      %v3005 = vld [vmem:[%s621 + $0x64] sm:$0xf]
      %v3006 = vld [vmem:[%s621 + $0x6c] sm:$0xf]
      %v3007 = vld [vmem:[%s621 + $0x70] sm:$0xf]
      %v3008 = vld [vmem:[%s621 + $0x78] sm:$0xf]
      %v3009 = vld [vmem:[%s621 + $0x7c] sm:$0xf]
      %v3010 = vld [vmem:[%s621 + $0x84] sm:$0xf]
      %v3011 = vld [vmem:[%s621 + $0x88] sm:$0xf]
      %v3012 = vld [vmem:[%s621 + $0x90] sm:$0xf]
      %v3013 = vld [vmem:[%s621 + $0x94] sm:$0xf]
      %v3014 = vld [vmem:[%s621 + $0x9c] sm:$0xf]
      %v3015 = vld [vmem:[%s621 + $0xa0] sm:$0xf]
      %v3016 = vld [vmem:[%s621 + $0xa8] sm:$0xf]
      %v3017 = vld [vmem:[%s621 + $0xac] sm:$0xf]
      %v3018 = vld [vmem:[%s621 + $0xb4] sm:$0xf]
      %v3019 = vld [vmem:[%s621 + $0xb8] sm:$0xf]
      %s3020 = scalar_lea.vmem %s2, 6
      %v3021 = vld [vmem:[%s3020] sm:$0x3]
      %v3054 = vunpack.c.l.b16 %v2988
      %v3055 = vunpack.c.l.b16 %v2989
      %v3056 = vunpack.c.l.b16 %v2990
      %v3057 = vunpack.c.l.b16 %v2991
      %v3058 = vunpack.c.l.b16 %v2992
      %v3059 = vunpack.c.l.b16 %v2993
      %v3060 = vunpack.c.l.b16 %v2994
      %v3061 = vunpack.c.l.b16 %v2995
      %v3062 = vunpack.c.l.b16 %v2996
      %v3063 = vunpack.c.l.b16 %v2997
      %v3064 = vunpack.c.l.b16 %v2998
      %v3065 = vunpack.c.l.b16 %v2999
      %v3066 = vunpack.c.l.b16 %v3000
      %v3067 = vunpack.c.l.b16 %v3001
      %v3068 = vunpack.c.l.b16 %v3002
      %v3069 = vunpack.c.l.b16 %v3003
      %v3070 = vunpack.c.l.b16 %v3004
      %v3071 = vunpack.c.l.b16 %v3005
      %v3072 = vunpack.c.l.b16 %v3006
      %v3073 = vunpack.c.l.b16 %v3007
      %v3074 = vunpack.c.l.b16 %v3008
      %v3075 = vunpack.c.l.b16 %v3009
      %v3076 = vunpack.c.l.b16 %v3010
      %v3077 = vunpack.c.l.b16 %v3011
      %v3078 = vunpack.c.l.b16 %v3012
      %v3079 = vunpack.c.l.b16 %v3013
      %v3080 = vunpack.c.l.b16 %v3014
      %v3081 = vunpack.c.l.b16 %v3015
      %v3082 = vunpack.c.l.b16 %v3016
      %v3083 = vunpack.c.l.b16 %v3017
      %v3084 = vunpack.c.l.b16 %v3018
      %v3085 = vunpack.c.l.b16 %v3019
      %v3086 = vpack.c.b16 %v3055, %v3054
      %v3087 = vpack.c.b16 %v3057, %v3056
      %v3088 = vpack.c.b16 %v3059, %v3058
      %v3089 = vpack.c.b16 %v3061, %v3060
      %v3090 = vpack.c.b16 %v3063, %v3062
      %v3091 = vpack.c.b16 %v3065, %v3064
      %v3092 = vpack.c.b16 %v3067, %v3066
      %v3093 = vpack.c.b16 %v3069, %v3068
      %v3094 = vpack.c.b16 %v3071, %v3070
      %v3095 = vpack.c.b16 %v3073, %v3072
      %v3096 = vpack.c.b16 %v3075, %v3074
      %v3097 = vpack.c.b16 %v3077, %v3076
      %v3098 = vpack.c.b16 %v3079, %v3078
      %v3099 = vpack.c.b16 %v3081, %v3080
      %v3100 = vpack.c.b16 %v3083, %v3082
      %v3101 = vpack.c.b16 %v3085, %v3084
      %v3103 = vsel %vm2025, %v3086, 0
      %v3106 = vsel %vm2025, %v3087, 0
      %v3109 = vsel %vm2025, %v3088, 0
      %v3112 = vsel %vm2025, %v3089, 0
      %v3115 = vsel %vm2025, %v3090, 0
      %v3118 = vsel %vm2025, %v3091, 0
      %v3121 = vsel %vm2025, %v3092, 0
      %v3124 = vsel %vm2025, %v3093, 0
      %v3127 = vsel %vm2025, %v3094, 0
      %v3130 = vsel %vm2025, %v3095, 0
      %v3133 = vsel %vm2025, %v3096, 0
      %v3136 = vsel %vm2025, %v3097, 0
      %v3139 = vsel %vm2025, %v3098, 0
      %v3142 = vsel %vm2025, %v3099, 0
      %v3145 = vsel %vm2025, %v3100, 0
      %v3148 = vsel %vm2025, %v3101, 0
      %v3151 = vsel %vm2074, %v3021, 0
      %3153 = vmatprep.subr.bf16.mxu0 0
      %3154 = vmatpush1.bf16.msra.mxu0 0
      %3155 = vmatprep.subr.bf16.mxu0 0
      %3156 = vmatpush1.bf16.msra.mxu0 0
      %3157 = vmatprep.subr.bf16.mxu0 0
      %3158 = vmatpush1.bf16.msra.mxu0 0
      %3159 = vmatprep.subr.bf16.mxu0 0
      %3160 = vmatpush1.bf16.msra.mxu0 0
      %3161 = vmatprep.subr.bf16.mxu0 0
      %3162 = vmatpush1.bf16.msra.mxu0 0
      %3163 = vmatprep.subr.bf16.mxu0 0
      %3164 = vmatpush1.bf16.msra.mxu0 0
      %3165 = vmatprep.subr.bf16.mxu0 0
      %3166 = vmatpush1.bf16.msra.mxu0 0
      %3167 = vmatprep.subr.bf16.mxu0 0
      %3168 = vmatpush1.bf16.msra.mxu0 %v3151
      %3169 = vmatprep.subr.bf16.mxu0 0
      %3170 = vmatpush2.bf16.msra.mxu0 0
      %3171 = vmatprep.subr.bf16.mxu0 0
      %3172 = vmatpush2.bf16.msra.mxu0 0
      %3173 = vmatprep.subr.bf16.mxu0 0
      %3174 = vmatpush2.bf16.msra.mxu0 0
      %3175 = vmatprep.subr.bf16.mxu0 0
      %3176 = vmatpush2.bf16.msra.mxu0 0
      %3177 = vmatprep.subr.bf16.mxu0 0
      %3178 = vmatpush2.bf16.msra.mxu0 0
      %3179 = vmatprep.subr.bf16.mxu0 0
      %3180 = vmatpush2.bf16.msra.mxu0 0
      %3181 = vmatprep.subr.bf16.mxu0 0
      %3182 = vmatpush2.bf16.msra.mxu0 0
      %3183 = vmatprep.subr.bf16.mxu0 0
      %3184 = vmatpush2.bf16.msra.mxu0 0
      %3185 = vmatprep.mubr.bf16.mxu0 0
      %3186 = vmatmul.mubr.bf16.gmra.mxu0 %v3103
      %v3187 = vpop.f32.mrf.mxu0
      %v3188 = vadd.f32 0.0, %v3187
      %v3189 = vpop.f32.mrf.mxu0
      %v3190 = vpop.f32.mrf.mxu0
      %v3191 = vadd.f32 0.0, %v3190
      %v3192 = vpop.f32.mrf.mxu0
      %3193 = vmatprep.mubr.bf16.mxu0 0
      %3194 = vmatmul.mubr.bf16.gmra.mxu0 %v3106
      %v3195 = vpop.f32.mrf.mxu0
      %v3196 = vadd.f32 0.0, %v3195
      %v3197 = vpop.f32.mrf.mxu0
      %v3198 = vpop.f32.mrf.mxu0
      %v3199 = vadd.f32 0.0, %v3198
      %v3200 = vpop.f32.mrf.mxu0
      %3201 = vmatprep.mubr.bf16.mxu0 0
      %3202 = vmatmul.mubr.bf16.gmra.mxu0 %v3109
      %v3203 = vpop.f32.mrf.mxu0
      %v3204 = vadd.f32 0.0, %v3203
      %v3205 = vpop.f32.mrf.mxu0
      %v3206 = vpop.f32.mrf.mxu0
      %v3207 = vadd.f32 0.0, %v3206
      %v3208 = vpop.f32.mrf.mxu0
      %3209 = vmatprep.mubr.bf16.mxu0 0
      %3210 = vmatmul.mubr.bf16.gmra.mxu0 %v3112
      %v3211 = vpop.f32.mrf.mxu0
      %v3212 = vadd.f32 0.0, %v3211
      %v3213 = vpop.f32.mrf.mxu0
      %v3214 = vpop.f32.mrf.mxu0
      %v3215 = vadd.f32 0.0, %v3214
      %v3216 = vpop.f32.mrf.mxu0
      %3217 = vmatprep.mubr.bf16.mxu0 0
      %3218 = vmatmul.mubr.bf16.gmra.mxu0 %v3115
      %v3219 = vpop.f32.mrf.mxu0
      %v3220 = vadd.f32 0.0, %v3219
      %v3221 = vpop.f32.mrf.mxu0
      %v3222 = vpop.f32.mrf.mxu0
      %v3223 = vadd.f32 0.0, %v3222
      %v3224 = vpop.f32.mrf.mxu0
      %3225 = vmatprep.mubr.bf16.mxu0 0
      %3226 = vmatmul.mubr.bf16.gmra.mxu0 %v3118
      %v3227 = vpop.f32.mrf.mxu0
      %v3228 = vadd.f32 0.0, %v3227
      %v3229 = vpop.f32.mrf.mxu0
      %v3230 = vpop.f32.mrf.mxu0
      %v3231 = vadd.f32 0.0, %v3230
      %v3232 = vpop.f32.mrf.mxu0
      %3233 = vmatprep.mubr.bf16.mxu0 0
      %3234 = vmatmul.mubr.bf16.gmra.mxu0 %v3121
      %v3235 = vpop.f32.mrf.mxu0
      %v3236 = vadd.f32 0.0, %v3235
      %v3237 = vpop.f32.mrf.mxu0
      %v3238 = vpop.f32.mrf.mxu0
      %v3239 = vadd.f32 0.0, %v3238
      %v3240 = vpop.f32.mrf.mxu0
      %3241 = vmatprep.mubr.bf16.mxu0 0
      %3242 = vmatmul.mubr.bf16.gmra.mxu0 %v3124
      %v3243 = vpop.f32.mrf.mxu0
      %v3244 = vadd.f32 0.0, %v3243
      %v3245 = vpop.f32.mrf.mxu0
      %v3246 = vpop.f32.mrf.mxu0
      %v3247 = vadd.f32 0.0, %v3246
      %v3248 = vpop.f32.mrf.mxu0
      %3249 = vmatprep.mubr.bf16.mxu0 0
      %3250 = vmatmul.mubr.bf16.gmra.mxu0 %v3127
      %v3251 = vpop.f32.mrf.mxu0
      %v3252 = vadd.f32 0.0, %v3251
      %v3253 = vpop.f32.mrf.mxu0
      %v3254 = vpop.f32.mrf.mxu0
      %v3255 = vadd.f32 0.0, %v3254
      %v3256 = vpop.f32.mrf.mxu0
      %3257 = vmatprep.mubr.bf16.mxu0 0
      %3258 = vmatmul.mubr.bf16.gmra.mxu0 %v3130
      %v3259 = vpop.f32.mrf.mxu0
      %v3260 = vadd.f32 0.0, %v3259
      %v3261 = vpop.f32.mrf.mxu0
      %v3262 = vpop.f32.mrf.mxu0
      %v3263 = vadd.f32 0.0, %v3262
      %v3264 = vpop.f32.mrf.mxu0
      %3265 = vmatprep.mubr.bf16.mxu0 0
      %3266 = vmatmul.mubr.bf16.gmra.mxu0 %v3133
      %v3267 = vpop.f32.mrf.mxu0
      %v3268 = vadd.f32 0.0, %v3267
      %v3269 = vpop.f32.mrf.mxu0
      %v3270 = vpop.f32.mrf.mxu0
      %v3271 = vadd.f32 0.0, %v3270
      %v3272 = vpop.f32.mrf.mxu0
      %3273 = vmatprep.mubr.bf16.mxu0 0
      %3274 = vmatmul.mubr.bf16.gmra.mxu0 %v3136
      %v3275 = vpop.f32.mrf.mxu0
      %v3276 = vadd.f32 0.0, %v3275
      %v3277 = vpop.f32.mrf.mxu0
      %v3278 = vpop.f32.mrf.mxu0
      %v3279 = vadd.f32 0.0, %v3278
      %v3280 = vpop.f32.mrf.mxu0
      %3281 = vmatprep.mubr.bf16.mxu0 0
      %3282 = vmatmul.mubr.bf16.gmra.mxu0 %v3139
      %v3283 = vpop.f32.mrf.mxu0
      %v3284 = vadd.f32 0.0, %v3283
      %v3285 = vpop.f32.mrf.mxu0
      %v3286 = vpop.f32.mrf.mxu0
      %v3287 = vadd.f32 0.0, %v3286
      %v3288 = vpop.f32.mrf.mxu0
      %3289 = vmatprep.mubr.bf16.mxu0 0
      %3290 = vmatmul.mubr.bf16.gmra.mxu0 %v3142
      %v3291 = vpop.f32.mrf.mxu0
      %v3292 = vadd.f32 0.0, %v3291
      %v3293 = vpop.f32.mrf.mxu0
      %v3294 = vpop.f32.mrf.mxu0
      %v3295 = vadd.f32 0.0, %v3294
      %v3296 = vpop.f32.mrf.mxu0
      %3297 = vmatprep.mubr.bf16.mxu0 0
      %3298 = vmatmul.mubr.bf16.gmra.mxu0 %v3145
      %v3299 = vpop.f32.mrf.mxu0
      %v3300 = vadd.f32 0.0, %v3299
      %v3301 = vpop.f32.mrf.mxu0
      %v3302 = vpop.f32.mrf.mxu0
      %v3303 = vadd.f32 0.0, %v3302
      %v3304 = vpop.f32.mrf.mxu0
      %3305 = vmatprep.mubr.bf16.mxu0 0
      %3306 = vmatmul.mubr.bf16.gmra.mxu0 %v3148
      %v3307 = vpop.f32.mrf.mxu0
      %v3308 = vadd.f32 0.0, %v3307
      %v3309 = vpop.f32.mrf.mxu0
      %v3310 = vpop.f32.mrf.mxu0
      %v3311 = vadd.f32 0.0, %v3310
      %v3312 = vpop.f32.mrf.mxu0
      %3313 = vdwg.mxu0
      %v3314 = vadd.f32 %v2956, %v3188
      %v3315 = vadd.f32 %v2957, %v3191
      %v3316 = vadd.f32 %v2958, %v3196
      %v3317 = vadd.f32 %v2959, %v3199
      %v3318 = vadd.f32 %v2960, %v3204
      %v3319 = vadd.f32 %v2961, %v3207
      %v3320 = vadd.f32 %v2962, %v3212
      %v3321 = vadd.f32 %v2963, %v3215
      %v3322 = vadd.f32 %v2964, %v3220
      %v3323 = vadd.f32 %v2965, %v3223
      %v3324 = vadd.f32 %v2966, %v3228
      %v3325 = vadd.f32 %v2967, %v3231
      %v3326 = vadd.f32 %v2968, %v3236
      %v3327 = vadd.f32 %v2969, %v3239
      %v3328 = vadd.f32 %v2970, %v3244
      %v3329 = vadd.f32 %v2971, %v3247
      %v3330 = vadd.f32 %v2972, %v3252
      %v3331 = vadd.f32 %v2973, %v3255
      %v3332 = vadd.f32 %v2974, %v3260
      %v3333 = vadd.f32 %v2975, %v3263
      %v3334 = vadd.f32 %v2976, %v3268
      %v3335 = vadd.f32 %v2977, %v3271
      %v3336 = vadd.f32 %v2978, %v3276
      %v3337 = vadd.f32 %v2979, %v3279
      %v3338 = vadd.f32 %v2980, %v3284
      %v3339 = vadd.f32 %v2981, %v3287
      %v3340 = vadd.f32 %v2982, %v3292
      %v3341 = vadd.f32 %v2983, %v3295
      %v3342 = vadd.f32 %v2984, %v3300
      %v3343 = vadd.f32 %v2985, %v3303
      %v3344 = vadd.f32 %v2986, %v3308
      %v3345 = vadd.f32 %v2987, %v3311
      %v3346 = vld [vmem:[%s621] sm:$0xe]
      %v3347 = vld [vmem:[%s621 + $0x4] sm:$0xf]
      %v3348 = vld [vmem:[%s621 + $0x8] sm:$0x1]
      %v3349 = vld [vmem:[%s621 + $0xc] sm:$0xe]
      %v3350 = vld [vmem:[%s621 + $0x10] sm:$0xf]
      %v3351 = vld [vmem:[%s621 + $0x14] sm:$0x1]
      %v3352 = vld [vmem:[%s621 + $0x18] sm:$0xe]
      %v3353 = vld [vmem:[%s621 + $0x1c] sm:$0xf]
      %v3354 = vld [vmem:[%s621 + $0x20] sm:$0x1]
      %v3355 = vld [vmem:[%s621 + $0x24] sm:$0xe]
      %v3356 = vld [vmem:[%s621 + $0x28] sm:$0xf]
      %v3357 = vld [vmem:[%s621 + $0x2c] sm:$0x1]
      %v3358 = vld [vmem:[%s621 + $0x30] sm:$0xe]
      %v3359 = vld [vmem:[%s621 + $0x34] sm:$0xf]
      %v3360 = vld [vmem:[%s621 + $0x38] sm:$0x1]
      %v3361 = vld [vmem:[%s621 + $0x3c] sm:$0xe]
      %v3362 = vld [vmem:[%s621 + $0x40] sm:$0xf]
      %v3363 = vld [vmem:[%s621 + $0x44] sm:$0x1]
      %v3364 = vld [vmem:[%s621 + $0x48] sm:$0xe]
      %v3365 = vld [vmem:[%s621 + $0x4c] sm:$0xf]
      %v3366 = vld [vmem:[%s621 + $0x50] sm:$0x1]
      %v3367 = vld [vmem:[%s621 + $0x54] sm:$0xe]
      %v3368 = vld [vmem:[%s621 + $0x58] sm:$0xf]
      %v3369 = vld [vmem:[%s621 + $0x5c] sm:$0x1]
      %v3370 = vld [vmem:[%s621 + $0x60] sm:$0xe]
      %v3371 = vld [vmem:[%s621 + $0x64] sm:$0xf]
      %v3372 = vld [vmem:[%s621 + $0x68] sm:$0x1]
      %v3373 = vld [vmem:[%s621 + $0x6c] sm:$0xe]
      %v3374 = vld [vmem:[%s621 + $0x70] sm:$0xf]
      %v3375 = vld [vmem:[%s621 + $0x74] sm:$0x1]
      %v3376 = vld [vmem:[%s621 + $0x78] sm:$0xe]
      %v3377 = vld [vmem:[%s621 + $0x7c] sm:$0xf]
      %v3378 = vld [vmem:[%s621 + $0x80] sm:$0x1]
      %v3379 = vld [vmem:[%s621 + $0x84] sm:$0xe]
      %v3380 = vld [vmem:[%s621 + $0x88] sm:$0xf]
      %v3381 = vld [vmem:[%s621 + $0x8c] sm:$0x1]
      %v3382 = vld [vmem:[%s621 + $0x90] sm:$0xe]
      %v3383 = vld [vmem:[%s621 + $0x94] sm:$0xf]
      %v3384 = vld [vmem:[%s621 + $0x98] sm:$0x1]
      %v3385 = vld [vmem:[%s621 + $0x9c] sm:$0xe]
      %v3386 = vld [vmem:[%s621 + $0xa0] sm:$0xf]
      %v3387 = vld [vmem:[%s621 + $0xa4] sm:$0x1]
      %v3388 = vld [vmem:[%s621 + $0xa8] sm:$0xe]
      %v3389 = vld [vmem:[%s621 + $0xac] sm:$0xf]
      %v3390 = vld [vmem:[%s621 + $0xb0] sm:$0x1]
      %v3391 = vld [vmem:[%s621 + $0xb4] sm:$0xe]
      %v3392 = vld [vmem:[%s621 + $0xb8] sm:$0xf]
      %v3393 = vld [vmem:[%s621 + $0xbc] sm:$0x1]
      %v3442 = vrot.slane %v3346, 5
      %v3443 = vrot.slane %v3442, 4
      %v3444 = vrot.slane %v3347, 5
      %v3445 = vsel %vm1862, %v3443, %v3444
      %v3446 = vrot.slane %v3444, 4
      %v3447 = vrot.slane %v3348, 5
      %v3448 = vsel %vm1862, %v3446, %v3447
      %v3449 = vrot.slane %v3349, 5
      %v3450 = vrot.slane %v3449, 4
      %v3451 = vrot.slane %v3350, 5
      %v3452 = vsel %vm1862, %v3450, %v3451
      %v3453 = vrot.slane %v3451, 4
      %v3454 = vrot.slane %v3351, 5
      %v3455 = vsel %vm1862, %v3453, %v3454
      %v3456 = vrot.slane %v3352, 5
      %v3457 = vrot.slane %v3456, 4
      %v3458 = vrot.slane %v3353, 5
      %v3459 = vsel %vm1862, %v3457, %v3458
      %v3460 = vrot.slane %v3458, 4
      %v3461 = vrot.slane %v3354, 5
      %v3462 = vsel %vm1862, %v3460, %v3461
      %v3463 = vrot.slane %v3355, 5
      %v3464 = vrot.slane %v3463, 4
      %v3465 = vrot.slane %v3356, 5
      %v3466 = vsel %vm1862, %v3464, %v3465
      %v3467 = vrot.slane %v3465, 4
      %v3468 = vrot.slane %v3357, 5
      %v3469 = vsel %vm1862, %v3467, %v3468
      %v3470 = vrot.slane %v3358, 5
      %v3471 = vrot.slane %v3470, 4
      %v3472 = vrot.slane %v3359, 5
      %v3473 = vsel %vm1862, %v3471, %v3472
      %v3474 = vrot.slane %v3472, 4
      %v3475 = vrot.slane %v3360, 5
      %v3476 = vsel %vm1862, %v3474, %v3475
      %v3477 = vrot.slane %v3361, 5
      %v3478 = vrot.slane %v3477, 4
      %v3479 = vrot.slane %v3362, 5
      %v3480 = vsel %vm1862, %v3478, %v3479
      %v3481 = vrot.slane %v3479, 4
      %v3482 = vrot.slane %v3363, 5
      %v3483 = vsel %vm1862, %v3481, %v3482
      %v3484 = vrot.slane %v3364, 5
      %v3485 = vrot.slane %v3484, 4
      %v3486 = vrot.slane %v3365, 5
      %v3487 = vsel %vm1862, %v3485, %v3486
      %v3488 = vrot.slane %v3486, 4
      %v3489 = vrot.slane %v3366, 5
      %v3490 = vsel %vm1862, %v3488, %v3489
      %v3491 = vrot.slane %v3367, 5
      %v3492 = vrot.slane %v3491, 4
      %v3493 = vrot.slane %v3368, 5
      %v3494 = vsel %vm1862, %v3492, %v3493
      %v3495 = vrot.slane %v3493, 4
      %v3496 = vrot.slane %v3369, 5
      %v3497 = vsel %vm1862, %v3495, %v3496
      %v3498 = vrot.slane %v3370, 5
      %v3499 = vrot.slane %v3498, 4
      %v3500 = vrot.slane %v3371, 5
      %v3501 = vsel %vm1862, %v3499, %v3500
      %v3502 = vrot.slane %v3500, 4
      %v3503 = vrot.slane %v3372, 5
      %v3504 = vsel %vm1862, %v3502, %v3503
      %v3505 = vrot.slane %v3373, 5
      %v3506 = vrot.slane %v3505, 4
      %v3507 = vrot.slane %v3374, 5
      %v3508 = vsel %vm1862, %v3506, %v3507
      %v3509 = vrot.slane %v3507, 4
      %v3510 = vrot.slane %v3375, 5
      %v3511 = vsel %vm1862, %v3509, %v3510
      %v3512 = vrot.slane %v3376, 5
      %v3513 = vrot.slane %v3512, 4
      %v3514 = vrot.slane %v3377, 5
      %v3515 = vsel %vm1862, %v3513, %v3514
      %v3516 = vrot.slane %v3514, 4
      %v3517 = vrot.slane %v3378, 5
      %v3518 = vsel %vm1862, %v3516, %v3517
      %v3519 = vrot.slane %v3379, 5
      %v3520 = vrot.slane %v3519, 4
      %v3521 = vrot.slane %v3380, 5
      %v3522 = vsel %vm1862, %v3520, %v3521
      %v3523 = vrot.slane %v3521, 4
      %v3524 = vrot.slane %v3381, 5
      %v3525 = vsel %vm1862, %v3523, %v3524
      %v3526 = vrot.slane %v3382, 5
      %v3527 = vrot.slane %v3526, 4
      %v3528 = vrot.slane %v3383, 5
      %v3529 = vsel %vm1862, %v3527, %v3528
      %v3530 = vrot.slane %v3528, 4
      %v3531 = vrot.slane %v3384, 5
      %v3532 = vsel %vm1862, %v3530, %v3531
      %v3533 = vrot.slane %v3385, 5
      %v3534 = vrot.slane %v3533, 4
      %v3535 = vrot.slane %v3386, 5
      %v3536 = vsel %vm1862, %v3534, %v3535
      %v3537 = vrot.slane %v3535, 4
      %v3538 = vrot.slane %v3387, 5
      %v3539 = vsel %vm1862, %v3537, %v3538
      %v3540 = vrot.slane %v3388, 5
      %v3541 = vrot.slane %v3540, 4
      %v3542 = vrot.slane %v3389, 5
      %v3543 = vsel %vm1862, %v3541, %v3542
      %v3544 = vrot.slane %v3542, 4
      %v3545 = vrot.slane %v3390, 5
      %v3546 = vsel %vm1862, %v3544, %v3545
      %v3547 = vrot.slane %v3391, 5
      %v3548 = vrot.slane %v3547, 4
      %v3549 = vrot.slane %v3392, 5
      %v3550 = vsel %vm1862, %v3548, %v3549
      %v3551 = vrot.slane %v3549, 4
      %v3552 = vrot.slane %v3393, 5
      %v3553 = vsel %vm1862, %v3551, %v3552
      %s3554 = scalar_lea.vmem %s2, 8
      %v3555 = vld [vmem:[%s3554] sm:$0x3]
      %v3556 = vunpack.c.l.b16 %v3445
      %v3557 = vunpack.c.l.b16 %v3448
      %v3558 = vunpack.c.l.b16 %v3452
      %v3559 = vunpack.c.l.b16 %v3455
      %v3560 = vunpack.c.l.b16 %v3459
      %v3561 = vunpack.c.l.b16 %v3462
      %v3562 = vunpack.c.l.b16 %v3466
      %v3563 = vunpack.c.l.b16 %v3469
      %v3564 = vunpack.c.l.b16 %v3473
      %v3565 = vunpack.c.l.b16 %v3476
      %v3566 = vunpack.c.l.b16 %v3480
      %v3567 = vunpack.c.l.b16 %v3483
      %v3568 = vunpack.c.l.b16 %v3487
      %v3569 = vunpack.c.l.b16 %v3490
      %v3570 = vunpack.c.l.b16 %v3494
      %v3571 = vunpack.c.l.b16 %v3497
      %v3572 = vunpack.c.l.b16 %v3501
      %v3573 = vunpack.c.l.b16 %v3504
      %v3574 = vunpack.c.l.b16 %v3508
      %v3575 = vunpack.c.l.b16 %v3511
      %v3576 = vunpack.c.l.b16 %v3515
      %v3577 = vunpack.c.l.b16 %v3518
      %v3578 = vunpack.c.l.b16 %v3522
      %v3579 = vunpack.c.l.b16 %v3525
      %v3580 = vunpack.c.l.b16 %v3529
      %v3581 = vunpack.c.l.b16 %v3532
      %v3582 = vunpack.c.l.b16 %v3536
      %v3583 = vunpack.c.l.b16 %v3539
      %v3584 = vunpack.c.l.b16 %v3543
      %v3585 = vunpack.c.l.b16 %v3546
      %v3586 = vunpack.c.l.b16 %v3550
      %v3587 = vunpack.c.l.b16 %v3553
      %v3588 = vpack.c.b16 %v3557, %v3556
      %v3589 = vpack.c.b16 %v3559, %v3558
      %v3590 = vpack.c.b16 %v3561, %v3560
      %v3591 = vpack.c.b16 %v3563, %v3562
      %v3592 = vpack.c.b16 %v3565, %v3564
      %v3593 = vpack.c.b16 %v3567, %v3566
      %v3594 = vpack.c.b16 %v3569, %v3568
      %v3595 = vpack.c.b16 %v3571, %v3570
      %v3596 = vpack.c.b16 %v3573, %v3572
      %v3597 = vpack.c.b16 %v3575, %v3574
      %v3598 = vpack.c.b16 %v3577, %v3576
      %v3599 = vpack.c.b16 %v3579, %v3578
      %v3600 = vpack.c.b16 %v3581, %v3580
      %v3601 = vpack.c.b16 %v3583, %v3582
      %v3602 = vpack.c.b16 %v3585, %v3584
      %v3603 = vpack.c.b16 %v3587, %v3586
      %v3605 = vsel %vm2025, %v3588, 0
      %v3608 = vsel %vm2025, %v3589, 0
      %v3611 = vsel %vm2025, %v3590, 0
      %v3614 = vsel %vm2025, %v3591, 0
      %v3617 = vsel %vm2025, %v3592, 0
      %v3620 = vsel %vm2025, %v3593, 0
      %v3623 = vsel %vm2025, %v3594, 0
      %v3626 = vsel %vm2025, %v3595, 0
      %v3629 = vsel %vm2025, %v3596, 0
      %v3632 = vsel %vm2025, %v3597, 0
      %v3635 = vsel %vm2025, %v3598, 0
      %v3638 = vsel %vm2025, %v3599, 0
      %v3641 = vsel %vm2025, %v3600, 0
      %v3644 = vsel %vm2025, %v3601, 0
      %v3647 = vsel %vm2025, %v3602, 0
      %v3650 = vsel %vm2025, %v3603, 0
      %v3653 = vsel %vm2074, %v3555, 0
      %3655 = vmatprep.subr.bf16.mxu0 0
      %3656 = vmatpush1.bf16.msra.mxu0 0
      %3657 = vmatprep.subr.bf16.mxu0 0
      %3658 = vmatpush1.bf16.msra.mxu0 0
      %3659 = vmatprep.subr.bf16.mxu0 0
      %3660 = vmatpush1.bf16.msra.mxu0 0
      %3661 = vmatprep.subr.bf16.mxu0 0
      %3662 = vmatpush1.bf16.msra.mxu0 0
      %3663 = vmatprep.subr.bf16.mxu0 0
      %3664 = vmatpush1.bf16.msra.mxu0 0
      %3665 = vmatprep.subr.bf16.mxu0 0
      %3666 = vmatpush1.bf16.msra.mxu0 0
      %3667 = vmatprep.subr.bf16.mxu0 0
      %3668 = vmatpush1.bf16.msra.mxu0 0
      %3669 = vmatprep.subr.bf16.mxu0 0
      %3670 = vmatpush1.bf16.msra.mxu0 %v3653
      %3671 = vmatprep.subr.bf16.mxu0 0
      %3672 = vmatpush2.bf16.msra.mxu0 0
      %3673 = vmatprep.subr.bf16.mxu0 0
      %3674 = vmatpush2.bf16.msra.mxu0 0
      %3675 = vmatprep.subr.bf16.mxu0 0
      %3676 = vmatpush2.bf16.msra.mxu0 0
      %3677 = vmatprep.subr.bf16.mxu0 0
      %3678 = vmatpush2.bf16.msra.mxu0 0
      %3679 = vmatprep.subr.bf16.mxu0 0
      %3680 = vmatpush2.bf16.msra.mxu0 0
      %3681 = vmatprep.subr.bf16.mxu0 0
      %3682 = vmatpush2.bf16.msra.mxu0 0
      %3683 = vmatprep.subr.bf16.mxu0 0
      %3684 = vmatpush2.bf16.msra.mxu0 0
      %3685 = vmatprep.subr.bf16.mxu0 0
      %3686 = vmatpush2.bf16.msra.mxu0 0
      %3687 = vmatprep.mubr.bf16.mxu0 0
      %3688 = vmatmul.mubr.bf16.gmra.mxu0 %v3605
      %v3689 = vpop.f32.mrf.mxu0
      %v3690 = vadd.f32 0.0, %v3689
      %v3691 = vpop.f32.mrf.mxu0
      %v3692 = vpop.f32.mrf.mxu0
      %v3693 = vadd.f32 0.0, %v3692
      %v3694 = vpop.f32.mrf.mxu0
      %3695 = vmatprep.mubr.bf16.mxu0 0
      %3696 = vmatmul.mubr.bf16.gmra.mxu0 %v3608
      %v3697 = vpop.f32.mrf.mxu0
      %v3698 = vadd.f32 0.0, %v3697
      %v3699 = vpop.f32.mrf.mxu0
      %v3700 = vpop.f32.mrf.mxu0
      %v3701 = vadd.f32 0.0, %v3700
      %v3702 = vpop.f32.mrf.mxu0
      %3703 = vmatprep.mubr.bf16.mxu0 0
      %3704 = vmatmul.mubr.bf16.gmra.mxu0 %v3611
      %v3705 = vpop.f32.mrf.mxu0
      %v3706 = vadd.f32 0.0, %v3705
      %v3707 = vpop.f32.mrf.mxu0
      %v3708 = vpop.f32.mrf.mxu0
      %v3709 = vadd.f32 0.0, %v3708
      %v3710 = vpop.f32.mrf.mxu0
      %3711 = vmatprep.mubr.bf16.mxu0 0
      %3712 = vmatmul.mubr.bf16.gmra.mxu0 %v3614
      %v3713 = vpop.f32.mrf.mxu0
      %v3714 = vadd.f32 0.0, %v3713
      %v3715 = vpop.f32.mrf.mxu0
      %v3716 = vpop.f32.mrf.mxu0
      %v3717 = vadd.f32 0.0, %v3716
      %v3718 = vpop.f32.mrf.mxu0
      %3719 = vmatprep.mubr.bf16.mxu0 0
      %3720 = vmatmul.mubr.bf16.gmra.mxu0 %v3617
      %v3721 = vpop.f32.mrf.mxu0
      %v3722 = vadd.f32 0.0, %v3721
      %v3723 = vpop.f32.mrf.mxu0
      %v3724 = vpop.f32.mrf.mxu0
      %v3725 = vadd.f32 0.0, %v3724
      %v3726 = vpop.f32.mrf.mxu0
      %3727 = vmatprep.mubr.bf16.mxu0 0
      %3728 = vmatmul.mubr.bf16.gmra.mxu0 %v3620
      %v3729 = vpop.f32.mrf.mxu0
      %v3730 = vadd.f32 0.0, %v3729
      %v3731 = vpop.f32.mrf.mxu0
      %v3732 = vpop.f32.mrf.mxu0
      %v3733 = vadd.f32 0.0, %v3732
      %v3734 = vpop.f32.mrf.mxu0
      %3735 = vmatprep.mubr.bf16.mxu0 0
      %3736 = vmatmul.mubr.bf16.gmra.mxu0 %v3623
      %v3737 = vpop.f32.mrf.mxu0
      %v3738 = vadd.f32 0.0, %v3737
      %v3739 = vpop.f32.mrf.mxu0
      %v3740 = vpop.f32.mrf.mxu0
      %v3741 = vadd.f32 0.0, %v3740
      %v3742 = vpop.f32.mrf.mxu0
      %3743 = vmatprep.mubr.bf16.mxu0 0
      %3744 = vmatmul.mubr.bf16.gmra.mxu0 %v3626
      %v3745 = vpop.f32.mrf.mxu0
      %v3746 = vadd.f32 0.0, %v3745
      %v3747 = vpop.f32.mrf.mxu0
      %v3748 = vpop.f32.mrf.mxu0
      %v3749 = vadd.f32 0.0, %v3748
      %v3750 = vpop.f32.mrf.mxu0
      %3751 = vmatprep.mubr.bf16.mxu0 0
      %3752 = vmatmul.mubr.bf16.gmra.mxu0 %v3629
      %v3753 = vpop.f32.mrf.mxu0
      %v3754 = vadd.f32 0.0, %v3753
      %v3755 = vpop.f32.mrf.mxu0
      %v3756 = vpop.f32.mrf.mxu0
      %v3757 = vadd.f32 0.0, %v3756
      %v3758 = vpop.f32.mrf.mxu0
      %3759 = vmatprep.mubr.bf16.mxu0 0
      %3760 = vmatmul.mubr.bf16.gmra.mxu0 %v3632
      %v3761 = vpop.f32.mrf.mxu0
      %v3762 = vadd.f32 0.0, %v3761
      %v3763 = vpop.f32.mrf.mxu0
      %v3764 = vpop.f32.mrf.mxu0
      %v3765 = vadd.f32 0.0, %v3764
      %v3766 = vpop.f32.mrf.mxu0
      %3767 = vmatprep.mubr.bf16.mxu0 0
      %3768 = vmatmul.mubr.bf16.gmra.mxu0 %v3635
      %v3769 = vpop.f32.mrf.mxu0
      %v3770 = vadd.f32 0.0, %v3769
      %v3771 = vpop.f32.mrf.mxu0
      %v3772 = vpop.f32.mrf.mxu0
      %v3773 = vadd.f32 0.0, %v3772
      %v3774 = vpop.f32.mrf.mxu0
      %3775 = vmatprep.mubr.bf16.mxu0 0
      %3776 = vmatmul.mubr.bf16.gmra.mxu0 %v3638
      %v3777 = vpop.f32.mrf.mxu0
      %v3778 = vadd.f32 0.0, %v3777
      %v3779 = vpop.f32.mrf.mxu0
      %v3780 = vpop.f32.mrf.mxu0
      %v3781 = vadd.f32 0.0, %v3780
      %v3782 = vpop.f32.mrf.mxu0
      %3783 = vmatprep.mubr.bf16.mxu0 0
      %3784 = vmatmul.mubr.bf16.gmra.mxu0 %v3641
      %v3785 = vpop.f32.mrf.mxu0
      %v3786 = vadd.f32 0.0, %v3785
      %v3787 = vpop.f32.mrf.mxu0
      %v3788 = vpop.f32.mrf.mxu0
      %v3789 = vadd.f32 0.0, %v3788
      %v3790 = vpop.f32.mrf.mxu0
      %3791 = vmatprep.mubr.bf16.mxu0 0
      %3792 = vmatmul.mubr.bf16.gmra.mxu0 %v3644
      %v3793 = vpop.f32.mrf.mxu0
      %v3794 = vadd.f32 0.0, %v3793
      %v3795 = vpop.f32.mrf.mxu0
      %v3796 = vpop.f32.mrf.mxu0
      %v3797 = vadd.f32 0.0, %v3796
      %v3798 = vpop.f32.mrf.mxu0
      %3799 = vmatprep.mubr.bf16.mxu0 0
      %3800 = vmatmul.mubr.bf16.gmra.mxu0 %v3647
      %v3801 = vpop.f32.mrf.mxu0
      %v3802 = vadd.f32 0.0, %v3801
      %v3803 = vpop.f32.mrf.mxu0
      %v3804 = vpop.f32.mrf.mxu0
      %v3805 = vadd.f32 0.0, %v3804
      %v3806 = vpop.f32.mrf.mxu0
      %3807 = vmatprep.mubr.bf16.mxu0 0
      %3808 = vmatmul.mubr.bf16.gmra.mxu0 %v3650
      %v3809 = vpop.f32.mrf.mxu0
      %v3810 = vadd.f32 0.0, %v3809
      %v3811 = vpop.f32.mrf.mxu0
      %v3812 = vpop.f32.mrf.mxu0
      %v3813 = vadd.f32 0.0, %v3812
      %v3814 = vpop.f32.mrf.mxu0
      %3815 = vdwg.mxu0
      %v3816 = vadd.f32 %v3314, %v3690
      %v3817 = vadd.f32 %v3315, %v3693
      %v3818 = vadd.f32 %v3316, %v3698
      %v3819 = vadd.f32 %v3317, %v3701
      %v3820 = vadd.f32 %v3318, %v3706
      %v3821 = vadd.f32 %v3319, %v3709
      %v3822 = vadd.f32 %v3320, %v3714
      %v3823 = vadd.f32 %v3321, %v3717
      %v3824 = vadd.f32 %v3322, %v3722
      %v3825 = vadd.f32 %v3323, %v3725
      %v3826 = vadd.f32 %v3324, %v3730
      %v3827 = vadd.f32 %v3325, %v3733
      %v3828 = vadd.f32 %v3326, %v3738
      %v3829 = vadd.f32 %v3327, %v3741
      %v3830 = vadd.f32 %v3328, %v3746
      %v3831 = vadd.f32 %v3329, %v3749
      %v3832 = vadd.f32 %v3330, %v3754
      %v3833 = vadd.f32 %v3331, %v3757
      %v3834 = vadd.f32 %v3332, %v3762
      %v3835 = vadd.f32 %v3333, %v3765
      %v3836 = vadd.f32 %v3334, %v3770
      %v3837 = vadd.f32 %v3335, %v3773
      %v3838 = vadd.f32 %v3336, %v3778
      %v3839 = vadd.f32 %v3337, %v3781
      %v3840 = vadd.f32 %v3338, %v3786
      %v3841 = vadd.f32 %v3339, %v3789
      %v3842 = vadd.f32 %v3340, %v3794
      %v3843 = vadd.f32 %v3341, %v3797
      %v3844 = vadd.f32 %v3342, %v3802
      %v3845 = vadd.f32 %v3343, %v3805
      %v3846 = vadd.f32 %v3344, %v3810
      %v3847 = vadd.f32 %v3345, %v3813
      %v3848 = vld [vmem:[%s621] sm:$0xc]
      %v3849 = vld [vmem:[%s621 + $0x8] sm:$0x3]
      %v3850 = vld [vmem:[%s621 + $0xc] sm:$0xc]
      %v3851 = vld [vmem:[%s621 + $0x14] sm:$0x3]
      %v3852 = vld [vmem:[%s621 + $0x18] sm:$0xc]
      %v3853 = vld [vmem:[%s621 + $0x20] sm:$0x3]
      %v3854 = vld [vmem:[%s621 + $0x24] sm:$0xc]
      %v3855 = vld [vmem:[%s621 + $0x2c] sm:$0x3]
      %v3856 = vld [vmem:[%s621 + $0x30] sm:$0xc]
      %v3857 = vld [vmem:[%s621 + $0x38] sm:$0x3]
      %v3858 = vld [vmem:[%s621 + $0x3c] sm:$0xc]
      %v3859 = vld [vmem:[%s621 + $0x44] sm:$0x3]
      %v3860 = vld [vmem:[%s621 + $0x48] sm:$0xc]
      %v3861 = vld [vmem:[%s621 + $0x50] sm:$0x3]
      %v3862 = vld [vmem:[%s621 + $0x54] sm:$0xc]
      %v3863 = vld [vmem:[%s621 + $0x5c] sm:$0x3]
      %v3864 = vld [vmem:[%s621 + $0x60] sm:$0xc]
      %v3865 = vld [vmem:[%s621 + $0x68] sm:$0x3]
      %v3866 = vld [vmem:[%s621 + $0x6c] sm:$0xc]
      %v3867 = vld [vmem:[%s621 + $0x74] sm:$0x3]
      %v3868 = vld [vmem:[%s621 + $0x78] sm:$0xc]
      %v3869 = vld [vmem:[%s621 + $0x80] sm:$0x3]
      %v3870 = vld [vmem:[%s621 + $0x84] sm:$0xc]
      %v3871 = vld [vmem:[%s621 + $0x8c] sm:$0x3]
      %v3872 = vld [vmem:[%s621 + $0x90] sm:$0xc]
      %v3873 = vld [vmem:[%s621 + $0x98] sm:$0x3]
      %v3874 = vld [vmem:[%s621 + $0x9c] sm:$0xc]
      %v3875 = vld [vmem:[%s621 + $0xa4] sm:$0x3]
      %v3876 = vld [vmem:[%s621 + $0xa8] sm:$0xc]
      %v3877 = vld [vmem:[%s621 + $0xb0] sm:$0x3]
      %v3878 = vld [vmem:[%s621 + $0xb4] sm:$0xc]
      %v3879 = vld [vmem:[%s621 + $0xbc] sm:$0x3]
      %v3912 = vrot.slane %v3848, 6
      %v3913 = vrot.slane %v3912, 4
      %v3914 = vrot.slane %v3347, 6
      %v3915 = vsel %vm2581, %v3913, %v3914
      %v3916 = vrot.slane %v3914, 4
      %v3917 = vrot.slane %v3849, 6
      %v3918 = vsel %vm2581, %v3916, %v3917
      %v3919 = vrot.slane %v3850, 6
      %v3920 = vrot.slane %v3919, 4
      %v3921 = vrot.slane %v3350, 6
      %v3922 = vsel %vm2581, %v3920, %v3921
      %v3923 = vrot.slane %v3921, 4
      %v3924 = vrot.slane %v3851, 6
      %v3925 = vsel %vm2581, %v3923, %v3924
      %v3926 = vrot.slane %v3852, 6
      %v3927 = vrot.slane %v3926, 4
      %v3928 = vrot.slane %v3353, 6
      %v3929 = vsel %vm2581, %v3927, %v3928
      %v3930 = vrot.slane %v3928, 4
      %v3931 = vrot.slane %v3853, 6
      %v3932 = vsel %vm2581, %v3930, %v3931
      %v3933 = vrot.slane %v3854, 6
      %v3934 = vrot.slane %v3933, 4
      %v3935 = vrot.slane %v3356, 6
      %v3936 = vsel %vm2581, %v3934, %v3935
      %v3937 = vrot.slane %v3935, 4
      %v3938 = vrot.slane %v3855, 6
      %v3939 = vsel %vm2581, %v3937, %v3938
      %v3940 = vrot.slane %v3856, 6
      %v3941 = vrot.slane %v3940, 4
      %v3942 = vrot.slane %v3359, 6
      %v3943 = vsel %vm2581, %v3941, %v3942
      %v3944 = vrot.slane %v3942, 4
      %v3945 = vrot.slane %v3857, 6
      %v3946 = vsel %vm2581, %v3944, %v3945
      %v3947 = vrot.slane %v3858, 6
      %v3948 = vrot.slane %v3947, 4
      %v3949 = vrot.slane %v3362, 6
      %v3950 = vsel %vm2581, %v3948, %v3949
      %v3951 = vrot.slane %v3949, 4
      %v3952 = vrot.slane %v3859, 6
      %v3953 = vsel %vm2581, %v3951, %v3952
      %v3954 = vrot.slane %v3860, 6
      %v3955 = vrot.slane %v3954, 4
      %v3956 = vrot.slane %v3365, 6
      %v3957 = vsel %vm2581, %v3955, %v3956
      %v3958 = vrot.slane %v3956, 4
      %v3959 = vrot.slane %v3861, 6
      %v3960 = vsel %vm2581, %v3958, %v3959
      %v3961 = vrot.slane %v3862, 6
      %v3962 = vrot.slane %v3961, 4
      %v3963 = vrot.slane %v3368, 6
      %v3964 = vsel %vm2581, %v3962, %v3963
      %v3965 = vrot.slane %v3963, 4
      %v3966 = vrot.slane %v3863, 6
      %v3967 = vsel %vm2581, %v3965, %v3966
      %v3968 = vrot.slane %v3864, 6
      %v3969 = vrot.slane %v3968, 4
      %v3970 = vrot.slane %v3371, 6
      %v3971 = vsel %vm2581, %v3969, %v3970
      %v3972 = vrot.slane %v3970, 4
      %v3973 = vrot.slane %v3865, 6
      %v3974 = vsel %vm2581, %v3972, %v3973
      %v3975 = vrot.slane %v3866, 6
      %v3976 = vrot.slane %v3975, 4
      %v3977 = vrot.slane %v3374, 6
      %v3978 = vsel %vm2581, %v3976, %v3977
      %v3979 = vrot.slane %v3977, 4
      %v3980 = vrot.slane %v3867, 6
      %v3981 = vsel %vm2581, %v3979, %v3980
      %v3982 = vrot.slane %v3868, 6
      %v3983 = vrot.slane %v3982, 4
      %v3984 = vrot.slane %v3377, 6
      %v3985 = vsel %vm2581, %v3983, %v3984
      %v3986 = vrot.slane %v3984, 4
      %v3987 = vrot.slane %v3869, 6
      %v3988 = vsel %vm2581, %v3986, %v3987
      %v3989 = vrot.slane %v3870, 6
      %v3990 = vrot.slane %v3989, 4
      %v3991 = vrot.slane %v3380, 6
      %v3992 = vsel %vm2581, %v3990, %v3991
      %v3993 = vrot.slane %v3991, 4
      %v3994 = vrot.slane %v3871, 6
      %v3995 = vsel %vm2581, %v3993, %v3994
      %v3996 = vrot.slane %v3872, 6
      %v3997 = vrot.slane %v3996, 4
      %v3998 = vrot.slane %v3383, 6
      %v3999 = vsel %vm2581, %v3997, %v3998
      %v4000 = vrot.slane %v3998, 4
      %v4001 = vrot.slane %v3873, 6
      %v4002 = vsel %vm2581, %v4000, %v4001
      %v4003 = vrot.slane %v3874, 6
      %v4004 = vrot.slane %v4003, 4
      %v4005 = vrot.slane %v3386, 6
      %v4006 = vsel %vm2581, %v4004, %v4005
      %v4007 = vrot.slane %v4005, 4
      %v4008 = vrot.slane %v3875, 6
      %v4009 = vsel %vm2581, %v4007, %v4008
      %v4010 = vrot.slane %v3876, 6
      %v4011 = vrot.slane %v4010, 4
      %v4012 = vrot.slane %v3389, 6
      %v4013 = vsel %vm2581, %v4011, %v4012
      %v4014 = vrot.slane %v4012, 4
      %v4015 = vrot.slane %v3877, 6
      %v4016 = vsel %vm2581, %v4014, %v4015
      %v4017 = vrot.slane %v3878, 6
      %v4018 = vrot.slane %v4017, 4
      %v4019 = vrot.slane %v3392, 6
      %v4020 = vsel %vm2581, %v4018, %v4019
      %v4021 = vrot.slane %v4019, 4
      %v4022 = vrot.slane %v3879, 6
      %v4023 = vsel %vm2581, %v4021, %v4022
      %s4024 = scalar_lea.vmem %s2, 10
      %v4025 = vld [vmem:[%s4024] sm:$0x3]
      %v4026 = vunpack.c.l.b16 %v3915
      %v4027 = vunpack.c.l.b16 %v3918
      %v4028 = vunpack.c.l.b16 %v3922
      %v4029 = vunpack.c.l.b16 %v3925
      %v4030 = vunpack.c.l.b16 %v3929
      %v4031 = vunpack.c.l.b16 %v3932
      %v4032 = vunpack.c.l.b16 %v3936
      %v4033 = vunpack.c.l.b16 %v3939
      %v4034 = vunpack.c.l.b16 %v3943
      %v4035 = vunpack.c.l.b16 %v3946
      %v4036 = vunpack.c.l.b16 %v3950
      %v4037 = vunpack.c.l.b16 %v3953
      %v4038 = vunpack.c.l.b16 %v3957
      %v4039 = vunpack.c.l.b16 %v3960
      %v4040 = vunpack.c.l.b16 %v3964
      %v4041 = vunpack.c.l.b16 %v3967
      %v4042 = vunpack.c.l.b16 %v3971
      %v4043 = vunpack.c.l.b16 %v3974
      %v4044 = vunpack.c.l.b16 %v3978
      %v4045 = vunpack.c.l.b16 %v3981
      %v4046 = vunpack.c.l.b16 %v3985
      %v4047 = vunpack.c.l.b16 %v3988
      %v4048 = vunpack.c.l.b16 %v3992
      %v4049 = vunpack.c.l.b16 %v3995
      %v4050 = vunpack.c.l.b16 %v3999
      %v4051 = vunpack.c.l.b16 %v4002
      %v4052 = vunpack.c.l.b16 %v4006
      %v4053 = vunpack.c.l.b16 %v4009
      %v4054 = vunpack.c.l.b16 %v4013
      %v4055 = vunpack.c.l.b16 %v4016
      %v4056 = vunpack.c.l.b16 %v4020
      %v4057 = vunpack.c.l.b16 %v4023
      %v4058 = vpack.c.b16 %v4027, %v4026
      %v4059 = vpack.c.b16 %v4029, %v4028
      %v4060 = vpack.c.b16 %v4031, %v4030
      %v4061 = vpack.c.b16 %v4033, %v4032
      %v4062 = vpack.c.b16 %v4035, %v4034
      %v4063 = vpack.c.b16 %v4037, %v4036
      %v4064 = vpack.c.b16 %v4039, %v4038
      %v4065 = vpack.c.b16 %v4041, %v4040
      %v4066 = vpack.c.b16 %v4043, %v4042
      %v4067 = vpack.c.b16 %v4045, %v4044
      %v4068 = vpack.c.b16 %v4047, %v4046
      %v4069 = vpack.c.b16 %v4049, %v4048
      %v4070 = vpack.c.b16 %v4051, %v4050
      %v4071 = vpack.c.b16 %v4053, %v4052
      %v4072 = vpack.c.b16 %v4055, %v4054
      %v4073 = vpack.c.b16 %v4057, %v4056
      %v4075 = vsel %vm2025, %v4058, 0
      %v4078 = vsel %vm2025, %v4059, 0
      %v4081 = vsel %vm2025, %v4060, 0
      %v4084 = vsel %vm2025, %v4061, 0
      %v4087 = vsel %vm2025, %v4062, 0
      %v4090 = vsel %vm2025, %v4063, 0
      %v4093 = vsel %vm2025, %v4064, 0
      %v4096 = vsel %vm2025, %v4065, 0
      %v4099 = vsel %vm2025, %v4066, 0
      %v4102 = vsel %vm2025, %v4067, 0
      %v4105 = vsel %vm2025, %v4068, 0
      %v4108 = vsel %vm2025, %v4069, 0
      %v4111 = vsel %vm2025, %v4070, 0
      %v4114 = vsel %vm2025, %v4071, 0
      %v4117 = vsel %vm2025, %v4072, 0
      %v4120 = vsel %vm2025, %v4073, 0
      %v4123 = vsel %vm2074, %v4025, 0
      %4125 = vmatprep.subr.bf16.mxu0 0
      %4126 = vmatpush1.bf16.msra.mxu0 0
      %4127 = vmatprep.subr.bf16.mxu0 0
      %4128 = vmatpush1.bf16.msra.mxu0 0
      %4129 = vmatprep.subr.bf16.mxu0 0
      %4130 = vmatpush1.bf16.msra.mxu0 0
      %4131 = vmatprep.subr.bf16.mxu0 0
      %4132 = vmatpush1.bf16.msra.mxu0 0
      %4133 = vmatprep.subr.bf16.mxu0 0
      %4134 = vmatpush1.bf16.msra.mxu0 0
      %4135 = vmatprep.subr.bf16.mxu0 0
      %4136 = vmatpush1.bf16.msra.mxu0 0
      %4137 = vmatprep.subr.bf16.mxu0 0
      %4138 = vmatpush1.bf16.msra.mxu0 0
      %4139 = vmatprep.subr.bf16.mxu0 0
      %4140 = vmatpush1.bf16.msra.mxu0 %v4123
      %4141 = vmatprep.subr.bf16.mxu0 0
      %4142 = vmatpush2.bf16.msra.mxu0 0
      %4143 = vmatprep.subr.bf16.mxu0 0
      %4144 = vmatpush2.bf16.msra.mxu0 0
      %4145 = vmatprep.subr.bf16.mxu0 0
      %4146 = vmatpush2.bf16.msra.mxu0 0
      %4147 = vmatprep.subr.bf16.mxu0 0
      %4148 = vmatpush2.bf16.msra.mxu0 0
      %4149 = vmatprep.subr.bf16.mxu0 0
      %4150 = vmatpush2.bf16.msra.mxu0 0
      %4151 = vmatprep.subr.bf16.mxu0 0
      %4152 = vmatpush2.bf16.msra.mxu0 0
      %4153 = vmatprep.subr.bf16.mxu0 0
      %4154 = vmatpush2.bf16.msra.mxu0 0
      %4155 = vmatprep.subr.bf16.mxu0 0
      %4156 = vmatpush2.bf16.msra.mxu0 0
      %4157 = vmatprep.mubr.bf16.mxu0 0
      %4158 = vmatmul.mubr.bf16.gmra.mxu0 %v4075
      %v4159 = vpop.f32.mrf.mxu0
      %v4160 = vadd.f32 0.0, %v4159
      %v4161 = vpop.f32.mrf.mxu0
      %v4162 = vpop.f32.mrf.mxu0
      %v4163 = vadd.f32 0.0, %v4162
      %v4164 = vpop.f32.mrf.mxu0
      %4165 = vmatprep.mubr.bf16.mxu0 0
      %4166 = vmatmul.mubr.bf16.gmra.mxu0 %v4078
      %v4167 = vpop.f32.mrf.mxu0
      %v4168 = vadd.f32 0.0, %v4167
      %v4169 = vpop.f32.mrf.mxu0
      %v4170 = vpop.f32.mrf.mxu0
      %v4171 = vadd.f32 0.0, %v4170
      %v4172 = vpop.f32.mrf.mxu0
      %4173 = vmatprep.mubr.bf16.mxu0 0
      %4174 = vmatmul.mubr.bf16.gmra.mxu0 %v4081
      %v4175 = vpop.f32.mrf.mxu0
      %v4176 = vadd.f32 0.0, %v4175
      %v4177 = vpop.f32.mrf.mxu0
      %v4178 = vpop.f32.mrf.mxu0
      %v4179 = vadd.f32 0.0, %v4178
      %v4180 = vpop.f32.mrf.mxu0
      %4181 = vmatprep.mubr.bf16.mxu0 0
      %4182 = vmatmul.mubr.bf16.gmra.mxu0 %v4084
      %v4183 = vpop.f32.mrf.mxu0
      %v4184 = vadd.f32 0.0, %v4183
      %v4185 = vpop.f32.mrf.mxu0
      %v4186 = vpop.f32.mrf.mxu0
      %v4187 = vadd.f32 0.0, %v4186
      %v4188 = vpop.f32.mrf.mxu0
      %4189 = vmatprep.mubr.bf16.mxu0 0
      %4190 = vmatmul.mubr.bf16.gmra.mxu0 %v4087
      %v4191 = vpop.f32.mrf.mxu0
      %v4192 = vadd.f32 0.0, %v4191
      %v4193 = vpop.f32.mrf.mxu0
      %v4194 = vpop.f32.mrf.mxu0
      %v4195 = vadd.f32 0.0, %v4194
      %v4196 = vpop.f32.mrf.mxu0
      %4197 = vmatprep.mubr.bf16.mxu0 0
      %4198 = vmatmul.mubr.bf16.gmra.mxu0 %v4090
      %v4199 = vpop.f32.mrf.mxu0
      %v4200 = vadd.f32 0.0, %v4199
      %v4201 = vpop.f32.mrf.mxu0
      %v4202 = vpop.f32.mrf.mxu0
      %v4203 = vadd.f32 0.0, %v4202
      %v4204 = vpop.f32.mrf.mxu0
      %4205 = vmatprep.mubr.bf16.mxu0 0
      %4206 = vmatmul.mubr.bf16.gmra.mxu0 %v4093
      %v4207 = vpop.f32.mrf.mxu0
      %v4208 = vadd.f32 0.0, %v4207
      %v4209 = vpop.f32.mrf.mxu0
      %v4210 = vpop.f32.mrf.mxu0
      %v4211 = vadd.f32 0.0, %v4210
      %v4212 = vpop.f32.mrf.mxu0
      %4213 = vmatprep.mubr.bf16.mxu0 0
      %4214 = vmatmul.mubr.bf16.gmra.mxu0 %v4096
      %v4215 = vpop.f32.mrf.mxu0
      %v4216 = vadd.f32 0.0, %v4215
      %v4217 = vpop.f32.mrf.mxu0
      %v4218 = vpop.f32.mrf.mxu0
      %v4219 = vadd.f32 0.0, %v4218
      %v4220 = vpop.f32.mrf.mxu0
      %4221 = vmatprep.mubr.bf16.mxu0 0
      %4222 = vmatmul.mubr.bf16.gmra.mxu0 %v4099
      %v4223 = vpop.f32.mrf.mxu0
      %v4224 = vadd.f32 0.0, %v4223
      %v4225 = vpop.f32.mrf.mxu0
      %v4226 = vpop.f32.mrf.mxu0
      %v4227 = vadd.f32 0.0, %v4226
      %v4228 = vpop.f32.mrf.mxu0
      %4229 = vmatprep.mubr.bf16.mxu0 0
      %4230 = vmatmul.mubr.bf16.gmra.mxu0 %v4102
      %v4231 = vpop.f32.mrf.mxu0
      %v4232 = vadd.f32 0.0, %v4231
      %v4233 = vpop.f32.mrf.mxu0
      %v4234 = vpop.f32.mrf.mxu0
      %v4235 = vadd.f32 0.0, %v4234
      %v4236 = vpop.f32.mrf.mxu0
      %4237 = vmatprep.mubr.bf16.mxu0 0
      %4238 = vmatmul.mubr.bf16.gmra.mxu0 %v4105
      %v4239 = vpop.f32.mrf.mxu0
      %v4240 = vadd.f32 0.0, %v4239
      %v4241 = vpop.f32.mrf.mxu0
      %v4242 = vpop.f32.mrf.mxu0
      %v4243 = vadd.f32 0.0, %v4242
      %v4244 = vpop.f32.mrf.mxu0
      %4245 = vmatprep.mubr.bf16.mxu0 0
      %4246 = vmatmul.mubr.bf16.gmra.mxu0 %v4108
      %v4247 = vpop.f32.mrf.mxu0
      %v4248 = vadd.f32 0.0, %v4247
      %v4249 = vpop.f32.mrf.mxu0
      %v4250 = vpop.f32.mrf.mxu0
      %v4251 = vadd.f32 0.0, %v4250
      %v4252 = vpop.f32.mrf.mxu0
      %4253 = vmatprep.mubr.bf16.mxu0 0
      %4254 = vmatmul.mubr.bf16.gmra.mxu0 %v4111
      %v4255 = vpop.f32.mrf.mxu0
      %v4256 = vadd.f32 0.0, %v4255
      %v4257 = vpop.f32.mrf.mxu0
      %v4258 = vpop.f32.mrf.mxu0
      %v4259 = vadd.f32 0.0, %v4258
      %v4260 = vpop.f32.mrf.mxu0
      %4261 = vmatprep.mubr.bf16.mxu0 0
      %4262 = vmatmul.mubr.bf16.gmra.mxu0 %v4114
      %v4263 = vpop.f32.mrf.mxu0
      %v4264 = vadd.f32 0.0, %v4263
      %v4265 = vpop.f32.mrf.mxu0
      %v4266 = vpop.f32.mrf.mxu0
      %v4267 = vadd.f32 0.0, %v4266
      %v4268 = vpop.f32.mrf.mxu0
      %4269 = vmatprep.mubr.bf16.mxu0 0
      %4270 = vmatmul.mubr.bf16.gmra.mxu0 %v4117
      %v4271 = vpop.f32.mrf.mxu0
      %v4272 = vadd.f32 0.0, %v4271
      %v4273 = vpop.f32.mrf.mxu0
      %v4274 = vpop.f32.mrf.mxu0
      %v4275 = vadd.f32 0.0, %v4274
      %v4276 = vpop.f32.mrf.mxu0
      %4277 = vmatprep.mubr.bf16.mxu0 0
      %4278 = vmatmul.mubr.bf16.gmra.mxu0 %v4120
      %v4279 = vpop.f32.mrf.mxu0
      %v4280 = vadd.f32 0.0, %v4279
      %v4281 = vpop.f32.mrf.mxu0
      %v4282 = vpop.f32.mrf.mxu0
      %v4283 = vadd.f32 0.0, %v4282
      %v4284 = vpop.f32.mrf.mxu0
      %4285 = vdwg.mxu0
      %v4286 = vadd.f32 %v3816, %v4160
      %v4287 = vadd.f32 %v3817, %v4163
      %v4288 = vadd.f32 %v3818, %v4168
      %v4289 = vadd.f32 %v3819, %v4171
      %v4290 = vadd.f32 %v3820, %v4176
      %v4291 = vadd.f32 %v3821, %v4179
      %v4292 = vadd.f32 %v3822, %v4184
      %v4293 = vadd.f32 %v3823, %v4187
      %v4294 = vadd.f32 %v3824, %v4192
      %v4295 = vadd.f32 %v3825, %v4195
      %v4296 = vadd.f32 %v3826, %v4200
      %v4297 = vadd.f32 %v3827, %v4203
      %v4298 = vadd.f32 %v3828, %v4208
      %v4299 = vadd.f32 %v3829, %v4211
      %v4300 = vadd.f32 %v3830, %v4216
      %v4301 = vadd.f32 %v3831, %v4219
      %v4302 = vadd.f32 %v3832, %v4224
      %v4303 = vadd.f32 %v3833, %v4227
      %v4304 = vadd.f32 %v3834, %v4232
      %v4305 = vadd.f32 %v3835, %v4235
      %v4306 = vadd.f32 %v3836, %v4240
      %v4307 = vadd.f32 %v3837, %v4243
      %v4308 = vadd.f32 %v3838, %v4248
      %v4309 = vadd.f32 %v3839, %v4251
      %v4310 = vadd.f32 %v3840, %v4256
      %v4311 = vadd.f32 %v3841, %v4259
      %v4312 = vadd.f32 %v3842, %v4264
      %v4313 = vadd.f32 %v3843, %v4267
      %v4314 = vadd.f32 %v3844, %v4272
      %v4315 = vadd.f32 %v3845, %v4275
      %v4316 = vadd.f32 %v3846, %v4280
      %v4317 = vadd.f32 %v3847, %v4283
      %v4318 = vld [vmem:[%s753] sm:$0xf]
      %v4319 = vld [vmem:[%s753 + $0x4] sm:$0xf]
      %v4320 = vld [vmem:[%s753 + $0xc] sm:$0xf]
      %v4321 = vld [vmem:[%s753 + $0x10] sm:$0xf]
      %v4322 = vld [vmem:[%s753 + $0x18] sm:$0xf]
      %v4323 = vld [vmem:[%s753 + $0x1c] sm:$0xf]
      %v4324 = vld [vmem:[%s753 + $0x24] sm:$0xf]
      %v4325 = vld [vmem:[%s753 + $0x28] sm:$0xf]
      %v4326 = vld [vmem:[%s753 + $0x30] sm:$0xf]
      %v4327 = vld [vmem:[%s753 + $0x34] sm:$0xf]
      %v4328 = vld [vmem:[%s753 + $0x3c] sm:$0xf]
      %v4329 = vld [vmem:[%s753 + $0x40] sm:$0xf]
      %v4330 = vld [vmem:[%s753 + $0x48] sm:$0xf]
      %v4331 = vld [vmem:[%s753 + $0x4c] sm:$0xf]
      %v4332 = vld [vmem:[%s753 + $0x54] sm:$0xf]
      %v4333 = vld [vmem:[%s753 + $0x58] sm:$0xf]
      %v4334 = vld [vmem:[%s753 + $0x60] sm:$0xf]
      %v4335 = vld [vmem:[%s753 + $0x64] sm:$0xf]
      %v4336 = vld [vmem:[%s753 + $0x6c] sm:$0xf]
      %v4337 = vld [vmem:[%s753 + $0x70] sm:$0xf]
      %v4338 = vld [vmem:[%s753 + $0x78] sm:$0xf]
      %v4339 = vld [vmem:[%s753 + $0x7c] sm:$0xf]
      %v4340 = vld [vmem:[%s753 + $0x84] sm:$0xf]
      %v4341 = vld [vmem:[%s753 + $0x88] sm:$0xf]
      %v4342 = vld [vmem:[%s753 + $0x90] sm:$0xf]
      %v4343 = vld [vmem:[%s753 + $0x94] sm:$0xf]
      %v4344 = vld [vmem:[%s753 + $0x9c] sm:$0xf]
      %v4345 = vld [vmem:[%s753 + $0xa0] sm:$0xf]
      %v4346 = vld [vmem:[%s753 + $0xa8] sm:$0xf]
      %v4347 = vld [vmem:[%s753 + $0xac] sm:$0xf]
      %v4348 = vld [vmem:[%s753 + $0xb4] sm:$0xf]
      %v4349 = vld [vmem:[%s753 + $0xb8] sm:$0xf]
      %s4350 = scalar_lea.vmem %s2, 12
      %v4351 = vld [vmem:[%s4350] sm:$0x3]
      %v4384 = vunpack.c.l.b16 %v4318
      %v4385 = vunpack.c.l.b16 %v4319
      %v4386 = vunpack.c.l.b16 %v4320
      %v4387 = vunpack.c.l.b16 %v4321
      %v4388 = vunpack.c.l.b16 %v4322
      %v4389 = vunpack.c.l.b16 %v4323
      %v4390 = vunpack.c.l.b16 %v4324
      %v4391 = vunpack.c.l.b16 %v4325
      %v4392 = vunpack.c.l.b16 %v4326
      %v4393 = vunpack.c.l.b16 %v4327
      %v4394 = vunpack.c.l.b16 %v4328
      %v4395 = vunpack.c.l.b16 %v4329
      %v4396 = vunpack.c.l.b16 %v4330
      %v4397 = vunpack.c.l.b16 %v4331
      %v4398 = vunpack.c.l.b16 %v4332
      %v4399 = vunpack.c.l.b16 %v4333
      %v4400 = vunpack.c.l.b16 %v4334
      %v4401 = vunpack.c.l.b16 %v4335
      %v4402 = vunpack.c.l.b16 %v4336
      %v4403 = vunpack.c.l.b16 %v4337
      %v4404 = vunpack.c.l.b16 %v4338
      %v4405 = vunpack.c.l.b16 %v4339
      %v4406 = vunpack.c.l.b16 %v4340
      %v4407 = vunpack.c.l.b16 %v4341
      %v4408 = vunpack.c.l.b16 %v4342
      %v4409 = vunpack.c.l.b16 %v4343
      %v4410 = vunpack.c.l.b16 %v4344
      %v4411 = vunpack.c.l.b16 %v4345
      %v4412 = vunpack.c.l.b16 %v4346
      %v4413 = vunpack.c.l.b16 %v4347
      %v4414 = vunpack.c.l.b16 %v4348
      %v4415 = vunpack.c.l.b16 %v4349
      %v4416 = vpack.c.b16 %v4385, %v4384
      %v4417 = vpack.c.b16 %v4387, %v4386
      %v4418 = vpack.c.b16 %v4389, %v4388
      %v4419 = vpack.c.b16 %v4391, %v4390
      %v4420 = vpack.c.b16 %v4393, %v4392
      %v4421 = vpack.c.b16 %v4395, %v4394
      %v4422 = vpack.c.b16 %v4397, %v4396
      %v4423 = vpack.c.b16 %v4399, %v4398
      %v4424 = vpack.c.b16 %v4401, %v4400
      %v4425 = vpack.c.b16 %v4403, %v4402
      %v4426 = vpack.c.b16 %v4405, %v4404
      %v4427 = vpack.c.b16 %v4407, %v4406
      %v4428 = vpack.c.b16 %v4409, %v4408
      %v4429 = vpack.c.b16 %v4411, %v4410
      %v4430 = vpack.c.b16 %v4413, %v4412
      %v4431 = vpack.c.b16 %v4415, %v4414
      %v4433 = vsel %vm2025, %v4416, 0
      %v4436 = vsel %vm2025, %v4417, 0
      %v4439 = vsel %vm2025, %v4418, 0
      %v4442 = vsel %vm2025, %v4419, 0
      %v4445 = vsel %vm2025, %v4420, 0
      %v4448 = vsel %vm2025, %v4421, 0
      %v4451 = vsel %vm2025, %v4422, 0
      %v4454 = vsel %vm2025, %v4423, 0
      %v4457 = vsel %vm2025, %v4424, 0
      %v4460 = vsel %vm2025, %v4425, 0
      %v4463 = vsel %vm2025, %v4426, 0
      %v4466 = vsel %vm2025, %v4427, 0
      %v4469 = vsel %vm2025, %v4428, 0
      %v4472 = vsel %vm2025, %v4429, 0
      %v4475 = vsel %vm2025, %v4430, 0
      %v4478 = vsel %vm2025, %v4431, 0
      %v4481 = vsel %vm2074, %v4351, 0
      %4483 = vmatprep.subr.bf16.mxu0 0
      %4484 = vmatpush1.bf16.msra.mxu0 0
      %4485 = vmatprep.subr.bf16.mxu0 0
      %4486 = vmatpush1.bf16.msra.mxu0 0
      %4487 = vmatprep.subr.bf16.mxu0 0
      %4488 = vmatpush1.bf16.msra.mxu0 0
      %4489 = vmatprep.subr.bf16.mxu0 0
      %4490 = vmatpush1.bf16.msra.mxu0 0
      %4491 = vmatprep.subr.bf16.mxu0 0
      %4492 = vmatpush1.bf16.msra.mxu0 0
      %4493 = vmatprep.subr.bf16.mxu0 0
      %4494 = vmatpush1.bf16.msra.mxu0 0
      %4495 = vmatprep.subr.bf16.mxu0 0
      %4496 = vmatpush1.bf16.msra.mxu0 0
      %4497 = vmatprep.subr.bf16.mxu0 0
      %4498 = vmatpush1.bf16.msra.mxu0 %v4481
      %4499 = vmatprep.subr.bf16.mxu0 0
      %4500 = vmatpush2.bf16.msra.mxu0 0
      %4501 = vmatprep.subr.bf16.mxu0 0
      %4502 = vmatpush2.bf16.msra.mxu0 0
      %4503 = vmatprep.subr.bf16.mxu0 0
      %4504 = vmatpush2.bf16.msra.mxu0 0
      %4505 = vmatprep.subr.bf16.mxu0 0
      %4506 = vmatpush2.bf16.msra.mxu0 0
      %4507 = vmatprep.subr.bf16.mxu0 0
      %4508 = vmatpush2.bf16.msra.mxu0 0
      %4509 = vmatprep.subr.bf16.mxu0 0
      %4510 = vmatpush2.bf16.msra.mxu0 0
      %4511 = vmatprep.subr.bf16.mxu0 0
      %4512 = vmatpush2.bf16.msra.mxu0 0
      %4513 = vmatprep.subr.bf16.mxu0 0
      %4514 = vmatpush2.bf16.msra.mxu0 0
      %4515 = vmatprep.mubr.bf16.mxu0 0
      %4516 = vmatmul.mubr.bf16.gmra.mxu0 %v4433
      %v4517 = vpop.f32.mrf.mxu0
      %v4518 = vadd.f32 0.0, %v4517
      %v4519 = vpop.f32.mrf.mxu0
      %v4520 = vpop.f32.mrf.mxu0
      %v4521 = vadd.f32 0.0, %v4520
      %v4522 = vpop.f32.mrf.mxu0
      %4523 = vmatprep.mubr.bf16.mxu0 0
      %4524 = vmatmul.mubr.bf16.gmra.mxu0 %v4436
      %v4525 = vpop.f32.mrf.mxu0
      %v4526 = vadd.f32 0.0, %v4525
      %v4527 = vpop.f32.mrf.mxu0
      %v4528 = vpop.f32.mrf.mxu0
      %v4529 = vadd.f32 0.0, %v4528
      %v4530 = vpop.f32.mrf.mxu0
      %4531 = vmatprep.mubr.bf16.mxu0 0
      %4532 = vmatmul.mubr.bf16.gmra.mxu0 %v4439
      %v4533 = vpop.f32.mrf.mxu0
      %v4534 = vadd.f32 0.0, %v4533
      %v4535 = vpop.f32.mrf.mxu0
      %v4536 = vpop.f32.mrf.mxu0
      %v4537 = vadd.f32 0.0, %v4536
      %v4538 = vpop.f32.mrf.mxu0
      %4539 = vmatprep.mubr.bf16.mxu0 0
      %4540 = vmatmul.mubr.bf16.gmra.mxu0 %v4442
      %v4541 = vpop.f32.mrf.mxu0
      %v4542 = vadd.f32 0.0, %v4541
      %v4543 = vpop.f32.mrf.mxu0
      %v4544 = vpop.f32.mrf.mxu0
      %v4545 = vadd.f32 0.0, %v4544
      %v4546 = vpop.f32.mrf.mxu0
      %4547 = vmatprep.mubr.bf16.mxu0 0
      %4548 = vmatmul.mubr.bf16.gmra.mxu0 %v4445
      %v4549 = vpop.f32.mrf.mxu0
      %v4550 = vadd.f32 0.0, %v4549
      %v4551 = vpop.f32.mrf.mxu0
      %v4552 = vpop.f32.mrf.mxu0
      %v4553 = vadd.f32 0.0, %v4552
      %v4554 = vpop.f32.mrf.mxu0
      %4555 = vmatprep.mubr.bf16.mxu0 0
      %4556 = vmatmul.mubr.bf16.gmra.mxu0 %v4448
      %v4557 = vpop.f32.mrf.mxu0
      %v4558 = vadd.f32 0.0, %v4557
      %v4559 = vpop.f32.mrf.mxu0
      %v4560 = vpop.f32.mrf.mxu0
      %v4561 = vadd.f32 0.0, %v4560
      %v4562 = vpop.f32.mrf.mxu0
      %4563 = vmatprep.mubr.bf16.mxu0 0
      %4564 = vmatmul.mubr.bf16.gmra.mxu0 %v4451
      %v4565 = vpop.f32.mrf.mxu0
      %v4566 = vadd.f32 0.0, %v4565
      %v4567 = vpop.f32.mrf.mxu0
      %v4568 = vpop.f32.mrf.mxu0
      %v4569 = vadd.f32 0.0, %v4568
      %v4570 = vpop.f32.mrf.mxu0
      %4571 = vmatprep.mubr.bf16.mxu0 0
      %4572 = vmatmul.mubr.bf16.gmra.mxu0 %v4454
      %v4573 = vpop.f32.mrf.mxu0
      %v4574 = vadd.f32 0.0, %v4573
      %v4575 = vpop.f32.mrf.mxu0
      %v4576 = vpop.f32.mrf.mxu0
      %v4577 = vadd.f32 0.0, %v4576
      %v4578 = vpop.f32.mrf.mxu0
      %4579 = vmatprep.mubr.bf16.mxu0 0
      %4580 = vmatmul.mubr.bf16.gmra.mxu0 %v4457
      %v4581 = vpop.f32.mrf.mxu0
      %v4582 = vadd.f32 0.0, %v4581
      %v4583 = vpop.f32.mrf.mxu0
      %v4584 = vpop.f32.mrf.mxu0
      %v4585 = vadd.f32 0.0, %v4584
      %v4586 = vpop.f32.mrf.mxu0
      %4587 = vmatprep.mubr.bf16.mxu0 0
      %4588 = vmatmul.mubr.bf16.gmra.mxu0 %v4460
      %v4589 = vpop.f32.mrf.mxu0
      %v4590 = vadd.f32 0.0, %v4589
      %v4591 = vpop.f32.mrf.mxu0
      %v4592 = vpop.f32.mrf.mxu0
      %v4593 = vadd.f32 0.0, %v4592
      %v4594 = vpop.f32.mrf.mxu0
      %4595 = vmatprep.mubr.bf16.mxu0 0
      %4596 = vmatmul.mubr.bf16.gmra.mxu0 %v4463
      %v4597 = vpop.f32.mrf.mxu0
      %v4598 = vadd.f32 0.0, %v4597
      %v4599 = vpop.f32.mrf.mxu0
      %v4600 = vpop.f32.mrf.mxu0
      %v4601 = vadd.f32 0.0, %v4600
      %v4602 = vpop.f32.mrf.mxu0
      %4603 = vmatprep.mubr.bf16.mxu0 0
      %4604 = vmatmul.mubr.bf16.gmra.mxu0 %v4466
      %v4605 = vpop.f32.mrf.mxu0
      %v4606 = vadd.f32 0.0, %v4605
      %v4607 = vpop.f32.mrf.mxu0
      %v4608 = vpop.f32.mrf.mxu0
      %v4609 = vadd.f32 0.0, %v4608
      %v4610 = vpop.f32.mrf.mxu0
      %4611 = vmatprep.mubr.bf16.mxu0 0
      %4612 = vmatmul.mubr.bf16.gmra.mxu0 %v4469
      %v4613 = vpop.f32.mrf.mxu0
      %v4614 = vadd.f32 0.0, %v4613
      %v4615 = vpop.f32.mrf.mxu0
      %v4616 = vpop.f32.mrf.mxu0
      %v4617 = vadd.f32 0.0, %v4616
      %v4618 = vpop.f32.mrf.mxu0
      %4619 = vmatprep.mubr.bf16.mxu0 0
      %4620 = vmatmul.mubr.bf16.gmra.mxu0 %v4472
      %v4621 = vpop.f32.mrf.mxu0
      %v4622 = vadd.f32 0.0, %v4621
      %v4623 = vpop.f32.mrf.mxu0
      %v4624 = vpop.f32.mrf.mxu0
      %v4625 = vadd.f32 0.0, %v4624
      %v4626 = vpop.f32.mrf.mxu0
      %4627 = vmatprep.mubr.bf16.mxu0 0
      %4628 = vmatmul.mubr.bf16.gmra.mxu0 %v4475
      %v4629 = vpop.f32.mrf.mxu0
      %v4630 = vadd.f32 0.0, %v4629
      %v4631 = vpop.f32.mrf.mxu0
      %v4632 = vpop.f32.mrf.mxu0
      %v4633 = vadd.f32 0.0, %v4632
      %v4634 = vpop.f32.mrf.mxu0
      %4635 = vmatprep.mubr.bf16.mxu0 0
      %4636 = vmatmul.mubr.bf16.gmra.mxu0 %v4478
      %v4637 = vpop.f32.mrf.mxu0
      %v4638 = vadd.f32 0.0, %v4637
      %v4639 = vpop.f32.mrf.mxu0
      %v4640 = vpop.f32.mrf.mxu0
      %v4641 = vadd.f32 0.0, %v4640
      %v4642 = vpop.f32.mrf.mxu0
      %4643 = vdwg.mxu0
      %v4644 = vadd.f32 %v4286, %v4518
      %v4645 = vadd.f32 %v4287, %v4521
      %v4646 = vadd.f32 %v4288, %v4526
      %v4647 = vadd.f32 %v4289, %v4529
      %v4648 = vadd.f32 %v4290, %v4534
      %v4649 = vadd.f32 %v4291, %v4537
      %v4650 = vadd.f32 %v4292, %v4542
      %v4651 = vadd.f32 %v4293, %v4545
      %v4652 = vadd.f32 %v4294, %v4550
      %v4653 = vadd.f32 %v4295, %v4553
      %v4654 = vadd.f32 %v4296, %v4558
      %v4655 = vadd.f32 %v4297, %v4561
      %v4656 = vadd.f32 %v4298, %v4566
      %v4657 = vadd.f32 %v4299, %v4569
      %v4658 = vadd.f32 %v4300, %v4574
      %v4659 = vadd.f32 %v4301, %v4577
      %v4660 = vadd.f32 %v4302, %v4582
      %v4661 = vadd.f32 %v4303, %v4585
      %v4662 = vadd.f32 %v4304, %v4590
      %v4663 = vadd.f32 %v4305, %v4593
      %v4664 = vadd.f32 %v4306, %v4598
      %v4665 = vadd.f32 %v4307, %v4601
      %v4666 = vadd.f32 %v4308, %v4606
      %v4667 = vadd.f32 %v4309, %v4609
      %v4668 = vadd.f32 %v4310, %v4614
      %v4669 = vadd.f32 %v4311, %v4617
      %v4670 = vadd.f32 %v4312, %v4622
      %v4671 = vadd.f32 %v4313, %v4625
      %v4672 = vadd.f32 %v4314, %v4630
      %v4673 = vadd.f32 %v4315, %v4633
      %v4674 = vadd.f32 %v4316, %v4638
      %v4675 = vadd.f32 %v4317, %v4641
      %v4676 = vld [vmem:[%s753] sm:$0xe]
      %v4677 = vld [vmem:[%s753 + $0x4] sm:$0xf]
      %v4678 = vld [vmem:[%s753 + $0x8] sm:$0x1]
      %v4679 = vld [vmem:[%s753 + $0xc] sm:$0xe]
      %v4680 = vld [vmem:[%s753 + $0x10] sm:$0xf]
      %v4681 = vld [vmem:[%s753 + $0x14] sm:$0x1]
      %v4682 = vld [vmem:[%s753 + $0x18] sm:$0xe]
      %v4683 = vld [vmem:[%s753 + $0x1c] sm:$0xf]
      %v4684 = vld [vmem:[%s753 + $0x20] sm:$0x1]
      %v4685 = vld [vmem:[%s753 + $0x24] sm:$0xe]
      %v4686 = vld [vmem:[%s753 + $0x28] sm:$0xf]
      %v4687 = vld [vmem:[%s753 + $0x2c] sm:$0x1]
      %v4688 = vld [vmem:[%s753 + $0x30] sm:$0xe]
      %v4689 = vld [vmem:[%s753 + $0x34] sm:$0xf]
      %v4690 = vld [vmem:[%s753 + $0x38] sm:$0x1]
      %v4691 = vld [vmem:[%s753 + $0x3c] sm:$0xe]
      %v4692 = vld [vmem:[%s753 + $0x40] sm:$0xf]
      %v4693 = vld [vmem:[%s753 + $0x44] sm:$0x1]
      %v4694 = vld [vmem:[%s753 + $0x48] sm:$0xe]
      %v4695 = vld [vmem:[%s753 + $0x4c] sm:$0xf]
      %v4696 = vld [vmem:[%s753 + $0x50] sm:$0x1]
      %v4697 = vld [vmem:[%s753 + $0x54] sm:$0xe]
      %v4698 = vld [vmem:[%s753 + $0x58] sm:$0xf]
      %v4699 = vld [vmem:[%s753 + $0x5c] sm:$0x1]
      %v4700 = vld [vmem:[%s753 + $0x60] sm:$0xe]
      %v4701 = vld [vmem:[%s753 + $0x64] sm:$0xf]
      %v4702 = vld [vmem:[%s753 + $0x68] sm:$0x1]
      %v4703 = vld [vmem:[%s753 + $0x6c] sm:$0xe]
      %v4704 = vld [vmem:[%s753 + $0x70] sm:$0xf]
      %v4705 = vld [vmem:[%s753 + $0x74] sm:$0x1]
      %v4706 = vld [vmem:[%s753 + $0x78] sm:$0xe]
      %v4707 = vld [vmem:[%s753 + $0x7c] sm:$0xf]
      %v4708 = vld [vmem:[%s753 + $0x80] sm:$0x1]
      %v4709 = vld [vmem:[%s753 + $0x84] sm:$0xe]
      %v4710 = vld [vmem:[%s753 + $0x88] sm:$0xf]
      %v4711 = vld [vmem:[%s753 + $0x8c] sm:$0x1]
      %v4712 = vld [vmem:[%s753 + $0x90] sm:$0xe]
      %v4713 = vld [vmem:[%s753 + $0x94] sm:$0xf]
      %v4714 = vld [vmem:[%s753 + $0x98] sm:$0x1]
      %v4715 = vld [vmem:[%s753 + $0x9c] sm:$0xe]
      %v4716 = vld [vmem:[%s753 + $0xa0] sm:$0xf]
      %v4717 = vld [vmem:[%s753 + $0xa4] sm:$0x1]
      %v4718 = vld [vmem:[%s753 + $0xa8] sm:$0xe]
      %v4719 = vld [vmem:[%s753 + $0xac] sm:$0xf]
      %v4720 = vld [vmem:[%s753 + $0xb0] sm:$0x1]
      %v4721 = vld [vmem:[%s753 + $0xb4] sm:$0xe]
      %v4722 = vld [vmem:[%s753 + $0xb8] sm:$0xf]
      %v4723 = vld [vmem:[%s753 + $0xbc] sm:$0x1]
      %v4772 = vrot.slane %v4676, 5
      %v4773 = vrot.slane %v4772, 4
      %v4774 = vrot.slane %v4677, 5
      %v4775 = vsel %vm1862, %v4773, %v4774
      %v4776 = vrot.slane %v4774, 4
      %v4777 = vrot.slane %v4678, 5
      %v4778 = vsel %vm1862, %v4776, %v4777
      %v4779 = vrot.slane %v4679, 5
      %v4780 = vrot.slane %v4779, 4
      %v4781 = vrot.slane %v4680, 5
      %v4782 = vsel %vm1862, %v4780, %v4781
      %v4783 = vrot.slane %v4781, 4
      %v4784 = vrot.slane %v4681, 5
      %v4785 = vsel %vm1862, %v4783, %v4784
      %v4786 = vrot.slane %v4682, 5
      %v4787 = vrot.slane %v4786, 4
      %v4788 = vrot.slane %v4683, 5
      %v4789 = vsel %vm1862, %v4787, %v4788
      %v4790 = vrot.slane %v4788, 4
      %v4791 = vrot.slane %v4684, 5
      %v4792 = vsel %vm1862, %v4790, %v4791
      %v4793 = vrot.slane %v4685, 5
      %v4794 = vrot.slane %v4793, 4
      %v4795 = vrot.slane %v4686, 5
      %v4796 = vsel %vm1862, %v4794, %v4795
      %v4797 = vrot.slane %v4795, 4
      %v4798 = vrot.slane %v4687, 5
      %v4799 = vsel %vm1862, %v4797, %v4798
      %v4800 = vrot.slane %v4688, 5
      %v4801 = vrot.slane %v4800, 4
      %v4802 = vrot.slane %v4689, 5
      %v4803 = vsel %vm1862, %v4801, %v4802
      %v4804 = vrot.slane %v4802, 4
      %v4805 = vrot.slane %v4690, 5
      %v4806 = vsel %vm1862, %v4804, %v4805
      %v4807 = vrot.slane %v4691, 5
      %v4808 = vrot.slane %v4807, 4
      %v4809 = vrot.slane %v4692, 5
      %v4810 = vsel %vm1862, %v4808, %v4809
      %v4811 = vrot.slane %v4809, 4
      %v4812 = vrot.slane %v4693, 5
      %v4813 = vsel %vm1862, %v4811, %v4812
      %v4814 = vrot.slane %v4694, 5
      %v4815 = vrot.slane %v4814, 4
      %v4816 = vrot.slane %v4695, 5
      %v4817 = vsel %vm1862, %v4815, %v4816
      %v4818 = vrot.slane %v4816, 4
      %v4819 = vrot.slane %v4696, 5
      %v4820 = vsel %vm1862, %v4818, %v4819
      %v4821 = vrot.slane %v4697, 5
      %v4822 = vrot.slane %v4821, 4
      %v4823 = vrot.slane %v4698, 5
      %v4824 = vsel %vm1862, %v4822, %v4823
      %v4825 = vrot.slane %v4823, 4
      %v4826 = vrot.slane %v4699, 5
      %v4827 = vsel %vm1862, %v4825, %v4826
      %v4828 = vrot.slane %v4700, 5
      %v4829 = vrot.slane %v4828, 4
      %v4830 = vrot.slane %v4701, 5
      %v4831 = vsel %vm1862, %v4829, %v4830
      %v4832 = vrot.slane %v4830, 4
      %v4833 = vrot.slane %v4702, 5
      %v4834 = vsel %vm1862, %v4832, %v4833
      %v4835 = vrot.slane %v4703, 5
      %v4836 = vrot.slane %v4835, 4
      %v4837 = vrot.slane %v4704, 5
      %v4838 = vsel %vm1862, %v4836, %v4837
      %v4839 = vrot.slane %v4837, 4
      %v4840 = vrot.slane %v4705, 5
      %v4841 = vsel %vm1862, %v4839, %v4840
      %v4842 = vrot.slane %v4706, 5
      %v4843 = vrot.slane %v4842, 4
      %v4844 = vrot.slane %v4707, 5
      %v4845 = vsel %vm1862, %v4843, %v4844
      %v4846 = vrot.slane %v4844, 4
      %v4847 = vrot.slane %v4708, 5
      %v4848 = vsel %vm1862, %v4846, %v4847
      %v4849 = vrot.slane %v4709, 5
      %v4850 = vrot.slane %v4849, 4
      %v4851 = vrot.slane %v4710, 5
      %v4852 = vsel %vm1862, %v4850, %v4851
      %v4853 = vrot.slane %v4851, 4
      %v4854 = vrot.slane %v4711, 5
      %v4855 = vsel %vm1862, %v4853, %v4854
      %v4856 = vrot.slane %v4712, 5
      %v4857 = vrot.slane %v4856, 4
      %v4858 = vrot.slane %v4713, 5
      %v4859 = vsel %vm1862, %v4857, %v4858
      %v4860 = vrot.slane %v4858, 4
      %v4861 = vrot.slane %v4714, 5
      %v4862 = vsel %vm1862, %v4860, %v4861
      %v4863 = vrot.slane %v4715, 5
      %v4864 = vrot.slane %v4863, 4
      %v4865 = vrot.slane %v4716, 5
      %v4866 = vsel %vm1862, %v4864, %v4865
      %v4867 = vrot.slane %v4865, 4
      %v4868 = vrot.slane %v4717, 5
      %v4869 = vsel %vm1862, %v4867, %v4868
      %v4870 = vrot.slane %v4718, 5
      %v4871 = vrot.slane %v4870, 4
      %v4872 = vrot.slane %v4719, 5
      %v4873 = vsel %vm1862, %v4871, %v4872
      %v4874 = vrot.slane %v4872, 4
      %v4875 = vrot.slane %v4720, 5
      %v4876 = vsel %vm1862, %v4874, %v4875
      %v4877 = vrot.slane %v4721, 5
      %v4878 = vrot.slane %v4877, 4
      %v4879 = vrot.slane %v4722, 5
      %v4880 = vsel %vm1862, %v4878, %v4879
      %v4881 = vrot.slane %v4879, 4
      %v4882 = vrot.slane %v4723, 5
      %v4883 = vsel %vm1862, %v4881, %v4882
      %s4884 = scalar_lea.vmem %s2, 14
      %v4885 = vld [vmem:[%s4884] sm:$0x3]
      %v4886 = vunpack.c.l.b16 %v4775
      %v4887 = vunpack.c.l.b16 %v4778
      %v4888 = vunpack.c.l.b16 %v4782
      %v4889 = vunpack.c.l.b16 %v4785
      %v4890 = vunpack.c.l.b16 %v4789
      %v4891 = vunpack.c.l.b16 %v4792
      %v4892 = vunpack.c.l.b16 %v4796
      %v4893 = vunpack.c.l.b16 %v4799
      %v4894 = vunpack.c.l.b16 %v4803
      %v4895 = vunpack.c.l.b16 %v4806
      %v4896 = vunpack.c.l.b16 %v4810
      %v4897 = vunpack.c.l.b16 %v4813
      %v4898 = vunpack.c.l.b16 %v4817
      %v4899 = vunpack.c.l.b16 %v4820
      %v4900 = vunpack.c.l.b16 %v4824
      %v4901 = vunpack.c.l.b16 %v4827
      %v4902 = vunpack.c.l.b16 %v4831
      %v4903 = vunpack.c.l.b16 %v4834
      %v4904 = vunpack.c.l.b16 %v4838
      %v4905 = vunpack.c.l.b16 %v4841
      %v4906 = vunpack.c.l.b16 %v4845
      %v4907 = vunpack.c.l.b16 %v4848
      %v4908 = vunpack.c.l.b16 %v4852
      %v4909 = vunpack.c.l.b16 %v4855
      %v4910 = vunpack.c.l.b16 %v4859
      %v4911 = vunpack.c.l.b16 %v4862
      %v4912 = vunpack.c.l.b16 %v4866
      %v4913 = vunpack.c.l.b16 %v4869
      %v4914 = vunpack.c.l.b16 %v4873
      %v4915 = vunpack.c.l.b16 %v4876
      %v4916 = vunpack.c.l.b16 %v4880
      %v4917 = vunpack.c.l.b16 %v4883
      %v4918 = vpack.c.b16 %v4887, %v4886
      %v4919 = vpack.c.b16 %v4889, %v4888
      %v4920 = vpack.c.b16 %v4891, %v4890
      %v4921 = vpack.c.b16 %v4893, %v4892
      %v4922 = vpack.c.b16 %v4895, %v4894
      %v4923 = vpack.c.b16 %v4897, %v4896
      %v4924 = vpack.c.b16 %v4899, %v4898
      %v4925 = vpack.c.b16 %v4901, %v4900
      %v4926 = vpack.c.b16 %v4903, %v4902
      %v4927 = vpack.c.b16 %v4905, %v4904
      %v4928 = vpack.c.b16 %v4907, %v4906
      %v4929 = vpack.c.b16 %v4909, %v4908
      %v4930 = vpack.c.b16 %v4911, %v4910
      %v4931 = vpack.c.b16 %v4913, %v4912
      %v4932 = vpack.c.b16 %v4915, %v4914
      %v4933 = vpack.c.b16 %v4917, %v4916
      %v4935 = vsel %vm2025, %v4918, 0
      %v4938 = vsel %vm2025, %v4919, 0
      %v4941 = vsel %vm2025, %v4920, 0
      %v4944 = vsel %vm2025, %v4921, 0
      %v4947 = vsel %vm2025, %v4922, 0
      %v4950 = vsel %vm2025, %v4923, 0
      %v4953 = vsel %vm2025, %v4924, 0
      %v4956 = vsel %vm2025, %v4925, 0
      %v4959 = vsel %vm2025, %v4926, 0
      %v4962 = vsel %vm2025, %v4927, 0
      %v4965 = vsel %vm2025, %v4928, 0
      %v4968 = vsel %vm2025, %v4929, 0
      %v4971 = vsel %vm2025, %v4930, 0
      %v4974 = vsel %vm2025, %v4931, 0
      %v4977 = vsel %vm2025, %v4932, 0
      %v4980 = vsel %vm2025, %v4933, 0
      %v4983 = vsel %vm2074, %v4885, 0
      %4985 = vmatprep.subr.bf16.mxu0 0
      %4986 = vmatpush1.bf16.msra.mxu0 0
      %4987 = vmatprep.subr.bf16.mxu0 0
      %4988 = vmatpush1.bf16.msra.mxu0 0
      %4989 = vmatprep.subr.bf16.mxu0 0
      %4990 = vmatpush1.bf16.msra.mxu0 0
      %4991 = vmatprep.subr.bf16.mxu0 0
      %4992 = vmatpush1.bf16.msra.mxu0 0
      %4993 = vmatprep.subr.bf16.mxu0 0
      %4994 = vmatpush1.bf16.msra.mxu0 0
      %4995 = vmatprep.subr.bf16.mxu0 0
      %4996 = vmatpush1.bf16.msra.mxu0 0
      %4997 = vmatprep.subr.bf16.mxu0 0
      %4998 = vmatpush1.bf16.msra.mxu0 0
      %4999 = vmatprep.subr.bf16.mxu0 0
      %5000 = vmatpush1.bf16.msra.mxu0 %v4983
      %5001 = vmatprep.subr.bf16.mxu0 0
      %5002 = vmatpush2.bf16.msra.mxu0 0
      %5003 = vmatprep.subr.bf16.mxu0 0
      %5004 = vmatpush2.bf16.msra.mxu0 0
      %5005 = vmatprep.subr.bf16.mxu0 0
      %5006 = vmatpush2.bf16.msra.mxu0 0
      %5007 = vmatprep.subr.bf16.mxu0 0
      %5008 = vmatpush2.bf16.msra.mxu0 0
      %5009 = vmatprep.subr.bf16.mxu0 0
      %5010 = vmatpush2.bf16.msra.mxu0 0
      %5011 = vmatprep.subr.bf16.mxu0 0
      %5012 = vmatpush2.bf16.msra.mxu0 0
      %5013 = vmatprep.subr.bf16.mxu0 0
      %5014 = vmatpush2.bf16.msra.mxu0 0
      %5015 = vmatprep.subr.bf16.mxu0 0
      %5016 = vmatpush2.bf16.msra.mxu0 0
      %5017 = vmatprep.mubr.bf16.mxu0 0
      %5018 = vmatmul.mubr.bf16.gmra.mxu0 %v4935
      %v5019 = vpop.f32.mrf.mxu0
      %v5020 = vadd.f32 0.0, %v5019
      %v5021 = vpop.f32.mrf.mxu0
      %v5022 = vpop.f32.mrf.mxu0
      %v5023 = vadd.f32 0.0, %v5022
      %v5024 = vpop.f32.mrf.mxu0
      %5025 = vmatprep.mubr.bf16.mxu0 0
      %5026 = vmatmul.mubr.bf16.gmra.mxu0 %v4938
      %v5027 = vpop.f32.mrf.mxu0
      %v5028 = vadd.f32 0.0, %v5027
      %v5029 = vpop.f32.mrf.mxu0
      %v5030 = vpop.f32.mrf.mxu0
      %v5031 = vadd.f32 0.0, %v5030
      %v5032 = vpop.f32.mrf.mxu0
      %5033 = vmatprep.mubr.bf16.mxu0 0
      %5034 = vmatmul.mubr.bf16.gmra.mxu0 %v4941
      %v5035 = vpop.f32.mrf.mxu0
      %v5036 = vadd.f32 0.0, %v5035
      %v5037 = vpop.f32.mrf.mxu0
      %v5038 = vpop.f32.mrf.mxu0
      %v5039 = vadd.f32 0.0, %v5038
      %v5040 = vpop.f32.mrf.mxu0
      %5041 = vmatprep.mubr.bf16.mxu0 0
      %5042 = vmatmul.mubr.bf16.gmra.mxu0 %v4944
      %v5043 = vpop.f32.mrf.mxu0
      %v5044 = vadd.f32 0.0, %v5043
      %v5045 = vpop.f32.mrf.mxu0
      %v5046 = vpop.f32.mrf.mxu0
      %v5047 = vadd.f32 0.0, %v5046
      %v5048 = vpop.f32.mrf.mxu0
      %5049 = vmatprep.mubr.bf16.mxu0 0
      %5050 = vmatmul.mubr.bf16.gmra.mxu0 %v4947
      %v5051 = vpop.f32.mrf.mxu0
      %v5052 = vadd.f32 0.0, %v5051
      %v5053 = vpop.f32.mrf.mxu0
      %v5054 = vpop.f32.mrf.mxu0
      %v5055 = vadd.f32 0.0, %v5054
      %v5056 = vpop.f32.mrf.mxu0
      %5057 = vmatprep.mubr.bf16.mxu0 0
      %5058 = vmatmul.mubr.bf16.gmra.mxu0 %v4950
      %v5059 = vpop.f32.mrf.mxu0
      %v5060 = vadd.f32 0.0, %v5059
      %v5061 = vpop.f32.mrf.mxu0
      %v5062 = vpop.f32.mrf.mxu0
      %v5063 = vadd.f32 0.0, %v5062
      %v5064 = vpop.f32.mrf.mxu0
      %5065 = vmatprep.mubr.bf16.mxu0 0
      %5066 = vmatmul.mubr.bf16.gmra.mxu0 %v4953
      %v5067 = vpop.f32.mrf.mxu0
      %v5068 = vadd.f32 0.0, %v5067
      %v5069 = vpop.f32.mrf.mxu0
      %v5070 = vpop.f32.mrf.mxu0
      %v5071 = vadd.f32 0.0, %v5070
      %v5072 = vpop.f32.mrf.mxu0
      %5073 = vmatprep.mubr.bf16.mxu0 0
      %5074 = vmatmul.mubr.bf16.gmra.mxu0 %v4956
      %v5075 = vpop.f32.mrf.mxu0
      %v5076 = vadd.f32 0.0, %v5075
      %v5077 = vpop.f32.mrf.mxu0
      %v5078 = vpop.f32.mrf.mxu0
      %v5079 = vadd.f32 0.0, %v5078
      %v5080 = vpop.f32.mrf.mxu0
      %5081 = vmatprep.mubr.bf16.mxu0 0
      %5082 = vmatmul.mubr.bf16.gmra.mxu0 %v4959
      %v5083 = vpop.f32.mrf.mxu0
      %v5084 = vadd.f32 0.0, %v5083
      %v5085 = vpop.f32.mrf.mxu0
      %v5086 = vpop.f32.mrf.mxu0
      %v5087 = vadd.f32 0.0, %v5086
      %v5088 = vpop.f32.mrf.mxu0
      %5089 = vmatprep.mubr.bf16.mxu0 0
      %5090 = vmatmul.mubr.bf16.gmra.mxu0 %v4962
      %v5091 = vpop.f32.mrf.mxu0
      %v5092 = vadd.f32 0.0, %v5091
      %v5093 = vpop.f32.mrf.mxu0
      %v5094 = vpop.f32.mrf.mxu0
      %v5095 = vadd.f32 0.0, %v5094
      %v5096 = vpop.f32.mrf.mxu0
      %5097 = vmatprep.mubr.bf16.mxu0 0
      %5098 = vmatmul.mubr.bf16.gmra.mxu0 %v4965
      %v5099 = vpop.f32.mrf.mxu0
      %v5100 = vadd.f32 0.0, %v5099
      %v5101 = vpop.f32.mrf.mxu0
      %v5102 = vpop.f32.mrf.mxu0
      %v5103 = vadd.f32 0.0, %v5102
      %v5104 = vpop.f32.mrf.mxu0
      %5105 = vmatprep.mubr.bf16.mxu0 0
      %5106 = vmatmul.mubr.bf16.gmra.mxu0 %v4968
      %v5107 = vpop.f32.mrf.mxu0
      %v5108 = vadd.f32 0.0, %v5107
      %v5109 = vpop.f32.mrf.mxu0
      %v5110 = vpop.f32.mrf.mxu0
      %v5111 = vadd.f32 0.0, %v5110
      %v5112 = vpop.f32.mrf.mxu0
      %5113 = vmatprep.mubr.bf16.mxu0 0
      %5114 = vmatmul.mubr.bf16.gmra.mxu0 %v4971
      %v5115 = vpop.f32.mrf.mxu0
      %v5116 = vadd.f32 0.0, %v5115
      %v5117 = vpop.f32.mrf.mxu0
      %v5118 = vpop.f32.mrf.mxu0
      %v5119 = vadd.f32 0.0, %v5118
      %v5120 = vpop.f32.mrf.mxu0
      %5121 = vmatprep.mubr.bf16.mxu0 0
      %5122 = vmatmul.mubr.bf16.gmra.mxu0 %v4974
      %v5123 = vpop.f32.mrf.mxu0
      %v5124 = vadd.f32 0.0, %v5123
      %v5125 = vpop.f32.mrf.mxu0
      %v5126 = vpop.f32.mrf.mxu0
      %v5127 = vadd.f32 0.0, %v5126
      %v5128 = vpop.f32.mrf.mxu0
      %5129 = vmatprep.mubr.bf16.mxu0 0
      %5130 = vmatmul.mubr.bf16.gmra.mxu0 %v4977
      %v5131 = vpop.f32.mrf.mxu0
      %v5132 = vadd.f32 0.0, %v5131
      %v5133 = vpop.f32.mrf.mxu0
      %v5134 = vpop.f32.mrf.mxu0
      %v5135 = vadd.f32 0.0, %v5134
      %v5136 = vpop.f32.mrf.mxu0
      %5137 = vmatprep.mubr.bf16.mxu0 0
      %5138 = vmatmul.mubr.bf16.gmra.mxu0 %v4980
      %v5139 = vpop.f32.mrf.mxu0
      %v5140 = vadd.f32 0.0, %v5139
      %v5141 = vpop.f32.mrf.mxu0
      %v5142 = vpop.f32.mrf.mxu0
      %v5143 = vadd.f32 0.0, %v5142
      %v5144 = vpop.f32.mrf.mxu0
      %5145 = vdwg.mxu0
      %v5146 = vadd.f32 %v4644, %v5020
      %v5147 = vadd.f32 %v4645, %v5023
      %v5148 = vadd.f32 %v4646, %v5028
      %v5149 = vadd.f32 %v4647, %v5031
      %v5150 = vadd.f32 %v4648, %v5036
      %v5151 = vadd.f32 %v4649, %v5039
      %v5152 = vadd.f32 %v4650, %v5044
      %v5153 = vadd.f32 %v4651, %v5047
      %v5154 = vadd.f32 %v4652, %v5052
      %v5155 = vadd.f32 %v4653, %v5055
      %v5156 = vadd.f32 %v4654, %v5060
      %v5157 = vadd.f32 %v4655, %v5063
      %v5158 = vadd.f32 %v4656, %v5068
      %v5159 = vadd.f32 %v4657, %v5071
      %v5160 = vadd.f32 %v4658, %v5076
      %v5161 = vadd.f32 %v4659, %v5079
      %v5162 = vadd.f32 %v4660, %v5084
      %v5163 = vadd.f32 %v4661, %v5087
      %v5164 = vadd.f32 %v4662, %v5092
      %v5165 = vadd.f32 %v4663, %v5095
      %v5166 = vadd.f32 %v4664, %v5100
      %v5167 = vadd.f32 %v4665, %v5103
      %v5168 = vadd.f32 %v4666, %v5108
      %v5169 = vadd.f32 %v4667, %v5111
      %v5170 = vadd.f32 %v4668, %v5116
      %v5171 = vadd.f32 %v4669, %v5119
      %v5172 = vadd.f32 %v4670, %v5124
      %v5173 = vadd.f32 %v4671, %v5127
      %v5174 = vadd.f32 %v4672, %v5132
      %v5175 = vadd.f32 %v4673, %v5135
      %v5176 = vadd.f32 %v4674, %v5140
      %v5177 = vadd.f32 %v4675, %v5143
      %v5178 = vld [vmem:[%s753] sm:$0xc]
      %v5179 = vld [vmem:[%s753 + $0x8] sm:$0x3]
      %v5180 = vld [vmem:[%s753 + $0xc] sm:$0xc]
      %v5181 = vld [vmem:[%s753 + $0x14] sm:$0x3]
      %v5182 = vld [vmem:[%s753 + $0x18] sm:$0xc]
      %v5183 = vld [vmem:[%s753 + $0x20] sm:$0x3]
      %v5184 = vld [vmem:[%s753 + $0x24] sm:$0xc]
      %v5185 = vld [vmem:[%s753 + $0x2c] sm:$0x3]
      %v5186 = vld [vmem:[%s753 + $0x30] sm:$0xc]
      %v5187 = vld [vmem:[%s753 + $0x38] sm:$0x3]
      %v5188 = vld [vmem:[%s753 + $0x3c] sm:$0xc]
      %v5189 = vld [vmem:[%s753 + $0x44] sm:$0x3]
      %v5190 = vld [vmem:[%s753 + $0x48] sm:$0xc]
      %v5191 = vld [vmem:[%s753 + $0x50] sm:$0x3]
      %v5192 = vld [vmem:[%s753 + $0x54] sm:$0xc]
      %v5193 = vld [vmem:[%s753 + $0x5c] sm:$0x3]
      %v5194 = vld [vmem:[%s753 + $0x60] sm:$0xc]
      %v5195 = vld [vmem:[%s753 + $0x68] sm:$0x3]
      %v5196 = vld [vmem:[%s753 + $0x6c] sm:$0xc]
      %v5197 = vld [vmem:[%s753 + $0x74] sm:$0x3]
      %v5198 = vld [vmem:[%s753 + $0x78] sm:$0xc]
      %v5199 = vld [vmem:[%s753 + $0x80] sm:$0x3]
      %v5200 = vld [vmem:[%s753 + $0x84] sm:$0xc]
      %v5201 = vld [vmem:[%s753 + $0x8c] sm:$0x3]
      %v5202 = vld [vmem:[%s753 + $0x90] sm:$0xc]
      %v5203 = vld [vmem:[%s753 + $0x98] sm:$0x3]
      %v5204 = vld [vmem:[%s753 + $0x9c] sm:$0xc]
      %v5205 = vld [vmem:[%s753 + $0xa4] sm:$0x3]
      %v5206 = vld [vmem:[%s753 + $0xa8] sm:$0xc]
      %v5207 = vld [vmem:[%s753 + $0xb0] sm:$0x3]
      %v5208 = vld [vmem:[%s753 + $0xb4] sm:$0xc]
      %v5209 = vld [vmem:[%s753 + $0xbc] sm:$0x3]
      %v5242 = vrot.slane %v5178, 6
      %v5243 = vrot.slane %v5242, 4
      %v5244 = vrot.slane %v4677, 6
      %v5245 = vsel %vm2581, %v5243, %v5244
      %v5246 = vrot.slane %v5244, 4
      %v5247 = vrot.slane %v5179, 6
      %v5248 = vsel %vm2581, %v5246, %v5247
      %v5249 = vrot.slane %v5180, 6
      %v5250 = vrot.slane %v5249, 4
      %v5251 = vrot.slane %v4680, 6
      %v5252 = vsel %vm2581, %v5250, %v5251
      %v5253 = vrot.slane %v5251, 4
      %v5254 = vrot.slane %v5181, 6
      %v5255 = vsel %vm2581, %v5253, %v5254
      %v5256 = vrot.slane %v5182, 6
      %v5257 = vrot.slane %v5256, 4
      %v5258 = vrot.slane %v4683, 6
      %v5259 = vsel %vm2581, %v5257, %v5258
      %v5260 = vrot.slane %v5258, 4
      %v5261 = vrot.slane %v5183, 6
      %v5262 = vsel %vm2581, %v5260, %v5261
      %v5263 = vrot.slane %v5184, 6
      %v5264 = vrot.slane %v5263, 4
      %v5265 = vrot.slane %v4686, 6
      %v5266 = vsel %vm2581, %v5264, %v5265
      %v5267 = vrot.slane %v5265, 4
      %v5268 = vrot.slane %v5185, 6
      %v5269 = vsel %vm2581, %v5267, %v5268
      %v5270 = vrot.slane %v5186, 6
      %v5271 = vrot.slane %v5270, 4
      %v5272 = vrot.slane %v4689, 6
      %v5273 = vsel %vm2581, %v5271, %v5272
      %v5274 = vrot.slane %v5272, 4
      %v5275 = vrot.slane %v5187, 6
      %v5276 = vsel %vm2581, %v5274, %v5275
      %v5277 = vrot.slane %v5188, 6
      %v5278 = vrot.slane %v5277, 4
      %v5279 = vrot.slane %v4692, 6
      %v5280 = vsel %vm2581, %v5278, %v5279
      %v5281 = vrot.slane %v5279, 4
      %v5282 = vrot.slane %v5189, 6
      %v5283 = vsel %vm2581, %v5281, %v5282
      %v5284 = vrot.slane %v5190, 6
      %v5285 = vrot.slane %v5284, 4
      %v5286 = vrot.slane %v4695, 6
      %v5287 = vsel %vm2581, %v5285, %v5286
      %v5288 = vrot.slane %v5286, 4
      %v5289 = vrot.slane %v5191, 6
      %v5290 = vsel %vm2581, %v5288, %v5289
      %v5291 = vrot.slane %v5192, 6
      %v5292 = vrot.slane %v5291, 4
      %v5293 = vrot.slane %v4698, 6
      %v5294 = vsel %vm2581, %v5292, %v5293
      %v5295 = vrot.slane %v5293, 4
      %v5296 = vrot.slane %v5193, 6
      %v5297 = vsel %vm2581, %v5295, %v5296
      %v5298 = vrot.slane %v5194, 6
      %v5299 = vrot.slane %v5298, 4
      %v5300 = vrot.slane %v4701, 6
      %v5301 = vsel %vm2581, %v5299, %v5300
      %v5302 = vrot.slane %v5300, 4
      %v5303 = vrot.slane %v5195, 6
      %v5304 = vsel %vm2581, %v5302, %v5303
      %v5305 = vrot.slane %v5196, 6
      %v5306 = vrot.slane %v5305, 4
      %v5307 = vrot.slane %v4704, 6
      %v5308 = vsel %vm2581, %v5306, %v5307
      %v5309 = vrot.slane %v5307, 4
      %v5310 = vrot.slane %v5197, 6
      %v5311 = vsel %vm2581, %v5309, %v5310
      %v5312 = vrot.slane %v5198, 6
      %v5313 = vrot.slane %v5312, 4
      %v5314 = vrot.slane %v4707, 6
      %v5315 = vsel %vm2581, %v5313, %v5314
      %v5316 = vrot.slane %v5314, 4
      %v5317 = vrot.slane %v5199, 6
      %v5318 = vsel %vm2581, %v5316, %v5317
      %v5319 = vrot.slane %v5200, 6
      %v5320 = vrot.slane %v5319, 4
      %v5321 = vrot.slane %v4710, 6
      %v5322 = vsel %vm2581, %v5320, %v5321
      %v5323 = vrot.slane %v5321, 4
      %v5324 = vrot.slane %v5201, 6
      %v5325 = vsel %vm2581, %v5323, %v5324
      %v5326 = vrot.slane %v5202, 6
      %v5327 = vrot.slane %v5326, 4
      %v5328 = vrot.slane %v4713, 6
      %v5329 = vsel %vm2581, %v5327, %v5328
      %v5330 = vrot.slane %v5328, 4
      %v5331 = vrot.slane %v5203, 6
      %v5332 = vsel %vm2581, %v5330, %v5331
      %v5333 = vrot.slane %v5204, 6
      %v5334 = vrot.slane %v5333, 4
      %v5335 = vrot.slane %v4716, 6
      %v5336 = vsel %vm2581, %v5334, %v5335
      %v5337 = vrot.slane %v5335, 4
      %v5338 = vrot.slane %v5205, 6
      %v5339 = vsel %vm2581, %v5337, %v5338
      %v5340 = vrot.slane %v5206, 6
      %v5341 = vrot.slane %v5340, 4
      %v5342 = vrot.slane %v4719, 6
      %v5343 = vsel %vm2581, %v5341, %v5342
      %v5344 = vrot.slane %v5342, 4
      %v5345 = vrot.slane %v5207, 6
      %v5346 = vsel %vm2581, %v5344, %v5345
      %v5347 = vrot.slane %v5208, 6
      %v5348 = vrot.slane %v5347, 4
      %v5349 = vrot.slane %v4722, 6
      %v5350 = vsel %vm2581, %v5348, %v5349
      %v5351 = vrot.slane %v5349, 4
      %v5352 = vrot.slane %v5209, 6
      %v5353 = vsel %vm2581, %v5351, %v5352
      %s5354 = scalar_lea.vmem %s2, 16
      %v5355 = vld [vmem:[%s5354] sm:$0x3]
      %v5356 = vunpack.c.l.b16 %v5245
      %v5357 = vunpack.c.l.b16 %v5248
      %v5358 = vunpack.c.l.b16 %v5252
      %v5359 = vunpack.c.l.b16 %v5255
      %v5360 = vunpack.c.l.b16 %v5259
      %v5361 = vunpack.c.l.b16 %v5262
      %v5362 = vunpack.c.l.b16 %v5266
      %v5363 = vunpack.c.l.b16 %v5269
      %v5364 = vunpack.c.l.b16 %v5273
      %v5365 = vunpack.c.l.b16 %v5276
      %v5366 = vunpack.c.l.b16 %v5280
      %v5367 = vunpack.c.l.b16 %v5283
      %v5368 = vunpack.c.l.b16 %v5287
      %v5369 = vunpack.c.l.b16 %v5290
      %v5370 = vunpack.c.l.b16 %v5294
      %v5371 = vunpack.c.l.b16 %v5297
      %v5372 = vunpack.c.l.b16 %v5301
      %v5373 = vunpack.c.l.b16 %v5304
      %v5374 = vunpack.c.l.b16 %v5308
      %v5375 = vunpack.c.l.b16 %v5311
      %v5376 = vunpack.c.l.b16 %v5315
      %v5377 = vunpack.c.l.b16 %v5318
      %v5378 = vunpack.c.l.b16 %v5322
      %v5379 = vunpack.c.l.b16 %v5325
      %v5380 = vunpack.c.l.b16 %v5329
      %v5381 = vunpack.c.l.b16 %v5332
      %v5382 = vunpack.c.l.b16 %v5336
      %v5383 = vunpack.c.l.b16 %v5339
      %v5384 = vunpack.c.l.b16 %v5343
      %v5385 = vunpack.c.l.b16 %v5346
      %v5386 = vunpack.c.l.b16 %v5350
      %v5387 = vunpack.c.l.b16 %v5353
      %v5388 = vpack.c.b16 %v5357, %v5356
      %v5389 = vpack.c.b16 %v5359, %v5358
      %v5390 = vpack.c.b16 %v5361, %v5360
      %v5391 = vpack.c.b16 %v5363, %v5362
      %v5392 = vpack.c.b16 %v5365, %v5364
      %v5393 = vpack.c.b16 %v5367, %v5366
      %v5394 = vpack.c.b16 %v5369, %v5368
      %v5395 = vpack.c.b16 %v5371, %v5370
      %v5396 = vpack.c.b16 %v5373, %v5372
      %v5397 = vpack.c.b16 %v5375, %v5374
      %v5398 = vpack.c.b16 %v5377, %v5376
      %v5399 = vpack.c.b16 %v5379, %v5378
      %v5400 = vpack.c.b16 %v5381, %v5380
      %v5401 = vpack.c.b16 %v5383, %v5382
      %v5402 = vpack.c.b16 %v5385, %v5384
      %v5403 = vpack.c.b16 %v5387, %v5386
      %v5405 = vsel %vm2025, %v5388, 0
      %v5408 = vsel %vm2025, %v5389, 0
      %v5411 = vsel %vm2025, %v5390, 0
      %v5414 = vsel %vm2025, %v5391, 0
      %v5417 = vsel %vm2025, %v5392, 0
      %v5420 = vsel %vm2025, %v5393, 0
      %v5423 = vsel %vm2025, %v5394, 0
      %v5426 = vsel %vm2025, %v5395, 0
      %v5429 = vsel %vm2025, %v5396, 0
      %v5432 = vsel %vm2025, %v5397, 0
      %v5435 = vsel %vm2025, %v5398, 0
      %v5438 = vsel %vm2025, %v5399, 0
      %v5441 = vsel %vm2025, %v5400, 0
      %v5444 = vsel %vm2025, %v5401, 0
      %v5447 = vsel %vm2025, %v5402, 0
      %v5450 = vsel %vm2025, %v5403, 0
      %v5453 = vsel %vm2074, %v5355, 0
      %5455 = vmatprep.subr.bf16.mxu0 0
      %5456 = vmatpush1.bf16.msra.mxu0 0
      %5457 = vmatprep.subr.bf16.mxu0 0
      %5458 = vmatpush1.bf16.msra.mxu0 0
      %5459 = vmatprep.subr.bf16.mxu0 0
      %5460 = vmatpush1.bf16.msra.mxu0 0
      %5461 = vmatprep.subr.bf16.mxu0 0
      %5462 = vmatpush1.bf16.msra.mxu0 0
      %5463 = vmatprep.subr.bf16.mxu0 0
      %5464 = vmatpush1.bf16.msra.mxu0 0
      %5465 = vmatprep.subr.bf16.mxu0 0
      %5466 = vmatpush1.bf16.msra.mxu0 0
      %5467 = vmatprep.subr.bf16.mxu0 0
      %5468 = vmatpush1.bf16.msra.mxu0 0
      %5469 = vmatprep.subr.bf16.mxu0 0
      %5470 = vmatpush1.bf16.msra.mxu0 %v5453
      %5471 = vmatprep.subr.bf16.mxu0 0
      %5472 = vmatpush2.bf16.msra.mxu0 0
      %5473 = vmatprep.subr.bf16.mxu0 0
      %5474 = vmatpush2.bf16.msra.mxu0 0
      %5475 = vmatprep.subr.bf16.mxu0 0
      %5476 = vmatpush2.bf16.msra.mxu0 0
      %5477 = vmatprep.subr.bf16.mxu0 0
      %5478 = vmatpush2.bf16.msra.mxu0 0
      %5479 = vmatprep.subr.bf16.mxu0 0
      %5480 = vmatpush2.bf16.msra.mxu0 0
      %5481 = vmatprep.subr.bf16.mxu0 0
      %5482 = vmatpush2.bf16.msra.mxu0 0
      %5483 = vmatprep.subr.bf16.mxu0 0
      %5484 = vmatpush2.bf16.msra.mxu0 0
      %5485 = vmatprep.subr.bf16.mxu0 0
      %5486 = vmatpush2.bf16.msra.mxu0 0
      %5487 = vmatprep.mubr.bf16.mxu0 0
      %5488 = vmatmul.mubr.bf16.gmra.mxu0 %v5405
      %v5489 = vpop.f32.mrf.mxu0
      %v5490 = vadd.f32 0.0, %v5489
      %v5491 = vpop.f32.mrf.mxu0
      %v5492 = vpop.f32.mrf.mxu0
      %v5493 = vadd.f32 0.0, %v5492
      %v5494 = vpop.f32.mrf.mxu0
      %5495 = vmatprep.mubr.bf16.mxu0 0
      %5496 = vmatmul.mubr.bf16.gmra.mxu0 %v5408
      %v5497 = vpop.f32.mrf.mxu0
      %v5498 = vadd.f32 0.0, %v5497
      %v5499 = vpop.f32.mrf.mxu0
      %v5500 = vpop.f32.mrf.mxu0
      %v5501 = vadd.f32 0.0, %v5500
      %v5502 = vpop.f32.mrf.mxu0
      %5503 = vmatprep.mubr.bf16.mxu0 0
      %5504 = vmatmul.mubr.bf16.gmra.mxu0 %v5411
      %v5505 = vpop.f32.mrf.mxu0
      %v5506 = vadd.f32 0.0, %v5505
      %v5507 = vpop.f32.mrf.mxu0
      %v5508 = vpop.f32.mrf.mxu0
      %v5509 = vadd.f32 0.0, %v5508
      %v5510 = vpop.f32.mrf.mxu0
      %5511 = vmatprep.mubr.bf16.mxu0 0
      %5512 = vmatmul.mubr.bf16.gmra.mxu0 %v5414
      %v5513 = vpop.f32.mrf.mxu0
      %v5514 = vadd.f32 0.0, %v5513
      %v5515 = vpop.f32.mrf.mxu0
      %v5516 = vpop.f32.mrf.mxu0
      %v5517 = vadd.f32 0.0, %v5516
      %v5518 = vpop.f32.mrf.mxu0
      %5519 = vmatprep.mubr.bf16.mxu0 0
      %5520 = vmatmul.mubr.bf16.gmra.mxu0 %v5417
      %v5521 = vpop.f32.mrf.mxu0
      %v5522 = vadd.f32 0.0, %v5521
      %v5523 = vpop.f32.mrf.mxu0
      %v5524 = vpop.f32.mrf.mxu0
      %v5525 = vadd.f32 0.0, %v5524
      %v5526 = vpop.f32.mrf.mxu0
      %5527 = vmatprep.mubr.bf16.mxu0 0
      %5528 = vmatmul.mubr.bf16.gmra.mxu0 %v5420
      %v5529 = vpop.f32.mrf.mxu0
      %v5530 = vadd.f32 0.0, %v5529
      %v5531 = vpop.f32.mrf.mxu0
      %v5532 = vpop.f32.mrf.mxu0
      %v5533 = vadd.f32 0.0, %v5532
      %v5534 = vpop.f32.mrf.mxu0
      %5535 = vmatprep.mubr.bf16.mxu0 0
      %5536 = vmatmul.mubr.bf16.gmra.mxu0 %v5423
      %v5537 = vpop.f32.mrf.mxu0
      %v5538 = vadd.f32 0.0, %v5537
      %v5539 = vpop.f32.mrf.mxu0
      %v5540 = vpop.f32.mrf.mxu0
      %v5541 = vadd.f32 0.0, %v5540
      %v5542 = vpop.f32.mrf.mxu0
      %5543 = vmatprep.mubr.bf16.mxu0 0
      %5544 = vmatmul.mubr.bf16.gmra.mxu0 %v5426
      %v5545 = vpop.f32.mrf.mxu0
      %v5546 = vadd.f32 0.0, %v5545
      %v5547 = vpop.f32.mrf.mxu0
      %v5548 = vpop.f32.mrf.mxu0
      %v5549 = vadd.f32 0.0, %v5548
      %v5550 = vpop.f32.mrf.mxu0
      %5551 = vmatprep.mubr.bf16.mxu0 0
      %5552 = vmatmul.mubr.bf16.gmra.mxu0 %v5429
      %v5553 = vpop.f32.mrf.mxu0
      %v5554 = vadd.f32 0.0, %v5553
      %v5555 = vpop.f32.mrf.mxu0
      %v5556 = vpop.f32.mrf.mxu0
      %v5557 = vadd.f32 0.0, %v5556
      %v5558 = vpop.f32.mrf.mxu0
      %5559 = vmatprep.mubr.bf16.mxu0 0
      %5560 = vmatmul.mubr.bf16.gmra.mxu0 %v5432
      %v5561 = vpop.f32.mrf.mxu0
      %v5562 = vadd.f32 0.0, %v5561
      %v5563 = vpop.f32.mrf.mxu0
      %v5564 = vpop.f32.mrf.mxu0
      %v5565 = vadd.f32 0.0, %v5564
      %v5566 = vpop.f32.mrf.mxu0
      %5567 = vmatprep.mubr.bf16.mxu0 0
      %5568 = vmatmul.mubr.bf16.gmra.mxu0 %v5435
      %v5569 = vpop.f32.mrf.mxu0
      %v5570 = vadd.f32 0.0, %v5569
      %v5571 = vpop.f32.mrf.mxu0
      %v5572 = vpop.f32.mrf.mxu0
      %v5573 = vadd.f32 0.0, %v5572
      %v5574 = vpop.f32.mrf.mxu0
      %5575 = vmatprep.mubr.bf16.mxu0 0
      %5576 = vmatmul.mubr.bf16.gmra.mxu0 %v5438
      %v5577 = vpop.f32.mrf.mxu0
      %v5578 = vadd.f32 0.0, %v5577
      %v5579 = vpop.f32.mrf.mxu0
      %v5580 = vpop.f32.mrf.mxu0
      %v5581 = vadd.f32 0.0, %v5580
      %v5582 = vpop.f32.mrf.mxu0
      %5583 = vmatprep.mubr.bf16.mxu0 0
      %5584 = vmatmul.mubr.bf16.gmra.mxu0 %v5441
      %v5585 = vpop.f32.mrf.mxu0
      %v5586 = vadd.f32 0.0, %v5585
      %v5587 = vpop.f32.mrf.mxu0
      %v5588 = vpop.f32.mrf.mxu0
      %v5589 = vadd.f32 0.0, %v5588
      %v5590 = vpop.f32.mrf.mxu0
      %5591 = vmatprep.mubr.bf16.mxu0 0
      %5592 = vmatmul.mubr.bf16.gmra.mxu0 %v5444
      %v5593 = vpop.f32.mrf.mxu0
      %v5594 = vadd.f32 0.0, %v5593
      %v5595 = vpop.f32.mrf.mxu0
      %v5596 = vpop.f32.mrf.mxu0
      %v5597 = vadd.f32 0.0, %v5596
      %v5598 = vpop.f32.mrf.mxu0
      %5599 = vmatprep.mubr.bf16.mxu0 0
      %5600 = vmatmul.mubr.bf16.gmra.mxu0 %v5447
      %v5601 = vpop.f32.mrf.mxu0
      %v5602 = vadd.f32 0.0, %v5601
      %v5603 = vpop.f32.mrf.mxu0
      %v5604 = vpop.f32.mrf.mxu0
      %v5605 = vadd.f32 0.0, %v5604
      %v5606 = vpop.f32.mrf.mxu0
      %5607 = vmatprep.mubr.bf16.mxu0 0
      %5608 = vmatmul.mubr.bf16.gmra.mxu0 %v5450
      %v5609 = vpop.f32.mrf.mxu0
      %v5610 = vadd.f32 0.0, %v5609
      %v5611 = vpop.f32.mrf.mxu0
      %v5612 = vpop.f32.mrf.mxu0
      %v5613 = vadd.f32 0.0, %v5612
      %v5614 = vpop.f32.mrf.mxu0
      %5615 = vdwg.mxu0
      %v5616 = vadd.f32 %v5146, %v5490
      %v5617 = vadd.f32 %v5147, %v5493
      %v5618 = vadd.f32 %v5148, %v5498
      %v5619 = vadd.f32 %v5149, %v5501
      %v5620 = vadd.f32 %v5150, %v5506
      %v5621 = vadd.f32 %v5151, %v5509
      %v5622 = vadd.f32 %v5152, %v5514
      %v5623 = vadd.f32 %v5153, %v5517
      %v5624 = vadd.f32 %v5154, %v5522
      %v5625 = vadd.f32 %v5155, %v5525
      %v5626 = vadd.f32 %v5156, %v5530
      %v5627 = vadd.f32 %v5157, %v5533
      %v5628 = vadd.f32 %v5158, %v5538
      %v5629 = vadd.f32 %v5159, %v5541
      %v5630 = vadd.f32 %v5160, %v5546
      %v5631 = vadd.f32 %v5161, %v5549
      %v5632 = vadd.f32 %v5162, %v5554
      %v5633 = vadd.f32 %v5163, %v5557
      %v5634 = vadd.f32 %v5164, %v5562
      %v5635 = vadd.f32 %v5165, %v5565
      %v5636 = vadd.f32 %v5166, %v5570
      %v5637 = vadd.f32 %v5167, %v5573
      %v5638 = vadd.f32 %v5168, %v5578
      %v5639 = vadd.f32 %v5169, %v5581
      %v5640 = vadd.f32 %v5170, %v5586
      %v5641 = vadd.f32 %v5171, %v5589
      %v5642 = vadd.f32 %v5172, %v5594
      %v5643 = vadd.f32 %v5173, %v5597
      %v5644 = vadd.f32 %v5174, %v5602
      %v5645 = vadd.f32 %v5175, %v5605
      %v5646 = vadd.f32 %v5176, %v5610
      %v5647 = vadd.f32 %v5177, %v5613
      %v5648 = vld [vmem:[%s3] sm:$0x1]
      %v5650 = vlaneseq
      %v5651 = vshrl.u32 %v5650, 7
      %v5652 = vsub.s32 0, %v5651
      %v5653 = vrot.slane %v5648, %v5652
      %v5655 = vadd.f32 %v5616, %v5653
      %v5656 = vadd.f32 %v5617, %v5653
      %v5657 = vadd.f32 %v5618, %v5653
      %v5658 = vadd.f32 %v5619, %v5653
      %v5659 = vadd.f32 %v5620, %v5653
      %v5660 = vadd.f32 %v5621, %v5653
      %v5661 = vadd.f32 %v5622, %v5653
      %v5662 = vadd.f32 %v5623, %v5653
      %v5663 = vadd.f32 %v5624, %v5653
      %v5664 = vadd.f32 %v5625, %v5653
      %v5665 = vadd.f32 %v5626, %v5653
      %v5666 = vadd.f32 %v5627, %v5653
      %v5667 = vadd.f32 %v5628, %v5653
      %v5668 = vadd.f32 %v5629, %v5653
      %v5669 = vadd.f32 %v5630, %v5653
      %v5670 = vadd.f32 %v5631, %v5653
      %v5671 = vadd.f32 %v5632, %v5653
      %v5672 = vadd.f32 %v5633, %v5653
      %v5673 = vadd.f32 %v5634, %v5653
      %v5674 = vadd.f32 %v5635, %v5653
      %v5675 = vadd.f32 %v5636, %v5653
      %v5676 = vadd.f32 %v5637, %v5653
      %v5677 = vadd.f32 %v5638, %v5653
      %v5678 = vadd.f32 %v5639, %v5653
      %v5679 = vadd.f32 %v5640, %v5653
      %v5680 = vadd.f32 %v5641, %v5653
      %v5681 = vadd.f32 %v5642, %v5653
      %v5682 = vadd.f32 %v5643, %v5653
      %v5683 = vadd.f32 %v5644, %v5653
      %v5684 = vadd.f32 %v5645, %v5653
      %v5685 = vadd.f32 %v5646, %v5653
      %v5686 = vadd.f32 %v5647, %v5653
      %v5687 = vld [vmem:[%s399] sm:$0xf]
      %v5688 = vld [vmem:[%s399 + $0x4] sm:$0xf]
      %v5689 = vld [vmem:[%s399 + $0x8] sm:$0xf]
      %v5690 = vld [vmem:[%s399 + $0xc] sm:$0xf]
      %v5691 = vld [vmem:[%s399 + $0x10] sm:$0xf]
      %v5692 = vld [vmem:[%s399 + $0x14] sm:$0xf]
      %v5693 = vld [vmem:[%s399 + $0x18] sm:$0xf]
      %v5694 = vld [vmem:[%s399 + $0x1c] sm:$0xf]
      %v5695 = vld [vmem:[%s399 + $0x20] sm:$0xf]
      %v5696 = vld [vmem:[%s399 + $0x24] sm:$0xf]
      %v5697 = vld [vmem:[%s399 + $0x28] sm:$0xf]
      %v5698 = vld [vmem:[%s399 + $0x2c] sm:$0xf]
      %v5699 = vld [vmem:[%s399 + $0x30] sm:$0xf]
      %v5700 = vld [vmem:[%s399 + $0x34] sm:$0xf]
      %v5701 = vld [vmem:[%s399 + $0x38] sm:$0xf]
      %v5702 = vld [vmem:[%s399 + $0x3c] sm:$0xf]
      %v5703 = vld [vmem:[%s399 + $0x40] sm:$0xf]
      %v5704 = vld [vmem:[%s399 + $0x44] sm:$0xf]
      %v5705 = vld [vmem:[%s399 + $0x48] sm:$0xf]
      %v5706 = vld [vmem:[%s399 + $0x4c] sm:$0xf]
      %v5707 = vld [vmem:[%s399 + $0x50] sm:$0xf]
      %v5708 = vld [vmem:[%s399 + $0x54] sm:$0xf]
      %v5709 = vld [vmem:[%s399 + $0x58] sm:$0xf]
      %v5710 = vld [vmem:[%s399 + $0x5c] sm:$0xf]
      %v5711 = vld [vmem:[%s399 + $0x60] sm:$0xf]
      %v5712 = vld [vmem:[%s399 + $0x64] sm:$0xf]
      %v5713 = vld [vmem:[%s399 + $0x68] sm:$0xf]
      %v5714 = vld [vmem:[%s399 + $0x6c] sm:$0xf]
      %v5715 = vld [vmem:[%s399 + $0x70] sm:$0xf]
      %v5716 = vld [vmem:[%s399 + $0x74] sm:$0xf]
      %v5717 = vld [vmem:[%s399 + $0x78] sm:$0xf]
      %v5718 = vld [vmem:[%s399 + $0x7c] sm:$0xf]
      %v5719 = vld [vmem:[%s4] sm:$0xf]
      %v5720 = vld [vmem:[%s5] sm:$0x1]
      %v5722 = vlaneseq
      %v5723 = vshrl.u32 %v5722, 7
      %v5724 = vsub.s32 0, %v5723
      %v5725 = vrot.slane %v5720, %v5724
      %v5759 = vunpack.c.l.b16 %v5687
      %v5760 = vunpack.c.l.b16 %v5688
      %v5761 = vunpack.c.l.b16 %v5689
      %v5762 = vunpack.c.l.b16 %v5690
      %v5763 = vunpack.c.l.b16 %v5691
      %v5764 = vunpack.c.l.b16 %v5692
      %v5765 = vunpack.c.l.b16 %v5693
      %v5766 = vunpack.c.l.b16 %v5694
      %v5767 = vunpack.c.l.b16 %v5695
      %v5768 = vunpack.c.l.b16 %v5696
      %v5769 = vunpack.c.l.b16 %v5697
      %v5770 = vunpack.c.l.b16 %v5698
      %v5771 = vunpack.c.l.b16 %v5699
      %v5772 = vunpack.c.l.b16 %v5700
      %v5773 = vunpack.c.l.b16 %v5701
      %v5774 = vunpack.c.l.b16 %v5702
      %v5775 = vunpack.c.l.b16 %v5703
      %v5776 = vunpack.c.l.b16 %v5704
      %v5777 = vunpack.c.l.b16 %v5705
      %v5778 = vunpack.c.l.b16 %v5706
      %v5779 = vunpack.c.l.b16 %v5707
      %v5780 = vunpack.c.l.b16 %v5708
      %v5781 = vunpack.c.l.b16 %v5709
      %v5782 = vunpack.c.l.b16 %v5710
      %v5783 = vunpack.c.l.b16 %v5711
      %v5784 = vunpack.c.l.b16 %v5712
      %v5785 = vunpack.c.l.b16 %v5713
      %v5786 = vunpack.c.l.b16 %v5714
      %v5787 = vunpack.c.l.b16 %v5715
      %v5788 = vunpack.c.l.b16 %v5716
      %v5789 = vunpack.c.l.b16 %v5717
      %v5790 = vunpack.c.l.b16 %v5718
      %v5791 = vpack.c.b16 %v5760, %v5759
      %v5792 = vpack.c.b16 %v5762, %v5761
      %v5793 = vpack.c.b16 %v5764, %v5763
      %v5794 = vpack.c.b16 %v5766, %v5765
      %v5795 = vpack.c.b16 %v5768, %v5767
      %v5796 = vpack.c.b16 %v5770, %v5769
      %v5797 = vpack.c.b16 %v5772, %v5771
      %v5798 = vpack.c.b16 %v5774, %v5773
      %v5799 = vpack.c.b16 %v5776, %v5775
      %v5800 = vpack.c.b16 %v5778, %v5777
      %v5801 = vpack.c.b16 %v5780, %v5779
      %v5802 = vpack.c.b16 %v5782, %v5781
      %v5803 = vpack.c.b16 %v5784, %v5783
      %v5804 = vpack.c.b16 %v5786, %v5785
      %v5805 = vpack.c.b16 %v5788, %v5787
      %v5806 = vpack.c.b16 %v5790, %v5789
      %vm5807 = vcmask 64512
      %v5809 = vsel %vm5807, %v5791, 0
      %v5812 = vsel %vm5807, %v5792, 0
      %v5815 = vsel %vm5807, %v5793, 0
      %v5818 = vsel %vm5807, %v5794, 0
      %v5821 = vsel %vm5807, %v5795, 0
      %v5824 = vsel %vm5807, %v5796, 0
      %v5827 = vsel %vm5807, %v5797, 0
      %v5830 = vsel %vm5807, %v5798, 0
      %v5833 = vsel %vm5807, %v5799, 0
      %v5836 = vsel %vm5807, %v5800, 0
      %v5839 = vsel %vm5807, %v5801, 0
      %v5842 = vsel %vm5807, %v5802, 0
      %v5845 = vsel %vm5807, %v5803, 0
      %v5848 = vsel %vm5807, %v5804, 0
      %v5851 = vsel %vm5807, %v5805, 0
      %v5854 = vsel %vm5807, %v5806, 0
      %vm5856 = vcmask 1043456
      %v5858 = vsel %vm5856, %v5719, 0
      %5860 = vmatprep.subr.bf16.mxu0 0
      %5861 = vmatpush1.bf16.msra.mxu0 0
      %5862 = vmatprep.subr.bf16.mxu0 0
      %5863 = vmatpush1.bf16.msra.mxu0 0
      %5864 = vmatprep.subr.bf16.mxu0 0
      %5865 = vmatpush1.bf16.msra.mxu0 0
      %5866 = vmatprep.subr.bf16.mxu0 0
      %5867 = vmatpush1.bf16.msra.mxu0 0
      %5868 = vmatprep.subr.bf16.mxu0 0
      %5869 = vmatpush1.bf16.msra.mxu0 0
      %5870 = vmatprep.subr.bf16.mxu0 0
      %5871 = vmatpush1.bf16.msra.mxu0 0
      %5872 = vmatprep.subr.bf16.mxu0 0
      %5873 = vmatpush1.bf16.msra.mxu0 0
      %5874 = vmatprep.subr.bf16.mxu0 0
      %5875 = vmatpush1.bf16.msra.mxu0 %v5858
      %5876 = vmatprep.subr.bf16.mxu0 0
      %5877 = vmatpush2.bf16.msra.mxu0 0
      %5878 = vmatprep.subr.bf16.mxu0 0
      %5879 = vmatpush2.bf16.msra.mxu0 0
      %5880 = vmatprep.subr.bf16.mxu0 0
      %5881 = vmatpush2.bf16.msra.mxu0 0
      %5882 = vmatprep.subr.bf16.mxu0 0
      %5883 = vmatpush2.bf16.msra.mxu0 0
      %5884 = vmatprep.subr.bf16.mxu0 0
      %5885 = vmatpush2.bf16.msra.mxu0 0
      %5886 = vmatprep.subr.bf16.mxu0 0
      %5887 = vmatpush2.bf16.msra.mxu0 0
      %5888 = vmatprep.subr.bf16.mxu0 0
      %5889 = vmatpush2.bf16.msra.mxu0 0
      %5890 = vmatprep.subr.bf16.mxu0 0
      %5891 = vmatpush2.bf16.msra.mxu0 0
      %5892 = vmatprep.mubr.bf16.mxu0 0
      %5893 = vmatmul.mubr.bf16.gmra.mxu0 %v5809
      %v5894 = vpop.f32.mrf.mxu0
      %v5895 = vadd.f32 %v5725, %v5894
      %v5896 = vpop.f32.mrf.mxu0
      %v5897 = vpop.f32.mrf.mxu0
      %v5898 = vadd.f32 %v5725, %v5897
      %v5899 = vpop.f32.mrf.mxu0
      %5900 = vmatprep.mubr.bf16.mxu0 0
      %5901 = vmatmul.mubr.bf16.gmra.mxu0 %v5812
      %v5902 = vpop.f32.mrf.mxu0
      %v5903 = vadd.f32 %v5725, %v5902
      %v5904 = vpop.f32.mrf.mxu0
      %v5905 = vpop.f32.mrf.mxu0
      %v5906 = vadd.f32 %v5725, %v5905
      %v5907 = vpop.f32.mrf.mxu0
      %5908 = vmatprep.mubr.bf16.mxu0 0
      %5909 = vmatmul.mubr.bf16.gmra.mxu0 %v5815
      %v5910 = vpop.f32.mrf.mxu0
      %v5911 = vadd.f32 %v5725, %v5910
      %v5912 = vpop.f32.mrf.mxu0
      %v5913 = vpop.f32.mrf.mxu0
      %v5914 = vadd.f32 %v5725, %v5913
      %v5915 = vpop.f32.mrf.mxu0
      %5916 = vmatprep.mubr.bf16.mxu0 0
      %5917 = vmatmul.mubr.bf16.gmra.mxu0 %v5818
      %v5918 = vpop.f32.mrf.mxu0
      %v5919 = vadd.f32 %v5725, %v5918
      %v5920 = vpop.f32.mrf.mxu0
      %v5921 = vpop.f32.mrf.mxu0
      %v5922 = vadd.f32 %v5725, %v5921
      %v5923 = vpop.f32.mrf.mxu0
      %5924 = vmatprep.mubr.bf16.mxu0 0
      %5925 = vmatmul.mubr.bf16.gmra.mxu0 %v5821
      %v5926 = vpop.f32.mrf.mxu0
      %v5927 = vadd.f32 %v5725, %v5926
      %v5928 = vpop.f32.mrf.mxu0
      %v5929 = vpop.f32.mrf.mxu0
      %v5930 = vadd.f32 %v5725, %v5929
      %v5931 = vpop.f32.mrf.mxu0
      %5932 = vmatprep.mubr.bf16.mxu0 0
      %5933 = vmatmul.mubr.bf16.gmra.mxu0 %v5824
      %v5934 = vpop.f32.mrf.mxu0
      %v5935 = vadd.f32 %v5725, %v5934
      %v5936 = vpop.f32.mrf.mxu0
      %v5937 = vpop.f32.mrf.mxu0
      %v5938 = vadd.f32 %v5725, %v5937
      %v5939 = vpop.f32.mrf.mxu0
      %5940 = vmatprep.mubr.bf16.mxu0 0
      %5941 = vmatmul.mubr.bf16.gmra.mxu0 %v5827
      %v5942 = vpop.f32.mrf.mxu0
      %v5943 = vadd.f32 %v5725, %v5942
      %v5944 = vpop.f32.mrf.mxu0
      %v5945 = vpop.f32.mrf.mxu0
      %v5946 = vadd.f32 %v5725, %v5945
      %v5947 = vpop.f32.mrf.mxu0
      %5948 = vmatprep.mubr.bf16.mxu0 0
      %5949 = vmatmul.mubr.bf16.gmra.mxu0 %v5830
      %v5950 = vpop.f32.mrf.mxu0
      %v5951 = vadd.f32 %v5725, %v5950
      %v5952 = vpop.f32.mrf.mxu0
      %v5953 = vpop.f32.mrf.mxu0
      %v5954 = vadd.f32 %v5725, %v5953
      %v5955 = vpop.f32.mrf.mxu0
      %5956 = vmatprep.mubr.bf16.mxu0 0
      %5957 = vmatmul.mubr.bf16.gmra.mxu0 %v5833
      %v5958 = vpop.f32.mrf.mxu0
      %v5959 = vadd.f32 %v5725, %v5958
      %v5960 = vpop.f32.mrf.mxu0
      %v5961 = vpop.f32.mrf.mxu0
      %v5962 = vadd.f32 %v5725, %v5961
      %v5963 = vpop.f32.mrf.mxu0
      %5964 = vmatprep.mubr.bf16.mxu0 0
      %5965 = vmatmul.mubr.bf16.gmra.mxu0 %v5836
      %v5966 = vpop.f32.mrf.mxu0
      %v5967 = vadd.f32 %v5725, %v5966
      %v5968 = vpop.f32.mrf.mxu0
      %v5969 = vpop.f32.mrf.mxu0
      %v5970 = vadd.f32 %v5725, %v5969
      %v5971 = vpop.f32.mrf.mxu0
      %5972 = vmatprep.mubr.bf16.mxu0 0
      %5973 = vmatmul.mubr.bf16.gmra.mxu0 %v5839
      %v5974 = vpop.f32.mrf.mxu0
      %v5975 = vadd.f32 %v5725, %v5974
      %v5976 = vpop.f32.mrf.mxu0
      %v5977 = vpop.f32.mrf.mxu0
      %v5978 = vadd.f32 %v5725, %v5977
      %v5979 = vpop.f32.mrf.mxu0
      %5980 = vmatprep.mubr.bf16.mxu0 0
      %5981 = vmatmul.mubr.bf16.gmra.mxu0 %v5842
      %v5982 = vpop.f32.mrf.mxu0
      %v5983 = vadd.f32 %v5725, %v5982
      %v5984 = vpop.f32.mrf.mxu0
      %v5985 = vpop.f32.mrf.mxu0
      %v5986 = vadd.f32 %v5725, %v5985
      %v5987 = vpop.f32.mrf.mxu0
      %5988 = vmatprep.mubr.bf16.mxu0 0
      %5989 = vmatmul.mubr.bf16.gmra.mxu0 %v5845
      %v5990 = vpop.f32.mrf.mxu0
      %v5991 = vadd.f32 %v5725, %v5990
      %v5992 = vpop.f32.mrf.mxu0
      %v5993 = vpop.f32.mrf.mxu0
      %v5994 = vadd.f32 %v5725, %v5993
      %v5995 = vpop.f32.mrf.mxu0
      %5996 = vmatprep.mubr.bf16.mxu0 0
      %5997 = vmatmul.mubr.bf16.gmra.mxu0 %v5848
      %v5998 = vpop.f32.mrf.mxu0
      %v5999 = vadd.f32 %v5725, %v5998
      %v6000 = vpop.f32.mrf.mxu0
      %v6001 = vpop.f32.mrf.mxu0
      %v6002 = vadd.f32 %v5725, %v6001
      %v6003 = vpop.f32.mrf.mxu0
      %6004 = vmatprep.mubr.bf16.mxu0 0
      %6005 = vmatmul.mubr.bf16.gmra.mxu0 %v5851
      %v6006 = vpop.f32.mrf.mxu0
      %v6007 = vadd.f32 %v5725, %v6006
      %v6008 = vpop.f32.mrf.mxu0
      %v6009 = vpop.f32.mrf.mxu0
      %v6010 = vadd.f32 %v5725, %v6009
      %v6011 = vpop.f32.mrf.mxu0
      %6012 = vmatprep.mubr.bf16.mxu0 0
      %6013 = vmatmul.mubr.bf16.gmra.mxu0 %v5854
      %v6014 = vpop.f32.mrf.mxu0
      %v6015 = vadd.f32 %v5725, %v6014
      %v6016 = vpop.f32.mrf.mxu0
      %v6017 = vpop.f32.mrf.mxu0
      %v6018 = vadd.f32 %v5725, %v6017
      %v6019 = vpop.f32.mrf.mxu0
      %6020 = vdwg.mxu0
      %v6021 = vadd.f32 %v5655, %v5895
      %v6022 = vadd.f32 %v5656, %v5898
      %v6023 = vadd.f32 %v5657, %v5903
      %v6024 = vadd.f32 %v5658, %v5906
      %v6025 = vadd.f32 %v5659, %v5911
      %v6026 = vadd.f32 %v5660, %v5914
      %v6027 = vadd.f32 %v5661, %v5919
      %v6028 = vadd.f32 %v5662, %v5922
      %v6029 = vadd.f32 %v5663, %v5927
      %v6030 = vadd.f32 %v5664, %v5930
      %v6031 = vadd.f32 %v5665, %v5935
      %v6032 = vadd.f32 %v5666, %v5938
      %v6033 = vadd.f32 %v5667, %v5943
      %v6034 = vadd.f32 %v5668, %v5946
      %v6035 = vadd.f32 %v5669, %v5951
      %v6036 = vadd.f32 %v5670, %v5954
      %v6037 = vadd.f32 %v5671, %v5959
      %v6038 = vadd.f32 %v5672, %v5962
      %v6039 = vadd.f32 %v5673, %v5967
      %v6040 = vadd.f32 %v5674, %v5970
      %v6041 = vadd.f32 %v5675, %v5975
      %v6042 = vadd.f32 %v5676, %v5978
      %v6043 = vadd.f32 %v5677, %v5983
      %v6044 = vadd.f32 %v5678, %v5986
      %v6045 = vadd.f32 %v5679, %v5991
      %v6046 = vadd.f32 %v5680, %v5994
      %v6047 = vadd.f32 %v5681, %v5999
      %v6048 = vadd.f32 %v5682, %v6002
      %v6049 = vadd.f32 %v5683, %v6007
      %v6050 = vadd.f32 %v5684, %v6010
      %v6051 = vadd.f32 %v5685, %v6015
      %v6052 = vadd.f32 %v5686, %v6018
      %v6053 = vmax.f32 %v6021, 0.0
      %v6054 = vmax.f32 %v6022, 0.0
      %v6055 = vmax.f32 %v6023, 0.0
      %v6056 = vmax.f32 %v6024, 0.0
      %v6057 = vmax.f32 %v6025, 0.0
      %v6058 = vmax.f32 %v6026, 0.0
      %v6059 = vmax.f32 %v6027, 0.0
      %v6060 = vmax.f32 %v6028, 0.0
      %v6061 = vmax.f32 %v6029, 0.0
      %v6062 = vmax.f32 %v6030, 0.0
      %v6063 = vmax.f32 %v6031, 0.0
      %v6064 = vmax.f32 %v6032, 0.0
      %v6065 = vmax.f32 %v6033, 0.0
      %v6066 = vmax.f32 %v6034, 0.0
      %v6067 = vmax.f32 %v6035, 0.0
      %v6068 = vmax.f32 %v6036, 0.0
      %v6069 = vmax.f32 %v6037, 0.0
      %v6070 = vmax.f32 %v6038, 0.0
      %v6071 = vmax.f32 %v6039, 0.0
      %v6072 = vmax.f32 %v6040, 0.0
      %v6073 = vmax.f32 %v6041, 0.0
      %v6074 = vmax.f32 %v6042, 0.0
      %v6075 = vmax.f32 %v6043, 0.0
      %v6076 = vmax.f32 %v6044, 0.0
      %v6077 = vmax.f32 %v6045, 0.0
      %v6078 = vmax.f32 %v6046, 0.0
      %v6079 = vmax.f32 %v6047, 0.0
      %v6080 = vmax.f32 %v6048, 0.0
      %v6081 = vmax.f32 %v6049, 0.0
      %v6082 = vmax.f32 %v6050, 0.0
      %v6083 = vmax.f32 %v6051, 0.0
      %v6084 = vmax.f32 %v6052, 0.0
      %v6085 = vpack.c.bf16 %v5617, %v5616
      %v6086 = vpack.c.bf16 %v5619, %v5618
      %v6087 = vpack.c.bf16 %v5621, %v5620
      %v6088 = vpack.c.bf16 %v5623, %v5622
      %v6089 = vpack.c.bf16 %v5625, %v5624
      %v6090 = vpack.c.bf16 %v5627, %v5626
      %v6091 = vpack.c.bf16 %v5629, %v5628
      %v6092 = vpack.c.bf16 %v5631, %v5630
      %v6093 = vpack.c.bf16 %v5633, %v5632
      %v6094 = vpack.c.bf16 %v5635, %v5634
      %v6095 = vpack.c.bf16 %v5637, %v5636
      %v6096 = vpack.c.bf16 %v5639, %v5638
      %v6097 = vpack.c.bf16 %v5641, %v5640
      %v6098 = vpack.c.bf16 %v5643, %v5642
      %v6099 = vpack.c.bf16 %v5645, %v5644
      %v6100 = vpack.c.bf16 %v5647, %v5646
      %v6101 = vld [vmem:[%s6] sm:$0xf]
      %v6102 = vld [vmem:[%s6 + $0x4] sm:$0xf]
      %v6103 = vld [vmem:[%s6 + $0x8] sm:$0xf]
      %v6104 = vld [vmem:[%s6 + $0xc] sm:$0xf]
      %v6105 = vld [vmem:[%s6 + $0x10] sm:$0xf]
      %v6106 = vld [vmem:[%s6 + $0x14] sm:$0xf]
      %v6107 = vld [vmem:[%s6 + $0x18] sm:$0xf]
      %v6108 = vld [vmem:[%s6 + $0x1c] sm:$0xf]
      %v6109 = vld [vmem:[%s6 + $0x20] sm:$0xf]
      %v6110 = vld [vmem:[%s6 + $0x24] sm:$0xf]
      %v6111 = vld [vmem:[%s6 + $0x28] sm:$0xf]
      %v6112 = vld [vmem:[%s6 + $0x2c] sm:$0xf]
      %v6113 = vld [vmem:[%s6 + $0x30] sm:$0xf]
      %v6114 = vld [vmem:[%s6 + $0x34] sm:$0xf]
      %v6115 = vld [vmem:[%s6 + $0x38] sm:$0xf]
      %v6116 = vld [vmem:[%s6 + $0x3c] sm:$0xf]
      %v6117 = vld [vmem:[%s7] sm:$0x1]
      %v6119 = vlaneseq
      %v6120 = vshrl.u32 %v6119, 7
      %v6121 = vsub.s32 0, %v6120
      %v6122 = vrot.slane %v6117, %v6121
      %v6140 = vunpack.c.l.b16 %v6101
      %v6141 = vunpack.c.l.b16 %v6102
      %v6142 = vunpack.c.l.b16 %v6103
      %v6143 = vunpack.c.l.b16 %v6104
      %v6144 = vunpack.c.l.b16 %v6105
      %v6145 = vunpack.c.l.b16 %v6106
      %v6146 = vunpack.c.l.b16 %v6107
      %v6147 = vunpack.c.l.b16 %v6108
      %v6148 = vunpack.c.l.b16 %v6109
      %v6149 = vunpack.c.l.b16 %v6110
      %v6150 = vunpack.c.l.b16 %v6111
      %v6151 = vunpack.c.l.b16 %v6112
      %v6152 = vunpack.c.l.b16 %v6113
      %v6153 = vunpack.c.l.b16 %v6114
      %v6154 = vunpack.c.l.b16 %v6115
      %v6155 = vunpack.c.l.b16 %v6116
      %v6156 = vpack.c.b16 %v6141, %v6140
      %v6157 = vpack.c.b16 %v6143, %v6142
      %v6158 = vpack.c.b16 %v6145, %v6144
      %v6159 = vpack.c.b16 %v6147, %v6146
      %v6160 = vpack.c.b16 %v6149, %v6148
      %v6161 = vpack.c.b16 %v6151, %v6150
      %v6162 = vpack.c.b16 %v6153, %v6152
      %v6163 = vpack.c.b16 %v6155, %v6154
      %6172 = vmatprep.subr.bf16.mxu0 0
      %6173 = vmatpush1.bf16.msra.mxu0 %v6163
      %6174 = vmatprep.subr.bf16.mxu0 0
      %6175 = vmatpush1.bf16.msra.mxu0 %v6162
      %6176 = vmatprep.subr.bf16.mxu0 0
      %6177 = vmatpush1.bf16.msra.mxu0 %v6161
      %6178 = vmatprep.subr.bf16.mxu0 0
      %6179 = vmatpush1.bf16.msra.mxu0 %v6160
      %6180 = vmatprep.subr.bf16.mxu0 0
      %6181 = vmatpush1.bf16.msra.mxu0 %v6159
      %6182 = vmatprep.subr.bf16.mxu0 0
      %6183 = vmatpush1.bf16.msra.mxu0 %v6158
      %6184 = vmatprep.subr.bf16.mxu0 0
      %6185 = vmatpush1.bf16.msra.mxu0 %v6157
      %6186 = vmatprep.subr.bf16.mxu0 0
      %6187 = vmatpush1.bf16.msra.mxu0 %v6156
      %6188 = vmatprep.subr.bf16.mxu0 0
      %6189 = vmatpush2.bf16.msra.mxu0 0
      %6190 = vmatprep.subr.bf16.mxu0 0
      %6191 = vmatpush2.bf16.msra.mxu0 0
      %6192 = vmatprep.subr.bf16.mxu0 0
      %6193 = vmatpush2.bf16.msra.mxu0 0
      %6194 = vmatprep.subr.bf16.mxu0 0
      %6195 = vmatpush2.bf16.msra.mxu0 0
      %6196 = vmatprep.subr.bf16.mxu0 0
      %6197 = vmatpush2.bf16.msra.mxu0 0
      %6198 = vmatprep.subr.bf16.mxu0 0
      %6199 = vmatpush2.bf16.msra.mxu0 0
      %6200 = vmatprep.subr.bf16.mxu0 0
      %6201 = vmatpush2.bf16.msra.mxu0 0
      %6202 = vmatprep.subr.bf16.mxu0 0
      %6203 = vmatpush2.bf16.msra.mxu0 0
      %6204 = vmatprep.mubr.bf16.mxu0 0
      %6205 = vmatmul.mubr.bf16.gmra.mxu0 %v6085
      %v6206 = vpop.f32.mrf.mxu0
      %v6207 = vadd.f32 %v6122, %v6206
      %v6208 = vpop.f32.mrf.mxu0
      %v6209 = vpop.f32.mrf.mxu0
      %v6210 = vadd.f32 %v6122, %v6209
      %v6211 = vpop.f32.mrf.mxu0
      %6212 = vmatprep.mubr.bf16.mxu0 0
      %6213 = vmatmul.mubr.bf16.gmra.mxu0 %v6086
      %v6214 = vpop.f32.mrf.mxu0
      %v6215 = vadd.f32 %v6122, %v6214
      %v6216 = vpop.f32.mrf.mxu0
      %v6217 = vpop.f32.mrf.mxu0
      %v6218 = vadd.f32 %v6122, %v6217
      %v6219 = vpop.f32.mrf.mxu0
      %6220 = vmatprep.mubr.bf16.mxu0 0
      %6221 = vmatmul.mubr.bf16.gmra.mxu0 %v6087
      %v6222 = vpop.f32.mrf.mxu0
      %v6223 = vadd.f32 %v6122, %v6222
      %v6224 = vpop.f32.mrf.mxu0
      %v6225 = vpop.f32.mrf.mxu0
      %v6226 = vadd.f32 %v6122, %v6225
      %v6227 = vpop.f32.mrf.mxu0
      %6228 = vmatprep.mubr.bf16.mxu0 0
      %6229 = vmatmul.mubr.bf16.gmra.mxu0 %v6088
      %v6230 = vpop.f32.mrf.mxu0
      %v6231 = vadd.f32 %v6122, %v6230
      %v6232 = vpop.f32.mrf.mxu0
      %v6233 = vpop.f32.mrf.mxu0
      %v6234 = vadd.f32 %v6122, %v6233
      %v6235 = vpop.f32.mrf.mxu0
      %6236 = vmatprep.mubr.bf16.mxu0 0
      %6237 = vmatmul.mubr.bf16.gmra.mxu0 %v6089
      %v6238 = vpop.f32.mrf.mxu0
      %v6239 = vadd.f32 %v6122, %v6238
      %v6240 = vpop.f32.mrf.mxu0
      %v6241 = vpop.f32.mrf.mxu0
      %v6242 = vadd.f32 %v6122, %v6241
      %v6243 = vpop.f32.mrf.mxu0
      %6244 = vmatprep.mubr.bf16.mxu0 0
      %6245 = vmatmul.mubr.bf16.gmra.mxu0 %v6090
      %v6246 = vpop.f32.mrf.mxu0
      %v6247 = vadd.f32 %v6122, %v6246
      %v6248 = vpop.f32.mrf.mxu0
      %v6249 = vpop.f32.mrf.mxu0
      %v6250 = vadd.f32 %v6122, %v6249
      %v6251 = vpop.f32.mrf.mxu0
      %6252 = vmatprep.mubr.bf16.mxu0 0
      %6253 = vmatmul.mubr.bf16.gmra.mxu0 %v6091
      %v6254 = vpop.f32.mrf.mxu0
      %v6255 = vadd.f32 %v6122, %v6254
      %v6256 = vpop.f32.mrf.mxu0
      %v6257 = vpop.f32.mrf.mxu0
      %v6258 = vadd.f32 %v6122, %v6257
      %v6259 = vpop.f32.mrf.mxu0
      %6260 = vmatprep.mubr.bf16.mxu0 0
      %6261 = vmatmul.mubr.bf16.gmra.mxu0 %v6092
      %v6262 = vpop.f32.mrf.mxu0
      %v6263 = vadd.f32 %v6122, %v6262
      %v6264 = vpop.f32.mrf.mxu0
      %v6265 = vpop.f32.mrf.mxu0
      %v6266 = vadd.f32 %v6122, %v6265
      %v6267 = vpop.f32.mrf.mxu0
      %6268 = vmatprep.mubr.bf16.mxu0 0
      %6269 = vmatmul.mubr.bf16.gmra.mxu0 %v6093
      %v6270 = vpop.f32.mrf.mxu0
      %v6271 = vadd.f32 %v6122, %v6270
      %v6272 = vpop.f32.mrf.mxu0
      %v6273 = vpop.f32.mrf.mxu0
      %v6274 = vadd.f32 %v6122, %v6273
      %v6275 = vpop.f32.mrf.mxu0
      %6276 = vmatprep.mubr.bf16.mxu0 0
      %6277 = vmatmul.mubr.bf16.gmra.mxu0 %v6094
      %v6278 = vpop.f32.mrf.mxu0
      %v6279 = vadd.f32 %v6122, %v6278
      %v6280 = vpop.f32.mrf.mxu0
      %v6281 = vpop.f32.mrf.mxu0
      %v6282 = vadd.f32 %v6122, %v6281
      %v6283 = vpop.f32.mrf.mxu0
      %6284 = vmatprep.mubr.bf16.mxu0 0
      %6285 = vmatmul.mubr.bf16.gmra.mxu0 %v6095
      %v6286 = vpop.f32.mrf.mxu0
      %v6287 = vadd.f32 %v6122, %v6286
      %v6288 = vpop.f32.mrf.mxu0
      %v6289 = vpop.f32.mrf.mxu0
      %v6290 = vadd.f32 %v6122, %v6289
      %v6291 = vpop.f32.mrf.mxu0
      %6292 = vmatprep.mubr.bf16.mxu0 0
      %6293 = vmatmul.mubr.bf16.gmra.mxu0 %v6096
      %v6294 = vpop.f32.mrf.mxu0
      %v6295 = vadd.f32 %v6122, %v6294
      %v6296 = vpop.f32.mrf.mxu0
      %v6297 = vpop.f32.mrf.mxu0
      %v6298 = vadd.f32 %v6122, %v6297
      %v6299 = vpop.f32.mrf.mxu0
      %6300 = vmatprep.mubr.bf16.mxu0 0
      %6301 = vmatmul.mubr.bf16.gmra.mxu0 %v6097
      %v6302 = vpop.f32.mrf.mxu0
      %v6303 = vadd.f32 %v6122, %v6302
      %v6304 = vpop.f32.mrf.mxu0
      %v6305 = vpop.f32.mrf.mxu0
      %v6306 = vadd.f32 %v6122, %v6305
      %v6307 = vpop.f32.mrf.mxu0
      %6308 = vmatprep.mubr.bf16.mxu0 0
      %6309 = vmatmul.mubr.bf16.gmra.mxu0 %v6098
      %v6310 = vpop.f32.mrf.mxu0
      %v6311 = vadd.f32 %v6122, %v6310
      %v6312 = vpop.f32.mrf.mxu0
      %v6313 = vpop.f32.mrf.mxu0
      %v6314 = vadd.f32 %v6122, %v6313
      %v6315 = vpop.f32.mrf.mxu0
      %6316 = vmatprep.mubr.bf16.mxu0 0
      %6317 = vmatmul.mubr.bf16.gmra.mxu0 %v6099
      %v6318 = vpop.f32.mrf.mxu0
      %v6319 = vadd.f32 %v6122, %v6318
      %v6320 = vpop.f32.mrf.mxu0
      %v6321 = vpop.f32.mrf.mxu0
      %v6322 = vadd.f32 %v6122, %v6321
      %v6323 = vpop.f32.mrf.mxu0
      %6324 = vmatprep.mubr.bf16.mxu0 0
      %6325 = vmatmul.mubr.bf16.gmra.mxu0 %v6100
      %v6326 = vpop.f32.mrf.mxu0
      %v6327 = vadd.f32 %v6122, %v6326
      %v6328 = vpop.f32.mrf.mxu0
      %v6329 = vpop.f32.mrf.mxu0
      %v6330 = vadd.f32 %v6122, %v6329
      %v6331 = vpop.f32.mrf.mxu0
      %6332 = vdwg.mxu0
      %v6333 = vpack.c.bf16 %v6054, %v6053
      %v6334 = vpack.c.bf16 %v6056, %v6055
      %v6335 = vpack.c.bf16 %v6058, %v6057
      %v6336 = vpack.c.bf16 %v6060, %v6059
      %v6337 = vpack.c.bf16 %v6062, %v6061
      %v6338 = vpack.c.bf16 %v6064, %v6063
      %v6339 = vpack.c.bf16 %v6066, %v6065
      %v6340 = vpack.c.bf16 %v6068, %v6067
      %v6341 = vpack.c.bf16 %v6070, %v6069
      %v6342 = vpack.c.bf16 %v6072, %v6071
      %v6343 = vpack.c.bf16 %v6074, %v6073
      %v6344 = vpack.c.bf16 %v6076, %v6075
      %v6345 = vpack.c.bf16 %v6078, %v6077
      %v6346 = vpack.c.bf16 %v6080, %v6079
      %v6347 = vpack.c.bf16 %v6082, %v6081
      %v6348 = vpack.c.bf16 %v6084, %v6083
      %v6365 = vunpack.c.l.b16 %v6333
      %v6366 = vunpack.c.h.b16 %v6333
      %v6367 = vunpack.c.l.b16 %v6334
      %v6368 = vunpack.c.h.b16 %v6334
      %v6369 = vunpack.c.l.b16 %v6335
      %v6370 = vunpack.c.h.b16 %v6335
      %v6371 = vunpack.c.l.b16 %v6336
      %v6372 = vunpack.c.h.b16 %v6336
      %v6373 = vunpack.c.l.b16 %v6337
      %v6374 = vunpack.c.h.b16 %v6337
      %v6375 = vunpack.c.l.b16 %v6338
      %v6376 = vunpack.c.h.b16 %v6338
      %v6377 = vunpack.c.l.b16 %v6339
      %v6378 = vunpack.c.h.b16 %v6339
      %v6379 = vunpack.c.l.b16 %v6340
      %v6380 = vunpack.c.h.b16 %v6340
      %v6381 = vunpack.c.l.b16 %v6341
      %v6382 = vunpack.c.h.b16 %v6341
      %v6383 = vunpack.c.l.b16 %v6342
      %v6384 = vunpack.c.h.b16 %v6342
      %v6385 = vunpack.c.l.b16 %v6343
      %v6386 = vunpack.c.h.b16 %v6343
      %v6387 = vunpack.c.l.b16 %v6344
      %v6388 = vunpack.c.h.b16 %v6344
      %v6389 = vunpack.c.l.b16 %v6345
      %v6390 = vunpack.c.h.b16 %v6345
      %v6391 = vunpack.c.l.b16 %v6346
      %v6392 = vunpack.c.h.b16 %v6346
      %v6393 = vunpack.c.l.b16 %v6347
      %v6394 = vunpack.c.h.b16 %v6347
      %v6395 = vunpack.c.l.b16 %v6348
      %v6396 = vunpack.c.h.b16 %v6348
      %v6397 = vpack.c.b16 %v6365, %v6365
      %v6398 = vpack.c.b16 %v6366, %v6366
      %v6399 = vpack.c.b16 %v6367, %v6367
      %v6400 = vpack.c.b16 %v6368, %v6368
      %v6401 = vpack.c.b16 %v6369, %v6369
      %v6402 = vpack.c.b16 %v6370, %v6370
      %v6403 = vpack.c.b16 %v6371, %v6371
      %v6404 = vpack.c.b16 %v6372, %v6372
      %v6405 = vpack.c.b16 %v6373, %v6373
      %v6406 = vpack.c.b16 %v6374, %v6374
      %v6407 = vpack.c.b16 %v6375, %v6375
      %v6408 = vpack.c.b16 %v6376, %v6376
      %v6409 = vpack.c.b16 %v6377, %v6377
      %v6410 = vpack.c.b16 %v6378, %v6378
      %v6411 = vpack.c.b16 %v6379, %v6379
      %v6412 = vpack.c.b16 %v6380, %v6380
      %v6413 = vpack.c.b16 %v6381, %v6381
      %v6414 = vpack.c.b16 %v6382, %v6382
      %v6415 = vpack.c.b16 %v6383, %v6383
      %v6416 = vpack.c.b16 %v6384, %v6384
      %v6417 = vpack.c.b16 %v6385, %v6385
      %v6418 = vpack.c.b16 %v6386, %v6386
      %v6419 = vpack.c.b16 %v6387, %v6387
      %v6420 = vpack.c.b16 %v6388, %v6388
      %v6421 = vpack.c.b16 %v6389, %v6389
      %v6422 = vpack.c.b16 %v6390, %v6390
      %v6423 = vpack.c.b16 %v6391, %v6391
      %v6424 = vpack.c.b16 %v6392, %v6392
      %v6425 = vpack.c.b16 %v6393, %v6393
      %v6426 = vpack.c.b16 %v6394, %v6394
      %v6427 = vpack.c.b16 %v6395, %v6395
      %v6428 = vpack.c.b16 %v6396, %v6396
      %6461 = vst [vmem:[%s410] sm:$0xf] %v6397
      %6462 = vst [vmem:[%s410 + $0x4] sm:$0xf] %v6398
      %6463 = vst [vmem:[%s410 + $0x8] sm:$0xf] %v6399
      %6464 = vst [vmem:[%s410 + $0xc] sm:$0xf] %v6400
      %6465 = vst [vmem:[%s410 + $0x10] sm:$0xf] %v6401
      %6466 = vst [vmem:[%s410 + $0x14] sm:$0xf] %v6402
      %6467 = vst [vmem:[%s410 + $0x18] sm:$0xf] %v6403
      %6468 = vst [vmem:[%s410 + $0x1c] sm:$0xf] %v6404
      %6469 = vst [vmem:[%s410 + $0x20] sm:$0xf] %v6405
      %6470 = vst [vmem:[%s410 + $0x24] sm:$0xf] %v6406
      %6471 = vst [vmem:[%s410 + $0x28] sm:$0xf] %v6407
      %6472 = vst [vmem:[%s410 + $0x2c] sm:$0xf] %v6408
      %6473 = vst [vmem:[%s410 + $0x30] sm:$0xf] %v6409
      %6474 = vst [vmem:[%s410 + $0x34] sm:$0xf] %v6410
      %6475 = vst [vmem:[%s410 + $0x38] sm:$0xf] %v6411
      %6476 = vst [vmem:[%s410 + $0x3c] sm:$0xf] %v6412
      %6477 = vst [vmem:[%s410 + $0x40] sm:$0xf] %v6413
      %6478 = vst [vmem:[%s410 + $0x44] sm:$0xf] %v6414
      %6479 = vst [vmem:[%s410 + $0x48] sm:$0xf] %v6415
      %6480 = vst [vmem:[%s410 + $0x4c] sm:$0xf] %v6416
      %6481 = vst [vmem:[%s410 + $0x50] sm:$0xf] %v6417
      %6482 = vst [vmem:[%s410 + $0x54] sm:$0xf] %v6418
      %6483 = vst [vmem:[%s410 + $0x58] sm:$0xf] %v6419
      %6484 = vst [vmem:[%s410 + $0x5c] sm:$0xf] %v6420
      %6485 = vst [vmem:[%s410 + $0x60] sm:$0xf] %v6421
      %6486 = vst [vmem:[%s410 + $0x64] sm:$0xf] %v6422
      %6487 = vst [vmem:[%s410 + $0x68] sm:$0xf] %v6423
      %6488 = vst [vmem:[%s410 + $0x6c] sm:$0xf] %v6424
      %6489 = vst [vmem:[%s410 + $0x70] sm:$0xf] %v6425
      %6490 = vst [vmem:[%s410 + $0x74] sm:$0xf] %v6426
      %6491 = vst [vmem:[%s410 + $0x78] sm:$0xf] %v6427
      %6492 = vst [vmem:[%s410 + $0x7c] sm:$0xf] %v6428
      %v6493 = vpack.c.bf16 %v6210, %v6207
      %v6494 = vpack.c.bf16 %v6218, %v6215
      %v6495 = vpack.c.bf16 %v6226, %v6223
      %v6496 = vpack.c.bf16 %v6234, %v6231
      %v6497 = vpack.c.bf16 %v6242, %v6239
      %v6498 = vpack.c.bf16 %v6250, %v6247
      %v6499 = vpack.c.bf16 %v6258, %v6255
      %v6500 = vpack.c.bf16 %v6266, %v6263
      %v6501 = vpack.c.bf16 %v6274, %v6271
      %v6502 = vpack.c.bf16 %v6282, %v6279
      %v6503 = vpack.c.bf16 %v6290, %v6287
      %v6504 = vpack.c.bf16 %v6298, %v6295
      %v6505 = vpack.c.bf16 %v6306, %v6303
      %v6506 = vpack.c.bf16 %v6314, %v6311
      %v6507 = vpack.c.bf16 %v6322, %v6319
      %v6508 = vpack.c.bf16 %v6330, %v6327
      %v6525 = vunpack.c.l.b16 %v6493
      %v6526 = vunpack.c.h.b16 %v6493
      %v6527 = vunpack.c.l.b16 %v6494
      %v6528 = vunpack.c.h.b16 %v6494
      %v6529 = vunpack.c.l.b16 %v6495
      %v6530 = vunpack.c.h.b16 %v6495
      %v6531 = vunpack.c.l.b16 %v6496
      %v6532 = vunpack.c.h.b16 %v6496
      %v6533 = vunpack.c.l.b16 %v6497
      %v6534 = vunpack.c.h.b16 %v6497
      %v6535 = vunpack.c.l.b16 %v6498
      %v6536 = vunpack.c.h.b16 %v6498
      %v6537 = vunpack.c.l.b16 %v6499
      %v6538 = vunpack.c.h.b16 %v6499
      %v6539 = vunpack.c.l.b16 %v6500
      %v6540 = vunpack.c.h.b16 %v6500
      %v6541 = vunpack.c.l.b16 %v6501
      %v6542 = vunpack.c.h.b16 %v6501
      %v6543 = vunpack.c.l.b16 %v6502
      %v6544 = vunpack.c.h.b16 %v6502
      %v6545 = vunpack.c.l.b16 %v6503
      %v6546 = vunpack.c.h.b16 %v6503
      %v6547 = vunpack.c.l.b16 %v6504
      %v6548 = vunpack.c.h.b16 %v6504
      %v6549 = vunpack.c.l.b16 %v6505
      %v6550 = vunpack.c.h.b16 %v6505
      %v6551 = vunpack.c.l.b16 %v6506
      %v6552 = vunpack.c.h.b16 %v6506
      %v6553 = vunpack.c.l.b16 %v6507
      %v6554 = vunpack.c.h.b16 %v6507
      %v6555 = vunpack.c.l.b16 %v6508
      %v6556 = vunpack.c.h.b16 %v6508
      %v6557 = vpack.c.b16 %v6525, %v6525
      %v6558 = vpack.c.b16 %v6526, %v6526
      %v6559 = vpack.c.b16 %v6527, %v6527
      %v6560 = vpack.c.b16 %v6528, %v6528
      %v6561 = vpack.c.b16 %v6529, %v6529
      %v6562 = vpack.c.b16 %v6530, %v6530
      %v6563 = vpack.c.b16 %v6531, %v6531
      %v6564 = vpack.c.b16 %v6532, %v6532
      %v6565 = vpack.c.b16 %v6533, %v6533
      %v6566 = vpack.c.b16 %v6534, %v6534
      %v6567 = vpack.c.b16 %v6535, %v6535
      %v6568 = vpack.c.b16 %v6536, %v6536
      %v6569 = vpack.c.b16 %v6537, %v6537
      %v6570 = vpack.c.b16 %v6538, %v6538
      %v6571 = vpack.c.b16 %v6539, %v6539
      %v6572 = vpack.c.b16 %v6540, %v6540
      %v6573 = vpack.c.b16 %v6541, %v6541
      %v6574 = vpack.c.b16 %v6542, %v6542
      %v6575 = vpack.c.b16 %v6543, %v6543
      %v6576 = vpack.c.b16 %v6544, %v6544
      %v6577 = vpack.c.b16 %v6545, %v6545
      %v6578 = vpack.c.b16 %v6546, %v6546
      %v6579 = vpack.c.b16 %v6547, %v6547
      %v6580 = vpack.c.b16 %v6548, %v6548
      %v6581 = vpack.c.b16 %v6549, %v6549
      %v6582 = vpack.c.b16 %v6550, %v6550
      %v6583 = vpack.c.b16 %v6551, %v6551
      %v6584 = vpack.c.b16 %v6552, %v6552
      %v6585 = vpack.c.b16 %v6553, %v6553
      %v6586 = vpack.c.b16 %v6554, %v6554
      %v6587 = vpack.c.b16 %v6555, %v6555
      %v6588 = vpack.c.b16 %v6556, %v6556
      %vm6621 = vcmask 60416
      %6622 = vst.msk [vmem:[%s421] sm:$0xf] %vm6621, %v6557
      %6623 = vst.msk [vmem:[%s421 + $0x4] sm:$0xf] %vm6621, %v6558
      %6624 = vst.msk [vmem:[%s421 + $0x8] sm:$0xf] %vm6621, %v6559
      %6625 = vst.msk [vmem:[%s421 + $0xc] sm:$0xf] %vm6621, %v6560
      %6626 = vst.msk [vmem:[%s421 + $0x10] sm:$0xf] %vm6621, %v6561
      %6627 = vst.msk [vmem:[%s421 + $0x14] sm:$0xf] %vm6621, %v6562
      %6628 = vst.msk [vmem:[%s421 + $0x18] sm:$0xf] %vm6621, %v6563
      %6629 = vst.msk [vmem:[%s421 + $0x1c] sm:$0xf] %vm6621, %v6564
      %6630 = vst.msk [vmem:[%s421 + $0x20] sm:$0xf] %vm6621, %v6565
      %6631 = vst.msk [vmem:[%s421 + $0x24] sm:$0xf] %vm6621, %v6566
      %6632 = vst.msk [vmem:[%s421 + $0x28] sm:$0xf] %vm6621, %v6567
      %6633 = vst.msk [vmem:[%s421 + $0x2c] sm:$0xf] %vm6621, %v6568
      %6634 = vst.msk [vmem:[%s421 + $0x30] sm:$0xf] %vm6621, %v6569
      %6635 = vst.msk [vmem:[%s421 + $0x34] sm:$0xf] %vm6621, %v6570
      %6636 = vst.msk [vmem:[%s421 + $0x38] sm:$0xf] %vm6621, %v6571
      %6637 = vst.msk [vmem:[%s421 + $0x3c] sm:$0xf] %vm6621, %v6572
      %6638 = vst.msk [vmem:[%s421 + $0x40] sm:$0xf] %vm6621, %v6573
      %6639 = vst.msk [vmem:[%s421 + $0x44] sm:$0xf] %vm6621, %v6574
      %6640 = vst.msk [vmem:[%s421 + $0x48] sm:$0xf] %vm6621, %v6575
      %6641 = vst.msk [vmem:[%s421 + $0x4c] sm:$0xf] %vm6621, %v6576
      %6642 = vst.msk [vmem:[%s421 + $0x50] sm:$0xf] %vm6621, %v6577
      %6643 = vst.msk [vmem:[%s421 + $0x54] sm:$0xf] %vm6621, %v6578
      %6644 = vst.msk [vmem:[%s421 + $0x58] sm:$0xf] %vm6621, %v6579
      %6645 = vst.msk [vmem:[%s421 + $0x5c] sm:$0xf] %vm6621, %v6580
      %6646 = vst.msk [vmem:[%s421 + $0x60] sm:$0xf] %vm6621, %v6581
      %6647 = vst.msk [vmem:[%s421 + $0x64] sm:$0xf] %vm6621, %v6582
      %6648 = vst.msk [vmem:[%s421 + $0x68] sm:$0xf] %vm6621, %v6583
      %6649 = vst.msk [vmem:[%s421 + $0x6c] sm:$0xf] %vm6621, %v6584
      %6650 = vst.msk [vmem:[%s421 + $0x70] sm:$0xf] %vm6621, %v6585
      %6651 = vst.msk [vmem:[%s421 + $0x74] sm:$0xf] %vm6621, %v6586
      %6652 = vst.msk [vmem:[%s421 + $0x78] sm:$0xf] %vm6621, %v6587
      %6653 = vst.msk [vmem:[%s421 + $0x7c] sm:$0xf] %vm6621, %v6588
      %s6654 = smul.u32 16, %s26
      %p6655 = scmp.lt.s32.totalorder %s25, 1
      %s6656 = scalar_select %p6655, %s25, 1
      %p6657 = scmp.lt.s32.totalorder %s6654, 15
      %s6658 = scalar_select %p6657, %s6654, 15
      %s6659 = smul.addr %s6658, 2
      %s6660 = smul.addr %s6656, 32
      %s6661 = sadd.s32 %s6659, %s6660
      %s6662 = smul.addr %s6661, 4
      %s6663 = scalar_lea.vmem %s8, %s6662
      %s6664 = smul.u32 16, %s26
      %p6665 = scmp.lt.s32.totalorder %s25, 1
      %s6666 = scalar_select %p6665, %s25, 1
      %p6667 = scmp.lt.s32.totalorder %s6664, 15
      %s6668 = scalar_select %p6667, %s6664, 15
      %s6669 = smul.addr %s6668, 2
      %s6670 = smul.addr %s6666, 32
      %s6671 = sadd.s32 %s6669, %s6670
      %s6672 = smul.addr %s6671, 4
      %s6673 = scalar_lea.vmem %s9, %s6672
      // Predicated region
      $region53: #{cff_block_forward.1} parent=51 // pred_check
        %p6674 = pneg %p233
      $region54: #{cff_block_forward.1} parent=51 // pred_check_branch
        %6676 = sbr.rel (%p6674) target = $region56
      $region55: #{cff_block_forward.1} parent=51 // pred_region
        %s6677 = smul.u32 16, %s26
      $region56: #{cff_block_forward.1} parent=51 // pred_fallthru
        _
      // Predicated region
      $region57: #{cff_block_forward.1} parent=51 // pred_check
        %p6678 = pneg %p261
      $region58: #{cff_block_forward.1} parent=51 // pred_check_branch
        %6680 = sbr.rel (%p6678) target = $region60
      $region59: #{cff_block_forward.1} parent=51 // pred_region
        %s6681 = smul.u32 16, %s26
      $region60: #{cff_block_forward.1} parent=51 // pred_fallthru
        _
    $region52: #{cff_block_forward.1} parent=5 // pred_fallthru
      _
    %p6682 = scmp.le.s32.totalorder 2, %s16
    // Predicated region
    $region61: #{cff_block_forward.1} parent=5 // pred_check
      %p6683 = pneg %p6682
    $region62: #{cff_block_forward.1} parent=5 // pred_check_branch
      %6685 = sbr.rel (%p6683) target = $region64
    $region63: #{cff_block_forward.1} parent=5 // pred_region
      %s6686 = ssub.s32 %s16, 2
      // Predicated region
      $region65: #{cff_block_forward.1} parent=63 // pred_check
        %p6687 = pneg %p239
      $region66: #{cff_block_forward.1} parent=63 // pred_check_branch
        %6689 = sbr.rel (%p6687) target = $region68
      $region67: #{cff_block_forward.1} parent=63 // pred_region
        %s6690 = smul.u32 16, %s28
        %p6691 = scmp.lt.s32.totalorder %s27, 1
        %s6692 = scalar_select %p6691, %s27, 1
        %p6693 = scmp.lt.s32.totalorder %s6690, 15
        %s6694 = scalar_select %p6693, %s6690, 15
        %s6695 = smul.addr %s6694, 2
        %s6696 = smul.addr %s6692, 32
        %s6697 = sadd.s32 %s6695, %s6696
        %s6698 = smul.addr %s6697, 4
        %s6699 = scalar_lea.vmem %s8, %s6698
      $region68: #{cff_block_forward.1} parent=63 // pred_fallthru
        _
      // Predicated region
      $region69: #{cff_block_forward.1} parent=63 // pred_check
        %p6700 = pneg %p267
      $region70: #{cff_block_forward.1} parent=63 // pred_check_branch
        %6702 = sbr.rel (%p6700) target = $region72
      $region71: #{cff_block_forward.1} parent=63 // pred_region
        %s6703 = smul.u32 16, %s28
        %p6704 = scmp.lt.s32.totalorder %s27, 1
        %s6705 = scalar_select %p6704, %s27, 1
        %p6706 = scmp.lt.s32.totalorder %s6703, 15
        %s6707 = scalar_select %p6706, %s6703, 15
        %s6708 = smul.addr %s6707, 2
        %s6709 = smul.addr %s6705, 32
        %s6710 = sadd.s32 %s6708, %s6709
        %s6711 = smul.addr %s6710, 4
        %s6712 = scalar_lea.vmem %s9, %s6711
      $region72: #{cff_block_forward.1} parent=63 // pred_fallthru
        _
    $region64: #{cff_block_forward.1} parent=5 // pred_fallthru
      _
  $region6: #{cff_block_forward.1} parent=0 // loop_footer
    %s20 = sadd.s32 1, %s16
  $region7: #{cff_block_forward.1} parent=0 // loop_footer_branch
    %15 = sbr.rel target = $region3
  $region8: #{cff_block_forward.1} parent=0 // loop_exit
    _

</llo_original>
